<compile_context>
chip_gen: v7x
topology: tpu7x:2x2x1
jax: 0.10.0
libtpu: 0.0.40
codegen_flags: <defaults>
</compile_context>

<pallas_src>
import math

import jax
import jax.numpy as jnp
from jax.experimental import pallas as pl
from jax.experimental.pallas import tpu as pltpu

BN_EPS = 1e-5
LEAKY_SLOPE = 0.01

IN_DIM = 773
ENC_DIM = 100

_LAYER_DIMS = [
    (773, 600), (600, 400), (400, 200), (200, 100),   # encoder fce1..fce4
    (100, 200), (200, 400), (400, 600), (600, 773),   # decoder fcd1..fcd4
]
NUM_LAYERS = len(_LAYER_DIMS)


def _round_up(n, m):
    return ((n + m - 1) // m) * m


_PADDED_DIMS = [(_round_up(din, 128), _round_up(dout, 128)) for din, dout in _LAYER_DIMS]
PAD_IN = _PADDED_DIMS[0][0]       # 896  (input / decoded width, padded)
ENC_PAD = _PADDED_DIMS[3][1]      # 128  (encoded width, padded)
PAD_OUT = _PADDED_DIMS[-1][1]     # 896


def _fused_autoencoder_kernel(x_ref, bn_ref, w0_ref, *rest):
    """One grid step = one independent forward() on a (B, 896) micro-batch.

    rest layout:
      rest[0 : 7]            -- HBM refs for layer 1..7 weights (memory_space=pl.ANY)
      rest[7], rest[8]       -- decoded / encoded output refs
      rest[9 : 16]           -- persistent VMEM scratch for layer 1..7 weights
      rest[16]               -- DMA semaphore array, shape (7,)
    """
    n_manual = NUM_LAYERS - 1
    w_hbm = rest[:n_manual]
    dec_ref = rest[n_manual]
    enc_ref = rest[n_manual + 1]
    w_vmem = rest[n_manual + 2: n_manual + 2 + n_manual]
    sems = rest[-1]

    first_step = pl.program_id(0) == 0

    # Cold step only: issue all later-layer weight DMAs up front so they overlap with the
    # earlier layers' matmul/BN compute.  They stay resident for every later grid step.
    @pl.when(first_step)
    def _start_weight_dmas():
        for i in range(n_manual):
            pltpu.make_async_copy(w_hbm[i], w_vmem[i], sems.at[i]).start()

    h = x_ref[0]                                            # (B, 896) bf16, padded lanes 0
    decoded = None
    encoded = None

    for layer in range(NUM_LAYERS):
        dout_p = _PADDED_DIMS[layer][1]

        if layer == 0:
            w = w0_ref[...]
        else:
            @pl.when(first_step)
            def _wait_weight():                              # noqa: B023 (traced immediately)
                pltpu.make_async_copy(
                    w_hbm[layer - 1], w_vmem[layer - 1], sems.at[layer - 1]
                ).wait()
            w = w_vmem[layer - 1][...]

        # MXU matmul: bf16 operands, f32 accumulation.
        y = jnp.dot(h, w, preferred_element_type=jnp.float32)     # (B, dout_p) f32

        # BatchNorm1d (training mode): batch mean + biased batch variance (two-pass for
        # numerical stability), folded with the affine transform into one scale/shift.
        # (Linear bias omitted: exactly cancelled by the mean subtraction in train mode.)
        mean = jnp.mean(y, axis=0, keepdims=True)
        var = jnp.mean(jnp.square(y - mean), axis=0, keepdims=True)
        gamma = bn_ref[2 * layer: 2 * layer + 1, :dout_p]
        beta = bn_ref[2 * layer + 1: 2 * layer + 2, :dout_p]
        scale = gamma * jax.lax.rsqrt(var + BN_EPS)
        shift = beta - mean * scale
        y = y * scale + shift

        if layer == NUM_LAYERS - 1:
            # Exact sigmoid via a single EUP tanh (no approx-reciprocal error).
            decoded = 0.5 * (jnp.tanh(0.5 * y) + 1.0)
        else:
            act = jnp.where(y >= 0, y, LEAKY_SLOPE * y)            # leaky_relu(0.01), f32
            if layer == 3:
                encoded = act                                      # encoder output, f32
            h = act.astype(jnp.bfloat16)                           # bf16 operand for next MXU

    enc_ref[0] = encoded.astype(enc_ref.dtype)
    dec_ref[0] = decoded.astype(dec_ref.dtype)


def autoencoder_forward_stacked(xs, params):
    """xs: (N, B, 773) -- N independent forward() calls (BN stats per B-row slice).

    Returns (decoded (N, B, 773), encoded (N, B, 100)).  Weights are DMA'd once and stay
    VMEM-resident across the N grid steps.
    """
    w0, w_rest, bn_packed = params
    N, B, _ = xs.shape

    # bf16 + zero-pad the feature axis once in the wrapper (halves the small input DMA).
    x_p = jnp.pad(xs.astype(jnp.bfloat16), ((0, 0), (0, 0), (0, PAD_IN - IN_DIM)))

    grid_spec = pltpu.PrefetchScalarGridSpec(
        num_scalar_prefetch=0,
        grid=(N,),
        in_specs=[
            # Per-step activation block.
            pl.BlockSpec((1, B, PAD_IN), lambda n: (n, 0, 0)),
            # Packed BN params + layer-0 weight: constant index_map -> fetched once,
            # VMEM-resident across all grid steps.
            pl.BlockSpec((2 * NUM_LAYERS, PAD_OUT), lambda n: (0, 0)),
            pl.BlockSpec(_PADDED_DIMS[0], lambda n: (0, 0)),
        ] + [
            # Layers 1..7 weights stay in HBM; fetched manually (overlapped) on step 0.
            pl.BlockSpec(memory_space=pl.ANY) for _ in range(NUM_LAYERS - 1)
        ],
        out_specs=(
            pl.BlockSpec((1, B, PAD_OUT), lambda n: (n, 0, 0)),
            pl.BlockSpec((1, B, ENC_PAD), lambda n: (n, 0, 0)),
        ),
        scratch_shapes=[pltpu.VMEM(_PADDED_DIMS[i], jnp.bfloat16)
                        for i in range(1, NUM_LAYERS)]
                       + [pltpu.SemaphoreType.DMA((NUM_LAYERS - 1,))],
    )

    dec_p, enc_p = pl.pallas_call(
        _fused_autoencoder_kernel,
        out_shape=(
            jax.ShapeDtypeStruct((N, B, PAD_OUT), jnp.float32),
            jax.ShapeDtypeStruct((N, B, ENC_PAD), jnp.float32),
        ),
        grid_spec=grid_spec,
        compiler_params=pltpu.CompilerParams(
            # Must stay sequential on one core: weight scratch persists across grid steps.
            # (Splitting B=8 across v7x's 2 TCs would be a regression anyway.)
            dimension_semantics=("arbitrary",),
        ),
    )(x_p, bn_packed, w0, *w_rest)

    # Slice padded lanes off (padded columns carry no information).
    return dec_p[:, :, :IN_DIM], enc_p[:, :, :ENC_DIM]


def autoencoder_forward(x, params):
    """Single-batch forward, matching the PyTorch module: returns (decoded, encoded)."""
    dec, enc = autoencoder_forward_stacked(x[None], params)
    return dec[0], enc[0]


# ---------------------------------------------------------------------------
# Parameter construction (deterministic). Mimics PyTorch Linear default init
# U(-1/sqrt(fan_in), 1/sqrt(fan_in)) for the weight; bias dropped (redundant under
# training-mode BatchNorm). BN gamma=1 / beta=0, packed into one (16, 896) f32 array.
# Weights stored pre-transposed (W^T), zero-padded to lane-aligned shapes, as bf16.
# (Optional further byte-saving: int8 weights on v5e/v6e, fp8 on v7x -- BN absorbs the
#  per-output-column scale -- not applied here to keep numerics simple.)
# ---------------------------------------------------------------------------
def init_params(key):
    kernel_ws = []
    ref_ws = []
    bn_packed = jnp.zeros((2 * NUM_LAYERS, PAD_OUT), jnp.float32)
    for i, ((din, dout), (din_p, dout_p)) in enumerate(zip(_LAYER_DIMS, _PADDED_DIMS)):
        key, kw = jax.random.split(key)
        bound = 1.0 / math.sqrt(din)
        w_t = jax.random.uniform(kw, (din, dout), jnp.float32, -bound, bound)   # W^T
        w_bf16 = w_t.astype(jnp.bfloat16)
        w_pad = jnp.zeros((din_p, dout_p), jnp.bfloat16).at[:din, :dout].set(w_bf16)
        kernel_ws.append(w_pad)
        ref_ws.append(w_bf16)
        bn_packed = bn_packed.at[2 * i, :dout].set(1.0)        # gamma=1 (pad lanes stay 0)
        # beta row (2*i + 1) stays 0.
    kernel_params = (kernel_ws[0], tuple(kernel_ws[1:]), bn_packed)
    return kernel_params, ref_ws


def autoencoder_ref(x, ref_ws):
    """Pure-JAX reference with the same dtype pipeline (bf16 matmuls, f32 BN)."""
    h = x.astype(jnp.bfloat16)
    dec = enc = None
    for i, w in enumerate(ref_ws):
        y = jnp.dot(h, w, preferred_element_type=jnp.float32)
        mean = jnp.mean(y, axis=0, keepdims=True)
        var = jnp.mean(jnp.square(y - mean), axis=0, keepdims=True)
        y = (y - mean) * jax.lax.rsqrt(var + BN_EPS)           # gamma=1, beta=0
        if i == NUM_LAYERS - 1:
            dec = jax.nn.sigmoid(y)
        else:
            act = jnp.where(y >= 0, y, LEAKY_SLOPE * y)
            if i == 3:
                enc = act
            h = act.astype(jnp.bfloat16)
    return dec, enc


if __name__ == "__main__":
    key = jax.random.PRNGKey(0)
    key, kx, kp = jax.random.split(key, 3)

    N, B = 3, 8                      # 3 independent micro-batches of 8 rows (BN needs B > 1)
    xs = jax.random.uniform(kx, (N, B, IN_DIM), jnp.float32)

    kernel_params, ref_ws = init_params(kp)

    fwd = jax.jit(autoencoder_forward_stacked)
    decoded, encoded = fwd(xs, kernel_params)
    jax.block_until_ready((decoded, encoded))

    assert decoded.shape == (N, B, IN_DIM), decoded.shape
    assert encoded.shape == (N, B, ENC_DIM), encoded.shape
    assert bool(jnp.all(jnp.isfinite(decoded))) and bool(jnp.all(jnp.isfinite(encoded)))
    assert bool(jnp.all(decoded > 0.0)) and bool(jnp.all(decoded < 1.0))

    # Validate every grid step against the pure-JAX reference (each slice is an
    # independent forward() call) -- also proves the resident-weight path (steps > 0).
    for n in range(N):
        dref, eref = autoencoder_ref(xs[n], ref_ws)
        assert float(jnp.max(jnp.abs(decoded[n] - dref))) < 5e-2
        assert float(jnp.max(jnp.abs(encoded[n] - eref))) < 1e-1

    # Single-call API (N=1) — matches the PyTorch forward() on one batch.
    d1, e1 = jax.jit(autoencoder_forward)(xs[0], kernel_params)
    jax.block_until_ready((d1, e1))
    assert d1.shape == (B, IN_DIM) and e1.shape == (B, ENC_DIM)

    print("KERNEL_OK")
</pallas_src>

<mosaic_0001>
module attributes {stable_mosaic.version = 11 : i64} {
  func.func @_fused_autoencoder_kernel(%arg0: i32, %arg1: memref<1x8x896xbf16, #tpu.memory_space<vmem>>, %arg2: memref<16x896xf32, #tpu.memory_space<vmem>>, %arg3: memref<896x640xbf16, #tpu.memory_space<vmem>>, %arg4: memref<640x512xbf16, #tpu.memory_space<any>>, %arg5: memref<512x256xbf16, #tpu.memory_space<any>>, %arg6: memref<256x128xbf16, #tpu.memory_space<any>>, %arg7: memref<128x256xbf16, #tpu.memory_space<any>>, %arg8: memref<256x512xbf16, #tpu.memory_space<any>>, %arg9: memref<512x640xbf16, #tpu.memory_space<any>>, %arg10: memref<640x896xbf16, #tpu.memory_space<any>>, %arg11: memref<1x8x896xf32, #tpu.memory_space<vmem>>, %arg12: memref<1x8x128xf32, #tpu.memory_space<vmem>>, %arg13: memref<640x512xbf16, #tpu.memory_space<vmem>>, %arg14: memref<512x256xbf16, #tpu.memory_space<vmem>>, %arg15: memref<256x128xbf16, #tpu.memory_space<vmem>>, %arg16: memref<128x256xbf16, #tpu.memory_space<vmem>>, %arg17: memref<256x512xbf16, #tpu.memory_space<vmem>>, %arg18: memref<512x640xbf16, #tpu.memory_space<vmem>>, %arg19: memref<640x896xbf16, #tpu.memory_space<vmem>>, %arg20: memref<7x!tpu.dma_semaphore, #tpu.memory_space<semaphore_mem>>) attributes {dimension_semantics = [#tpu.dimension_semantics<arbitrary>], iteration_bounds = array<i64: 3>, scalar_prefetch = 0 : i64, scratch_operands = 8 : i64, tpu.core_type = #tpu.core_type<tc>, window_params = [{transform_indices = @transform_0, window_bounds = array<i64: 1, 8, 896>}, {pipeline_mode = #tpu.pipeline_mode<synchronous>, transform_indices = @transform_1, window_bounds = array<i64: 16, 896>}, {pipeline_mode = #tpu.pipeline_mode<synchronous>, transform_indices = @transform_2, window_bounds = array<i64: 896, 640>}, {}, {}, {}, {}, {}, {}, {}, {transform_indices = @transform_10, window_bounds = array<i64: 1, 8, 896>}, {transform_indices = @transform_11, window_bounds = array<i64: 1, 8, 128>}]} {
    %c0_i32 = arith.constant 0 : i32
    %0 = arith.cmpi eq, %arg0, %c0_i32 : i32
    %1 = arith.extui %0 : i1 to i32
    %c0_i32_0 = arith.constant 0 : i32
    %2 = arith.cmpi ne, %1, %c0_i32_0 : i32
    scf.if %2 {
      %c0_i32_113 = arith.constant 0 : i32
      %274 = tpu.memref_slice %arg20[%c0_i32_113] : memref<7x!tpu.dma_semaphore, #tpu.memory_space<semaphore_mem>> -> memref<1x!tpu.dma_semaphore, #tpu.memory_space<semaphore_mem>>
      %275 = tpu.memref_squeeze %274 : memref<1x!tpu.dma_semaphore, #tpu.memory_space<semaphore_mem>> -> memref<!tpu.dma_semaphore, #tpu.memory_space<semaphore_mem>>
      tpu.enqueue_dma source(%arg4 : memref<640x512xbf16, #tpu.memory_space<any>>) target(%arg13 : memref<640x512xbf16, #tpu.memory_space<vmem>>) target_semaphore(%275 : memref<!tpu.dma_semaphore, #tpu.memory_space<semaphore_mem>>)
      %c1_i32 = arith.constant 1 : i32
      %276 = tpu.memref_slice %arg20[%c1_i32] : memref<7x!tpu.dma_semaphore, #tpu.memory_space<semaphore_mem>> -> memref<1x!tpu.dma_semaphore, #tpu.memory_space<semaphore_mem>>
      %277 = tpu.memref_squeeze %276 : memref<1x!tpu.dma_semaphore, #tpu.memory_space<semaphore_mem>> -> memref<!tpu.dma_semaphore, #tpu.memory_space<semaphore_mem>>
      tpu.enqueue_dma source(%arg5 : memref<512x256xbf16, #tpu.memory_space<any>>) target(%arg14 : memref<512x256xbf16, #tpu.memory_space<vmem>>) target_semaphore(%277 : memref<!tpu.dma_semaphore, #tpu.memory_space<semaphore_mem>>)
      %c2_i32 = arith.constant 2 : i32
      %278 = tpu.memref_slice %arg20[%c2_i32] : memref<7x!tpu.dma_semaphore, #tpu.memory_space<semaphore_mem>> -> memref<1x!tpu.dma_semaphore, #tpu.memory_space<semaphore_mem>>
      %279 = tpu.memref_squeeze %278 : memref<1x!tpu.dma_semaphore, #tpu.memory_space<semaphore_mem>> -> memref<!tpu.dma_semaphore, #tpu.memory_space<semaphore_mem>>
      tpu.enqueue_dma source(%arg6 : memref<256x128xbf16, #tpu.memory_space<any>>) target(%arg15 : memref<256x128xbf16, #tpu.memory_space<vmem>>) target_semaphore(%279 : memref<!tpu.dma_semaphore, #tpu.memory_space<semaphore_mem>>)
      %c3_i32 = arith.constant 3 : i32
      %280 = tpu.memref_slice %arg20[%c3_i32] : memref<7x!tpu.dma_semaphore, #tpu.memory_space<semaphore_mem>> -> memref<1x!tpu.dma_semaphore, #tpu.memory_space<semaphore_mem>>
      %281 = tpu.memref_squeeze %280 : memref<1x!tpu.dma_semaphore, #tpu.memory_space<semaphore_mem>> -> memref<!tpu.dma_semaphore, #tpu.memory_space<semaphore_mem>>
      tpu.enqueue_dma source(%arg7 : memref<128x256xbf16, #tpu.memory_space<any>>) target(%arg16 : memref<128x256xbf16, #tpu.memory_space<vmem>>) target_semaphore(%281 : memref<!tpu.dma_semaphore, #tpu.memory_space<semaphore_mem>>)
      %c4_i32 = arith.constant 4 : i32
      %282 = tpu.memref_slice %arg20[%c4_i32] : memref<7x!tpu.dma_semaphore, #tpu.memory_space<semaphore_mem>> -> memref<1x!tpu.dma_semaphore, #tpu.memory_space<semaphore_mem>>
      %283 = tpu.memref_squeeze %282 : memref<1x!tpu.dma_semaphore, #tpu.memory_space<semaphore_mem>> -> memref<!tpu.dma_semaphore, #tpu.memory_space<semaphore_mem>>
      tpu.enqueue_dma source(%arg8 : memref<256x512xbf16, #tpu.memory_space<any>>) target(%arg17 : memref<256x512xbf16, #tpu.memory_space<vmem>>) target_semaphore(%283 : memref<!tpu.dma_semaphore, #tpu.memory_space<semaphore_mem>>)
      %c5_i32 = arith.constant 5 : i32
      %284 = tpu.memref_slice %arg20[%c5_i32] : memref<7x!tpu.dma_semaphore, #tpu.memory_space<semaphore_mem>> -> memref<1x!tpu.dma_semaphore, #tpu.memory_space<semaphore_mem>>
      %285 = tpu.memref_squeeze %284 : memref<1x!tpu.dma_semaphore, #tpu.memory_space<semaphore_mem>> -> memref<!tpu.dma_semaphore, #tpu.memory_space<semaphore_mem>>
      tpu.enqueue_dma source(%arg9 : memref<512x640xbf16, #tpu.memory_space<any>>) target(%arg18 : memref<512x640xbf16, #tpu.memory_space<vmem>>) target_semaphore(%285 : memref<!tpu.dma_semaphore, #tpu.memory_space<semaphore_mem>>)
      %c6_i32 = arith.constant 6 : i32
      %286 = tpu.memref_slice %arg20[%c6_i32] : memref<7x!tpu.dma_semaphore, #tpu.memory_space<semaphore_mem>> -> memref<1x!tpu.dma_semaphore, #tpu.memory_space<semaphore_mem>>
      %287 = tpu.memref_squeeze %286 : memref<1x!tpu.dma_semaphore, #tpu.memory_space<semaphore_mem>> -> memref<!tpu.dma_semaphore, #tpu.memory_space<semaphore_mem>>
      tpu.enqueue_dma source(%arg10 : memref<640x896xbf16, #tpu.memory_space<any>>) target(%arg19 : memref<640x896xbf16, #tpu.memory_space<vmem>>) target_semaphore(%287 : memref<!tpu.dma_semaphore, #tpu.memory_space<semaphore_mem>>)
    } else {
    }
    %c0 = arith.constant 0 : index
    %c0_1 = arith.constant 0 : index
    %c0_2 = arith.constant 0 : index
    %3 = vector.load %arg1[%c0, %c0_1, %c0_2] : memref<1x8x896xbf16, #tpu.memory_space<vmem>>, vector<1x8x896xbf16>
    %4 = vector.shape_cast %3 : vector<1x8x896xbf16> to vector<8x896xbf16>
    %c0_3 = arith.constant 0 : index
    %c0_4 = arith.constant 0 : index
    %5 = vector.load %arg3[%c0_3, %c0_4] : memref<896x640xbf16, #tpu.memory_space<vmem>>, vector<896x640xbf16>
    %cst = arith.constant dense<0.000000e+00> : vector<8x640xf32>
    %6 = tpu.matmul %4, %5, %cst {dimension_numbers = #tpu.dot_dimension_numbers<[1], [0], [0], [1], [0, 0, 1, 1], [], []>} : vector<8x896xbf16>, vector<896x640xbf16>, vector<8x640xf32> -> vector<8x640xf32>
    %cst_5 = arith.constant dense<0.000000e+00> : vector<640xf32>
    %7 = vector.multi_reduction <add>, %6, %cst_5 [0] : vector<8x640xf32> to vector<640xf32>
    %8 = vector.shape_cast %7 : vector<640xf32> to vector<1x640xf32>
    %cst_6 = arith.constant 8.000000e+00 : f32
    %9 = vector.broadcast %cst_6 : f32 to vector<1x640xf32>
    %10 = arith.divf %8, %9 : vector<1x640xf32>
    %11 = vector.broadcast %10 : vector<1x640xf32> to vector<8x640xf32>
    %12 = arith.subf %6, %11 : vector<8x640xf32>
    %13 = arith.mulf %12, %12 : vector<8x640xf32>
    %cst_7 = arith.constant dense<0.000000e+00> : vector<640xf32>
    %14 = vector.multi_reduction <add>, %13, %cst_7 [0] : vector<8x640xf32> to vector<640xf32>
    %15 = vector.shape_cast %14 : vector<640xf32> to vector<1x640xf32>
    %cst_8 = arith.constant 8.000000e+00 : f32
    %16 = vector.broadcast %cst_8 : f32 to vector<1x640xf32>
    %17 = arith.divf %15, %16 : vector<1x640xf32>
    %c0_9 = arith.constant 0 : index
    %c0_10 = arith.constant 0 : index
    %18 = vector.load %arg2[%c0_9, %c0_10] : memref<16x896xf32, #tpu.memory_space<vmem>>, vector<1x640xf32>
    %c1 = arith.constant 1 : index
    %c0_11 = arith.constant 0 : index
    %19 = vector.load %arg2[%c1, %c0_11] : memref<16x896xf32, #tpu.memory_space<vmem>>, vector<1x640xf32>
    %cst_12 = arith.constant 9.99999974E-6 : f32
    %20 = vector.broadcast %cst_12 : f32 to vector<1x640xf32>
    %21 = arith.addf %17, %20 : vector<1x640xf32>
    %22 = math.rsqrt %21 : vector<1x640xf32>
    %23 = arith.mulf %18, %22 : vector<1x640xf32>
    %24 = arith.mulf %10, %23 : vector<1x640xf32>
    %25 = arith.subf %19, %24 : vector<1x640xf32>
    %26 = vector.broadcast %23 : vector<1x640xf32> to vector<8x640xf32>
    %27 = arith.mulf %6, %26 : vector<8x640xf32>
    %28 = vector.broadcast %25 : vector<1x640xf32> to vector<8x640xf32>
    %29 = arith.addf %27, %28 : vector<8x640xf32>
    %cst_13 = arith.constant 0.000000e+00 : f32
    %30 = vector.broadcast %cst_13 : f32 to vector<8x640xf32>
    %31 = arith.cmpf oge, %29, %30 : vector<8x640xf32>
    %cst_14 = arith.constant 0.00999999977 : f32
    %32 = vector.broadcast %cst_14 : f32 to vector<8x640xf32>
    %33 = arith.mulf %32, %29 : vector<8x640xf32>
    %34 = arith.select %31, %29, %33 : vector<8x640xi1>, vector<8x640xf32>
    %35 = arith.truncf %34 : vector<8x640xf32> to vector<8x640xbf16>
    %36 = arith.extui %0 : i1 to i32
    %c0_i32_15 = arith.constant 0 : i32
    %37 = arith.cmpi ne, %36, %c0_i32_15 : i32
    scf.if %37 {
      %c0_i32_113 = arith.constant 0 : i32
      %274 = tpu.memref_slice %arg20[%c0_i32_113] : memref<7x!tpu.dma_semaphore, #tpu.memory_space<semaphore_mem>> -> memref<1x!tpu.dma_semaphore, #tpu.memory_space<semaphore_mem>>
      %275 = tpu.memref_squeeze %274 : memref<1x!tpu.dma_semaphore, #tpu.memory_space<semaphore_mem>> -> memref<!tpu.dma_semaphore, #tpu.memory_space<semaphore_mem>>
      tpu.wait_dma2 semaphore(%275 : memref<!tpu.dma_semaphore, #tpu.memory_space<semaphore_mem>>) src(%arg4 : memref<640x512xbf16, #tpu.memory_space<any>>) dst(%arg13 : memref<640x512xbf16, #tpu.memory_space<vmem>>)
    } else {
    }
    %c0_16 = arith.constant 0 : index
    %c0_17 = arith.constant 0 : index
    %38 = vector.load %arg13[%c0_16, %c0_17] : memref<640x512xbf16, #tpu.memory_space<vmem>>, vector<640x512xbf16>
    %cst_18 = arith.constant dense<0.000000e+00> : vector<8x512xf32>
    %39 = tpu.matmul %35, %38, %cst_18 {dimension_numbers = #tpu.dot_dimension_numbers<[1], [0], [0], [1], [0, 0, 1, 1], [], []>} : vector<8x640xbf16>, vector<640x512xbf16>, vector<8x512xf32> -> vector<8x512xf32>
    %cst_19 = arith.constant dense<0.000000e+00> : vector<512xf32>
    %40 = vector.multi_reduction <add>, %39, %cst_19 [0] : vector<8x512xf32> to vector<512xf32>
    %41 = vector.shape_cast %40 : vector<512xf32> to vector<1x512xf32>
    %cst_20 = arith.constant 8.000000e+00 : f32
    %42 = vector.broadcast %cst_20 : f32 to vector<1x512xf32>
    %43 = arith.divf %41, %42 : vector<1x512xf32>
    %44 = vector.broadcast %43 : vector<1x512xf32> to vector<8x512xf32>
    %45 = arith.subf %39, %44 : vector<8x512xf32>
    %46 = arith.mulf %45, %45 : vector<8x512xf32>
    %cst_21 = arith.constant dense<0.000000e+00> : vector<512xf32>
    %47 = vector.multi_reduction <add>, %46, %cst_21 [0] : vector<8x512xf32> to vector<512xf32>
    %48 = vector.shape_cast %47 : vector<512xf32> to vector<1x512xf32>
    %cst_22 = arith.constant 8.000000e+00 : f32
    %49 = vector.broadcast %cst_22 : f32 to vector<1x512xf32>
    %50 = arith.divf %48, %49 : vector<1x512xf32>
    %c2 = arith.constant 2 : index
    %c0_23 = arith.constant 0 : index
    %51 = vector.load %arg2[%c2, %c0_23] : memref<16x896xf32, #tpu.memory_space<vmem>>, vector<1x512xf32>
    %c3 = arith.constant 3 : index
    %c0_24 = arith.constant 0 : index
    %52 = vector.load %arg2[%c3, %c0_24] : memref<16x896xf32, #tpu.memory_space<vmem>>, vector<1x512xf32>
    %cst_25 = arith.constant 9.99999974E-6 : f32
    %53 = vector.broadcast %cst_25 : f32 to vector<1x512xf32>
    %54 = arith.addf %50, %53 : vector<1x512xf32>
    %55 = math.rsqrt %54 : vector<1x512xf32>
    %56 = arith.mulf %51, %55 : vector<1x512xf32>
    %57 = arith.mulf %43, %56 : vector<1x512xf32>
    %58 = arith.subf %52, %57 : vector<1x512xf32>
    %59 = vector.broadcast %56 : vector<1x512xf32> to vector<8x512xf32>
    %60 = arith.mulf %39, %59 : vector<8x512xf32>
    %61 = vector.broadcast %58 : vector<1x512xf32> to vector<8x512xf32>
    %62 = arith.addf %60, %61 : vector<8x512xf32>
    %cst_26 = arith.constant 0.000000e+00 : f32
    %63 = vector.broadcast %cst_26 : f32 to vector<8x512xf32>
    %64 = arith.cmpf oge, %62, %63 : vector<8x512xf32>
    %cst_27 = arith.constant 0.00999999977 : f32
    %65 = vector.broadcast %cst_27 : f32 to vector<8x512xf32>
    %66 = arith.mulf %65, %62 : vector<8x512xf32>
    %67 = arith.select %64, %62, %66 : vector<8x512xi1>, vector<8x512xf32>
    %68 = arith.truncf %67 : vector<8x512xf32> to vector<8x512xbf16>
    %69 = arith.extui %0 : i1 to i32
    %c0_i32_28 = arith.constant 0 : i32
    %70 = arith.cmpi ne, %69, %c0_i32_28 : i32
    scf.if %70 {
      %c1_i32 = arith.constant 1 : i32
      %274 = tpu.memref_slice %arg20[%c1_i32] : memref<7x!tpu.dma_semaphore, #tpu.memory_space<semaphore_mem>> -> memref<1x!tpu.dma_semaphore, #tpu.memory_space<semaphore_mem>>
      %275 = tpu.memref_squeeze %274 : memref<1x!tpu.dma_semaphore, #tpu.memory_space<semaphore_mem>> -> memref<!tpu.dma_semaphore, #tpu.memory_space<semaphore_mem>>
      tpu.wait_dma2 semaphore(%275 : memref<!tpu.dma_semaphore, #tpu.memory_space<semaphore_mem>>) src(%arg5 : memref<512x256xbf16, #tpu.memory_space<any>>) dst(%arg14 : memref<512x256xbf16, #tpu.memory_space<vmem>>)
    } else {
    }
    %c0_29 = arith.constant 0 : index
    %c0_30 = arith.constant 0 : index
    %71 = vector.load %arg14[%c0_29, %c0_30] : memref<512x256xbf16, #tpu.memory_space<vmem>>, vector<512x256xbf16>
    %cst_31 = arith.constant dense<0.000000e+00> : vector<8x256xf32>
    %72 = tpu.matmul %68, %71, %cst_31 {dimension_numbers = #tpu.dot_dimension_numbers<[1], [0], [0], [1], [0, 0, 1, 1], [], []>} : vector<8x512xbf16>, vector<512x256xbf16>, vector<8x256xf32> -> vector<8x256xf32>
    %cst_32 = arith.constant dense<0.000000e+00> : vector<256xf32>
    %73 = vector.multi_reduction <add>, %72, %cst_32 [0] : vector<8x256xf32> to vector<256xf32>
    %74 = vector.shape_cast %73 : vector<256xf32> to vector<1x256xf32>
    %cst_33 = arith.constant 8.000000e+00 : f32
    %75 = vector.broadcast %cst_33 : f32 to vector<1x256xf32>
    %76 = arith.divf %74, %75 : vector<1x256xf32>
    %77 = vector.broadcast %76 : vector<1x256xf32> to vector<8x256xf32>
    %78 = arith.subf %72, %77 : vector<8x256xf32>
    %79 = arith.mulf %78, %78 : vector<8x256xf32>
    %cst_34 = arith.constant dense<0.000000e+00> : vector<256xf32>
    %80 = vector.multi_reduction <add>, %79, %cst_34 [0] : vector<8x256xf32> to vector<256xf32>
    %81 = vector.shape_cast %80 : vector<256xf32> to vector<1x256xf32>
    %cst_35 = arith.constant 8.000000e+00 : f32
    %82 = vector.broadcast %cst_35 : f32 to vector<1x256xf32>
    %83 = arith.divf %81, %82 : vector<1x256xf32>
    %c4 = arith.constant 4 : index
    %c0_36 = arith.constant 0 : index
    %84 = vector.load %arg2[%c4, %c0_36] : memref<16x896xf32, #tpu.memory_space<vmem>>, vector<1x256xf32>
    %c5 = arith.constant 5 : index
    %c0_37 = arith.constant 0 : index
    %85 = vector.load %arg2[%c5, %c0_37] : memref<16x896xf32, #tpu.memory_space<vmem>>, vector<1x256xf32>
    %cst_38 = arith.constant 9.99999974E-6 : f32
    %86 = vector.broadcast %cst_38 : f32 to vector<1x256xf32>
    %87 = arith.addf %83, %86 : vector<1x256xf32>
    %88 = math.rsqrt %87 : vector<1x256xf32>
    %89 = arith.mulf %84, %88 : vector<1x256xf32>
    %90 = arith.mulf %76, %89 : vector<1x256xf32>
    %91 = arith.subf %85, %90 : vector<1x256xf32>
    %92 = vector.broadcast %89 : vector<1x256xf32> to vector<8x256xf32>
    %93 = arith.mulf %72, %92 : vector<8x256xf32>
    %94 = vector.broadcast %91 : vector<1x256xf32> to vector<8x256xf32>
    %95 = arith.addf %93, %94 : vector<8x256xf32>
    %cst_39 = arith.constant 0.000000e+00 : f32
    %96 = vector.broadcast %cst_39 : f32 to vector<8x256xf32>
    %97 = arith.cmpf oge, %95, %96 : vector<8x256xf32>
    %cst_40 = arith.constant 0.00999999977 : f32
    %98 = vector.broadcast %cst_40 : f32 to vector<8x256xf32>
    %99 = arith.mulf %98, %95 : vector<8x256xf32>
    %100 = arith.select %97, %95, %99 : vector<8x256xi1>, vector<8x256xf32>
    %101 = arith.truncf %100 : vector<8x256xf32> to vector<8x256xbf16>
    %102 = arith.extui %0 : i1 to i32
    %c0_i32_41 = arith.constant 0 : i32
    %103 = arith.cmpi ne, %102, %c0_i32_41 : i32
    scf.if %103 {
      %c2_i32 = arith.constant 2 : i32
      %274 = tpu.memref_slice %arg20[%c2_i32] : memref<7x!tpu.dma_semaphore, #tpu.memory_space<semaphore_mem>> -> memref<1x!tpu.dma_semaphore, #tpu.memory_space<semaphore_mem>>
      %275 = tpu.memref_squeeze %274 : memref<1x!tpu.dma_semaphore, #tpu.memory_space<semaphore_mem>> -> memref<!tpu.dma_semaphore, #tpu.memory_space<semaphore_mem>>
      tpu.wait_dma2 semaphore(%275 : memref<!tpu.dma_semaphore, #tpu.memory_space<semaphore_mem>>) src(%arg6 : memref<256x128xbf16, #tpu.memory_space<any>>) dst(%arg15 : memref<256x128xbf16, #tpu.memory_space<vmem>>)
    } else {
    }
    %c0_42 = arith.constant 0 : index
    %c0_43 = arith.constant 0 : index
    %104 = vector.load %arg15[%c0_42, %c0_43] : memref<256x128xbf16, #tpu.memory_space<vmem>>, vector<256x128xbf16>
    %cst_44 = arith.constant dense<0.000000e+00> : vector<8x128xf32>
    %105 = tpu.matmul %101, %104, %cst_44 {dimension_numbers = #tpu.dot_dimension_numbers<[1], [0], [0], [1], [0, 0, 1, 1], [], []>} : vector<8x256xbf16>, vector<256x128xbf16>, vector<8x128xf32> -> vector<8x128xf32>
    %cst_45 = arith.constant dense<0.000000e+00> : vector<128xf32>
    %106 = vector.multi_reduction <add>, %105, %cst_45 [0] : vector<8x128xf32> to vector<128xf32>
    %107 = vector.shape_cast %106 : vector<128xf32> to vector<1x128xf32>
    %cst_46 = arith.constant 8.000000e+00 : f32
    %108 = vector.broadcast %cst_46 : f32 to vector<1x128xf32>
    %109 = arith.divf %107, %108 : vector<1x128xf32>
    %110 = vector.broadcast %109 : vector<1x128xf32> to vector<8x128xf32>
    %111 = arith.subf %105, %110 : vector<8x128xf32>
    %112 = arith.mulf %111, %111 : vector<8x128xf32>
    %cst_47 = arith.constant dense<0.000000e+00> : vector<128xf32>
    %113 = vector.multi_reduction <add>, %112, %cst_47 [0] : vector<8x128xf32> to vector<128xf32>
    %114 = vector.shape_cast %113 : vector<128xf32> to vector<1x128xf32>
    %cst_48 = arith.constant 8.000000e+00 : f32
    %115 = vector.broadcast %cst_48 : f32 to vector<1x128xf32>
    %116 = arith.divf %114, %115 : vector<1x128xf32>
    %c6 = arith.constant 6 : index
    %c0_49 = arith.constant 0 : index
    %117 = vector.load %arg2[%c6, %c0_49] : memref<16x896xf32, #tpu.memory_space<vmem>>, vector<1x128xf32>
    %c7 = arith.constant 7 : index
    %c0_50 = arith.constant 0 : index
    %118 = vector.load %arg2[%c7, %c0_50] : memref<16x896xf32, #tpu.memory_space<vmem>>, vector<1x128xf32>
    %cst_51 = arith.constant 9.99999974E-6 : f32
    %119 = vector.broadcast %cst_51 : f32 to vector<1x128xf32>
    %120 = arith.addf %116, %119 : vector<1x128xf32>
    %121 = math.rsqrt %120 : vector<1x128xf32>
    %122 = arith.mulf %117, %121 : vector<1x128xf32>
    %123 = arith.mulf %109, %122 : vector<1x128xf32>
    %124 = arith.subf %118, %123 : vector<1x128xf32>
    %125 = vector.broadcast %122 : vector<1x128xf32> to vector<8x128xf32>
    %126 = arith.mulf %105, %125 : vector<8x128xf32>
    %127 = vector.broadcast %124 : vector<1x128xf32> to vector<8x128xf32>
    %128 = arith.addf %126, %127 : vector<8x128xf32>
    %cst_52 = arith.constant 0.000000e+00 : f32
    %129 = vector.broadcast %cst_52 : f32 to vector<8x128xf32>
    %130 = arith.cmpf oge, %128, %129 : vector<8x128xf32>
    %cst_53 = arith.constant 0.00999999977 : f32
    %131 = vector.broadcast %cst_53 : f32 to vector<8x128xf32>
    %132 = arith.mulf %131, %128 : vector<8x128xf32>
    %133 = arith.select %130, %128, %132 : vector<8x128xi1>, vector<8x128xf32>
    %134 = arith.truncf %133 : vector<8x128xf32> to vector<8x128xbf16>
    %135 = arith.extui %0 : i1 to i32
    %c0_i32_54 = arith.constant 0 : i32
    %136 = arith.cmpi ne, %135, %c0_i32_54 : i32
    scf.if %136 {
      %c3_i32 = arith.constant 3 : i32
      %274 = tpu.memref_slice %arg20[%c3_i32] : memref<7x!tpu.dma_semaphore, #tpu.memory_space<semaphore_mem>> -> memref<1x!tpu.dma_semaphore, #tpu.memory_space<semaphore_mem>>
      %275 = tpu.memref_squeeze %274 : memref<1x!tpu.dma_semaphore, #tpu.memory_space<semaphore_mem>> -> memref<!tpu.dma_semaphore, #tpu.memory_space<semaphore_mem>>
      tpu.wait_dma2 semaphore(%275 : memref<!tpu.dma_semaphore, #tpu.memory_space<semaphore_mem>>) src(%arg7 : memref<128x256xbf16, #tpu.memory_space<any>>) dst(%arg16 : memref<128x256xbf16, #tpu.memory_space<vmem>>)
    } else {
    }
    %c0_55 = arith.constant 0 : index
    %c0_56 = arith.constant 0 : index
    %137 = vector.load %arg16[%c0_55, %c0_56] : memref<128x256xbf16, #tpu.memory_space<vmem>>, vector<128x256xbf16>
    %cst_57 = arith.constant dense<0.000000e+00> : vector<8x256xf32>
    %138 = tpu.matmul %134, %137, %cst_57 {dimension_numbers = #tpu.dot_dimension_numbers<[1], [0], [0], [1], [0, 0, 1, 1], [], []>} : vector<8x128xbf16>, vector<128x256xbf16>, vector<8x256xf32> -> vector<8x256xf32>
    %cst_58 = arith.constant dense<0.000000e+00> : vector<256xf32>
    %139 = vector.multi_reduction <add>, %138, %cst_58 [0] : vector<8x256xf32> to vector<256xf32>
    %140 = vector.shape_cast %139 : vector<256xf32> to vector<1x256xf32>
    %cst_59 = arith.constant 8.000000e+00 : f32
    %141 = vector.broadcast %cst_59 : f32 to vector<1x256xf32>
    %142 = arith.divf %140, %141 : vector<1x256xf32>
    %143 = vector.broadcast %142 : vector<1x256xf32> to vector<8x256xf32>
    %144 = arith.subf %138, %143 : vector<8x256xf32>
    %145 = arith.mulf %144, %144 : vector<8x256xf32>
    %cst_60 = arith.constant dense<0.000000e+00> : vector<256xf32>
    %146 = vector.multi_reduction <add>, %145, %cst_60 [0] : vector<8x256xf32> to vector<256xf32>
    %147 = vector.shape_cast %146 : vector<256xf32> to vector<1x256xf32>
    %cst_61 = arith.constant 8.000000e+00 : f32
    %148 = vector.broadcast %cst_61 : f32 to vector<1x256xf32>
    %149 = arith.divf %147, %148 : vector<1x256xf32>
    %c8 = arith.constant 8 : index
    %c0_62 = arith.constant 0 : index
    %150 = vector.load %arg2[%c8, %c0_62] : memref<16x896xf32, #tpu.memory_space<vmem>>, vector<1x256xf32>
    %c9 = arith.constant 9 : index
    %c0_63 = arith.constant 0 : index
    %151 = vector.load %arg2[%c9, %c0_63] : memref<16x896xf32, #tpu.memory_space<vmem>>, vector<1x256xf32>
    %cst_64 = arith.constant 9.99999974E-6 : f32
    %152 = vector.broadcast %cst_64 : f32 to vector<1x256xf32>
    %153 = arith.addf %149, %152 : vector<1x256xf32>
    %154 = math.rsqrt %153 : vector<1x256xf32>
    %155 = arith.mulf %150, %154 : vector<1x256xf32>
    %156 = arith.mulf %142, %155 : vector<1x256xf32>
    %157 = arith.subf %151, %156 : vector<1x256xf32>
    %158 = vector.broadcast %155 : vector<1x256xf32> to vector<8x256xf32>
    %159 = arith.mulf %138, %158 : vector<8x256xf32>
    %160 = vector.broadcast %157 : vector<1x256xf32> to vector<8x256xf32>
    %161 = arith.addf %159, %160 : vector<8x256xf32>
    %cst_65 = arith.constant 0.000000e+00 : f32
    %162 = vector.broadcast %cst_65 : f32 to vector<8x256xf32>
    %163 = arith.cmpf oge, %161, %162 : vector<8x256xf32>
    %cst_66 = arith.constant 0.00999999977 : f32
    %164 = vector.broadcast %cst_66 : f32 to vector<8x256xf32>
    %165 = arith.mulf %164, %161 : vector<8x256xf32>
    %166 = arith.select %163, %161, %165 : vector<8x256xi1>, vector<8x256xf32>
    %167 = arith.truncf %166 : vector<8x256xf32> to vector<8x256xbf16>
    %168 = arith.extui %0 : i1 to i32
    %c0_i32_67 = arith.constant 0 : i32
    %169 = arith.cmpi ne, %168, %c0_i32_67 : i32
    scf.if %169 {
      %c4_i32 = arith.constant 4 : i32
      %274 = tpu.memref_slice %arg20[%c4_i32] : memref<7x!tpu.dma_semaphore, #tpu.memory_space<semaphore_mem>> -> memref<1x!tpu.dma_semaphore, #tpu.memory_space<semaphore_mem>>
      %275 = tpu.memref_squeeze %274 : memref<1x!tpu.dma_semaphore, #tpu.memory_space<semaphore_mem>> -> memref<!tpu.dma_semaphore, #tpu.memory_space<semaphore_mem>>
      tpu.wait_dma2 semaphore(%275 : memref<!tpu.dma_semaphore, #tpu.memory_space<semaphore_mem>>) src(%arg8 : memref<256x512xbf16, #tpu.memory_space<any>>) dst(%arg17 : memref<256x512xbf16, #tpu.memory_space<vmem>>)
    } else {
    }
    %c0_68 = arith.constant 0 : index
    %c0_69 = arith.constant 0 : index
    %170 = vector.load %arg17[%c0_68, %c0_69] : memref<256x512xbf16, #tpu.memory_space<vmem>>, vector<256x512xbf16>
    %cst_70 = arith.constant dense<0.000000e+00> : vector<8x512xf32>
    %171 = tpu.matmul %167, %170, %cst_70 {dimension_numbers = #tpu.dot_dimension_numbers<[1], [0], [0], [1], [0, 0, 1, 1], [], []>} : vector<8x256xbf16>, vector<256x512xbf16>, vector<8x512xf32> -> vector<8x512xf32>
    %cst_71 = arith.constant dense<0.000000e+00> : vector<512xf32>
    %172 = vector.multi_reduction <add>, %171, %cst_71 [0] : vector<8x512xf32> to vector<512xf32>
    %173 = vector.shape_cast %172 : vector<512xf32> to vector<1x512xf32>
    %cst_72 = arith.constant 8.000000e+00 : f32
    %174 = vector.broadcast %cst_72 : f32 to vector<1x512xf32>
    %175 = arith.divf %173, %174 : vector<1x512xf32>
    %176 = vector.broadcast %175 : vector<1x512xf32> to vector<8x512xf32>
    %177 = arith.subf %171, %176 : vector<8x512xf32>
    %178 = arith.mulf %177, %177 : vector<8x512xf32>
    %cst_73 = arith.constant dense<0.000000e+00> : vector<512xf32>
    %179 = vector.multi_reduction <add>, %178, %cst_73 [0] : vector<8x512xf32> to vector<512xf32>
    %180 = vector.shape_cast %179 : vector<512xf32> to vector<1x512xf32>
    %cst_74 = arith.constant 8.000000e+00 : f32
    %181 = vector.broadcast %cst_74 : f32 to vector<1x512xf32>
    %182 = arith.divf %180, %181 : vector<1x512xf32>
    %c10 = arith.constant 10 : index
    %c0_75 = arith.constant 0 : index
    %183 = vector.load %arg2[%c10, %c0_75] : memref<16x896xf32, #tpu.memory_space<vmem>>, vector<1x512xf32>
    %c11 = arith.constant 11 : index
    %c0_76 = arith.constant 0 : index
    %184 = vector.load %arg2[%c11, %c0_76] : memref<16x896xf32, #tpu.memory_space<vmem>>, vector<1x512xf32>
    %cst_77 = arith.constant 9.99999974E-6 : f32
    %185 = vector.broadcast %cst_77 : f32 to vector<1x512xf32>
    %186 = arith.addf %182, %185 : vector<1x512xf32>
    %187 = math.rsqrt %186 : vector<1x512xf32>
    %188 = arith.mulf %183, %187 : vector<1x512xf32>
    %189 = arith.mulf %175, %188 : vector<1x512xf32>
    %190 = arith.subf %184, %189 : vector<1x512xf32>
    %191 = vector.broadcast %188 : vector<1x512xf32> to vector<8x512xf32>
    %192 = arith.mulf %171, %191 : vector<8x512xf32>
    %193 = vector.broadcast %190 : vector<1x512xf32> to vector<8x512xf32>
    %194 = arith.addf %192, %193 : vector<8x512xf32>
    %cst_78 = arith.constant 0.000000e+00 : f32
    %195 = vector.broadcast %cst_78 : f32 to vector<8x512xf32>
    %196 = arith.cmpf oge, %194, %195 : vector<8x512xf32>
    %cst_79 = arith.constant 0.00999999977 : f32
    %197 = vector.broadcast %cst_79 : f32 to vector<8x512xf32>
    %198 = arith.mulf %197, %194 : vector<8x512xf32>
    %199 = arith.select %196, %194, %198 : vector<8x512xi1>, vector<8x512xf32>
    %200 = arith.truncf %199 : vector<8x512xf32> to vector<8x512xbf16>
    %201 = arith.extui %0 : i1 to i32
    %c0_i32_80 = arith.constant 0 : i32
    %202 = arith.cmpi ne, %201, %c0_i32_80 : i32
    scf.if %202 {
      %c5_i32 = arith.constant 5 : i32
      %274 = tpu.memref_slice %arg20[%c5_i32] : memref<7x!tpu.dma_semaphore, #tpu.memory_space<semaphore_mem>> -> memref<1x!tpu.dma_semaphore, #tpu.memory_space<semaphore_mem>>
      %275 = tpu.memref_squeeze %274 : memref<1x!tpu.dma_semaphore, #tpu.memory_space<semaphore_mem>> -> memref<!tpu.dma_semaphore, #tpu.memory_space<semaphore_mem>>
      tpu.wait_dma2 semaphore(%275 : memref<!tpu.dma_semaphore, #tpu.memory_space<semaphore_mem>>) src(%arg9 : memref<512x640xbf16, #tpu.memory_space<any>>) dst(%arg18 : memref<512x640xbf16, #tpu.memory_space<vmem>>)
    } else {
    }
    %c0_81 = arith.constant 0 : index
    %c0_82 = arith.constant 0 : index
    %203 = vector.load %arg18[%c0_81, %c0_82] : memref<512x640xbf16, #tpu.memory_space<vmem>>, vector<512x640xbf16>
    %cst_83 = arith.constant dense<0.000000e+00> : vector<8x640xf32>
    %204 = tpu.matmul %200, %203, %cst_83 {dimension_numbers = #tpu.dot_dimension_numbers<[1], [0], [0], [1], [0, 0, 1, 1], [], []>} : vector<8x512xbf16>, vector<512x640xbf16>, vector<8x640xf32> -> vector<8x640xf32>
    %cst_84 = arith.constant dense<0.000000e+00> : vector<640xf32>
    %205 = vector.multi_reduction <add>, %204, %cst_84 [0] : vector<8x640xf32> to vector<640xf32>
    %206 = vector.shape_cast %205 : vector<640xf32> to vector<1x640xf32>
    %cst_85 = arith.constant 8.000000e+00 : f32
    %207 = vector.broadcast %cst_85 : f32 to vector<1x640xf32>
    %208 = arith.divf %206, %207 : vector<1x640xf32>
    %209 = vector.broadcast %208 : vector<1x640xf32> to vector<8x640xf32>
    %210 = arith.subf %204, %209 : vector<8x640xf32>
    %211 = arith.mulf %210, %210 : vector<8x640xf32>
    %cst_86 = arith.constant dense<0.000000e+00> : vector<640xf32>
    %212 = vector.multi_reduction <add>, %211, %cst_86 [0] : vector<8x640xf32> to vector<640xf32>
    %213 = vector.shape_cast %212 : vector<640xf32> to vector<1x640xf32>
    %cst_87 = arith.constant 8.000000e+00 : f32
    %214 = vector.broadcast %cst_87 : f32 to vector<1x640xf32>
    %215 = arith.divf %213, %214 : vector<1x640xf32>
    %c12 = arith.constant 12 : index
    %c0_88 = arith.constant 0 : index
    %216 = vector.load %arg2[%c12, %c0_88] : memref<16x896xf32, #tpu.memory_space<vmem>>, vector<1x640xf32>
    %c13 = arith.constant 13 : index
    %c0_89 = arith.constant 0 : index
    %217 = vector.load %arg2[%c13, %c0_89] : memref<16x896xf32, #tpu.memory_space<vmem>>, vector<1x640xf32>
    %cst_90 = arith.constant 9.99999974E-6 : f32
    %218 = vector.broadcast %cst_90 : f32 to vector<1x640xf32>
    %219 = arith.addf %215, %218 : vector<1x640xf32>
    %220 = math.rsqrt %219 : vector<1x640xf32>
    %221 = arith.mulf %216, %220 : vector<1x640xf32>
    %222 = arith.mulf %208, %221 : vector<1x640xf32>
    %223 = arith.subf %217, %222 : vector<1x640xf32>
    %224 = vector.broadcast %221 : vector<1x640xf32> to vector<8x640xf32>
    %225 = arith.mulf %204, %224 : vector<8x640xf32>
    %226 = vector.broadcast %223 : vector<1x640xf32> to vector<8x640xf32>
    %227 = arith.addf %225, %226 : vector<8x640xf32>
    %cst_91 = arith.constant 0.000000e+00 : f32
    %228 = vector.broadcast %cst_91 : f32 to vector<8x640xf32>
    %229 = arith.cmpf oge, %227, %228 : vector<8x640xf32>
    %cst_92 = arith.constant 0.00999999977 : f32
    %230 = vector.broadcast %cst_92 : f32 to vector<8x640xf32>
    %231 = arith.mulf %230, %227 : vector<8x640xf32>
    %232 = arith.select %229, %227, %231 : vector<8x640xi1>, vector<8x640xf32>
    %233 = arith.truncf %232 : vector<8x640xf32> to vector<8x640xbf16>
    %234 = arith.extui %0 : i1 to i32
    %c0_i32_93 = arith.constant 0 : i32
    %235 = arith.cmpi ne, %234, %c0_i32_93 : i32
    scf.if %235 {
      %c6_i32 = arith.constant 6 : i32
      %274 = tpu.memref_slice %arg20[%c6_i32] : memref<7x!tpu.dma_semaphore, #tpu.memory_space<semaphore_mem>> -> memref<1x!tpu.dma_semaphore, #tpu.memory_space<semaphore_mem>>
      %275 = tpu.memref_squeeze %274 : memref<1x!tpu.dma_semaphore, #tpu.memory_space<semaphore_mem>> -> memref<!tpu.dma_semaphore, #tpu.memory_space<semaphore_mem>>
      tpu.wait_dma2 semaphore(%275 : memref<!tpu.dma_semaphore, #tpu.memory_space<semaphore_mem>>) src(%arg10 : memref<640x896xbf16, #tpu.memory_space<any>>) dst(%arg19 : memref<640x896xbf16, #tpu.memory_space<vmem>>)
    } else {
    }
    %c0_94 = arith.constant 0 : index
    %c0_95 = arith.constant 0 : index
    %236 = vector.load %arg19[%c0_94, %c0_95] : memref<640x896xbf16, #tpu.memory_space<vmem>>, vector<640x896xbf16>
    %cst_96 = arith.constant dense<0.000000e+00> : vector<8x896xf32>
    %237 = tpu.matmul %233, %236, %cst_96 {dimension_numbers = #tpu.dot_dimension_numbers<[1], [0], [0], [1], [0, 0, 1, 1], [], []>} : vector<8x640xbf16>, vector<640x896xbf16>, vector<8x896xf32> -> vector<8x896xf32>
    %cst_97 = arith.constant dense<0.000000e+00> : vector<896xf32>
    %238 = vector.multi_reduction <add>, %237, %cst_97 [0] : vector<8x896xf32> to vector<896xf32>
    %239 = vector.shape_cast %238 : vector<896xf32> to vector<1x896xf32>
    %cst_98 = arith.constant 8.000000e+00 : f32
    %240 = vector.broadcast %cst_98 : f32 to vector<1x896xf32>
    %241 = arith.divf %239, %240 : vector<1x896xf32>
    %242 = vector.broadcast %241 : vector<1x896xf32> to vector<8x896xf32>
    %243 = arith.subf %237, %242 : vector<8x896xf32>
    %244 = arith.mulf %243, %243 : vector<8x896xf32>
    %cst_99 = arith.constant dense<0.000000e+00> : vector<896xf32>
    %245 = vector.multi_reduction <add>, %244, %cst_99 [0] : vector<8x896xf32> to vector<896xf32>
    %246 = vector.shape_cast %245 : vector<896xf32> to vector<1x896xf32>
    %cst_100 = arith.constant 8.000000e+00 : f32
    %247 = vector.broadcast %cst_100 : f32 to vector<1x896xf32>
    %248 = arith.divf %246, %247 : vector<1x896xf32>
    %c14 = arith.constant 14 : index
    %c0_101 = arith.constant 0 : index
    %249 = vector.load %arg2[%c14, %c0_101] : memref<16x896xf32, #tpu.memory_space<vmem>>, vector<1x896xf32>
    %c15 = arith.constant 15 : index
    %c0_102 = arith.constant 0 : index
    %250 = vector.load %arg2[%c15, %c0_102] : memref<16x896xf32, #tpu.memory_space<vmem>>, vector<1x896xf32>
    %cst_103 = arith.constant 9.99999974E-6 : f32
    %251 = vector.broadcast %cst_103 : f32 to vector<1x896xf32>
    %252 = arith.addf %248, %251 : vector<1x896xf32>
    %253 = math.rsqrt %252 : vector<1x896xf32>
    %254 = arith.mulf %249, %253 : vector<1x896xf32>
    %255 = arith.mulf %241, %254 : vector<1x896xf32>
    %256 = arith.subf %250, %255 : vector<1x896xf32>
    %257 = vector.broadcast %254 : vector<1x896xf32> to vector<8x896xf32>
    %258 = arith.mulf %237, %257 : vector<8x896xf32>
    %259 = vector.broadcast %256 : vector<1x896xf32> to vector<8x896xf32>
    %260 = arith.addf %258, %259 : vector<8x896xf32>
    %cst_104 = arith.constant 5.000000e-01 : f32
    %261 = vector.broadcast %cst_104 : f32 to vector<8x896xf32>
    %262 = arith.mulf %261, %260 : vector<8x896xf32>
    %263 = math.tanh %262 : vector<8x896xf32>
    %cst_105 = arith.constant 1.000000e+00 : f32
    %264 = vector.broadcast %cst_105 : f32 to vector<8x896xf32>
    %265 = arith.addf %263, %264 : vector<8x896xf32>
    %cst_106 = arith.constant 5.000000e-01 : f32
    %266 = vector.broadcast %cst_106 : f32 to vector<8x896xf32>
    %267 = arith.mulf %266, %265 : vector<8x896xf32>
    %c0_107 = arith.constant 0 : index
    %c0_108 = arith.constant 0 : index
    %c0_109 = arith.constant 0 : index
    %268 = vector.load %arg12[%c0_107, %c0_108, %c0_109] : memref<1x8x128xf32, #tpu.memory_space<vmem>>, vector<1x8x128xf32>
    %269 = vector.shape_cast %268 : vector<1x8x128xf32> to vector<8x128xf32>
    %270 = vector.shape_cast %133 : vector<8x128xf32> to vector<1x8x128xf32>
    tpu.vector_store %arg12[%c0_107, %c0_108, %c0_109], %270 {strides = array<i32>} : memref<1x8x128xf32, #tpu.memory_space<vmem>>, vector<1x8x128xf32>,
    %c0_110 = arith.constant 0 : index
    %c0_111 = arith.constant 0 : index
    %c0_112 = arith.constant 0 : index
    %271 = vector.load %arg11[%c0_110, %c0_111, %c0_112] : memref<1x8x896xf32, #tpu.memory_space<vmem>>, vector<1x8x896xf32>
    %272 = vector.shape_cast %271 : vector<1x8x896xf32> to vector<8x896xf32>
    %273 = vector.shape_cast %267 : vector<8x896xf32> to vector<1x8x896xf32>
    tpu.vector_store %arg11[%c0_110, %c0_111, %c0_112], %273 {strides = array<i32>} : memref<1x8x896xf32, #tpu.memory_space<vmem>>, vector<1x8x896xf32>,
    return
  }
  func.func @transform_0(%arg0: i32) -> (i32, i32, i32) {
    %c0_i32 = arith.constant 0 : i32
    %c0_i32_0 = arith.constant 0 : i32
    %c0_i32_1 = arith.constant 0 : i32
    return %arg0, %c0_i32, %c0_i32_0 : i32, i32, i32
  }
  func.func @transform_1(%arg0: i32) -> (i32, i32) {
    %c0_i32 = arith.constant 0 : i32
    %c0_i32_0 = arith.constant 0 : i32
    %c0_i32_1 = arith.constant 0 : i32
    return %c0_i32, %c0_i32_0 : i32, i32
  }
  func.func @transform_2(%arg0: i32) -> (i32, i32) {
    %c0_i32 = arith.constant 0 : i32
    %c0_i32_0 = arith.constant 0 : i32
    %c0_i32_1 = arith.constant 0 : i32
    return %c0_i32, %c0_i32_0 : i32, i32
  }
  func.func @transform_10(%arg0: i32) -> (i32, i32, i32) {
    %c0_i32 = arith.constant 0 : i32
    %c0_i32_0 = arith.constant 0 : i32
    %c0_i32_1 = arith.constant 0 : i32
    return %arg0, %c0_i32, %c0_i32_0 : i32, i32, i32
  }
  func.func @transform_11(%arg0: i32) -> (i32, i32, i32) {
    %c0_i32 = arith.constant 0 : i32
    %c0_i32_0 = arith.constant 0 : i32
    %c0_i32_1 = arith.constant 0 : i32
    return %arg0, %c0_i32, %c0_i32_0 : i32, i32, i32
  }
}

</mosaic_0001>

<llo_original>
// kernel: autoencoder_forward_stacked.1
$region0: #{autoencoder_forward_stacked.1}
  #allocation0 [shape = 'u32[]', space=smem, size = 0x4, offset = 0x4, fixed_abs, tag = 'smem constant byte address 0x4 - core index']
  #allocation1 [shape = 'u32[144,128]{1,0:T(1,128)}', space=vmem, size = 0x12000, scoped, tag = 'internal scratch']
  #allocation2 [shape = 'bf16[640,512]{1,0:T(16,128)(2,1)}', space=vmem, size = 0xa0000, scoped, tag = 'scratch operand']
  #allocation3 [shape = 'bf16[512,256]{1,0:T(16,128)(2,1)}', space=vmem, size = 0x40000, scoped, tag = 'scratch operand']
  #allocation4 [shape = 'bf16[256,128]{1,0:T(16,128)(2,1)}', space=vmem, size = 0x10000, scoped, tag = 'scratch operand']
  #allocation5 [shape = 'bf16[128,256]{1,0:T(16,128)(2,1)}', space=vmem, size = 0x10000, scoped, tag = 'scratch operand']
  #allocation6 [shape = 'bf16[256,512]{1,0:T(16,128)(2,1)}', space=vmem, size = 0x40000, scoped, tag = 'scratch operand']
  #allocation7 [shape = 'bf16[512,640]{1,0:T(16,128)(2,1)}', space=vmem, size = 0xa0000, scoped, tag = 'scratch operand']
  #allocation8 [shape = 'bf16[640,896]{1,0:T(16,128)(2,1)}', space=vmem, size = 0x118000, scoped, tag = 'scratch operand']
  #allocation9 [shape = 's32[7]{0}', space=sflag, size = 0x1c, scoped, tag = 'scratch operand']
  #allocation18 [shape = 's32[]', space=sflag, size = 0x4, offset = 0, fixed_abs, tag = 'sflag constant byte address 0x0 - dummy sync flag']
  #allocation20 [shape = 's32[]', space=sflag, size = 0x4, offset = 0, fixed_abs, tag = 'sflag constant byte address 0x0 - dummy sync flag']
  #allocation22 [shape = 's32[]', space=sflag, size = 0x4, offset = 0, fixed_abs, tag = 'sflag constant byte address 0x0 - dummy sync flag']
  #allocation23 [shape = 's32[]', space=sflag, size = 0x4, offset = 0, fixed_abs, tag = 'sflag constant byte address 0x0 - dummy sync flag']
  #allocation24 [shape = 'u32[]', space=smem, size = 0x4, offset = 0x44, fixed_abs, tag = 'smem constant byte address 0x44 - assertion arg 0']
  #allocation25 [shape = 'u32[]', space=smem, size = 0x4, offset = 0x48, fixed_abs, tag = 'smem constant byte address 0x48 - assertion arg 1']
  #allocation26 [shape = 's32[]', space=sflag, size = 0x4, offset = 0, fixed_abs, tag = 'sflag constant byte address 0x0 - dummy sync flag']
  #allocation28 [shape = 's32[]', space=sflag, size = 0x4, offset = 0, fixed_abs, tag = 'sflag constant byte address 0x0 - dummy sync flag']
  #allocation30 [shape = 's32[]', space=sflag, size = 0x4, offset = 0, fixed_abs, tag = 'sflag constant byte address 0x0 - dummy sync flag']
  #allocation32 [shape = 's32[]', space=sflag, size = 0x4, offset = 0, fixed_abs, tag = 'sflag constant byte address 0x0 - dummy sync flag']
  %s0 = inlined_call_operand.vmem [shape: bf16[3,8,896], index: 0, kind: input, shape index: {}]
  %s1 = inlined_call_operand.hbm [shape: f32[16,896], index: 1, kind: input, shape index: {}]
  %s2 = inlined_call_operand.hbm [shape: bf16[896,640], index: 2, kind: input, shape index: {}]
  %s3 = inlined_call_operand.hbm [shape: bf16[640,512], index: 3, kind: input, shape index: {}]
  %s4 = inlined_call_operand.hbm [shape: bf16[512,256], index: 4, kind: input, shape index: {}]
  %s5 = inlined_call_operand.hbm [shape: bf16[256,128], index: 5, kind: input, shape index: {}]
  %s6 = inlined_call_operand.hbm [shape: bf16[128,256], index: 6, kind: input, shape index: {}]
  %s7 = inlined_call_operand.hbm [shape: bf16[256,512], index: 7, kind: input, shape index: {}]
  %s8 = inlined_call_operand.hbm [shape: bf16[512,640], index: 8, kind: input, shape index: {}]
  %s9 = inlined_call_operand.hbm [shape: bf16[640,896], index: 9, kind: input, shape index: {}]
  %s10 = inlined_call_operand.hbm [shape: f32[3,8,896], index: 10, kind: output, shape index: {0}]
  %s11 = inlined_call_operand.hbm [shape: f32[3,8,128], index: 11, kind: output, shape index: {1}]
  %12 = xla_tuple %s10, %s11
  %s13 = sld [smem:[#allocation0]]
  $region97: #{autoencoder_forward_stacked.1} parent=0
    _
  %s15 = ssub.s32 1, %s13
  %s16 = scalar_select 0, %s15, %s13
  $region1: #{autoencoder_forward_stacked.1} parent=0
    #allocation10 [shape = 'u8[57344]{0}', space=vmem, size = 0xe000, scoped, tag = 'input window, operand 1, single buffered']
    #allocation11 [shape = 's32[2]{0}', space=sflag, size = 0x8, scoped, tag = 'scoped memory for autoencoder_forward_stacked.1']
    #allocation12 [shape = 's32[2]{0}', space=sflag, size = 0x8, scoped, tag = 'scoped memory for autoencoder_forward_stacked.1']
    #allocation13 [shape = 'u8[1146880]{0}', space=vmem, size = 0x118000, scoped, tag = 'input window, operand 2, single buffered']
    #allocation14 [shape = 's32[1]{0}', space=sflag, size = 0x4, scoped, tag = 'scoped memory for autoencoder_forward_stacked.1']
    #allocation15 [shape = 'u8[57344]{0}', space=vmem, size = 0xe000, scoped, tag = 'output window, operand 0']
    #allocation16 [shape = 'u8[8192]{0}', space=vmem, size = 0x2000, scoped, tag = 'output window, operand 1']
    #allocation17 [shape = 's32[2]{0}', space=sflag, size = 0x8, scoped, tag = 'scoped memory for autoencoder_forward_stacked.1']
    %17 = vsyncpa [#allocation11], 0
    %18 = vsyncpa [#allocation14], 0
    %19 = vsyncpa [#allocation12], 0
    %s20 = scalar_lea.sflag [#allocation12], 1
    %21 = vsyncpa %s20, 0
    %22 = vsyncpa [#allocation17], 0
    %s23 = scalar_lea.sflag [#allocation17], 1
    %24 = vsyncpa %s23, 0
    loop: start=0, step=1, limit=5
    $region2: #{autoencoder_forward_stacked.1} parent=1 // loop_pre_header
      _
    $region3: #{autoencoder_forward_stacked.1} parent=1 // loop_header
      %s26 = sphi 0, %s30
      %p27 = scmp.ge.s32.totalorder %s26, 5
      %s36 = sphi 0, %s38
      %s39 = sphi 0, %s36
      %s40 = sphi 0, %s39
      %s56 = sphi 0, %s40
      %s60 = sphi 0, %s60
      %s62 = sphi 0, %s60
      %s63 = sphi 0, %s62
      %s77 = sphi 0, %s63
      %s81 = sphi 0, %s81
      %s83 = sphi 0, %s81
      %s84 = sphi 0, %s83
      %s98 = sphi 0, %s84
      %s104 = sphi 0, %s106
      %s107 = sphi 0, %s104
      %s108 = sphi 0, %s107
      %s124 = sphi 0, %s108
      %s130 = sphi 0, %s132
      %s133 = sphi 0, %s130
      %s134 = sphi 0, %s133
      %s150 = sphi 0, %s134
    $region4: #{autoencoder_forward_stacked.1} parent=1 // loop_header_branch
      %29 = sbr.rel (%p27) target = $region8
    $region5: #{autoencoder_forward_stacked.1} parent=1 // loop_body
      %s31 = ssub.s32 %s26, 1
      %s32 = ssub.s32 %s26, 2
      %s33 = sadd.s32 %s26, 1
      %s34 = ssub.s32 %s26, %s33
      %p35 = scmp.eq.s32.totalorder %s34, 0
      %s37 = sadd.s32 %s36, 1
      %s38 = scalar_select %p35, %s36, %s37
      %p41 = pneg %p35
      %p42 = scmp.eq.s32.totalorder %s26, 2
      %p43 = por %p41, %p42
      %p44 = scmp.ne.s32.totalorder %s36, %s39
      %p45 = scmp.eq.s32.totalorder %s26, 0
      %p46 = por %p44, %p45
      %p47 = scmp.ne.s32.totalorder %s36, %s39
      %p48 = scmp.eq.s32.totalorder %s31, 2
      %p49 = por %p47, %p48
      %p50 = scmp.ne.s32.totalorder %s39, %s40
      %p51 = scmp.eq.s32.totalorder %s31, 0
      %p52 = por %p50, %p51
      %p53 = scmp.ne.s32.totalorder %s39, %s40
      %p54 = scmp.eq.s32.totalorder %s32, 2
      %p55 = por %p53, %p54
      %p57 = scmp.ne.s32.totalorder %s40, %s56
      %p58 = scmp.eq.s32.totalorder %s32, 0
      %p59 = por %p57, %p58
      %s61 = sadd.s32 %s60, 1
      %p64 = scmp.eq.s32.totalorder %s26, 2
      %p65 = scmp.ne.s32.totalorder %s60, %s62
      %p66 = scmp.eq.s32.totalorder %s26, 0
      %p67 = por %p65, %p66
      %p68 = scmp.ne.s32.totalorder %s60, %s62
      %p69 = scmp.eq.s32.totalorder %s31, 2
      %p70 = por %p68, %p69
      %p71 = scmp.ne.s32.totalorder %s62, %s63
      %p72 = scmp.eq.s32.totalorder %s31, 0
      %p73 = por %p71, %p72
      %p74 = scmp.ne.s32.totalorder %s62, %s63
      %p75 = scmp.eq.s32.totalorder %s32, 2
      %p76 = por %p74, %p75
      %p78 = scmp.ne.s32.totalorder %s63, %s77
      %p79 = scmp.eq.s32.totalorder %s32, 0
      %p80 = por %p78, %p79
      %s82 = sadd.s32 %s81, 1
      %p85 = scmp.eq.s32.totalorder %s26, 2
      %p86 = scmp.ne.s32.totalorder %s81, %s83
      %p87 = scmp.eq.s32.totalorder %s26, 0
      %p88 = por %p86, %p87
      %p89 = scmp.ne.s32.totalorder %s81, %s83
      %p90 = scmp.eq.s32.totalorder %s31, 2
      %p91 = por %p89, %p90
      %p92 = scmp.ne.s32.totalorder %s83, %s84
      %p93 = scmp.eq.s32.totalorder %s31, 0
      %p94 = por %p92, %p93
      %p95 = scmp.ne.s32.totalorder %s83, %s84
      %p96 = scmp.eq.s32.totalorder %s32, 2
      %p97 = por %p95, %p96
      %p99 = scmp.ne.s32.totalorder %s84, %s98
      %p100 = scmp.eq.s32.totalorder %s32, 0
      %p101 = por %p99, %p100
      %s102 = ssub.s32 %s26, %s33
      %p103 = scmp.eq.s32.totalorder %s102, 0
      %s105 = sadd.s32 %s104, 1
      %s106 = scalar_select %p103, %s104, %s105
      %p109 = pneg %p103
      %p110 = scmp.eq.s32.totalorder %s26, 2
      %p111 = por %p109, %p110
      %p112 = scmp.ne.s32.totalorder %s104, %s107
      %p113 = scmp.eq.s32.totalorder %s26, 0
      %p114 = por %p112, %p113
      %p115 = scmp.ne.s32.totalorder %s104, %s107
      %p116 = scmp.eq.s32.totalorder %s31, 2
      %p117 = por %p115, %p116
      %p118 = scmp.ne.s32.totalorder %s107, %s108
      %p119 = scmp.eq.s32.totalorder %s31, 0
      %p120 = por %p118, %p119
      %p121 = scmp.ne.s32.totalorder %s107, %s108
      %p122 = scmp.eq.s32.totalorder %s32, 2
      %p123 = por %p121, %p122
      %p125 = scmp.ne.s32.totalorder %s108, %s124
      %p126 = scmp.eq.s32.totalorder %s32, 0
      %p127 = por %p125, %p126
      %s128 = ssub.s32 %s26, %s33
      %p129 = scmp.eq.s32.totalorder %s128, 0
      %s131 = sadd.s32 %s130, 1
      %s132 = scalar_select %p129, %s130, %s131
      %p135 = pneg %p129
      %p136 = scmp.eq.s32.totalorder %s26, 2
      %p137 = por %p135, %p136
      %p138 = scmp.ne.s32.totalorder %s130, %s133
      %p139 = scmp.eq.s32.totalorder %s26, 0
      %p140 = por %p138, %p139
      %p141 = scmp.ne.s32.totalorder %s130, %s133
      %p142 = scmp.eq.s32.totalorder %s31, 2
      %p143 = por %p141, %p142
      %p144 = scmp.ne.s32.totalorder %s133, %s134
      %p145 = scmp.eq.s32.totalorder %s31, 0
      %p146 = por %p144, %p145
      %p147 = scmp.ne.s32.totalorder %s133, %s134
      %p148 = scmp.eq.s32.totalorder %s32, 2
      %p149 = por %p147, %p148
      %p151 = scmp.ne.s32.totalorder %s134, %s150
      %p152 = scmp.eq.s32.totalorder %s32, 0
      %p153 = por %p151, %p152
      %p154 = scmp.le.s32.totalorder 1, %s26
      %p155 = scmp.lt.s32.totalorder %s26, 4
      %p156 = pnand %p154, %p155
      %p157 = pneg %p156
      // Predicated region
      $region9: #{autoencoder_forward_stacked.1} parent=5 // pred_check
        _
      $region10: #{autoencoder_forward_stacked.1} parent=5 // pred_check_branch
        %159 = sbr.rel (%p156) target = $region12
      $region11: #{autoencoder_forward_stacked.1} parent=5 // pred_region
        %s160 = ssub.s32 %s26, 1
        // Predicated region
        $region13: #{autoencoder_forward_stacked.1} parent=11 // pred_check
          %p161 = pneg %p73
        $region14: #{autoencoder_forward_stacked.1} parent=11 // pred_check_branch
          %163 = sbr.rel (%p161) target = $region16
        $region15: #{autoencoder_forward_stacked.1} parent=11 // pred_region
          %s165 = ssub.s32 1792, 1792
          %166 = vsyncadd [#allocation11], %s165
          %s167 = sshll.u32 [#allocation10], 4
          %s168 = int_to_ptr.vmem [resolvable:$true] %s167
          %173 = dma.hbm_to_vmem [thread:$0]  %s1, 1792, %s168, [#allocation11], 896, 896, 56
        $region16: #{autoencoder_forward_stacked.1} parent=11 // pred_fallthru
          _
        // Predicated region
        $region17: #{autoencoder_forward_stacked.1} parent=11 // pred_check
          %p174 = pneg %p94
        $region18: #{autoencoder_forward_stacked.1} parent=11 // pred_check_branch
          %176 = sbr.rel (%p174) target = $region20
        $region19: #{autoencoder_forward_stacked.1} parent=11 // pred_region
          %s178 = ssub.s32 35840, 35840
          %179 = vsyncadd [#allocation14], %s178
          %s180 = sshll.u32 [#allocation13], 4
          %s181 = int_to_ptr.vmem [resolvable:$true] %s180
          %186 = dma.hbm_to_vmem [thread:$0]  %s2, 35840, %s181, [#allocation14], 320, 320, 20
        $region20: #{autoencoder_forward_stacked.1} parent=11 // pred_fallthru
          _
      $region12: #{autoencoder_forward_stacked.1} parent=5 // pred_fallthru
        _
      %p187 = scmp.lt.s32.totalorder %s26, 3
      // Predicated region
      $region21: #{autoencoder_forward_stacked.1} parent=5 // pred_check
        %p188 = pneg %p187
      $region22: #{autoencoder_forward_stacked.1} parent=5 // pred_check_branch
        %190 = sbr.rel (%p188) target = $region24
      $region23: #{autoencoder_forward_stacked.1} parent=5 // pred_region
        // Predicated region
        $region25: #{autoencoder_forward_stacked.1} parent=23 // pred_check
          %p191 = pneg %p46
        $region26: #{autoencoder_forward_stacked.1} parent=23 // pred_check_branch
          %193 = sbr.rel (%p191) target = $region28
        $region27: #{autoencoder_forward_stacked.1} parent=23 // pred_region
          %p194 = scmp.lt.s32.totalorder %s26, 2
          %s195 = scalar_select %p194, %s26, 2
          %s196 = smul.addr %s195, 7
          %s197 = smul.addr %s196, 4
          %s198 = scalar_lea.vmem %s0, %s197
        $region28: #{autoencoder_forward_stacked.1} parent=23 // pred_fallthru
          _
      $region24: #{autoencoder_forward_stacked.1} parent=5 // pred_fallthru
        _
      %p199 = scmp.le.s32.totalorder 1, %s26
      %p200 = scmp.lt.s32.totalorder %s26, 4
      %p201 = pnand %p199, %p200
      %p202 = pneg %p201
      // Predicated region
      $region29: #{autoencoder_forward_stacked.1} parent=5 // pred_check
        _
      $region30: #{autoencoder_forward_stacked.1} parent=5 // pred_check_branch
        %204 = sbr.rel (%p201) target = $region32
      $region31: #{autoencoder_forward_stacked.1} parent=5 // pred_region
        %s205 = ssub.s32 %s26, 1
        // Predicated region
        $region33: #{autoencoder_forward_stacked.1} parent=31 // pred_check
          %p206 = pneg %p73
        $region34: #{autoencoder_forward_stacked.1} parent=31 // pred_check_branch
          %208 = sbr.rel (%p206) target = $region36
        $region35: #{autoencoder_forward_stacked.1} parent=31 // pred_region
          %209 = dma.done [#allocation11], 1792
        $region36: #{autoencoder_forward_stacked.1} parent=31 // pred_fallthru
          _
        // Predicated region
        $region37: #{autoencoder_forward_stacked.1} parent=31 // pred_check
          %p210 = pneg %p94
        $region38: #{autoencoder_forward_stacked.1} parent=31 // pred_check_branch
          %212 = sbr.rel (%p210) target = $region40
        $region39: #{autoencoder_forward_stacked.1} parent=31 // pred_region
          %213 = dma.done [#allocation14], 35840
        $region40: #{autoencoder_forward_stacked.1} parent=31 // pred_fallthru
          _
        %p214 = scmp.lt.s32.totalorder %s31, 2
        %s215 = scalar_select %p214, %s31, 2
        %s216 = smul.addr %s215, 7
        %s217 = smul.addr %s216, 4
        %s218 = scalar_lea.vmem %s0, %s217
        %p219 = pneg %p52
        %p220 = pneg %p49
        %p221 = pneg %p73
        %p222 = pneg %p70
        %p223 = pneg %p94
        %p224 = pneg %p91
        %p225 = pneg %p120
        %p226 = pneg %p117
        %s227 = sand.u32 %s107, 1
        %s228 = scalar_lea.sflag [#allocation12], %s227
        %s229 = sand.u32 %s107, 1
        %s230 = smul.addr %s229, 56
        %s231 = scalar_lea.vmem [#allocation15], %s230
        %p232 = pneg %p146
        %p233 = pneg %p143
        %s234 = sand.u32 %s133, 1
        %s235 = scalar_lea.sflag [#allocation17], %s234
        %s236 = sand.u32 %s133, 1
        %s237 = smul.addr %s236, 8
        %s238 = scalar_lea.vmem [#allocation16], %s237
        %p239 = scmp.lt.s32.totalorder %s31, 2
        %s240 = scalar_select %p239, %s31, 2
        %s241 = smul.addr %s240, 7
        %s242 = smul.addr %s241, 4
        %s243 = scalar_lea.vmem %s0, %s242
        %p245 = scmp.eq.s32.totalorder %s31, 0
        // Predicated region
        $region41: #{autoencoder_forward_stacked.1} parent=31 // pred_check
          %p246 = pneg %p245
        $region42: #{autoencoder_forward_stacked.1} parent=31 // pred_check_branch
          %248 = sbr.rel (%p246) target = $region44
        $region43: #{autoencoder_forward_stacked.1} parent=31 // pred_region
          #allocation19 [shape = 'u32[9]{0}', space=smem, size = 0x24, scoped, tag = 'DMA stride descriptor']
          #allocation21 [shape = 'u32[9]{0}', space=smem, size = 0x24, scoped, tag = 'DMA stride descriptor']
          #allocation27 [shape = 'u32[9]{0}', space=smem, size = 0x24, scoped, tag = 'DMA stride descriptor']
          #allocation29 [shape = 'u32[9]{0}', space=smem, size = 0x24, scoped, tag = 'DMA stride descriptor']
          #allocation31 [shape = 'u32[9]{0}', space=smem, size = 0x24, scoped, tag = 'DMA stride descriptor']
          #allocation33 [shape = 'u32[9]{0}', space=smem, size = 0x24, scoped, tag = 'DMA stride descriptor']
          %s250 = sshll.u32 1, 14
          %s251 = sxor.u32 4294967295, %s250
          %s253 = sld [smem:[#allocation0]]
          %s254 = sadd.s32 2, %s253
          %s256 = sshll.u32 7, 26
          %s257 = sxor.u32 4294967295, %s256
          %s258 = sand.u32 0, %s257
          %s259 = sshll.u32 %s254, 26
          %s260 = sor.u32 %s258, %s259
          %s261 = sshll.u32 [#allocation2], 4
          %s262 = int_to_ptr.vmem [resolvable:$true] %s261
          %265 = sst [smem:[#allocation19]] 512
          %s266 = scalar_lea.smem [#allocation19], 1
          %267 = sst [smem:[%s266]] 512
          %s268 = scalar_lea.smem [#allocation19], 2
          %269 = sst [smem:[%s268]] 4
          %s270 = scalar_lea.smem [#allocation19], 3
          %271 = sst [smem:[%s270]] 64
          %s272 = scalar_lea.smem [#allocation19], 4
          %273 = sst [smem:[%s272]] 128
          %s274 = scalar_lea.smem [#allocation19], 5
          %275 = sst [smem:[%s274]] 2
          %s276 = scalar_lea.smem [#allocation19], 6
          %277 = sst [smem:[%s276]] 256
          %s278 = scalar_lea.smem [#allocation19], 7
          %279 = sst [smem:[%s278]] 64
          %s280 = scalar_lea.smem [#allocation19], 8
          %281 = sst [smem:[%s280]] 4
          %283 = dma.general %s3, 20480, %s262, [#allocation9], [#allocation18], [#allocation19], %s260, 0
          %s284 = scalar_lea.sflag [#allocation9], 1
          %s286 = sshll.u32 1, 14
          %s287 = sxor.u32 4294967295, %s286
          %s289 = sadd.s32 2, %s253
          %s291 = sshll.u32 7, 26
          %s292 = sxor.u32 4294967295, %s291
          %s293 = sand.u32 0, %s292
          %s294 = sshll.u32 %s289, 26
          %s295 = sor.u32 %s293, %s294
          %s296 = sshll.u32 [#allocation3], 4
          %s297 = int_to_ptr.vmem [resolvable:$true] %s296
          %300 = sst [smem:[#allocation21]] 256
          %s301 = scalar_lea.smem [#allocation21], 1
          %302 = sst [smem:[%s301]] 256
          %s303 = scalar_lea.smem [#allocation21], 2
          %304 = sst [smem:[%s303]] 2
          %s305 = scalar_lea.smem [#allocation21], 3
          %306 = sst [smem:[%s305]] 64
          %s307 = scalar_lea.smem [#allocation21], 4
          %308 = sst [smem:[%s307]] 128
          %s309 = scalar_lea.smem [#allocation21], 5
          %310 = sst [smem:[%s309]] 2
          %s311 = scalar_lea.smem [#allocation21], 6
          %312 = sst [smem:[%s311]] 128
          %s313 = scalar_lea.smem [#allocation21], 7
          %314 = sst [smem:[%s313]] 64
          %s315 = scalar_lea.smem [#allocation21], 8
          %316 = sst [smem:[%s315]] 4
          %318 = dma.general %s4, 8192, %s297, %s284, [#allocation20], [#allocation21], %s295, 0
          %s319 = scalar_lea.sflag [#allocation9], 2
          // Predicated region
          $region45: #{autoencoder_forward_stacked.1} parent=43 // pred_check
            _
          $region46: #{autoencoder_forward_stacked.1} parent=43 // pred_check_branch
            %321 = sbr.rel target = $region48
          $region47: #{autoencoder_forward_stacked.1} parent=43 // pred_region
            %322 = sst [smem:[#allocation24]] [#allocation23]
            %323 = sst [smem:[#allocation25]] [#allocation22]
          $region48: #{autoencoder_forward_stacked.1} parent=43 // pred_fallthru
            _
          %325 = shalt.err (0)
          %s327 = sshll.u32 [#allocation4], 4
          %s328 = int_to_ptr.vmem [resolvable:$true] %s327
          %330 = dma.hbm_to_vmem [thread:$0]  %s5, 2048, %s328, %s319
          %s331 = scalar_lea.sflag [#allocation9], 3
          %s333 = sshll.u32 1, 14
          %s334 = sxor.u32 4294967295, %s333
          %s336 = sadd.s32 2, %s253
          %s338 = sshll.u32 7, 26
          %s339 = sxor.u32 4294967295, %s338
          %s340 = sand.u32 0, %s339
          %s341 = sshll.u32 %s336, 26
          %s342 = sor.u32 %s340, %s341
          %s343 = sshll.u32 [#allocation5], 4
          %s344 = int_to_ptr.vmem [resolvable:$true] %s343
          %347 = sst [smem:[#allocation27]] 256
          %s348 = scalar_lea.smem [#allocation27], 1
          %349 = sst [smem:[%s348]] 256
          %s350 = scalar_lea.smem [#allocation27], 2
          %351 = sst [smem:[%s350]] 2
          %s352 = scalar_lea.smem [#allocation27], 3
          %353 = sst [smem:[%s352]] 64
          %s354 = scalar_lea.smem [#allocation27], 4
          %355 = sst [smem:[%s354]] 128
          %s356 = scalar_lea.smem [#allocation27], 5
          %357 = sst [smem:[%s356]] 2
          %s358 = scalar_lea.smem [#allocation27], 6
          %359 = sst [smem:[%s358]] 128
          %s360 = scalar_lea.smem [#allocation27], 7
          %361 = sst [smem:[%s360]] 64
          %s362 = scalar_lea.smem [#allocation27], 8
          %363 = sst [smem:[%s362]] 4
          %365 = dma.general %s6, 2048, %s344, %s331, [#allocation26], [#allocation27], %s342, 0
          %s366 = scalar_lea.sflag [#allocation9], 4
          %s368 = sshll.u32 1, 14
          %s369 = sxor.u32 4294967295, %s368
          %s371 = sadd.s32 2, %s253
          %s373 = sshll.u32 7, 26
          %s374 = sxor.u32 4294967295, %s373
          %s375 = sand.u32 0, %s374
          %s376 = sshll.u32 %s371, 26
          %s377 = sor.u32 %s375, %s376
          %s378 = sshll.u32 [#allocation6], 4
          %s379 = int_to_ptr.vmem [resolvable:$true] %s378
          %382 = sst [smem:[#allocation29]] 512
          %s383 = scalar_lea.smem [#allocation29], 1
          %384 = sst [smem:[%s383]] 512
          %s385 = scalar_lea.smem [#allocation29], 2
          %386 = sst [smem:[%s385]] 4
          %s387 = scalar_lea.smem [#allocation29], 3
          %388 = sst [smem:[%s387]] 64
          %s389 = scalar_lea.smem [#allocation29], 4
          %390 = sst [smem:[%s389]] 128
          %s391 = scalar_lea.smem [#allocation29], 5
          %392 = sst [smem:[%s391]] 2
          %s393 = scalar_lea.smem [#allocation29], 6
          %394 = sst [smem:[%s393]] 256
          %s395 = scalar_lea.smem [#allocation29], 7
          %396 = sst [smem:[%s395]] 64
          %s397 = scalar_lea.smem [#allocation29], 8
          %398 = sst [smem:[%s397]] 4
          %400 = dma.general %s7, 8192, %s379, %s366, [#allocation28], [#allocation29], %s377, 0
          %s401 = scalar_lea.sflag [#allocation9], 5
          %s403 = sshll.u32 1, 14
          %s404 = sxor.u32 4294967295, %s403
          %s406 = sadd.s32 2, %s253
          %s408 = sshll.u32 7, 26
          %s409 = sxor.u32 4294967295, %s408
          %s410 = sand.u32 0, %s409
          %s411 = sshll.u32 %s406, 26
          %s412 = sor.u32 %s410, %s411
          %s413 = sshll.u32 [#allocation7], 4
          %s414 = int_to_ptr.vmem [resolvable:$true] %s413
          %417 = sst [smem:[#allocation31]] 640
          %s418 = scalar_lea.smem [#allocation31], 1
          %419 = sst [smem:[%s418]] 640
          %s420 = scalar_lea.smem [#allocation31], 2
          %421 = sst [smem:[%s420]] 5
          %s422 = scalar_lea.smem [#allocation31], 3
          %423 = sst [smem:[%s422]] 64
          %s424 = scalar_lea.smem [#allocation31], 4
          %425 = sst [smem:[%s424]] 128
          %s426 = scalar_lea.smem [#allocation31], 5
          %427 = sst [smem:[%s426]] 2
          %s428 = scalar_lea.smem [#allocation31], 6
          %429 = sst [smem:[%s428]] 320
          %s430 = scalar_lea.smem [#allocation31], 7
          %431 = sst [smem:[%s430]] 64
          %s432 = scalar_lea.smem [#allocation31], 8
          %433 = sst [smem:[%s432]] 4
          %435 = dma.general %s8, 20480, %s414, %s401, [#allocation30], [#allocation31], %s412, 0
          %s436 = scalar_lea.sflag [#allocation9], 6
          %s438 = sshll.u32 1, 14
          %s439 = sxor.u32 4294967295, %s438
          %s441 = sadd.s32 2, %s253
          %s443 = sshll.u32 7, 26
          %s444 = sxor.u32 4294967295, %s443
          %s445 = sand.u32 0, %s444
          %s446 = sshll.u32 %s441, 26
          %s447 = sor.u32 %s445, %s446
          %s448 = sshll.u32 [#allocation8], 4
          %s449 = int_to_ptr.vmem [resolvable:$true] %s448
          %452 = sst [smem:[#allocation33]] 896
          %s453 = scalar_lea.smem [#allocation33], 1
          %454 = sst [smem:[%s453]] 896
          %s455 = scalar_lea.smem [#allocation33], 2
          %456 = sst [smem:[%s455]] 7
          %s457 = scalar_lea.smem [#allocation33], 3
          %458 = sst [smem:[%s457]] 64
          %s459 = scalar_lea.smem [#allocation33], 4
          %460 = sst [smem:[%s459]] 128
          %s461 = scalar_lea.smem [#allocation33], 5
          %462 = sst [smem:[%s461]] 2
          %s463 = scalar_lea.smem [#allocation33], 6
          %464 = sst [smem:[%s463]] 448
          %s465 = scalar_lea.smem [#allocation33], 7
          %466 = sst [smem:[%s465]] 64
          %s467 = scalar_lea.smem [#allocation33], 8
          %468 = sst [smem:[%s467]] 4
          %470 = dma.general %s9, 35840, %s449, %s436, [#allocation32], [#allocation33], %s447, 0
        $region44: #{autoencoder_forward_stacked.1} parent=31 // pred_fallthru
          _
        %v471 = vld [vmem:[%s243] sm:$0xff]
        %v472 = vld [vmem:[%s243 + $0x8] sm:$0xff]
        %v473 = vld [vmem:[%s243 + $0x10] sm:$0xff]
        %v474 = vld [vmem:[%s243 + $0x18] sm:$0xf]
        %v475 = vld [vmem:[#allocation13] sm:$0xff]
        %v476 = vld [vmem:[#allocation13 + $0x8] sm:$0xff]
        %v477 = vld [vmem:[#allocation13 + $0x10] sm:$0xf]
        %v478 = vld [vmem:[#allocation13 + $0x14] sm:$0xff]
        %v479 = vld [vmem:[#allocation13 + $0x1c] sm:$0xff]
        %v480 = vld [vmem:[#allocation13 + $0x24] sm:$0xf]
        %v481 = vld [vmem:[#allocation13 + $0x28] sm:$0xff]
        %v482 = vld [vmem:[#allocation13 + $0x30] sm:$0xff]
        %v483 = vld [vmem:[#allocation13 + $0x38] sm:$0xf]
        %v484 = vld [vmem:[#allocation13 + $0x3c] sm:$0xff]
        %v485 = vld [vmem:[#allocation13 + $0x44] sm:$0xff]
        %v486 = vld [vmem:[#allocation13 + $0x4c] sm:$0xf]
        %v487 = vld [vmem:[#allocation13 + $0x50] sm:$0xff]
        %v488 = vld [vmem:[#allocation13 + $0x58] sm:$0xff]
        %v489 = vld [vmem:[#allocation13 + $0x60] sm:$0xf]
        %v490 = vld [vmem:[#allocation13 + $0x64] sm:$0xff]
        %v491 = vld [vmem:[#allocation13 + $0x6c] sm:$0xff]
        %v492 = vld [vmem:[#allocation13 + $0x74] sm:$0xf]
        %v493 = vld [vmem:[#allocation13 + $0x78] sm:$0xff]
        %v494 = vld [vmem:[#allocation13 + $0x80] sm:$0xff]
        %v495 = vld [vmem:[#allocation13 + $0x88] sm:$0xf]
        %v496 = vld [vmem:[#allocation13 + $0x8c] sm:$0xff]
        %v497 = vld [vmem:[#allocation13 + $0x94] sm:$0xff]
        %v498 = vld [vmem:[#allocation13 + $0x9c] sm:$0xf]
        %v499 = vld [vmem:[#allocation13 + $0xa0] sm:$0xff]
        %v500 = vld [vmem:[#allocation13 + $0xa8] sm:$0xff]
        %v501 = vld [vmem:[#allocation13 + $0xb0] sm:$0xf]
        %v502 = vld [vmem:[#allocation13 + $0xb4] sm:$0xff]
        %v503 = vld [vmem:[#allocation13 + $0xbc] sm:$0xff]
        %v504 = vld [vmem:[#allocation13 + $0xc4] sm:$0xf]
        %v505 = vld [vmem:[#allocation13 + $0xc8] sm:$0xff]
        %v506 = vld [vmem:[#allocation13 + $0xd0] sm:$0xff]
        %v507 = vld [vmem:[#allocation13 + $0xd8] sm:$0xf]
        %v508 = vld [vmem:[#allocation13 + $0xdc] sm:$0xff]
        %v509 = vld [vmem:[#allocation13 + $0xe4] sm:$0xff]
        %v510 = vld [vmem:[#allocation13 + $0xec] sm:$0xf]
        %v511 = vld [vmem:[#allocation13 + $0xf0] sm:$0xff]
        %v512 = vld [vmem:[#allocation13 + $0xf8] sm:$0xff]
        %v513 = vld [vmem:[#allocation13 + $0x100] sm:$0xf]
        %v514 = vld [vmem:[#allocation13 + $0x104] sm:$0xff]
        %v515 = vld [vmem:[#allocation13 + $0x10c] sm:$0xff]
        %v516 = vld [vmem:[#allocation13 + $0x114] sm:$0xf]
        %v517 = vld [vmem:[#allocation13 + $0x118] sm:$0xff]
        %v518 = vld [vmem:[#allocation13 + $0x120] sm:$0xff]
        %v519 = vld [vmem:[#allocation13 + $0x128] sm:$0xf]
        %v520 = vld [vmem:[#allocation13 + $0x12c] sm:$0xff]
        %v521 = vld [vmem:[#allocation13 + $0x134] sm:$0xff]
        %v522 = vld [vmem:[#allocation13 + $0x13c] sm:$0xf]
        %v523 = vld [vmem:[#allocation13 + $0x140] sm:$0xff]
        %v524 = vld [vmem:[#allocation13 + $0x148] sm:$0xff]
        %v525 = vld [vmem:[#allocation13 + $0x150] sm:$0xf]
        %v526 = vld [vmem:[#allocation13 + $0x154] sm:$0xff]
        %v527 = vld [vmem:[#allocation13 + $0x15c] sm:$0xff]
        %v528 = vld [vmem:[#allocation13 + $0x164] sm:$0xf]
        %v529 = vld [vmem:[#allocation13 + $0x168] sm:$0xff]
        %v530 = vld [vmem:[#allocation13 + $0x170] sm:$0xff]
        %v531 = vld [vmem:[#allocation13 + $0x178] sm:$0xf]
        %v532 = vld [vmem:[#allocation13 + $0x17c] sm:$0xff]
        %v533 = vld [vmem:[#allocation13 + $0x184] sm:$0xff]
        %v534 = vld [vmem:[#allocation13 + $0x18c] sm:$0xf]
        %v535 = vld [vmem:[#allocation13 + $0x190] sm:$0xff]
        %v536 = vld [vmem:[#allocation13 + $0x198] sm:$0xff]
        %v537 = vld [vmem:[#allocation13 + $0x1a0] sm:$0xf]
        %v538 = vld [vmem:[#allocation13 + $0x1a4] sm:$0xff]
        %v539 = vld [vmem:[#allocation13 + $0x1ac] sm:$0xff]
        %v540 = vld [vmem:[#allocation13 + $0x1b4] sm:$0xf]
        %v541 = vld [vmem:[#allocation13 + $0x1b8] sm:$0xff]
        %v542 = vld [vmem:[#allocation13 + $0x1c0] sm:$0xff]
        %v543 = vld [vmem:[#allocation13 + $0x1c8] sm:$0xf]
        %v544 = vld [vmem:[#allocation13 + $0x1cc] sm:$0xff]
        %v545 = vld [vmem:[#allocation13 + $0x1d4] sm:$0xff]
        %v546 = vld [vmem:[#allocation13 + $0x1dc] sm:$0xf]
        %v547 = vld [vmem:[#allocation13 + $0x1e0] sm:$0xff]
        %v548 = vld [vmem:[#allocation13 + $0x1e8] sm:$0xff]
        %v549 = vld [vmem:[#allocation13 + $0x1f0] sm:$0xf]
        %v550 = vld [vmem:[#allocation13 + $0x1f4] sm:$0xff]
        %v551 = vld [vmem:[#allocation13 + $0x1fc] sm:$0xff]
        %v552 = vld [vmem:[#allocation13 + $0x204] sm:$0xf]
        %v553 = vld [vmem:[#allocation13 + $0x208] sm:$0xff]
        %v554 = vld [vmem:[#allocation13 + $0x210] sm:$0xff]
        %v555 = vld [vmem:[#allocation13 + $0x218] sm:$0xf]
        %v556 = vld [vmem:[#allocation13 + $0x21c] sm:$0xff]
        %v557 = vld [vmem:[#allocation13 + $0x224] sm:$0xff]
        %v558 = vld [vmem:[#allocation13 + $0x22c] sm:$0xf]
        %v559 = vld [vmem:[#allocation13 + $0x230] sm:$0xff]
        %v560 = vld [vmem:[#allocation13 + $0x238] sm:$0xff]
        %v561 = vld [vmem:[#allocation13 + $0x240] sm:$0xf]
        %v562 = vld [vmem:[#allocation13 + $0x244] sm:$0xff]
        %v563 = vld [vmem:[#allocation13 + $0x24c] sm:$0xff]
        %v564 = vld [vmem:[#allocation13 + $0x254] sm:$0xf]
        %v565 = vld [vmem:[#allocation13 + $0x258] sm:$0xff]
        %v566 = vld [vmem:[#allocation13 + $0x260] sm:$0xff]
        %v567 = vld [vmem:[#allocation13 + $0x268] sm:$0xf]
        %v568 = vld [vmem:[#allocation13 + $0x26c] sm:$0xff]
        %v569 = vld [vmem:[#allocation13 + $0x274] sm:$0xff]
        %v570 = vld [vmem:[#allocation13 + $0x27c] sm:$0xf]
        %v571 = vld [vmem:[#allocation13 + $0x280] sm:$0xff]
        %v572 = vld [vmem:[#allocation13 + $0x288] sm:$0xff]
        %v573 = vld [vmem:[#allocation13 + $0x290] sm:$0xf]
        %v574 = vld [vmem:[#allocation13 + $0x294] sm:$0xff]
        %v575 = vld [vmem:[#allocation13 + $0x29c] sm:$0xff]
        %v576 = vld [vmem:[#allocation13 + $0x2a4] sm:$0xf]
        %v577 = vld [vmem:[#allocation13 + $0x2a8] sm:$0xff]
        %v578 = vld [vmem:[#allocation13 + $0x2b0] sm:$0xff]
        %v579 = vld [vmem:[#allocation13 + $0x2b8] sm:$0xf]
        %v580 = vld [vmem:[#allocation13 + $0x2bc] sm:$0xff]
        %v581 = vld [vmem:[#allocation13 + $0x2c4] sm:$0xff]
        %v582 = vld [vmem:[#allocation13 + $0x2cc] sm:$0xf]
        %v583 = vld [vmem:[#allocation13 + $0x2d0] sm:$0xff]
        %v584 = vld [vmem:[#allocation13 + $0x2d8] sm:$0xff]
        %v585 = vld [vmem:[#allocation13 + $0x2e0] sm:$0xf]
        %v586 = vld [vmem:[#allocation13 + $0x2e4] sm:$0xff]
        %v587 = vld [vmem:[#allocation13 + $0x2ec] sm:$0xff]
        %v588 = vld [vmem:[#allocation13 + $0x2f4] sm:$0xf]
        %v589 = vld [vmem:[#allocation13 + $0x2f8] sm:$0xff]
        %v590 = vld [vmem:[#allocation13 + $0x300] sm:$0xff]
        %v591 = vld [vmem:[#allocation13 + $0x308] sm:$0xf]
        %v592 = vld [vmem:[#allocation13 + $0x30c] sm:$0xff]
        %v593 = vld [vmem:[#allocation13 + $0x314] sm:$0xff]
        %v594 = vld [vmem:[#allocation13 + $0x31c] sm:$0xf]
        %v595 = vld [vmem:[#allocation13 + $0x320] sm:$0xff]
        %v596 = vld [vmem:[#allocation13 + $0x328] sm:$0xff]
        %v597 = vld [vmem:[#allocation13 + $0x330] sm:$0xf]
        %v598 = vld [vmem:[#allocation13 + $0x334] sm:$0xff]
        %v599 = vld [vmem:[#allocation13 + $0x33c] sm:$0xff]
        %v600 = vld [vmem:[#allocation13 + $0x344] sm:$0xf]
        %v601 = vld [vmem:[#allocation13 + $0x348] sm:$0xff]
        %v602 = vld [vmem:[#allocation13 + $0x350] sm:$0xff]
        %v603 = vld [vmem:[#allocation13 + $0x358] sm:$0xf]
        %v604 = vld [vmem:[#allocation13 + $0x35c] sm:$0xff]
        %v605 = vld [vmem:[#allocation13 + $0x364] sm:$0xff]
        %v606 = vld [vmem:[#allocation13 + $0x36c] sm:$0xf]
        %v607 = vld [vmem:[#allocation13 + $0x370] sm:$0xff]
        %v608 = vld [vmem:[#allocation13 + $0x378] sm:$0xff]
        %v609 = vld [vmem:[#allocation13 + $0x380] sm:$0xf]
        %v610 = vld [vmem:[#allocation13 + $0x384] sm:$0xff]
        %v611 = vld [vmem:[#allocation13 + $0x38c] sm:$0xff]
        %v612 = vld [vmem:[#allocation13 + $0x394] sm:$0xf]
        %v613 = vld [vmem:[#allocation13 + $0x398] sm:$0xff]
        %v614 = vld [vmem:[#allocation13 + $0x3a0] sm:$0xff]
        %v615 = vld [vmem:[#allocation13 + $0x3a8] sm:$0xf]
        %v616 = vld [vmem:[#allocation13 + $0x3ac] sm:$0xff]
        %v617 = vld [vmem:[#allocation13 + $0x3b4] sm:$0xff]
        %v618 = vld [vmem:[#allocation13 + $0x3bc] sm:$0xf]
        %v619 = vld [vmem:[#allocation13 + $0x3c0] sm:$0xff]
        %v620 = vld [vmem:[#allocation13 + $0x3c8] sm:$0xff]
        %v621 = vld [vmem:[#allocation13 + $0x3d0] sm:$0xf]
        %v622 = vld [vmem:[#allocation13 + $0x3d4] sm:$0xff]
        %v623 = vld [vmem:[#allocation13 + $0x3dc] sm:$0xff]
        %v624 = vld [vmem:[#allocation13 + $0x3e4] sm:$0xf]
        %v625 = vld [vmem:[#allocation13 + $0x3e8] sm:$0xff]
        %v626 = vld [vmem:[#allocation13 + $0x3f0] sm:$0xff]
        %v627 = vld [vmem:[#allocation13 + $0x3f8] sm:$0xf]
        %v628 = vld [vmem:[#allocation13 + $0x3fc] sm:$0xff]
        %v629 = vld [vmem:[#allocation13 + $0x404] sm:$0xff]
        %v630 = vld [vmem:[#allocation13 + $0x40c] sm:$0xf]
        %v631 = vld [vmem:[#allocation13 + $0x410] sm:$0xff]
        %v632 = vld [vmem:[#allocation13 + $0x418] sm:$0xff]
        %v633 = vld [vmem:[#allocation13 + $0x420] sm:$0xf]
        %v634 = vld [vmem:[#allocation13 + $0x424] sm:$0xff]
        %v635 = vld [vmem:[#allocation13 + $0x42c] sm:$0xff]
        %v636 = vld [vmem:[#allocation13 + $0x434] sm:$0xf]
        %v637 = vld [vmem:[#allocation13 + $0x438] sm:$0xff]
        %v638 = vld [vmem:[#allocation13 + $0x440] sm:$0xff]
        %v639 = vld [vmem:[#allocation13 + $0x448] sm:$0xf]
        %v640 = vld [vmem:[#allocation13 + $0x44c] sm:$0xff]
        %v641 = vld [vmem:[#allocation13 + $0x454] sm:$0xff]
        %v642 = vld [vmem:[#allocation13 + $0x45c] sm:$0xf]
        %v643 = vld [vmem:[#allocation13 + $0x460] sm:$0xff]
        %v644 = vld [vmem:[#allocation13 + $0x468] sm:$0xff]
        %v645 = vld [vmem:[#allocation13 + $0x470] sm:$0xf]
        %v646 = vld [vmem:[#allocation13 + $0x474] sm:$0xff]
        %v647 = vld [vmem:[#allocation13 + $0x47c] sm:$0xff]
        %v648 = vld [vmem:[#allocation13 + $0x484] sm:$0xf]
        %v649 = vld [vmem:[#allocation13 + $0x488] sm:$0xff]
        %v650 = vld [vmem:[#allocation13 + $0x490] sm:$0xff]
        %v651 = vld [vmem:[#allocation13 + $0x498] sm:$0xf]
        %v652 = vld [vmem:[#allocation13 + $0x49c] sm:$0xff]
        %v653 = vld [vmem:[#allocation13 + $0x4a4] sm:$0xff]
        %v654 = vld [vmem:[#allocation13 + $0x4ac] sm:$0xf]
        %v655 = vld [vmem:[#allocation13 + $0x4b0] sm:$0xff]
        %v656 = vld [vmem:[#allocation13 + $0x4b8] sm:$0xff]
        %v657 = vld [vmem:[#allocation13 + $0x4c0] sm:$0xf]
        %v658 = vld [vmem:[#allocation13 + $0x4c4] sm:$0xff]
        %v659 = vld [vmem:[#allocation13 + $0x4cc] sm:$0xff]
        %v660 = vld [vmem:[#allocation13 + $0x4d4] sm:$0xf]
        %v661 = vld [vmem:[#allocation13 + $0x4d8] sm:$0xff]
        %v662 = vld [vmem:[#allocation13 + $0x4e0] sm:$0xff]
        %v663 = vld [vmem:[#allocation13 + $0x4e8] sm:$0xf]
        %v664 = vld [vmem:[#allocation13 + $0x4ec] sm:$0xff]
        %v665 = vld [vmem:[#allocation13 + $0x4f4] sm:$0xff]
        %v666 = vld [vmem:[#allocation13 + $0x4fc] sm:$0xf]
        %v667 = vld [vmem:[#allocation13 + $0x500] sm:$0xff]
        %v668 = vld [vmem:[#allocation13 + $0x508] sm:$0xff]
        %v669 = vld [vmem:[#allocation13 + $0x510] sm:$0xf]
        %v670 = vld [vmem:[#allocation13 + $0x514] sm:$0xff]
        %v671 = vld [vmem:[#allocation13 + $0x51c] sm:$0xff]
        %v672 = vld [vmem:[#allocation13 + $0x524] sm:$0xf]
        %v673 = vld [vmem:[#allocation13 + $0x528] sm:$0xff]
        %v674 = vld [vmem:[#allocation13 + $0x530] sm:$0xff]
        %v675 = vld [vmem:[#allocation13 + $0x538] sm:$0xf]
        %v676 = vld [vmem:[#allocation13 + $0x53c] sm:$0xff]
        %v677 = vld [vmem:[#allocation13 + $0x544] sm:$0xff]
        %v678 = vld [vmem:[#allocation13 + $0x54c] sm:$0xf]
        %v679 = vld [vmem:[#allocation13 + $0x550] sm:$0xff]
        %v680 = vld [vmem:[#allocation13 + $0x558] sm:$0xff]
        %v681 = vld [vmem:[#allocation13 + $0x560] sm:$0xf]
        %v682 = vld [vmem:[#allocation13 + $0x564] sm:$0xff]
        %v683 = vld [vmem:[#allocation13 + $0x56c] sm:$0xff]
        %v684 = vld [vmem:[#allocation13 + $0x574] sm:$0xf]
        %v685 = vld [vmem:[#allocation13 + $0x578] sm:$0xff]
        %v686 = vld [vmem:[#allocation13 + $0x580] sm:$0xff]
        %v687 = vld [vmem:[#allocation13 + $0x588] sm:$0xf]
        %v688 = vld [vmem:[#allocation13 + $0x58c] sm:$0xff]
        %v689 = vld [vmem:[#allocation13 + $0x594] sm:$0xff]
        %v690 = vld [vmem:[#allocation13 + $0x59c] sm:$0xf]
        %v691 = vld [vmem:[#allocation13 + $0x5a0] sm:$0xff]
        %v692 = vld [vmem:[#allocation13 + $0x5a8] sm:$0xff]
        %v693 = vld [vmem:[#allocation13 + $0x5b0] sm:$0xf]
        %v694 = vld [vmem:[#allocation13 + $0x5b4] sm:$0xff]
        %v695 = vld [vmem:[#allocation13 + $0x5bc] sm:$0xff]
        %v696 = vld [vmem:[#allocation13 + $0x5c4] sm:$0xf]
        %v697 = vld [vmem:[#allocation13 + $0x5c8] sm:$0xff]
        %v698 = vld [vmem:[#allocation13 + $0x5d0] sm:$0xff]
        %v699 = vld [vmem:[#allocation13 + $0x5d8] sm:$0xf]
        %v700 = vld [vmem:[#allocation13 + $0x5dc] sm:$0xff]
        %v701 = vld [vmem:[#allocation13 + $0x5e4] sm:$0xff]
        %v702 = vld [vmem:[#allocation13 + $0x5ec] sm:$0xf]
        %v703 = vld [vmem:[#allocation13 + $0x5f0] sm:$0xff]
        %v704 = vld [vmem:[#allocation13 + $0x5f8] sm:$0xff]
        %v705 = vld [vmem:[#allocation13 + $0x600] sm:$0xf]
        %v706 = vld [vmem:[#allocation13 + $0x604] sm:$0xff]
        %v707 = vld [vmem:[#allocation13 + $0x60c] sm:$0xff]
        %v708 = vld [vmem:[#allocation13 + $0x614] sm:$0xf]
        %v709 = vld [vmem:[#allocation13 + $0x618] sm:$0xff]
        %v710 = vld [vmem:[#allocation13 + $0x620] sm:$0xff]
        %v711 = vld [vmem:[#allocation13 + $0x628] sm:$0xf]
        %v712 = vld [vmem:[#allocation13 + $0x62c] sm:$0xff]
        %v713 = vld [vmem:[#allocation13 + $0x634] sm:$0xff]
        %v714 = vld [vmem:[#allocation13 + $0x63c] sm:$0xf]
        %v715 = vld [vmem:[#allocation13 + $0x640] sm:$0xff]
        %v716 = vld [vmem:[#allocation13 + $0x648] sm:$0xff]
        %v717 = vld [vmem:[#allocation13 + $0x650] sm:$0xf]
        %v718 = vld [vmem:[#allocation13 + $0x654] sm:$0xff]
        %v719 = vld [vmem:[#allocation13 + $0x65c] sm:$0xff]
        %v720 = vld [vmem:[#allocation13 + $0x664] sm:$0xf]
        %v721 = vld [vmem:[#allocation13 + $0x668] sm:$0xff]
        %v722 = vld [vmem:[#allocation13 + $0x670] sm:$0xff]
        %v723 = vld [vmem:[#allocation13 + $0x678] sm:$0xf]
        %v724 = vld [vmem:[#allocation13 + $0x67c] sm:$0xff]
        %v725 = vld [vmem:[#allocation13 + $0x684] sm:$0xff]
        %v726 = vld [vmem:[#allocation13 + $0x68c] sm:$0xf]
        %v727 = vld [vmem:[#allocation13 + $0x690] sm:$0xff]
        %v728 = vld [vmem:[#allocation13 + $0x698] sm:$0xff]
        %v729 = vld [vmem:[#allocation13 + $0x6a0] sm:$0xf]
        %v730 = vld [vmem:[#allocation13 + $0x6a4] sm:$0xff]
        %v731 = vld [vmem:[#allocation13 + $0x6ac] sm:$0xff]
        %v732 = vld [vmem:[#allocation13 + $0x6b4] sm:$0xf]
        %v733 = vld [vmem:[#allocation13 + $0x6b8] sm:$0xff]
        %v734 = vld [vmem:[#allocation13 + $0x6c0] sm:$0xff]
        %v735 = vld [vmem:[#allocation13 + $0x6c8] sm:$0xf]
        %v736 = vld [vmem:[#allocation13 + $0x6cc] sm:$0xff]
        %v737 = vld [vmem:[#allocation13 + $0x6d4] sm:$0xff]
        %v738 = vld [vmem:[#allocation13 + $0x6dc] sm:$0xf]
        %v739 = vld [vmem:[#allocation13 + $0x6e0] sm:$0xff]
        %v740 = vld [vmem:[#allocation13 + $0x6e8] sm:$0xff]
        %v741 = vld [vmem:[#allocation13 + $0x6f0] sm:$0xf]
        %v742 = vld [vmem:[#allocation13 + $0x6f4] sm:$0xff]
        %v743 = vld [vmem:[#allocation13 + $0x6fc] sm:$0xff]
        %v744 = vld [vmem:[#allocation13 + $0x704] sm:$0xf]
        %v745 = vld [vmem:[#allocation13 + $0x708] sm:$0xff]
        %v746 = vld [vmem:[#allocation13 + $0x710] sm:$0xff]
        %v747 = vld [vmem:[#allocation13 + $0x718] sm:$0xf]
        %v748 = vld [vmem:[#allocation13 + $0x71c] sm:$0xff]
        %v749 = vld [vmem:[#allocation13 + $0x724] sm:$0xff]
        %v750 = vld [vmem:[#allocation13 + $0x72c] sm:$0xf]
        %v751 = vld [vmem:[#allocation13 + $0x730] sm:$0xff]
        %v752 = vld [vmem:[#allocation13 + $0x738] sm:$0xff]
        %v753 = vld [vmem:[#allocation13 + $0x740] sm:$0xf]
        %v754 = vld [vmem:[#allocation13 + $0x744] sm:$0xff]
        %v755 = vld [vmem:[#allocation13 + $0x74c] sm:$0xff]
        %v756 = vld [vmem:[#allocation13 + $0x754] sm:$0xf]
        %v757 = vld [vmem:[#allocation13 + $0x758] sm:$0xff]
        %v758 = vld [vmem:[#allocation13 + $0x760] sm:$0xff]
        %v759 = vld [vmem:[#allocation13 + $0x768] sm:$0xf]
        %v760 = vld [vmem:[#allocation13 + $0x76c] sm:$0xff]
        %v761 = vld [vmem:[#allocation13 + $0x774] sm:$0xff]
        %v762 = vld [vmem:[#allocation13 + $0x77c] sm:$0xf]
        %v763 = vld [vmem:[#allocation13 + $0x780] sm:$0xff]
        %v764 = vld [vmem:[#allocation13 + $0x788] sm:$0xff]
        %v765 = vld [vmem:[#allocation13 + $0x790] sm:$0xf]
        %v766 = vld [vmem:[#allocation13 + $0x794] sm:$0xff]
        %v767 = vld [vmem:[#allocation13 + $0x79c] sm:$0xff]
        %v768 = vld [vmem:[#allocation13 + $0x7a4] sm:$0xf]
        %v769 = vld [vmem:[#allocation13 + $0x7a8] sm:$0xff]
        %v770 = vld [vmem:[#allocation13 + $0x7b0] sm:$0xff]
        %v771 = vld [vmem:[#allocation13 + $0x7b8] sm:$0xf]
        %v772 = vld [vmem:[#allocation13 + $0x7bc] sm:$0xff]
        %v773 = vld [vmem:[#allocation13 + $0x7c4] sm:$0xff]
        %v774 = vld [vmem:[#allocation13 + $0x7cc] sm:$0xf]
        %v775 = vld [vmem:[#allocation13 + $0x7d0] sm:$0xff]
        %v776 = vld [vmem:[#allocation13 + $0x7d8] sm:$0xff]
        %v777 = vld [vmem:[#allocation13 + $0x7e0] sm:$0xf]
        %v778 = vld [vmem:[#allocation13 + $0x7e4] sm:$0xff]
        %v779 = vld [vmem:[#allocation13 + $0x7ec] sm:$0xff]
        %v780 = vld [vmem:[#allocation13 + $0x7f4] sm:$0xf]
        %v781 = vld [vmem:[#allocation13 + $0x7f8] sm:$0xff]
        %v782 = vld [vmem:[#allocation13 + $0x800] sm:$0xff]
        %v783 = vld [vmem:[#allocation13 + $0x808] sm:$0xf]
        %v784 = vld [vmem:[#allocation13 + $0x80c] sm:$0xff]
        %v785 = vld [vmem:[#allocation13 + $0x814] sm:$0xff]
        %v786 = vld [vmem:[#allocation13 + $0x81c] sm:$0xf]
        %v787 = vld [vmem:[#allocation13 + $0x820] sm:$0xff]
        %v788 = vld [vmem:[#allocation13 + $0x828] sm:$0xff]
        %v789 = vld [vmem:[#allocation13 + $0x830] sm:$0xf]
        %v790 = vld [vmem:[#allocation13 + $0x834] sm:$0xff]
        %v791 = vld [vmem:[#allocation13 + $0x83c] sm:$0xff]
        %v792 = vld [vmem:[#allocation13 + $0x844] sm:$0xf]
        %v793 = vld [vmem:[#allocation13 + $0x848] sm:$0xff]
        %v794 = vld [vmem:[#allocation13 + $0x850] sm:$0xff]
        %v795 = vld [vmem:[#allocation13 + $0x858] sm:$0xf]
        %v796 = vld [vmem:[#allocation13 + $0x85c] sm:$0xff]
        %v797 = vld [vmem:[#allocation13 + $0x864] sm:$0xff]
        %v798 = vld [vmem:[#allocation13 + $0x86c] sm:$0xf]
        %v799 = vld [vmem:[#allocation13 + $0x870] sm:$0xff]
        %v800 = vld [vmem:[#allocation13 + $0x878] sm:$0xff]
        %v801 = vld [vmem:[#allocation13 + $0x880] sm:$0xf]
        %v802 = vld [vmem:[#allocation13 + $0x884] sm:$0xff]
        %v803 = vld [vmem:[#allocation13 + $0x88c] sm:$0xff]
        %v804 = vld [vmem:[#allocation13 + $0x894] sm:$0xf]
        %v805 = vld [vmem:[#allocation13 + $0x898] sm:$0xff]
        %v806 = vld [vmem:[#allocation13 + $0x8a0] sm:$0xff]
        %v807 = vld [vmem:[#allocation13 + $0x8a8] sm:$0xf]
        %v808 = vld [vmem:[#allocation13 + $0x8ac] sm:$0xff]
        %v809 = vld [vmem:[#allocation13 + $0x8b4] sm:$0xff]
        %v810 = vld [vmem:[#allocation13 + $0x8bc] sm:$0xf]
        %v815 = vunpack.c.l.b16 %v471
        %v816 = vunpack.c.h.b16 %v471
        %v817 = vunpack.c.l.b16 %v472
        %v818 = vunpack.c.h.b16 %v472
        %v819 = vunpack.c.l.b16 %v473
        %v820 = vunpack.c.h.b16 %v473
        %v821 = vunpack.c.l.b16 %v474
        %v822 = vpack.c.b16 %v815, %v815
        %v823 = vpack.c.b16 %v816, %v816
        %v824 = vpack.c.b16 %v817, %v817
        %v825 = vpack.c.b16 %v818, %v818
        %v826 = vpack.c.b16 %v819, %v819
        %v827 = vpack.c.b16 %v820, %v820
        %v828 = vpack.c.b16 %v821, %v821
        %v1172 = vunpack.c.l.b16 %v475
        %v1173 = vunpack.c.h.b16 %v475
        %v1174 = vunpack.c.l.b16 %v476
        %v1175 = vunpack.c.h.b16 %v476
        %v1176 = vunpack.c.l.b16 %v477
        %v1177 = vunpack.c.l.b16 %v478
        %v1178 = vunpack.c.h.b16 %v478
        %v1179 = vunpack.c.l.b16 %v479
        %v1180 = vunpack.c.h.b16 %v479
        %v1181 = vunpack.c.l.b16 %v480
        %v1182 = vunpack.c.l.b16 %v481
        %v1183 = vunpack.c.h.b16 %v481
        %v1184 = vunpack.c.l.b16 %v482
        %v1185 = vunpack.c.h.b16 %v482
        %v1186 = vunpack.c.l.b16 %v483
        %v1187 = vunpack.c.l.b16 %v484
        %v1188 = vunpack.c.h.b16 %v484
        %v1189 = vunpack.c.l.b16 %v485
        %v1190 = vunpack.c.h.b16 %v485
        %v1191 = vunpack.c.l.b16 %v486
        %v1192 = vunpack.c.l.b16 %v487
        %v1193 = vunpack.c.h.b16 %v487
        %v1194 = vunpack.c.l.b16 %v488
        %v1195 = vunpack.c.h.b16 %v488
        %v1196 = vunpack.c.l.b16 %v489
        %v1197 = vunpack.c.l.b16 %v490
        %v1198 = vunpack.c.h.b16 %v490
        %v1199 = vunpack.c.l.b16 %v491
        %v1200 = vunpack.c.h.b16 %v491
        %v1201 = vunpack.c.l.b16 %v492
        %v1202 = vunpack.c.l.b16 %v493
        %v1203 = vunpack.c.h.b16 %v493
        %v1204 = vunpack.c.l.b16 %v494
        %v1205 = vunpack.c.h.b16 %v494
        %v1206 = vunpack.c.l.b16 %v495
        %v1207 = vunpack.c.l.b16 %v496
        %v1208 = vunpack.c.h.b16 %v496
        %v1209 = vunpack.c.l.b16 %v497
        %v1210 = vunpack.c.h.b16 %v497
        %v1211 = vunpack.c.l.b16 %v498
        %v1212 = vunpack.c.l.b16 %v499
        %v1213 = vunpack.c.h.b16 %v499
        %v1214 = vunpack.c.l.b16 %v500
        %v1215 = vunpack.c.h.b16 %v500
        %v1216 = vunpack.c.l.b16 %v501
        %v1217 = vunpack.c.l.b16 %v502
        %v1218 = vunpack.c.h.b16 %v502
        %v1219 = vunpack.c.l.b16 %v503
        %v1220 = vunpack.c.h.b16 %v503
        %v1221 = vunpack.c.l.b16 %v504
        %v1222 = vunpack.c.l.b16 %v505
        %v1223 = vunpack.c.h.b16 %v505
        %v1224 = vunpack.c.l.b16 %v506
        %v1225 = vunpack.c.h.b16 %v506
        %v1226 = vunpack.c.l.b16 %v507
        %v1227 = vunpack.c.l.b16 %v508
        %v1228 = vunpack.c.h.b16 %v508
        %v1229 = vunpack.c.l.b16 %v509
        %v1230 = vunpack.c.h.b16 %v509
        %v1231 = vunpack.c.l.b16 %v510
        %v1232 = vunpack.c.l.b16 %v511
        %v1233 = vunpack.c.h.b16 %v511
        %v1234 = vunpack.c.l.b16 %v512
        %v1235 = vunpack.c.h.b16 %v512
        %v1236 = vunpack.c.l.b16 %v513
        %v1237 = vunpack.c.l.b16 %v514
        %v1238 = vunpack.c.h.b16 %v514
        %v1239 = vunpack.c.l.b16 %v515
        %v1240 = vunpack.c.h.b16 %v515
        %v1241 = vunpack.c.l.b16 %v516
        %v1242 = vunpack.c.l.b16 %v517
        %v1243 = vunpack.c.h.b16 %v517
        %v1244 = vunpack.c.l.b16 %v518
        %v1245 = vunpack.c.h.b16 %v518
        %v1246 = vunpack.c.l.b16 %v519
        %v1247 = vunpack.c.l.b16 %v520
        %v1248 = vunpack.c.h.b16 %v520
        %v1249 = vunpack.c.l.b16 %v521
        %v1250 = vunpack.c.h.b16 %v521
        %v1251 = vunpack.c.l.b16 %v522
        %v1252 = vunpack.c.l.b16 %v523
        %v1253 = vunpack.c.h.b16 %v523
        %v1254 = vunpack.c.l.b16 %v524
        %v1255 = vunpack.c.h.b16 %v524
        %v1256 = vunpack.c.l.b16 %v525
        %v1257 = vunpack.c.l.b16 %v526
        %v1258 = vunpack.c.h.b16 %v526
        %v1259 = vunpack.c.l.b16 %v527
        %v1260 = vunpack.c.h.b16 %v527
        %v1261 = vunpack.c.l.b16 %v528
        %v1262 = vunpack.c.l.b16 %v529
        %v1263 = vunpack.c.h.b16 %v529
        %v1264 = vunpack.c.l.b16 %v530
        %v1265 = vunpack.c.h.b16 %v530
        %v1266 = vunpack.c.l.b16 %v531
        %v1267 = vunpack.c.l.b16 %v532
        %v1268 = vunpack.c.h.b16 %v532
        %v1269 = vunpack.c.l.b16 %v533
        %v1270 = vunpack.c.h.b16 %v533
        %v1271 = vunpack.c.l.b16 %v534
        %v1272 = vunpack.c.l.b16 %v535
        %v1273 = vunpack.c.h.b16 %v535
        %v1274 = vunpack.c.l.b16 %v536
        %v1275 = vunpack.c.h.b16 %v536
        %v1276 = vunpack.c.l.b16 %v537
        %v1277 = vunpack.c.l.b16 %v538
        %v1278 = vunpack.c.h.b16 %v538
        %v1279 = vunpack.c.l.b16 %v539
        %v1280 = vunpack.c.h.b16 %v539
        %v1281 = vunpack.c.l.b16 %v540
        %v1282 = vunpack.c.l.b16 %v541
        %v1283 = vunpack.c.h.b16 %v541
        %v1284 = vunpack.c.l.b16 %v542
        %v1285 = vunpack.c.h.b16 %v542
        %v1286 = vunpack.c.l.b16 %v543
        %v1287 = vunpack.c.l.b16 %v544
        %v1288 = vunpack.c.h.b16 %v544
        %v1289 = vunpack.c.l.b16 %v545
        %v1290 = vunpack.c.h.b16 %v545
        %v1291 = vunpack.c.l.b16 %v546
        %v1292 = vunpack.c.l.b16 %v547
        %v1293 = vunpack.c.h.b16 %v547
        %v1294 = vunpack.c.l.b16 %v548
        %v1295 = vunpack.c.h.b16 %v548
        %v1296 = vunpack.c.l.b16 %v549
        %v1297 = vunpack.c.l.b16 %v550
        %v1298 = vunpack.c.h.b16 %v550
        %v1299 = vunpack.c.l.b16 %v551
        %v1300 = vunpack.c.h.b16 %v551
        %v1301 = vunpack.c.l.b16 %v552
        %v1302 = vunpack.c.l.b16 %v553
        %v1303 = vunpack.c.h.b16 %v553
        %v1304 = vunpack.c.l.b16 %v554
        %v1305 = vunpack.c.h.b16 %v554
        %v1306 = vunpack.c.l.b16 %v555
        %v1307 = vunpack.c.l.b16 %v556
        %v1308 = vunpack.c.h.b16 %v556
        %v1309 = vunpack.c.l.b16 %v557
        %v1310 = vunpack.c.h.b16 %v557
        %v1311 = vunpack.c.l.b16 %v558
        %v1312 = vunpack.c.l.b16 %v559
        %v1313 = vunpack.c.h.b16 %v559
        %v1314 = vunpack.c.l.b16 %v560
        %v1315 = vunpack.c.h.b16 %v560
        %v1316 = vunpack.c.l.b16 %v561
        %v1317 = vunpack.c.l.b16 %v562
        %v1318 = vunpack.c.h.b16 %v562
        %v1319 = vunpack.c.l.b16 %v563
        %v1320 = vunpack.c.h.b16 %v563
        %v1321 = vunpack.c.l.b16 %v564
        %v1322 = vunpack.c.l.b16 %v565
        %v1323 = vunpack.c.h.b16 %v565
        %v1324 = vunpack.c.l.b16 %v566
        %v1325 = vunpack.c.h.b16 %v566
        %v1326 = vunpack.c.l.b16 %v567
        %v1327 = vunpack.c.l.b16 %v568
        %v1328 = vunpack.c.h.b16 %v568
        %v1329 = vunpack.c.l.b16 %v569
        %v1330 = vunpack.c.h.b16 %v569
        %v1331 = vunpack.c.l.b16 %v570
        %v1332 = vunpack.c.l.b16 %v571
        %v1333 = vunpack.c.h.b16 %v571
        %v1334 = vunpack.c.l.b16 %v572
        %v1335 = vunpack.c.h.b16 %v572
        %v1336 = vunpack.c.l.b16 %v573
        %v1337 = vunpack.c.l.b16 %v574
        %v1338 = vunpack.c.h.b16 %v574
        %v1339 = vunpack.c.l.b16 %v575
        %v1340 = vunpack.c.h.b16 %v575
        %v1341 = vunpack.c.l.b16 %v576
        %v1342 = vunpack.c.l.b16 %v577
        %v1343 = vunpack.c.h.b16 %v577
        %v1344 = vunpack.c.l.b16 %v578
        %v1345 = vunpack.c.h.b16 %v578
        %v1346 = vunpack.c.l.b16 %v579
        %v1347 = vunpack.c.l.b16 %v580
        %v1348 = vunpack.c.h.b16 %v580
        %v1349 = vunpack.c.l.b16 %v581
        %v1350 = vunpack.c.h.b16 %v581
        %v1351 = vunpack.c.l.b16 %v582
        %v1352 = vunpack.c.l.b16 %v583
        %v1353 = vunpack.c.h.b16 %v583
        %v1354 = vunpack.c.l.b16 %v584
        %v1355 = vunpack.c.h.b16 %v584
        %v1356 = vunpack.c.l.b16 %v585
        %v1357 = vunpack.c.l.b16 %v586
        %v1358 = vunpack.c.h.b16 %v586
        %v1359 = vunpack.c.l.b16 %v587
        %v1360 = vunpack.c.h.b16 %v587
        %v1361 = vunpack.c.l.b16 %v588
        %v1362 = vunpack.c.l.b16 %v589
        %v1363 = vunpack.c.h.b16 %v589
        %v1364 = vunpack.c.l.b16 %v590
        %v1365 = vunpack.c.h.b16 %v590
        %v1366 = vunpack.c.l.b16 %v591
        %v1367 = vunpack.c.l.b16 %v592
        %v1368 = vunpack.c.h.b16 %v592
        %v1369 = vunpack.c.l.b16 %v593
        %v1370 = vunpack.c.h.b16 %v593
        %v1371 = vunpack.c.l.b16 %v594
        %v1372 = vunpack.c.l.b16 %v595
        %v1373 = vunpack.c.h.b16 %v595
        %v1374 = vunpack.c.l.b16 %v596
        %v1375 = vunpack.c.h.b16 %v596
        %v1376 = vunpack.c.l.b16 %v597
        %v1377 = vunpack.c.l.b16 %v598
        %v1378 = vunpack.c.h.b16 %v598
        %v1379 = vunpack.c.l.b16 %v599
        %v1380 = vunpack.c.h.b16 %v599
        %v1381 = vunpack.c.l.b16 %v600
        %v1382 = vunpack.c.l.b16 %v601
        %v1383 = vunpack.c.h.b16 %v601
        %v1384 = vunpack.c.l.b16 %v602
        %v1385 = vunpack.c.h.b16 %v602
        %v1386 = vunpack.c.l.b16 %v603
        %v1387 = vunpack.c.l.b16 %v604
        %v1388 = vunpack.c.h.b16 %v604
        %v1389 = vunpack.c.l.b16 %v605
        %v1390 = vunpack.c.h.b16 %v605
        %v1391 = vunpack.c.l.b16 %v606
        %v1392 = vunpack.c.l.b16 %v607
        %v1393 = vunpack.c.h.b16 %v607
        %v1394 = vunpack.c.l.b16 %v608
        %v1395 = vunpack.c.h.b16 %v608
        %v1396 = vunpack.c.l.b16 %v609
        %v1397 = vunpack.c.l.b16 %v610
        %v1398 = vunpack.c.h.b16 %v610
        %v1399 = vunpack.c.l.b16 %v611
        %v1400 = vunpack.c.h.b16 %v611
        %v1401 = vunpack.c.l.b16 %v612
        %v1402 = vunpack.c.l.b16 %v613
        %v1403 = vunpack.c.h.b16 %v613
        %v1404 = vunpack.c.l.b16 %v614
        %v1405 = vunpack.c.h.b16 %v614
        %v1406 = vunpack.c.l.b16 %v615
        %v1407 = vunpack.c.l.b16 %v616
        %v1408 = vunpack.c.h.b16 %v616
        %v1409 = vunpack.c.l.b16 %v617
        %v1410 = vunpack.c.h.b16 %v617
        %v1411 = vunpack.c.l.b16 %v618
        %v1412 = vunpack.c.l.b16 %v619
        %v1413 = vunpack.c.h.b16 %v619
        %v1414 = vunpack.c.l.b16 %v620
        %v1415 = vunpack.c.h.b16 %v620
        %v1416 = vunpack.c.l.b16 %v621
        %v1417 = vunpack.c.l.b16 %v622
        %v1418 = vunpack.c.h.b16 %v622
        %v1419 = vunpack.c.l.b16 %v623
        %v1420 = vunpack.c.h.b16 %v623
        %v1421 = vunpack.c.l.b16 %v624
        %v1422 = vunpack.c.l.b16 %v625
        %v1423 = vunpack.c.h.b16 %v625
        %v1424 = vunpack.c.l.b16 %v626
        %v1425 = vunpack.c.h.b16 %v626
        %v1426 = vunpack.c.l.b16 %v627
        %v1427 = vunpack.c.l.b16 %v628
        %v1428 = vunpack.c.h.b16 %v628
        %v1429 = vunpack.c.l.b16 %v629
        %v1430 = vunpack.c.h.b16 %v629
        %v1431 = vunpack.c.l.b16 %v630
        %v1432 = vunpack.c.l.b16 %v631
        %v1433 = vunpack.c.h.b16 %v631
        %v1434 = vunpack.c.l.b16 %v632
        %v1435 = vunpack.c.h.b16 %v632
        %v1436 = vunpack.c.l.b16 %v633
        %v1437 = vunpack.c.l.b16 %v634
        %v1438 = vunpack.c.h.b16 %v634
        %v1439 = vunpack.c.l.b16 %v635
        %v1440 = vunpack.c.h.b16 %v635
        %v1441 = vunpack.c.l.b16 %v636
        %v1442 = vunpack.c.l.b16 %v637
        %v1443 = vunpack.c.h.b16 %v637
        %v1444 = vunpack.c.l.b16 %v638
        %v1445 = vunpack.c.h.b16 %v638
        %v1446 = vunpack.c.l.b16 %v639
        %v1447 = vunpack.c.l.b16 %v640
        %v1448 = vunpack.c.h.b16 %v640
        %v1449 = vunpack.c.l.b16 %v641
        %v1450 = vunpack.c.h.b16 %v641
        %v1451 = vunpack.c.l.b16 %v642
        %v1452 = vunpack.c.l.b16 %v643
        %v1453 = vunpack.c.h.b16 %v643
        %v1454 = vunpack.c.l.b16 %v644
        %v1455 = vunpack.c.h.b16 %v644
        %v1456 = vunpack.c.l.b16 %v645
        %v1457 = vunpack.c.l.b16 %v646
        %v1458 = vunpack.c.h.b16 %v646
        %v1459 = vunpack.c.l.b16 %v647
        %v1460 = vunpack.c.h.b16 %v647
        %v1461 = vunpack.c.l.b16 %v648
        %v1462 = vunpack.c.l.b16 %v649
        %v1463 = vunpack.c.h.b16 %v649
        %v1464 = vunpack.c.l.b16 %v650
        %v1465 = vunpack.c.h.b16 %v650
        %v1466 = vunpack.c.l.b16 %v651
        %v1467 = vunpack.c.l.b16 %v652
        %v1468 = vunpack.c.h.b16 %v652
        %v1469 = vunpack.c.l.b16 %v653
        %v1470 = vunpack.c.h.b16 %v653
        %v1471 = vunpack.c.l.b16 %v654
        %v1472 = vunpack.c.l.b16 %v655
        %v1473 = vunpack.c.h.b16 %v655
        %v1474 = vunpack.c.l.b16 %v656
        %v1475 = vunpack.c.h.b16 %v656
        %v1476 = vunpack.c.l.b16 %v657
        %v1477 = vunpack.c.l.b16 %v658
        %v1478 = vunpack.c.h.b16 %v658
        %v1479 = vunpack.c.l.b16 %v659
        %v1480 = vunpack.c.h.b16 %v659
        %v1481 = vunpack.c.l.b16 %v660
        %v1482 = vunpack.c.l.b16 %v661
        %v1483 = vunpack.c.h.b16 %v661
        %v1484 = vunpack.c.l.b16 %v662
        %v1485 = vunpack.c.h.b16 %v662
        %v1486 = vunpack.c.l.b16 %v663
        %v1487 = vunpack.c.l.b16 %v664
        %v1488 = vunpack.c.h.b16 %v664
        %v1489 = vunpack.c.l.b16 %v665
        %v1490 = vunpack.c.h.b16 %v665
        %v1491 = vunpack.c.l.b16 %v666
        %v1492 = vunpack.c.l.b16 %v667
        %v1493 = vunpack.c.h.b16 %v667
        %v1494 = vunpack.c.l.b16 %v668
        %v1495 = vunpack.c.h.b16 %v668
        %v1496 = vunpack.c.l.b16 %v669
        %v1497 = vunpack.c.l.b16 %v670
        %v1498 = vunpack.c.h.b16 %v670
        %v1499 = vunpack.c.l.b16 %v671
        %v1500 = vunpack.c.h.b16 %v671
        %v1501 = vunpack.c.l.b16 %v672
        %v1502 = vunpack.c.l.b16 %v673
        %v1503 = vunpack.c.h.b16 %v673
        %v1504 = vunpack.c.l.b16 %v674
        %v1505 = vunpack.c.h.b16 %v674
        %v1506 = vunpack.c.l.b16 %v675
        %v1507 = vunpack.c.l.b16 %v676
        %v1508 = vunpack.c.h.b16 %v676
        %v1509 = vunpack.c.l.b16 %v677
        %v1510 = vunpack.c.h.b16 %v677
        %v1511 = vunpack.c.l.b16 %v678
        %v1512 = vunpack.c.l.b16 %v679
        %v1513 = vunpack.c.h.b16 %v679
        %v1514 = vunpack.c.l.b16 %v680
        %v1515 = vunpack.c.h.b16 %v680
        %v1516 = vunpack.c.l.b16 %v681
        %v1517 = vunpack.c.l.b16 %v682
        %v1518 = vunpack.c.h.b16 %v682
        %v1519 = vunpack.c.l.b16 %v683
        %v1520 = vunpack.c.h.b16 %v683
        %v1521 = vunpack.c.l.b16 %v684
        %v1522 = vunpack.c.l.b16 %v685
        %v1523 = vunpack.c.h.b16 %v685
        %v1524 = vunpack.c.l.b16 %v686
        %v1525 = vunpack.c.h.b16 %v686
        %v1526 = vunpack.c.l.b16 %v687
        %v1527 = vunpack.c.l.b16 %v688
        %v1528 = vunpack.c.h.b16 %v688
        %v1529 = vunpack.c.l.b16 %v689
        %v1530 = vunpack.c.h.b16 %v689
        %v1531 = vunpack.c.l.b16 %v690
        %v1532 = vunpack.c.l.b16 %v691
        %v1533 = vunpack.c.h.b16 %v691
        %v1534 = vunpack.c.l.b16 %v692
        %v1535 = vunpack.c.h.b16 %v692
        %v1536 = vunpack.c.l.b16 %v693
        %v1537 = vunpack.c.l.b16 %v694
        %v1538 = vunpack.c.h.b16 %v694
        %v1539 = vunpack.c.l.b16 %v695
        %v1540 = vunpack.c.h.b16 %v695
        %v1541 = vunpack.c.l.b16 %v696
        %v1542 = vunpack.c.l.b16 %v697
        %v1543 = vunpack.c.h.b16 %v697
        %v1544 = vunpack.c.l.b16 %v698
        %v1545 = vunpack.c.h.b16 %v698
        %v1546 = vunpack.c.l.b16 %v699
        %v1547 = vunpack.c.l.b16 %v700
        %v1548 = vunpack.c.h.b16 %v700
        %v1549 = vunpack.c.l.b16 %v701
        %v1550 = vunpack.c.h.b16 %v701
        %v1551 = vunpack.c.l.b16 %v702
        %v1552 = vunpack.c.l.b16 %v703
        %v1553 = vunpack.c.h.b16 %v703
        %v1554 = vunpack.c.l.b16 %v704
        %v1555 = vunpack.c.h.b16 %v704
        %v1556 = vunpack.c.l.b16 %v705
        %v1557 = vunpack.c.l.b16 %v706
        %v1558 = vunpack.c.h.b16 %v706
        %v1559 = vunpack.c.l.b16 %v707
        %v1560 = vunpack.c.h.b16 %v707
        %v1561 = vunpack.c.l.b16 %v708
        %v1562 = vunpack.c.l.b16 %v709
        %v1563 = vunpack.c.h.b16 %v709
        %v1564 = vunpack.c.l.b16 %v710
        %v1565 = vunpack.c.h.b16 %v710
        %v1566 = vunpack.c.l.b16 %v711
        %v1567 = vunpack.c.l.b16 %v712
        %v1568 = vunpack.c.h.b16 %v712
        %v1569 = vunpack.c.l.b16 %v713
        %v1570 = vunpack.c.h.b16 %v713
        %v1571 = vunpack.c.l.b16 %v714
        %v1572 = vunpack.c.l.b16 %v715
        %v1573 = vunpack.c.h.b16 %v715
        %v1574 = vunpack.c.l.b16 %v716
        %v1575 = vunpack.c.h.b16 %v716
        %v1576 = vunpack.c.l.b16 %v717
        %v1577 = vunpack.c.l.b16 %v718
        %v1578 = vunpack.c.h.b16 %v718
        %v1579 = vunpack.c.l.b16 %v719
        %v1580 = vunpack.c.h.b16 %v719
        %v1581 = vunpack.c.l.b16 %v720
        %v1582 = vunpack.c.l.b16 %v721
        %v1583 = vunpack.c.h.b16 %v721
        %v1584 = vunpack.c.l.b16 %v722
        %v1585 = vunpack.c.h.b16 %v722
        %v1586 = vunpack.c.l.b16 %v723
        %v1587 = vunpack.c.l.b16 %v724
        %v1588 = vunpack.c.h.b16 %v724
        %v1589 = vunpack.c.l.b16 %v725
        %v1590 = vunpack.c.h.b16 %v725
        %v1591 = vunpack.c.l.b16 %v726
        %v1592 = vunpack.c.l.b16 %v727
        %v1593 = vunpack.c.h.b16 %v727
        %v1594 = vunpack.c.l.b16 %v728
        %v1595 = vunpack.c.h.b16 %v728
        %v1596 = vunpack.c.l.b16 %v729
        %v1597 = vunpack.c.l.b16 %v730
        %v1598 = vunpack.c.h.b16 %v730
        %v1599 = vunpack.c.l.b16 %v731
        %v1600 = vunpack.c.h.b16 %v731
        %v1601 = vunpack.c.l.b16 %v732
        %v1602 = vunpack.c.l.b16 %v733
        %v1603 = vunpack.c.h.b16 %v733
        %v1604 = vunpack.c.l.b16 %v734
        %v1605 = vunpack.c.h.b16 %v734
        %v1606 = vunpack.c.l.b16 %v735
        %v1607 = vunpack.c.l.b16 %v736
        %v1608 = vunpack.c.h.b16 %v736
        %v1609 = vunpack.c.l.b16 %v737
        %v1610 = vunpack.c.h.b16 %v737
        %v1611 = vunpack.c.l.b16 %v738
        %v1612 = vunpack.c.l.b16 %v739
        %v1613 = vunpack.c.h.b16 %v739
        %v1614 = vunpack.c.l.b16 %v740
        %v1615 = vunpack.c.h.b16 %v740
        %v1616 = vunpack.c.l.b16 %v741
        %v1617 = vunpack.c.l.b16 %v742
        %v1618 = vunpack.c.h.b16 %v742
        %v1619 = vunpack.c.l.b16 %v743
        %v1620 = vunpack.c.h.b16 %v743
        %v1621 = vunpack.c.l.b16 %v744
        %v1622 = vunpack.c.l.b16 %v745
        %v1623 = vunpack.c.h.b16 %v745
        %v1624 = vunpack.c.l.b16 %v746
        %v1625 = vunpack.c.h.b16 %v746
        %v1626 = vunpack.c.l.b16 %v747
        %v1627 = vunpack.c.l.b16 %v748
        %v1628 = vunpack.c.h.b16 %v748
        %v1629 = vunpack.c.l.b16 %v749
        %v1630 = vunpack.c.h.b16 %v749
        %v1631 = vunpack.c.l.b16 %v750
        %v1632 = vunpack.c.l.b16 %v751
        %v1633 = vunpack.c.h.b16 %v751
        %v1634 = vunpack.c.l.b16 %v752
        %v1635 = vunpack.c.h.b16 %v752
        %v1636 = vunpack.c.l.b16 %v753
        %v1637 = vunpack.c.l.b16 %v754
        %v1638 = vunpack.c.h.b16 %v754
        %v1639 = vunpack.c.l.b16 %v755
        %v1640 = vunpack.c.h.b16 %v755
        %v1641 = vunpack.c.l.b16 %v756
        %v1642 = vunpack.c.l.b16 %v757
        %v1643 = vunpack.c.h.b16 %v757
        %v1644 = vunpack.c.l.b16 %v758
        %v1645 = vunpack.c.h.b16 %v758
        %v1646 = vunpack.c.l.b16 %v759
        %v1647 = vunpack.c.l.b16 %v760
        %v1648 = vunpack.c.h.b16 %v760
        %v1649 = vunpack.c.l.b16 %v761
        %v1650 = vunpack.c.h.b16 %v761
        %v1651 = vunpack.c.l.b16 %v762
        %v1652 = vunpack.c.l.b16 %v763
        %v1653 = vunpack.c.h.b16 %v763
        %v1654 = vunpack.c.l.b16 %v764
        %v1655 = vunpack.c.h.b16 %v764
        %v1656 = vunpack.c.l.b16 %v765
        %v1657 = vunpack.c.l.b16 %v766
        %v1658 = vunpack.c.h.b16 %v766
        %v1659 = vunpack.c.l.b16 %v767
        %v1660 = vunpack.c.h.b16 %v767
        %v1661 = vunpack.c.l.b16 %v768
        %v1662 = vunpack.c.l.b16 %v769
        %v1663 = vunpack.c.h.b16 %v769
        %v1664 = vunpack.c.l.b16 %v770
        %v1665 = vunpack.c.h.b16 %v770
        %v1666 = vunpack.c.l.b16 %v771
        %v1667 = vunpack.c.l.b16 %v772
        %v1668 = vunpack.c.h.b16 %v772
        %v1669 = vunpack.c.l.b16 %v773
        %v1670 = vunpack.c.h.b16 %v773
        %v1671 = vunpack.c.l.b16 %v774
        %v1672 = vunpack.c.l.b16 %v775
        %v1673 = vunpack.c.h.b16 %v775
        %v1674 = vunpack.c.l.b16 %v776
        %v1675 = vunpack.c.h.b16 %v776
        %v1676 = vunpack.c.l.b16 %v777
        %v1677 = vunpack.c.l.b16 %v778
        %v1678 = vunpack.c.h.b16 %v778
        %v1679 = vunpack.c.l.b16 %v779
        %v1680 = vunpack.c.h.b16 %v779
        %v1681 = vunpack.c.l.b16 %v780
        %v1682 = vunpack.c.l.b16 %v781
        %v1683 = vunpack.c.h.b16 %v781
        %v1684 = vunpack.c.l.b16 %v782
        %v1685 = vunpack.c.h.b16 %v782
        %v1686 = vunpack.c.l.b16 %v783
        %v1687 = vunpack.c.l.b16 %v784
        %v1688 = vunpack.c.h.b16 %v784
        %v1689 = vunpack.c.l.b16 %v785
        %v1690 = vunpack.c.h.b16 %v785
        %v1691 = vunpack.c.l.b16 %v786
        %v1692 = vunpack.c.l.b16 %v787
        %v1693 = vunpack.c.h.b16 %v787
        %v1694 = vunpack.c.l.b16 %v788
        %v1695 = vunpack.c.h.b16 %v788
        %v1696 = vunpack.c.l.b16 %v789
        %v1697 = vunpack.c.l.b16 %v790
        %v1698 = vunpack.c.h.b16 %v790
        %v1699 = vunpack.c.l.b16 %v791
        %v1700 = vunpack.c.h.b16 %v791
        %v1701 = vunpack.c.l.b16 %v792
        %v1702 = vunpack.c.l.b16 %v793
        %v1703 = vunpack.c.h.b16 %v793
        %v1704 = vunpack.c.l.b16 %v794
        %v1705 = vunpack.c.h.b16 %v794
        %v1706 = vunpack.c.l.b16 %v795
        %v1707 = vunpack.c.l.b16 %v796
        %v1708 = vunpack.c.h.b16 %v796
        %v1709 = vunpack.c.l.b16 %v797
        %v1710 = vunpack.c.h.b16 %v797
        %v1711 = vunpack.c.l.b16 %v798
        %v1712 = vunpack.c.l.b16 %v799
        %v1713 = vunpack.c.h.b16 %v799
        %v1714 = vunpack.c.l.b16 %v800
        %v1715 = vunpack.c.h.b16 %v800
        %v1716 = vunpack.c.l.b16 %v801
        %v1717 = vunpack.c.l.b16 %v802
        %v1718 = vunpack.c.h.b16 %v802
        %v1719 = vunpack.c.l.b16 %v803
        %v1720 = vunpack.c.h.b16 %v803
        %v1721 = vunpack.c.l.b16 %v804
        %v1722 = vunpack.c.l.b16 %v805
        %v1723 = vunpack.c.h.b16 %v805
        %v1724 = vunpack.c.l.b16 %v806
        %v1725 = vunpack.c.h.b16 %v806
        %v1726 = vunpack.c.l.b16 %v807
        %v1727 = vunpack.c.l.b16 %v808
        %v1728 = vunpack.c.h.b16 %v808
        %v1729 = vunpack.c.l.b16 %v809
        %v1730 = vunpack.c.h.b16 %v809
        %v1731 = vunpack.c.l.b16 %v810
        %v1732 = vpack.c.b16 %v1177, %v1172
        %v1733 = vpack.c.b16 %v1178, %v1173
        %v1734 = vpack.c.b16 %v1179, %v1174
        %v1735 = vpack.c.b16 %v1180, %v1175
        %v1736 = vpack.c.b16 %v1181, %v1176
        %v1737 = vpack.c.b16 %v1187, %v1182
        %v1738 = vpack.c.b16 %v1188, %v1183
        %v1739 = vpack.c.b16 %v1189, %v1184
        %v1740 = vpack.c.b16 %v1190, %v1185
        %v1741 = vpack.c.b16 %v1191, %v1186
        %v1742 = vpack.c.b16 %v1197, %v1192
        %v1743 = vpack.c.b16 %v1198, %v1193
        %v1744 = vpack.c.b16 %v1199, %v1194
        %v1745 = vpack.c.b16 %v1200, %v1195
        %v1746 = vpack.c.b16 %v1201, %v1196
        %v1747 = vpack.c.b16 %v1207, %v1202
        %v1748 = vpack.c.b16 %v1208, %v1203
        %v1749 = vpack.c.b16 %v1209, %v1204
        %v1750 = vpack.c.b16 %v1210, %v1205
        %v1751 = vpack.c.b16 %v1211, %v1206
        %v1752 = vpack.c.b16 %v1217, %v1212
        %v1753 = vpack.c.b16 %v1218, %v1213
        %v1754 = vpack.c.b16 %v1219, %v1214
        %v1755 = vpack.c.b16 %v1220, %v1215
        %v1756 = vpack.c.b16 %v1221, %v1216
        %v1757 = vpack.c.b16 %v1227, %v1222
        %v1758 = vpack.c.b16 %v1228, %v1223
        %v1759 = vpack.c.b16 %v1229, %v1224
        %v1760 = vpack.c.b16 %v1230, %v1225
        %v1761 = vpack.c.b16 %v1231, %v1226
        %v1762 = vpack.c.b16 %v1237, %v1232
        %v1763 = vpack.c.b16 %v1238, %v1233
        %v1764 = vpack.c.b16 %v1239, %v1234
        %v1765 = vpack.c.b16 %v1240, %v1235
        %v1766 = vpack.c.b16 %v1241, %v1236
        %v1767 = vpack.c.b16 %v1247, %v1242
        %v1768 = vpack.c.b16 %v1248, %v1243
        %v1769 = vpack.c.b16 %v1249, %v1244
        %v1770 = vpack.c.b16 %v1250, %v1245
        %v1771 = vpack.c.b16 %v1251, %v1246
        %v1772 = vpack.c.b16 %v1257, %v1252
        %v1773 = vpack.c.b16 %v1258, %v1253
        %v1774 = vpack.c.b16 %v1259, %v1254
        %v1775 = vpack.c.b16 %v1260, %v1255
        %v1776 = vpack.c.b16 %v1261, %v1256
        %v1777 = vpack.c.b16 %v1267, %v1262
        %v1778 = vpack.c.b16 %v1268, %v1263
        %v1779 = vpack.c.b16 %v1269, %v1264
        %v1780 = vpack.c.b16 %v1270, %v1265
        %v1781 = vpack.c.b16 %v1271, %v1266
        %v1782 = vpack.c.b16 %v1277, %v1272
        %v1783 = vpack.c.b16 %v1278, %v1273
        %v1784 = vpack.c.b16 %v1279, %v1274
        %v1785 = vpack.c.b16 %v1280, %v1275
        %v1786 = vpack.c.b16 %v1281, %v1276
        %v1787 = vpack.c.b16 %v1287, %v1282
        %v1788 = vpack.c.b16 %v1288, %v1283
        %v1789 = vpack.c.b16 %v1289, %v1284
        %v1790 = vpack.c.b16 %v1290, %v1285
        %v1791 = vpack.c.b16 %v1291, %v1286
        %v1792 = vpack.c.b16 %v1297, %v1292
        %v1793 = vpack.c.b16 %v1298, %v1293
        %v1794 = vpack.c.b16 %v1299, %v1294
        %v1795 = vpack.c.b16 %v1300, %v1295
        %v1796 = vpack.c.b16 %v1301, %v1296
        %v1797 = vpack.c.b16 %v1307, %v1302
        %v1798 = vpack.c.b16 %v1308, %v1303
        %v1799 = vpack.c.b16 %v1309, %v1304
        %v1800 = vpack.c.b16 %v1310, %v1305
        %v1801 = vpack.c.b16 %v1311, %v1306
        %v1802 = vpack.c.b16 %v1317, %v1312
        %v1803 = vpack.c.b16 %v1318, %v1313
        %v1804 = vpack.c.b16 %v1319, %v1314
        %v1805 = vpack.c.b16 %v1320, %v1315
        %v1806 = vpack.c.b16 %v1321, %v1316
        %v1807 = vpack.c.b16 %v1327, %v1322
        %v1808 = vpack.c.b16 %v1328, %v1323
        %v1809 = vpack.c.b16 %v1329, %v1324
        %v1810 = vpack.c.b16 %v1330, %v1325
        %v1811 = vpack.c.b16 %v1331, %v1326
        %v1812 = vpack.c.b16 %v1337, %v1332
        %v1813 = vpack.c.b16 %v1338, %v1333
        %v1814 = vpack.c.b16 %v1339, %v1334
        %v1815 = vpack.c.b16 %v1340, %v1335
        %v1816 = vpack.c.b16 %v1341, %v1336
        %v1817 = vpack.c.b16 %v1347, %v1342
        %v1818 = vpack.c.b16 %v1348, %v1343
        %v1819 = vpack.c.b16 %v1349, %v1344
        %v1820 = vpack.c.b16 %v1350, %v1345
        %v1821 = vpack.c.b16 %v1351, %v1346
        %v1822 = vpack.c.b16 %v1357, %v1352
        %v1823 = vpack.c.b16 %v1358, %v1353
        %v1824 = vpack.c.b16 %v1359, %v1354
        %v1825 = vpack.c.b16 %v1360, %v1355
        %v1826 = vpack.c.b16 %v1361, %v1356
        %v1827 = vpack.c.b16 %v1367, %v1362
        %v1828 = vpack.c.b16 %v1368, %v1363
        %v1829 = vpack.c.b16 %v1369, %v1364
        %v1830 = vpack.c.b16 %v1370, %v1365
        %v1831 = vpack.c.b16 %v1371, %v1366
        %v1832 = vpack.c.b16 %v1377, %v1372
        %v1833 = vpack.c.b16 %v1378, %v1373
        %v1834 = vpack.c.b16 %v1379, %v1374
        %v1835 = vpack.c.b16 %v1380, %v1375
        %v1836 = vpack.c.b16 %v1381, %v1376
        %v1837 = vpack.c.b16 %v1387, %v1382
        %v1838 = vpack.c.b16 %v1388, %v1383
        %v1839 = vpack.c.b16 %v1389, %v1384
        %v1840 = vpack.c.b16 %v1390, %v1385
        %v1841 = vpack.c.b16 %v1391, %v1386
        %v1842 = vpack.c.b16 %v1397, %v1392
        %v1843 = vpack.c.b16 %v1398, %v1393
        %v1844 = vpack.c.b16 %v1399, %v1394
        %v1845 = vpack.c.b16 %v1400, %v1395
        %v1846 = vpack.c.b16 %v1401, %v1396
        %v1847 = vpack.c.b16 %v1407, %v1402
        %v1848 = vpack.c.b16 %v1408, %v1403
        %v1849 = vpack.c.b16 %v1409, %v1404
        %v1850 = vpack.c.b16 %v1410, %v1405
        %v1851 = vpack.c.b16 %v1411, %v1406
        %v1852 = vpack.c.b16 %v1417, %v1412
        %v1853 = vpack.c.b16 %v1418, %v1413
        %v1854 = vpack.c.b16 %v1419, %v1414
        %v1855 = vpack.c.b16 %v1420, %v1415
        %v1856 = vpack.c.b16 %v1421, %v1416
        %v1857 = vpack.c.b16 %v1427, %v1422
        %v1858 = vpack.c.b16 %v1428, %v1423
        %v1859 = vpack.c.b16 %v1429, %v1424
        %v1860 = vpack.c.b16 %v1430, %v1425
        %v1861 = vpack.c.b16 %v1431, %v1426
        %v1862 = vpack.c.b16 %v1437, %v1432
        %v1863 = vpack.c.b16 %v1438, %v1433
        %v1864 = vpack.c.b16 %v1439, %v1434
        %v1865 = vpack.c.b16 %v1440, %v1435
        %v1866 = vpack.c.b16 %v1441, %v1436
        %v1867 = vpack.c.b16 %v1447, %v1442
        %v1868 = vpack.c.b16 %v1448, %v1443
        %v1869 = vpack.c.b16 %v1449, %v1444
        %v1870 = vpack.c.b16 %v1450, %v1445
        %v1871 = vpack.c.b16 %v1451, %v1446
        %v1872 = vpack.c.b16 %v1457, %v1452
        %v1873 = vpack.c.b16 %v1458, %v1453
        %v1874 = vpack.c.b16 %v1459, %v1454
        %v1875 = vpack.c.b16 %v1460, %v1455
        %v1876 = vpack.c.b16 %v1461, %v1456
        %v1877 = vpack.c.b16 %v1467, %v1462
        %v1878 = vpack.c.b16 %v1468, %v1463
        %v1879 = vpack.c.b16 %v1469, %v1464
        %v1880 = vpack.c.b16 %v1470, %v1465
        %v1881 = vpack.c.b16 %v1471, %v1466
        %v1882 = vpack.c.b16 %v1477, %v1472
        %v1883 = vpack.c.b16 %v1478, %v1473
        %v1884 = vpack.c.b16 %v1479, %v1474
        %v1885 = vpack.c.b16 %v1480, %v1475
        %v1886 = vpack.c.b16 %v1481, %v1476
        %v1887 = vpack.c.b16 %v1487, %v1482
        %v1888 = vpack.c.b16 %v1488, %v1483
        %v1889 = vpack.c.b16 %v1489, %v1484
        %v1890 = vpack.c.b16 %v1490, %v1485
        %v1891 = vpack.c.b16 %v1491, %v1486
        %v1892 = vpack.c.b16 %v1497, %v1492
        %v1893 = vpack.c.b16 %v1498, %v1493
        %v1894 = vpack.c.b16 %v1499, %v1494
        %v1895 = vpack.c.b16 %v1500, %v1495
        %v1896 = vpack.c.b16 %v1501, %v1496
        %v1897 = vpack.c.b16 %v1507, %v1502
        %v1898 = vpack.c.b16 %v1508, %v1503
        %v1899 = vpack.c.b16 %v1509, %v1504
        %v1900 = vpack.c.b16 %v1510, %v1505
        %v1901 = vpack.c.b16 %v1511, %v1506
        %v1902 = vpack.c.b16 %v1517, %v1512
        %v1903 = vpack.c.b16 %v1518, %v1513
        %v1904 = vpack.c.b16 %v1519, %v1514
        %v1905 = vpack.c.b16 %v1520, %v1515
        %v1906 = vpack.c.b16 %v1521, %v1516
        %v1907 = vpack.c.b16 %v1527, %v1522
        %v1908 = vpack.c.b16 %v1528, %v1523
        %v1909 = vpack.c.b16 %v1529, %v1524
        %v1910 = vpack.c.b16 %v1530, %v1525
        %v1911 = vpack.c.b16 %v1531, %v1526
        %v1912 = vpack.c.b16 %v1537, %v1532
        %v1913 = vpack.c.b16 %v1538, %v1533
        %v1914 = vpack.c.b16 %v1539, %v1534
        %v1915 = vpack.c.b16 %v1540, %v1535
        %v1916 = vpack.c.b16 %v1541, %v1536
        %v1917 = vpack.c.b16 %v1547, %v1542
        %v1918 = vpack.c.b16 %v1548, %v1543
        %v1919 = vpack.c.b16 %v1549, %v1544
        %v1920 = vpack.c.b16 %v1550, %v1545
        %v1921 = vpack.c.b16 %v1551, %v1546
        %v1922 = vpack.c.b16 %v1557, %v1552
        %v1923 = vpack.c.b16 %v1558, %v1553
        %v1924 = vpack.c.b16 %v1559, %v1554
        %v1925 = vpack.c.b16 %v1560, %v1555
        %v1926 = vpack.c.b16 %v1561, %v1556
        %v1927 = vpack.c.b16 %v1567, %v1562
        %v1928 = vpack.c.b16 %v1568, %v1563
        %v1929 = vpack.c.b16 %v1569, %v1564
        %v1930 = vpack.c.b16 %v1570, %v1565
        %v1931 = vpack.c.b16 %v1571, %v1566
        %v1932 = vpack.c.b16 %v1577, %v1572
        %v1933 = vpack.c.b16 %v1578, %v1573
        %v1934 = vpack.c.b16 %v1579, %v1574
        %v1935 = vpack.c.b16 %v1580, %v1575
        %v1936 = vpack.c.b16 %v1581, %v1576
        %v1937 = vpack.c.b16 %v1587, %v1582
        %v1938 = vpack.c.b16 %v1588, %v1583
        %v1939 = vpack.c.b16 %v1589, %v1584
        %v1940 = vpack.c.b16 %v1590, %v1585
        %v1941 = vpack.c.b16 %v1591, %v1586
        %v1942 = vpack.c.b16 %v1597, %v1592
        %v1943 = vpack.c.b16 %v1598, %v1593
        %v1944 = vpack.c.b16 %v1599, %v1594
        %v1945 = vpack.c.b16 %v1600, %v1595
        %v1946 = vpack.c.b16 %v1601, %v1596
        %v1947 = vpack.c.b16 %v1607, %v1602
        %v1948 = vpack.c.b16 %v1608, %v1603
        %v1949 = vpack.c.b16 %v1609, %v1604
        %v1950 = vpack.c.b16 %v1610, %v1605
        %v1951 = vpack.c.b16 %v1611, %v1606
        %v1952 = vpack.c.b16 %v1617, %v1612
        %v1953 = vpack.c.b16 %v1618, %v1613
        %v1954 = vpack.c.b16 %v1619, %v1614
        %v1955 = vpack.c.b16 %v1620, %v1615
        %v1956 = vpack.c.b16 %v1621, %v1616
        %v1957 = vpack.c.b16 %v1627, %v1622
        %v1958 = vpack.c.b16 %v1628, %v1623
        %v1959 = vpack.c.b16 %v1629, %v1624
        %v1960 = vpack.c.b16 %v1630, %v1625
        %v1961 = vpack.c.b16 %v1631, %v1626
        %v1962 = vpack.c.b16 %v1637, %v1632
        %v1963 = vpack.c.b16 %v1638, %v1633
        %v1964 = vpack.c.b16 %v1639, %v1634
        %v1965 = vpack.c.b16 %v1640, %v1635
        %v1966 = vpack.c.b16 %v1641, %v1636
        %v1967 = vpack.c.b16 %v1647, %v1642
        %v1968 = vpack.c.b16 %v1648, %v1643
        %v1969 = vpack.c.b16 %v1649, %v1644
        %v1970 = vpack.c.b16 %v1650, %v1645
        %v1971 = vpack.c.b16 %v1651, %v1646
        %v1972 = vpack.c.b16 %v1657, %v1652
        %v1973 = vpack.c.b16 %v1658, %v1653
        %v1974 = vpack.c.b16 %v1659, %v1654
        %v1975 = vpack.c.b16 %v1660, %v1655
        %v1976 = vpack.c.b16 %v1661, %v1656
        %v1977 = vpack.c.b16 %v1667, %v1662
        %v1978 = vpack.c.b16 %v1668, %v1663
        %v1979 = vpack.c.b16 %v1669, %v1664
        %v1980 = vpack.c.b16 %v1670, %v1665
        %v1981 = vpack.c.b16 %v1671, %v1666
        %v1982 = vpack.c.b16 %v1677, %v1672
        %v1983 = vpack.c.b16 %v1678, %v1673
        %v1984 = vpack.c.b16 %v1679, %v1674
        %v1985 = vpack.c.b16 %v1680, %v1675
        %v1986 = vpack.c.b16 %v1681, %v1676
        %v1987 = vpack.c.b16 %v1687, %v1682
        %v1988 = vpack.c.b16 %v1688, %v1683
        %v1989 = vpack.c.b16 %v1689, %v1684
        %v1990 = vpack.c.b16 %v1690, %v1685
        %v1991 = vpack.c.b16 %v1691, %v1686
        %v1992 = vpack.c.b16 %v1697, %v1692
        %v1993 = vpack.c.b16 %v1698, %v1693
        %v1994 = vpack.c.b16 %v1699, %v1694
        %v1995 = vpack.c.b16 %v1700, %v1695
        %v1996 = vpack.c.b16 %v1701, %v1696
        %v1997 = vpack.c.b16 %v1707, %v1702
        %v1998 = vpack.c.b16 %v1708, %v1703
        %v1999 = vpack.c.b16 %v1709, %v1704
        %v2000 = vpack.c.b16 %v1710, %v1705
        %v2001 = vpack.c.b16 %v1711, %v1706
        %v2002 = vpack.c.b16 %v1717, %v1712
        %v2003 = vpack.c.b16 %v1718, %v1713
        %v2004 = vpack.c.b16 %v1719, %v1714
        %v2005 = vpack.c.b16 %v1720, %v1715
        %v2006 = vpack.c.b16 %v1721, %v1716
        %v2007 = vpack.c.b16 %v1727, %v1722
        %v2008 = vpack.c.b16 %v1728, %v1723
        %v2009 = vpack.c.b16 %v1729, %v1724
        %v2010 = vpack.c.b16 %v1730, %v1725
        %v2011 = vpack.c.b16 %v1731, %v1726
        %2292 = vmatprep.subr.bf16.mxu0 %v1733
        %2293 = vmatpush1.bf16.msra.mxu0 %v1732
        %2294 = vmatprep.subr.bf16.mxu0 %v1738
        %2295 = vmatpush1.bf16.msra.mxu0 %v1737
        %2296 = vmatprep.subr.bf16.mxu0 %v1743
        %2297 = vmatpush1.bf16.msra.mxu0 %v1742
        %2298 = vmatprep.subr.bf16.mxu0 %v1748
        %2299 = vmatpush1.bf16.msra.mxu0 %v1747
        %2300 = vmatprep.subr.bf16.mxu0 %v1753
        %2301 = vmatpush1.bf16.msra.mxu0 %v1752
        %2302 = vmatprep.subr.bf16.mxu0 %v1758
        %2303 = vmatpush1.bf16.msra.mxu0 %v1757
        %2304 = vmatprep.subr.bf16.mxu0 %v1763
        %2305 = vmatpush1.bf16.msra.mxu0 %v1762
        %2306 = vmatprep.subr.bf16.mxu0 %v1768
        %2307 = vmatpush1.bf16.msra.mxu0 %v1767
        %2308 = vmatprep.subr.bf16.mxu0 %v1773
        %2309 = vmatpush1.bf16.msra.mxu0 %v1772
        %2310 = vmatprep.subr.bf16.mxu0 %v1778
        %2311 = vmatpush1.bf16.msra.mxu0 %v1777
        %2312 = vmatprep.subr.bf16.mxu0 %v1783
        %2313 = vmatpush1.bf16.msra.mxu0 %v1782
        %2314 = vmatprep.subr.bf16.mxu0 %v1788
        %2315 = vmatpush1.bf16.msra.mxu0 %v1787
        %2316 = vmatprep.subr.bf16.mxu0 %v1793
        %2317 = vmatpush1.bf16.msra.mxu0 %v1792
        %2318 = vmatprep.subr.bf16.mxu0 %v1798
        %2319 = vmatpush1.bf16.msra.mxu0 %v1797
        %2320 = vmatprep.subr.bf16.mxu0 %v1803
        %2321 = vmatpush1.bf16.msra.mxu0 %v1802
        %2322 = vmatprep.subr.bf16.mxu0 %v1808
        %2323 = vmatpush1.bf16.msra.mxu0 %v1807
        %2324 = vmatprep.mubr.bf16.mxu0 %v823
        %2325 = vmatmul.mubr.bf16.gmra.mrb[0].mxu0 %v822
        %v2326 = vpop.f32.mrb[0].mxu0
        %v2327 = vadd.f32 0.0, %v2326
        %v2328 = vpop.f32.mrb[0].mxu0
        %v2329 = vadd.f32 0.0, %v2328
        %v2330 = vpop.f32.mrb[0].mxu0
        %v2331 = vpop.f32.mrb[0].mxu0
        %2332 = vdwg.mxu0
        %2333 = vmatprep.subr.bf16.mxu0 %v1813
        %2334 = vmatpush1.bf16.msra.mxu0 %v1812
        %2335 = vmatprep.subr.bf16.mxu0 %v1818
        %2336 = vmatpush1.bf16.msra.mxu0 %v1817
        %2337 = vmatprep.subr.bf16.mxu0 %v1823
        %2338 = vmatpush1.bf16.msra.mxu0 %v1822
        %2339 = vmatprep.subr.bf16.mxu0 %v1828
        %2340 = vmatpush1.bf16.msra.mxu0 %v1827
        %2341 = vmatprep.subr.bf16.mxu0 %v1833
        %2342 = vmatpush1.bf16.msra.mxu0 %v1832
        %2343 = vmatprep.subr.bf16.mxu0 %v1838
        %2344 = vmatpush1.bf16.msra.mxu0 %v1837
        %2345 = vmatprep.subr.bf16.mxu0 %v1843
        %2346 = vmatpush1.bf16.msra.mxu0 %v1842
        %2347 = vmatprep.subr.bf16.mxu0 %v1848
        %2348 = vmatpush1.bf16.msra.mxu0 %v1847
        %2349 = vmatprep.subr.bf16.mxu0 %v1853
        %2350 = vmatpush1.bf16.msra.mxu0 %v1852
        %2351 = vmatprep.subr.bf16.mxu0 %v1858
        %2352 = vmatpush1.bf16.msra.mxu0 %v1857
        %2353 = vmatprep.subr.bf16.mxu0 %v1863
        %2354 = vmatpush1.bf16.msra.mxu0 %v1862
        %2355 = vmatprep.subr.bf16.mxu0 %v1868
        %2356 = vmatpush1.bf16.msra.mxu0 %v1867
        %2357 = vmatprep.subr.bf16.mxu0 %v1873
        %2358 = vmatpush1.bf16.msra.mxu0 %v1872
        %2359 = vmatprep.subr.bf16.mxu0 %v1878
        %2360 = vmatpush1.bf16.msra.mxu0 %v1877
        %2361 = vmatprep.subr.bf16.mxu0 %v1883
        %2362 = vmatpush1.bf16.msra.mxu0 %v1882
        %2363 = vmatprep.subr.bf16.mxu0 %v1888
        %2364 = vmatpush1.bf16.msra.mxu0 %v1887
        %2365 = vmatprep.mubr.bf16.mxu0 %v825
        %2366 = vmatmul.mubr.bf16.gmra.mrb[0].mxu0 %v824
        %v2367 = vpop.f32.mrb[0].mxu0
        %v2368 = vadd.f32 %v2327, %v2367
        %v2369 = vpop.f32.mrb[0].mxu0
        %v2370 = vadd.f32 %v2329, %v2369
        %v2371 = vpop.f32.mrb[0].mxu0
        %v2372 = vpop.f32.mrb[0].mxu0
        %2373 = vdwg.mxu0
        %2374 = vmatprep.subr.bf16.mxu0 %v1893
        %2375 = vmatpush1.bf16.msra.mxu0 %v1892
        %2376 = vmatprep.subr.bf16.mxu0 %v1898
        %2377 = vmatpush1.bf16.msra.mxu0 %v1897
        %2378 = vmatprep.subr.bf16.mxu0 %v1903
        %2379 = vmatpush1.bf16.msra.mxu0 %v1902
        %2380 = vmatprep.subr.bf16.mxu0 %v1908
        %2381 = vmatpush1.bf16.msra.mxu0 %v1907
        %2382 = vmatprep.subr.bf16.mxu0 %v1913
        %2383 = vmatpush1.bf16.msra.mxu0 %v1912
        %2384 = vmatprep.subr.bf16.mxu0 %v1918
        %2385 = vmatpush1.bf16.msra.mxu0 %v1917
        %2386 = vmatprep.subr.bf16.mxu0 %v1923
        %2387 = vmatpush1.bf16.msra.mxu0 %v1922
        %2388 = vmatprep.subr.bf16.mxu0 %v1928
        %2389 = vmatpush1.bf16.msra.mxu0 %v1927
        %2390 = vmatprep.subr.bf16.mxu0 %v1933
        %2391 = vmatpush1.bf16.msra.mxu0 %v1932
        %2392 = vmatprep.subr.bf16.mxu0 %v1938
        %2393 = vmatpush1.bf16.msra.mxu0 %v1937
        %2394 = vmatprep.subr.bf16.mxu0 %v1943
        %2395 = vmatpush1.bf16.msra.mxu0 %v1942
        %2396 = vmatprep.subr.bf16.mxu0 %v1948
        %2397 = vmatpush1.bf16.msra.mxu0 %v1947
        %2398 = vmatprep.subr.bf16.mxu0 %v1953
        %2399 = vmatpush1.bf16.msra.mxu0 %v1952
        %2400 = vmatprep.subr.bf16.mxu0 %v1958
        %2401 = vmatpush1.bf16.msra.mxu0 %v1957
        %2402 = vmatprep.subr.bf16.mxu0 %v1963
        %2403 = vmatpush1.bf16.msra.mxu0 %v1962
        %2404 = vmatprep.subr.bf16.mxu0 %v1968
        %2405 = vmatpush1.bf16.msra.mxu0 %v1967
        %2406 = vmatprep.mubr.bf16.mxu0 %v827
        %2407 = vmatmul.mubr.bf16.gmra.mrb[0].mxu0 %v826
        %v2408 = vpop.f32.mrb[0].mxu0
        %v2409 = vadd.f32 %v2368, %v2408
        %v2410 = vpop.f32.mrb[0].mxu0
        %v2411 = vadd.f32 %v2370, %v2410
        %v2412 = vpop.f32.mrb[0].mxu0
        %v2413 = vpop.f32.mrb[0].mxu0
        %2414 = vdwg.mxu0
        %2415 = vmatprep.subr.bf16.mxu0 %v1973
        %2416 = vmatpush1.bf16.msra.mxu0 %v1972
        %2417 = vmatprep.subr.bf16.mxu0 %v1978
        %2418 = vmatpush1.bf16.msra.mxu0 %v1977
        %2419 = vmatprep.subr.bf16.mxu0 %v1983
        %2420 = vmatpush1.bf16.msra.mxu0 %v1982
        %2421 = vmatprep.subr.bf16.mxu0 %v1988
        %2422 = vmatpush1.bf16.msra.mxu0 %v1987
        %2423 = vmatprep.subr.bf16.mxu0 %v1993
        %2424 = vmatpush1.bf16.msra.mxu0 %v1992
        %2425 = vmatprep.subr.bf16.mxu0 %v1998
        %2426 = vmatpush1.bf16.msra.mxu0 %v1997
        %2427 = vmatprep.subr.bf16.mxu0 %v2003
        %2428 = vmatpush1.bf16.msra.mxu0 %v2002
        %2429 = vmatprep.subr.bf16.mxu0 %v2008
        %2430 = vmatpush1.bf16.msra.mxu0 %v2007
        %2431 = vmatprep.subr.bf16.mxu0 0
        %2432 = vmatpush1.bf16.msra.mxu0 0
        %2433 = vmatprep.subr.bf16.mxu0 0
        %2434 = vmatpush1.bf16.msra.mxu0 0
        %2435 = vmatprep.subr.bf16.mxu0 0
        %2436 = vmatpush1.bf16.msra.mxu0 0
        %2437 = vmatprep.subr.bf16.mxu0 0
        %2438 = vmatpush1.bf16.msra.mxu0 0
        %2439 = vmatprep.subr.bf16.mxu0 0
        %2440 = vmatpush1.bf16.msra.mxu0 0
        %2441 = vmatprep.subr.bf16.mxu0 0
        %2442 = vmatpush1.bf16.msra.mxu0 0
        %2443 = vmatprep.subr.bf16.mxu0 0
        %2444 = vmatpush1.bf16.msra.mxu0 0
        %2445 = vmatprep.subr.bf16.mxu0 0
        %2446 = vmatpush1.bf16.msra.mxu0 0
        %2447 = vmatprep.mubr.bf16.mxu0 0
        %2448 = vmatmul.mubr.bf16.gmra.mrb[0].mxu0 %v828
        %v2449 = vpop.f32.mrb[0].mxu0
        %v2450 = vadd.f32 %v2409, %v2449
        %v2451 = vpop.f32.mrb[0].mxu0
        %v2452 = vadd.f32 %v2411, %v2451
        %v2453 = vpop.f32.mrb[0].mxu0
        %v2454 = vpop.f32.mrb[0].mxu0
        %2455 = vdwg.mxu0
        %2456 = vmatprep.subr.bf16.mxu0 %v1735
        %2457 = vmatpush1.bf16.msra.mxu0 %v1734
        %2458 = vmatprep.subr.bf16.mxu0 %v1740
        %2459 = vmatpush1.bf16.msra.mxu0 %v1739
        %2460 = vmatprep.subr.bf16.mxu0 %v1745
        %2461 = vmatpush1.bf16.msra.mxu0 %v1744
        %2462 = vmatprep.subr.bf16.mxu0 %v1750
        %2463 = vmatpush1.bf16.msra.mxu0 %v1749
        %2464 = vmatprep.subr.bf16.mxu0 %v1755
        %2465 = vmatpush1.bf16.msra.mxu0 %v1754
        %2466 = vmatprep.subr.bf16.mxu0 %v1760
        %2467 = vmatpush1.bf16.msra.mxu0 %v1759
        %2468 = vmatprep.subr.bf16.mxu0 %v1765
        %2469 = vmatpush1.bf16.msra.mxu0 %v1764
        %2470 = vmatprep.subr.bf16.mxu0 %v1770
        %2471 = vmatpush1.bf16.msra.mxu0 %v1769
        %2472 = vmatprep.subr.bf16.mxu0 %v1775
        %2473 = vmatpush1.bf16.msra.mxu0 %v1774
        %2474 = vmatprep.subr.bf16.mxu0 %v1780
        %2475 = vmatpush1.bf16.msra.mxu0 %v1779
        %2476 = vmatprep.subr.bf16.mxu0 %v1785
        %2477 = vmatpush1.bf16.msra.mxu0 %v1784
        %2478 = vmatprep.subr.bf16.mxu0 %v1790
        %2479 = vmatpush1.bf16.msra.mxu0 %v1789
        %2480 = vmatprep.subr.bf16.mxu0 %v1795
        %2481 = vmatpush1.bf16.msra.mxu0 %v1794
        %2482 = vmatprep.subr.bf16.mxu0 %v1800
        %2483 = vmatpush1.bf16.msra.mxu0 %v1799
        %2484 = vmatprep.subr.bf16.mxu0 %v1805
        %2485 = vmatpush1.bf16.msra.mxu0 %v1804
        %2486 = vmatprep.subr.bf16.mxu0 %v1810
        %2487 = vmatpush1.bf16.msra.mxu0 %v1809
        %2488 = vmatprep.mubr.bf16.mxu0 %v823
        %2489 = vmatmul.mubr.bf16.gmra.mrb[0].mxu0 %v822
        %v2490 = vpop.f32.mrb[0].mxu0
        %v2491 = vadd.f32 0.0, %v2490
        %v2492 = vpop.f32.mrb[0].mxu0
        %v2493 = vadd.f32 0.0, %v2492
        %v2494 = vpop.f32.mrb[0].mxu0
        %v2495 = vpop.f32.mrb[0].mxu0
        %2496 = vdwg.mxu0
        %2497 = vmatprep.subr.bf16.mxu0 %v1815
        %2498 = vmatpush1.bf16.msra.mxu0 %v1814
        %2499 = vmatprep.subr.bf16.mxu0 %v1820
        %2500 = vmatpush1.bf16.msra.mxu0 %v1819
        %2501 = vmatprep.subr.bf16.mxu0 %v1825
        %2502 = vmatpush1.bf16.msra.mxu0 %v1824
        %2503 = vmatprep.subr.bf16.mxu0 %v1830
        %2504 = vmatpush1.bf16.msra.mxu0 %v1829
        %2505 = vmatprep.subr.bf16.mxu0 %v1835
        %2506 = vmatpush1.bf16.msra.mxu0 %v1834
        %2507 = vmatprep.subr.bf16.mxu0 %v1840
        %2508 = vmatpush1.bf16.msra.mxu0 %v1839
        %2509 = vmatprep.subr.bf16.mxu0 %v1845
        %2510 = vmatpush1.bf16.msra.mxu0 %v1844
        %2511 = vmatprep.subr.bf16.mxu0 %v1850
        %2512 = vmatpush1.bf16.msra.mxu0 %v1849
        %2513 = vmatprep.subr.bf16.mxu0 %v1855
        %2514 = vmatpush1.bf16.msra.mxu0 %v1854
        %2515 = vmatprep.subr.bf16.mxu0 %v1860
        %2516 = vmatpush1.bf16.msra.mxu0 %v1859
        %2517 = vmatprep.subr.bf16.mxu0 %v1865
        %2518 = vmatpush1.bf16.msra.mxu0 %v1864
        %2519 = vmatprep.subr.bf16.mxu0 %v1870
        %2520 = vmatpush1.bf16.msra.mxu0 %v1869
        %2521 = vmatprep.subr.bf16.mxu0 %v1875
        %2522 = vmatpush1.bf16.msra.mxu0 %v1874
        %2523 = vmatprep.subr.bf16.mxu0 %v1880
        %2524 = vmatpush1.bf16.msra.mxu0 %v1879
        %2525 = vmatprep.subr.bf16.mxu0 %v1885
        %2526 = vmatpush1.bf16.msra.mxu0 %v1884
        %2527 = vmatprep.subr.bf16.mxu0 %v1890
        %2528 = vmatpush1.bf16.msra.mxu0 %v1889
        %2529 = vmatprep.mubr.bf16.mxu0 %v825
        %2530 = vmatmul.mubr.bf16.gmra.mrb[0].mxu0 %v824
        %v2531 = vpop.f32.mrb[0].mxu0
        %v2532 = vadd.f32 %v2491, %v2531
        %v2533 = vpop.f32.mrb[0].mxu0
        %v2534 = vadd.f32 %v2493, %v2533
        %v2535 = vpop.f32.mrb[0].mxu0
        %v2536 = vpop.f32.mrb[0].mxu0
        %2537 = vdwg.mxu0
        %2538 = vmatprep.subr.bf16.mxu0 %v1895
        %2539 = vmatpush1.bf16.msra.mxu0 %v1894
        %2540 = vmatprep.subr.bf16.mxu0 %v1900
        %2541 = vmatpush1.bf16.msra.mxu0 %v1899
        %2542 = vmatprep.subr.bf16.mxu0 %v1905
        %2543 = vmatpush1.bf16.msra.mxu0 %v1904
        %2544 = vmatprep.subr.bf16.mxu0 %v1910
        %2545 = vmatpush1.bf16.msra.mxu0 %v1909
        %2546 = vmatprep.subr.bf16.mxu0 %v1915
        %2547 = vmatpush1.bf16.msra.mxu0 %v1914
        %2548 = vmatprep.subr.bf16.mxu0 %v1920
        %2549 = vmatpush1.bf16.msra.mxu0 %v1919
        %2550 = vmatprep.subr.bf16.mxu0 %v1925
        %2551 = vmatpush1.bf16.msra.mxu0 %v1924
        %2552 = vmatprep.subr.bf16.mxu0 %v1930
        %2553 = vmatpush1.bf16.msra.mxu0 %v1929
        %2554 = vmatprep.subr.bf16.mxu0 %v1935
        %2555 = vmatpush1.bf16.msra.mxu0 %v1934
        %2556 = vmatprep.subr.bf16.mxu0 %v1940
        %2557 = vmatpush1.bf16.msra.mxu0 %v1939
        %2558 = vmatprep.subr.bf16.mxu0 %v1945
        %2559 = vmatpush1.bf16.msra.mxu0 %v1944
        %2560 = vmatprep.subr.bf16.mxu0 %v1950
        %2561 = vmatpush1.bf16.msra.mxu0 %v1949
        %2562 = vmatprep.subr.bf16.mxu0 %v1955
        %2563 = vmatpush1.bf16.msra.mxu0 %v1954
        %2564 = vmatprep.subr.bf16.mxu0 %v1960
        %2565 = vmatpush1.bf16.msra.mxu0 %v1959
        %2566 = vmatprep.subr.bf16.mxu0 %v1965
        %2567 = vmatpush1.bf16.msra.mxu0 %v1964
        %2568 = vmatprep.subr.bf16.mxu0 %v1970
        %2569 = vmatpush1.bf16.msra.mxu0 %v1969
        %2570 = vmatprep.mubr.bf16.mxu0 %v827
        %2571 = vmatmul.mubr.bf16.gmra.mrb[0].mxu0 %v826
        %v2572 = vpop.f32.mrb[0].mxu0
        %v2573 = vadd.f32 %v2532, %v2572
        %v2574 = vpop.f32.mrb[0].mxu0
        %v2575 = vadd.f32 %v2534, %v2574
        %v2576 = vpop.f32.mrb[0].mxu0
        %v2577 = vpop.f32.mrb[0].mxu0
        %2578 = vdwg.mxu0
        %2579 = vmatprep.subr.bf16.mxu0 %v1975
        %2580 = vmatpush1.bf16.msra.mxu0 %v1974
        %2581 = vmatprep.subr.bf16.mxu0 %v1980
        %2582 = vmatpush1.bf16.msra.mxu0 %v1979
        %2583 = vmatprep.subr.bf16.mxu0 %v1985
        %2584 = vmatpush1.bf16.msra.mxu0 %v1984
        %2585 = vmatprep.subr.bf16.mxu0 %v1990
        %2586 = vmatpush1.bf16.msra.mxu0 %v1989
        %2587 = vmatprep.subr.bf16.mxu0 %v1995
        %2588 = vmatpush1.bf16.msra.mxu0 %v1994
        %2589 = vmatprep.subr.bf16.mxu0 %v2000
        %2590 = vmatpush1.bf16.msra.mxu0 %v1999
        %2591 = vmatprep.subr.bf16.mxu0 %v2005
        %2592 = vmatpush1.bf16.msra.mxu0 %v2004
        %2593 = vmatprep.subr.bf16.mxu0 %v2010
        %2594 = vmatpush1.bf16.msra.mxu0 %v2009
        %2595 = vmatprep.subr.bf16.mxu0 0
        %2596 = vmatpush1.bf16.msra.mxu0 0
        %2597 = vmatprep.subr.bf16.mxu0 0
        %2598 = vmatpush1.bf16.msra.mxu0 0
        %2599 = vmatprep.subr.bf16.mxu0 0
        %2600 = vmatpush1.bf16.msra.mxu0 0
        %2601 = vmatprep.subr.bf16.mxu0 0
        %2602 = vmatpush1.bf16.msra.mxu0 0
        %2603 = vmatprep.subr.bf16.mxu0 0
        %2604 = vmatpush1.bf16.msra.mxu0 0
        %2605 = vmatprep.subr.bf16.mxu0 0
        %2606 = vmatpush1.bf16.msra.mxu0 0
        %2607 = vmatprep.subr.bf16.mxu0 0
        %2608 = vmatpush1.bf16.msra.mxu0 0
        %2609 = vmatprep.subr.bf16.mxu0 0
        %2610 = vmatpush1.bf16.msra.mxu0 0
        %2611 = vmatprep.mubr.bf16.mxu0 0
        %2612 = vmatmul.mubr.bf16.gmra.mrb[0].mxu0 %v828
        %v2613 = vpop.f32.mrb[0].mxu0
        %v2614 = vadd.f32 %v2573, %v2613
        %v2615 = vpop.f32.mrb[0].mxu0
        %v2616 = vadd.f32 %v2575, %v2615
        %v2617 = vpop.f32.mrb[0].mxu0
        %v2618 = vpop.f32.mrb[0].mxu0
        %2619 = vdwg.mxu0
        %2620 = vmatprep.subr.bf16.mxu0 0
        %2621 = vmatpush1.bf16.msra.mxu0 %v1736
        %2622 = vmatprep.subr.bf16.mxu0 0
        %2623 = vmatpush1.bf16.msra.mxu0 %v1741
        %2624 = vmatprep.subr.bf16.mxu0 0
        %2625 = vmatpush1.bf16.msra.mxu0 %v1746
        %2626 = vmatprep.subr.bf16.mxu0 0
        %2627 = vmatpush1.bf16.msra.mxu0 %v1751
        %2628 = vmatprep.subr.bf16.mxu0 0
        %2629 = vmatpush1.bf16.msra.mxu0 %v1756
        %2630 = vmatprep.subr.bf16.mxu0 0
        %2631 = vmatpush1.bf16.msra.mxu0 %v1761
        %2632 = vmatprep.subr.bf16.mxu0 0
        %2633 = vmatpush1.bf16.msra.mxu0 %v1766
        %2634 = vmatprep.subr.bf16.mxu0 0
        %2635 = vmatpush1.bf16.msra.mxu0 %v1771
        %2636 = vmatprep.subr.bf16.mxu0 0
        %2637 = vmatpush1.bf16.msra.mxu0 %v1776
        %2638 = vmatprep.subr.bf16.mxu0 0
        %2639 = vmatpush1.bf16.msra.mxu0 %v1781
        %2640 = vmatprep.subr.bf16.mxu0 0
        %2641 = vmatpush1.bf16.msra.mxu0 %v1786
        %2642 = vmatprep.subr.bf16.mxu0 0
        %2643 = vmatpush1.bf16.msra.mxu0 %v1791
        %2644 = vmatprep.subr.bf16.mxu0 0
        %2645 = vmatpush1.bf16.msra.mxu0 %v1796
        %2646 = vmatprep.subr.bf16.mxu0 0
        %2647 = vmatpush1.bf16.msra.mxu0 %v1801
        %2648 = vmatprep.subr.bf16.mxu0 0
        %2649 = vmatpush1.bf16.msra.mxu0 %v1806
        %2650 = vmatprep.subr.bf16.mxu0 0
        %2651 = vmatpush1.bf16.msra.mxu0 %v1811
        %2652 = vmatprep.mubr.bf16.mxu0 %v823
        %2653 = vmatmul.mubr.bf16.gmra.mrb[0].mxu0 %v822
        %v2654 = vpop.f32.mrb[0].mxu0
        %v2655 = vadd.f32 0.0, %v2654
        %v2656 = vpop.f32.mrb[0].mxu0
        %v2657 = vpop.f32.mrb[0].mxu0
        %v2658 = vpop.f32.mrb[0].mxu0
        %2659 = vdwg.mxu0
        %2660 = vmatprep.subr.bf16.mxu0 0
        %2661 = vmatpush1.bf16.msra.mxu0 %v1816
        %2662 = vmatprep.subr.bf16.mxu0 0
        %2663 = vmatpush1.bf16.msra.mxu0 %v1821
        %2664 = vmatprep.subr.bf16.mxu0 0
        %2665 = vmatpush1.bf16.msra.mxu0 %v1826
        %2666 = vmatprep.subr.bf16.mxu0 0
        %2667 = vmatpush1.bf16.msra.mxu0 %v1831
        %2668 = vmatprep.subr.bf16.mxu0 0
        %2669 = vmatpush1.bf16.msra.mxu0 %v1836
        %2670 = vmatprep.subr.bf16.mxu0 0
        %2671 = vmatpush1.bf16.msra.mxu0 %v1841
        %2672 = vmatprep.subr.bf16.mxu0 0
        %2673 = vmatpush1.bf16.msra.mxu0 %v1846
        %2674 = vmatprep.subr.bf16.mxu0 0
        %2675 = vmatpush1.bf16.msra.mxu0 %v1851
        %2676 = vmatprep.subr.bf16.mxu0 0
        %2677 = vmatpush1.bf16.msra.mxu0 %v1856
        %2678 = vmatprep.subr.bf16.mxu0 0
        %2679 = vmatpush1.bf16.msra.mxu0 %v1861
        %2680 = vmatprep.subr.bf16.mxu0 0
        %2681 = vmatpush1.bf16.msra.mxu0 %v1866
        %2682 = vmatprep.subr.bf16.mxu0 0
        %2683 = vmatpush1.bf16.msra.mxu0 %v1871
        %2684 = vmatprep.subr.bf16.mxu0 0
        %2685 = vmatpush1.bf16.msra.mxu0 %v1876
        %2686 = vmatprep.subr.bf16.mxu0 0
        %2687 = vmatpush1.bf16.msra.mxu0 %v1881
        %2688 = vmatprep.subr.bf16.mxu0 0
        %2689 = vmatpush1.bf16.msra.mxu0 %v1886
        %2690 = vmatprep.subr.bf16.mxu0 0
        %2691 = vmatpush1.bf16.msra.mxu0 %v1891
        %2692 = vmatprep.mubr.bf16.mxu0 %v825
        %2693 = vmatmul.mubr.bf16.gmra.mrb[0].mxu0 %v824
        %v2694 = vpop.f32.mrb[0].mxu0
        %v2695 = vadd.f32 %v2655, %v2694
        %v2696 = vpop.f32.mrb[0].mxu0
        %v2697 = vpop.f32.mrb[0].mxu0
        %v2698 = vpop.f32.mrb[0].mxu0
        %2699 = vdwg.mxu0
        %2700 = vmatprep.subr.bf16.mxu0 0
        %2701 = vmatpush1.bf16.msra.mxu0 %v1896
        %2702 = vmatprep.subr.bf16.mxu0 0
        %2703 = vmatpush1.bf16.msra.mxu0 %v1901
        %2704 = vmatprep.subr.bf16.mxu0 0
        %2705 = vmatpush1.bf16.msra.mxu0 %v1906
        %2706 = vmatprep.subr.bf16.mxu0 0
        %2707 = vmatpush1.bf16.msra.mxu0 %v1911
        %2708 = vmatprep.subr.bf16.mxu0 0
        %2709 = vmatpush1.bf16.msra.mxu0 %v1916
        %2710 = vmatprep.subr.bf16.mxu0 0
        %2711 = vmatpush1.bf16.msra.mxu0 %v1921
        %2712 = vmatprep.subr.bf16.mxu0 0
        %2713 = vmatpush1.bf16.msra.mxu0 %v1926
        %2714 = vmatprep.subr.bf16.mxu0 0
        %2715 = vmatpush1.bf16.msra.mxu0 %v1931
        %2716 = vmatprep.subr.bf16.mxu0 0
        %2717 = vmatpush1.bf16.msra.mxu0 %v1936
        %2718 = vmatprep.subr.bf16.mxu0 0
        %2719 = vmatpush1.bf16.msra.mxu0 %v1941
        %2720 = vmatprep.subr.bf16.mxu0 0
        %2721 = vmatpush1.bf16.msra.mxu0 %v1946
        %2722 = vmatprep.subr.bf16.mxu0 0
        %2723 = vmatpush1.bf16.msra.mxu0 %v1951
        %2724 = vmatprep.subr.bf16.mxu0 0
        %2725 = vmatpush1.bf16.msra.mxu0 %v1956
        %2726 = vmatprep.subr.bf16.mxu0 0
        %2727 = vmatpush1.bf16.msra.mxu0 %v1961
        %2728 = vmatprep.subr.bf16.mxu0 0
        %2729 = vmatpush1.bf16.msra.mxu0 %v1966
        %2730 = vmatprep.subr.bf16.mxu0 0
        %2731 = vmatpush1.bf16.msra.mxu0 %v1971
        %2732 = vmatprep.mubr.bf16.mxu0 %v827
        %2733 = vmatmul.mubr.bf16.gmra.mrb[0].mxu0 %v826
        %v2734 = vpop.f32.mrb[0].mxu0
        %v2735 = vadd.f32 %v2695, %v2734
        %v2736 = vpop.f32.mrb[0].mxu0
        %v2737 = vpop.f32.mrb[0].mxu0
        %v2738 = vpop.f32.mrb[0].mxu0
        %2739 = vdwg.mxu0
        %2740 = vmatprep.subr.bf16.mxu0 0
        %2741 = vmatpush1.bf16.msra.mxu0 %v1976
        %2742 = vmatprep.subr.bf16.mxu0 0
        %2743 = vmatpush1.bf16.msra.mxu0 %v1981
        %2744 = vmatprep.subr.bf16.mxu0 0
        %2745 = vmatpush1.bf16.msra.mxu0 %v1986
        %2746 = vmatprep.subr.bf16.mxu0 0
        %2747 = vmatpush1.bf16.msra.mxu0 %v1991
        %2748 = vmatprep.subr.bf16.mxu0 0
        %2749 = vmatpush1.bf16.msra.mxu0 %v1996
        %2750 = vmatprep.subr.bf16.mxu0 0
        %2751 = vmatpush1.bf16.msra.mxu0 %v2001
        %2752 = vmatprep.subr.bf16.mxu0 0
        %2753 = vmatpush1.bf16.msra.mxu0 %v2006
        %2754 = vmatprep.subr.bf16.mxu0 0
        %2755 = vmatpush1.bf16.msra.mxu0 %v2011
        %2756 = vmatprep.subr.bf16.mxu0 0
        %2757 = vmatpush1.bf16.msra.mxu0 0
        %2758 = vmatprep.subr.bf16.mxu0 0
        %2759 = vmatpush1.bf16.msra.mxu0 0
        %2760 = vmatprep.subr.bf16.mxu0 0
        %2761 = vmatpush1.bf16.msra.mxu0 0
        %2762 = vmatprep.subr.bf16.mxu0 0
        %2763 = vmatpush1.bf16.msra.mxu0 0
        %2764 = vmatprep.subr.bf16.mxu0 0
        %2765 = vmatpush1.bf16.msra.mxu0 0
        %2766 = vmatprep.subr.bf16.mxu0 0
        %2767 = vmatpush1.bf16.msra.mxu0 0
        %2768 = vmatprep.subr.bf16.mxu0 0
        %2769 = vmatpush1.bf16.msra.mxu0 0
        %2770 = vmatprep.subr.bf16.mxu0 0
        %2771 = vmatpush1.bf16.msra.mxu0 0
        %2772 = vmatprep.mubr.bf16.mxu0 0
        %2773 = vmatmul.mubr.bf16.gmra.mrb[0].mxu0 %v828
        %v2774 = vpop.f32.mrb[0].mxu0
        %v2775 = vadd.f32 %v2735, %v2774
        %v2776 = vpop.f32.mrb[0].mxu0
        %v2777 = vpop.f32.mrb[0].mxu0
        %v2778 = vpop.f32.mrb[0].mxu0
        %2779 = vdwg.mxu0
        %v2780 = vrot.slane %v2450, 4
        %v2781 = vadd.f32 %v2450, %v2780
        %v2782 = vrot.slane %v2781, 2
        %v2783 = vadd.f32 %v2781, %v2782
        %v2784 = vrot.slane %v2783, 1
        %v2785 = vadd.f32 %v2783, %v2784
        %v2786 = vrot.slane %v2452, 4
        %v2787 = vadd.f32 %v2452, %v2786
        %v2788 = vrot.slane %v2787, 2
        %v2789 = vadd.f32 %v2787, %v2788
        %v2790 = vrot.slane %v2789, 1
        %v2791 = vadd.f32 %v2789, %v2790
        %v2792 = vrot.slane %v2614, 4
        %v2793 = vadd.f32 %v2614, %v2792
        %v2794 = vrot.slane %v2793, 2
        %v2795 = vadd.f32 %v2793, %v2794
        %v2796 = vrot.slane %v2795, 1
        %v2797 = vadd.f32 %v2795, %v2796
        %v2798 = vrot.slane %v2616, 4
        %v2799 = vadd.f32 %v2616, %v2798
        %v2800 = vrot.slane %v2799, 2
        %v2801 = vadd.f32 %v2799, %v2800
        %v2802 = vrot.slane %v2801, 1
        %v2803 = vadd.f32 %v2801, %v2802
        %v2804 = vrot.slane %v2775, 4
        %v2805 = vadd.f32 %v2775, %v2804
        %v2806 = vrot.slane %v2805, 2
        %v2807 = vadd.f32 %v2805, %v2806
        %v2808 = vrot.slane %v2807, 1
        %v2809 = vadd.f32 %v2807, %v2808
        %v2810 = vrcp.pop 8.0
        %v2811 = vmul.f32 %v2785, %v2810
        %v2812 = vmul.f32 %v2791, %v2810
        %v2813 = vmul.f32 %v2797, %v2810
        %v2814 = vmul.f32 %v2803, %v2810
        %v2815 = vmul.f32 %v2809, %v2810
        %v2816 = vsub.f32 %v2450, %v2811
        %v2817 = vsub.f32 %v2452, %v2812
        %v2818 = vsub.f32 %v2614, %v2813
        %v2819 = vsub.f32 %v2616, %v2814
        %v2820 = vsub.f32 %v2775, %v2815
        %v2821 = vmul.f32 %v2816, %v2816
        %v2822 = vmul.f32 %v2817, %v2817
        %v2823 = vmul.f32 %v2818, %v2818
        %v2824 = vmul.f32 %v2819, %v2819
        %v2825 = vmul.f32 %v2820, %v2820
        %v2826 = vrot.slane %v2821, 4
        %v2827 = vadd.f32 %v2821, %v2826
        %v2828 = vrot.slane %v2827, 2
        %v2829 = vadd.f32 %v2827, %v2828
        %v2830 = vrot.slane %v2829, 1
        %v2831 = vadd.f32 %v2829, %v2830
        %v2832 = vrot.slane %v2822, 4
        %v2833 = vadd.f32 %v2822, %v2832
        %v2834 = vrot.slane %v2833, 2
        %v2835 = vadd.f32 %v2833, %v2834
        %v2836 = vrot.slane %v2835, 1
        %v2837 = vadd.f32 %v2835, %v2836
        %v2838 = vrot.slane %v2823, 4
        %v2839 = vadd.f32 %v2823, %v2838
        %v2840 = vrot.slane %v2839, 2
        %v2841 = vadd.f32 %v2839, %v2840
        %v2842 = vrot.slane %v2841, 1
        %v2843 = vadd.f32 %v2841, %v2842
        %v2844 = vrot.slane %v2824, 4
        %v2845 = vadd.f32 %v2824, %v2844
        %v2846 = vrot.slane %v2845, 2
        %v2847 = vadd.f32 %v2845, %v2846
        %v2848 = vrot.slane %v2847, 1
        %v2849 = vadd.f32 %v2847, %v2848
        %v2850 = vrot.slane %v2825, 4
        %v2851 = vadd.f32 %v2825, %v2850
        %v2852 = vrot.slane %v2851, 2
        %v2853 = vadd.f32 %v2851, %v2852
        %v2854 = vrot.slane %v2853, 1
        %v2855 = vadd.f32 %v2853, %v2854
        %v2856 = vmul.f32 %v2831, %v2810
        %v2857 = vmul.f32 %v2837, %v2810
        %v2858 = vmul.f32 %v2843, %v2810
        %v2859 = vmul.f32 %v2849, %v2810
        %v2860 = vmul.f32 %v2855, %v2810
        %v2861 = vld [vmem:[#allocation10] ss:$8 sm:$0xf]
        %v2862 = vld [vmem:[#allocation10] ss:$8 sm:$0x10]
        %v2863 = vor.u32 %v2861, %v2862
        %s2864 = scalar_lea.vmem [#allocation10], 1
        %v2865 = vld [vmem:[%s2864] ss:$8 sm:$0xf]
        %v2866 = vld [vmem:[%s2864] ss:$8 sm:$0x10]
        %v2867 = vor.u32 %v2865, %v2866
        %v2868 = vadd.f32 %v2856, 1e-05
        %v2869 = vadd.f32 %v2857, 1e-05
        %v2870 = vadd.f32 %v2858, 1e-05
        %v2871 = vadd.f32 %v2859, 1e-05
        %v2872 = vadd.f32 %v2860, 1e-05
        %v2873 = vrsqrt.pop %v2868
        %v2874 = vrsqrt.pop %v2869
        %v2875 = vrsqrt.pop %v2870
        %v2876 = vrsqrt.pop %v2871
        %v2877 = vrsqrt.pop %v2872
        %v2883 = vcombine.low %v2873, %v2874
        %v2884 = vcombine.low %v2875, %v2876
        %v2886 = vunpack.c.l.s4 1966171168
        %v2887 = vunpack.c.0.s8 %v2886
        %v2888 = vlaneseq
        %v2889 = vshrl.u32 %v2888, 7
        %v2890 = vsub.s32 %v2887, %v2889
        %v2891 = vrot.slane %v2883, %v2890
        %v2893 = vunpack.c.l.s4 1966171168
        %v2894 = vunpack.c.0.s8 %v2893
        %v2895 = vlaneseq
        %v2896 = vshrl.u32 %v2895, 7
        %v2897 = vsub.s32 %v2894, %v2896
        %v2898 = vrot.slane %v2884, %v2897
        %v2900 = vunpack.c.l.s4 1966171168
        %v2901 = vunpack.c.0.s8 %v2900
        %v2902 = vlaneseq
        %v2903 = vshrl.u32 %v2902, 7
        %v2904 = vsub.s32 %v2901, %v2903
        %v2905 = vrot.slane %v2877, %v2904
        %v2906 = vcombine.low %v2891, %v2898
        %v2908 = vunpack.c.l.s4 1966171168
        %v2909 = vunpack.c.0.s8 %v2908
        %v2910 = vlaneseq
        %v2911 = vshrl.u32 %v2910, 7
        %v2912 = vsub.s32 %v2909, %v2911
        %v2913 = vrot.slane %v2906, %v2912
        %v2915 = vunpack.c.l.s4 1966171168
        %v2916 = vunpack.c.0.s8 %v2915
        %v2917 = vlaneseq
        %v2918 = vshrl.u32 %v2917, 7
        %v2919 = vsub.s32 %v2916, %v2918
        %v2920 = vrot.slane %v2905, %v2919
        %v2921 = vcombine.low %v2913, %v2920
        %v2923 = vmul.f32 %v2863, %v2921
        %v2925 = vlaneseq
        %v2926 = vshrl.u32 %v2925, 7
        %v2927 = vsub.s32 0, %v2926
        %v2928 = vrot.slane %v2923, %v2927
        %v2929 = vlaneseq
        %v2930 = vshrl.u32 %v2929, 7
        %v2931 = vsub.s32 1, %v2930
        %v2932 = vrot.slane %v2923, %v2931
        %v2933 = vlaneseq
        %v2934 = vshrl.u32 %v2933, 7
        %v2935 = vsub.s32 2, %v2934
        %v2936 = vrot.slane %v2923, %v2935
        %v2937 = vlaneseq
        %v2938 = vshrl.u32 %v2937, 7
        %v2939 = vsub.s32 3, %v2938
        %v2940 = vrot.slane %v2923, %v2939
        %v2941 = vlaneseq
        %v2942 = vshrl.u32 %v2941, 7
        %v2943 = vsub.s32 4, %v2942
        %v2944 = vrot.slane %v2923, %v2943
        %v2950 = vmul.f32 %v2811, %v2928
        %v2951 = vmul.f32 %v2812, %v2932
        %v2952 = vmul.f32 %v2813, %v2936
        %v2953 = vmul.f32 %v2814, %v2940
        %v2954 = vmul.f32 %v2815, %v2944
        %v2960 = vcombine.low %v2950, %v2951
        %v2961 = vcombine.low %v2952, %v2953
        %v2963 = vunpack.c.l.s4 1966171168
        %v2964 = vunpack.c.0.s8 %v2963
        %v2965 = vlaneseq
        %v2966 = vshrl.u32 %v2965, 7
        %v2967 = vsub.s32 %v2964, %v2966
        %v2968 = vrot.slane %v2960, %v2967
        %v2970 = vunpack.c.l.s4 1966171168
        %v2971 = vunpack.c.0.s8 %v2970
        %v2972 = vlaneseq
        %v2973 = vshrl.u32 %v2972, 7
        %v2974 = vsub.s32 %v2971, %v2973
        %v2975 = vrot.slane %v2961, %v2974
        %v2977 = vunpack.c.l.s4 1966171168
        %v2978 = vunpack.c.0.s8 %v2977
        %v2979 = vlaneseq
        %v2980 = vshrl.u32 %v2979, 7
        %v2981 = vsub.s32 %v2978, %v2980
        %v2982 = vrot.slane %v2954, %v2981
        %v2983 = vcombine.low %v2968, %v2975
        %v2985 = vunpack.c.l.s4 1966171168
        %v2986 = vunpack.c.0.s8 %v2985
        %v2987 = vlaneseq
        %v2988 = vshrl.u32 %v2987, 7
        %v2989 = vsub.s32 %v2986, %v2988
        %v2990 = vrot.slane %v2983, %v2989
        %v2992 = vunpack.c.l.s4 1966171168
        %v2993 = vunpack.c.0.s8 %v2992
        %v2994 = vlaneseq
        %v2995 = vshrl.u32 %v2994, 7
        %v2996 = vsub.s32 %v2993, %v2995
        %v2997 = vrot.slane %v2982, %v2996
        %v2998 = vcombine.low %v2990, %v2997
        %v3000 = vsub.f32 %v2867, %v2998
        %v3001 = vmul.f32 %v2450, %v2928
        %v3002 = vmul.f32 %v2452, %v2932
        %v3003 = vmul.f32 %v2614, %v2936
        %v3004 = vmul.f32 %v2616, %v2940
        %v3005 = vmul.f32 %v2775, %v2944
        %v3007 = vlaneseq
        %v3008 = vshrl.u32 %v3007, 7
        %v3009 = vsub.s32 0, %v3008
        %v3010 = vrot.slane %v3000, %v3009
        %v3011 = vlaneseq
        %v3012 = vshrl.u32 %v3011, 7
        %v3013 = vsub.s32 1, %v3012
        %v3014 = vrot.slane %v3000, %v3013
        %v3015 = vlaneseq
        %v3016 = vshrl.u32 %v3015, 7
        %v3017 = vsub.s32 2, %v3016
        %v3018 = vrot.slane %v3000, %v3017
        %v3019 = vlaneseq
        %v3020 = vshrl.u32 %v3019, 7
        %v3021 = vsub.s32 3, %v3020
        %v3022 = vrot.slane %v3000, %v3021
        %v3023 = vlaneseq
        %v3024 = vshrl.u32 %v3023, 7
        %v3025 = vsub.s32 4, %v3024
        %v3026 = vrot.slane %v3000, %v3025
        %v3032 = vadd.f32 %v3001, %v3010
        %v3033 = vadd.f32 %v3002, %v3014
        %v3034 = vadd.f32 %v3003, %v3018
        %v3035 = vadd.f32 %v3004, %v3022
        %v3036 = vadd.f32 %v3005, %v3026
        %vm3037 = vcmp.ge.f32.partialorder %v3032, 0.0
        %vm3038 = vcmp.ge.f32.partialorder %v3033, 0.0
        %vm3039 = vcmp.ge.f32.partialorder %v3034, 0.0
        %vm3040 = vcmp.ge.f32.partialorder %v3035, 0.0
        %vm3041 = vcmp.ge.f32.partialorder %v3036, 0.0
        %v3042 = vmul.f32 %v3032, 0.01
        %v3043 = vmul.f32 %v3033, 0.01
        %v3044 = vmul.f32 %v3034, 0.01
        %v3045 = vmul.f32 %v3035, 0.01
        %v3046 = vmul.f32 %v3036, 0.01
        %v3047 = vsel %vm3037, %v3032, %v3042
        %v3048 = vsel %vm3038, %v3033, %v3043
        %v3049 = vsel %vm3039, %v3034, %v3044
        %v3050 = vsel %vm3040, %v3035, %v3045
        %v3051 = vsel %vm3041, %v3036, %v3046
        %v3052 = vpack.c.bf16 %v3047, %v3047
        %v3053 = vpack.c.bf16 %v3048, %v3048
        %v3054 = vpack.c.bf16 %v3049, %v3049
        %v3055 = vpack.c.bf16 %v3050, %v3050
        %v3056 = vpack.c.bf16 %v3051, %v3051
        // Predicated region
        $region49: #{autoencoder_forward_stacked.1} parent=31 // pred_check
          %p3057 = pneg %p245
        $region50: #{autoencoder_forward_stacked.1} parent=31 // pred_check_branch
          %3059 = sbr.rel (%p3057) target = $region52
        $region51: #{autoencoder_forward_stacked.1} parent=31 // pred_region
          %s3060 = smul.u32 4, 80
          %s3061 = smul.u32 %s3060, 4
          %s3062 = sshll.u32 %s3061, 4
          %3063 = dma.done [#allocation9], %s3062
        $region52: #{autoencoder_forward_stacked.1} parent=31 // pred_fallthru
          _
        %v3064 = vld [vmem:[#allocation2] sm:$0xff]
        %v3065 = vld [vmem:[#allocation2 + $0x8] sm:$0xff]
        %v3066 = vld [vmem:[#allocation2 + $0x10] sm:$0xff]
        %v3067 = vld [vmem:[#allocation2 + $0x18] sm:$0xff]
        %v3068 = vld [vmem:[#allocation2 + $0x20] sm:$0xff]
        %v3069 = vld [vmem:[#allocation2 + $0x28] sm:$0xff]
        %v3070 = vld [vmem:[#allocation2 + $0x30] sm:$0xff]
        %v3071 = vld [vmem:[#allocation2 + $0x38] sm:$0xff]
        %v3072 = vld [vmem:[#allocation2 + $0x40] sm:$0xff]
        %v3073 = vld [vmem:[#allocation2 + $0x48] sm:$0xff]
        %v3074 = vld [vmem:[#allocation2 + $0x50] sm:$0xff]
        %v3075 = vld [vmem:[#allocation2 + $0x58] sm:$0xff]
        %v3076 = vld [vmem:[#allocation2 + $0x60] sm:$0xff]
        %v3077 = vld [vmem:[#allocation2 + $0x68] sm:$0xff]
        %v3078 = vld [vmem:[#allocation2 + $0x70] sm:$0xff]
        %v3079 = vld [vmem:[#allocation2 + $0x78] sm:$0xff]
        %v3080 = vld [vmem:[#allocation2 + $0x80] sm:$0xff]
        %v3081 = vld [vmem:[#allocation2 + $0x88] sm:$0xff]
        %v3082 = vld [vmem:[#allocation2 + $0x90] sm:$0xff]
        %v3083 = vld [vmem:[#allocation2 + $0x98] sm:$0xff]
        %v3084 = vld [vmem:[#allocation2 + $0xa0] sm:$0xff]
        %v3085 = vld [vmem:[#allocation2 + $0xa8] sm:$0xff]
        %v3086 = vld [vmem:[#allocation2 + $0xb0] sm:$0xff]
        %v3087 = vld [vmem:[#allocation2 + $0xb8] sm:$0xff]
        %v3088 = vld [vmem:[#allocation2 + $0xc0] sm:$0xff]
        %v3089 = vld [vmem:[#allocation2 + $0xc8] sm:$0xff]
        %v3090 = vld [vmem:[#allocation2 + $0xd0] sm:$0xff]
        %v3091 = vld [vmem:[#allocation2 + $0xd8] sm:$0xff]
        %v3092 = vld [vmem:[#allocation2 + $0xe0] sm:$0xff]
        %v3093 = vld [vmem:[#allocation2 + $0xe8] sm:$0xff]
        %v3094 = vld [vmem:[#allocation2 + $0xf0] sm:$0xff]
        %v3095 = vld [vmem:[#allocation2 + $0xf8] sm:$0xff]
        %v3096 = vld [vmem:[#allocation2 + $0x100] sm:$0xff]
        %v3097 = vld [vmem:[#allocation2 + $0x108] sm:$0xff]
        %v3098 = vld [vmem:[#allocation2 + $0x110] sm:$0xff]
        %v3099 = vld [vmem:[#allocation2 + $0x118] sm:$0xff]
        %v3100 = vld [vmem:[#allocation2 + $0x120] sm:$0xff]
        %v3101 = vld [vmem:[#allocation2 + $0x128] sm:$0xff]
        %v3102 = vld [vmem:[#allocation2 + $0x130] sm:$0xff]
        %v3103 = vld [vmem:[#allocation2 + $0x138] sm:$0xff]
        %v3104 = vld [vmem:[#allocation2 + $0x140] sm:$0xff]
        %v3105 = vld [vmem:[#allocation2 + $0x148] sm:$0xff]
        %v3106 = vld [vmem:[#allocation2 + $0x150] sm:$0xff]
        %v3107 = vld [vmem:[#allocation2 + $0x158] sm:$0xff]
        %v3108 = vld [vmem:[#allocation2 + $0x160] sm:$0xff]
        %v3109 = vld [vmem:[#allocation2 + $0x168] sm:$0xff]
        %v3110 = vld [vmem:[#allocation2 + $0x170] sm:$0xff]
        %v3111 = vld [vmem:[#allocation2 + $0x178] sm:$0xff]
        %v3112 = vld [vmem:[#allocation2 + $0x180] sm:$0xff]
        %v3113 = vld [vmem:[#allocation2 + $0x188] sm:$0xff]
        %v3114 = vld [vmem:[#allocation2 + $0x190] sm:$0xff]
        %v3115 = vld [vmem:[#allocation2 + $0x198] sm:$0xff]
        %v3116 = vld [vmem:[#allocation2 + $0x1a0] sm:$0xff]
        %v3117 = vld [vmem:[#allocation2 + $0x1a8] sm:$0xff]
        %v3118 = vld [vmem:[#allocation2 + $0x1b0] sm:$0xff]
        %v3119 = vld [vmem:[#allocation2 + $0x1b8] sm:$0xff]
        %v3120 = vld [vmem:[#allocation2 + $0x1c0] sm:$0xff]
        %v3121 = vld [vmem:[#allocation2 + $0x1c8] sm:$0xff]
        %v3122 = vld [vmem:[#allocation2 + $0x1d0] sm:$0xff]
        %v3123 = vld [vmem:[#allocation2 + $0x1d8] sm:$0xff]
        %v3124 = vld [vmem:[#allocation2 + $0x1e0] sm:$0xff]
        %v3125 = vld [vmem:[#allocation2 + $0x1e8] sm:$0xff]
        %v3126 = vld [vmem:[#allocation2 + $0x1f0] sm:$0xff]
        %v3127 = vld [vmem:[#allocation2 + $0x1f8] sm:$0xff]
        %v3128 = vld [vmem:[#allocation2 + $0x200] sm:$0xff]
        %v3129 = vld [vmem:[#allocation2 + $0x208] sm:$0xff]
        %v3130 = vld [vmem:[#allocation2 + $0x210] sm:$0xff]
        %v3131 = vld [vmem:[#allocation2 + $0x218] sm:$0xff]
        %v3132 = vld [vmem:[#allocation2 + $0x220] sm:$0xff]
        %v3133 = vld [vmem:[#allocation2 + $0x228] sm:$0xff]
        %v3134 = vld [vmem:[#allocation2 + $0x230] sm:$0xff]
        %v3135 = vld [vmem:[#allocation2 + $0x238] sm:$0xff]
        %v3136 = vld [vmem:[#allocation2 + $0x240] sm:$0xff]
        %v3137 = vld [vmem:[#allocation2 + $0x248] sm:$0xff]
        %v3138 = vld [vmem:[#allocation2 + $0x250] sm:$0xff]
        %v3139 = vld [vmem:[#allocation2 + $0x258] sm:$0xff]
        %v3140 = vld [vmem:[#allocation2 + $0x260] sm:$0xff]
        %v3141 = vld [vmem:[#allocation2 + $0x268] sm:$0xff]
        %v3142 = vld [vmem:[#allocation2 + $0x270] sm:$0xff]
        %v3143 = vld [vmem:[#allocation2 + $0x278] sm:$0xff]
        %v3144 = vld [vmem:[#allocation2 + $0x280] sm:$0xff]
        %v3145 = vld [vmem:[#allocation2 + $0x288] sm:$0xff]
        %v3146 = vld [vmem:[#allocation2 + $0x290] sm:$0xff]
        %v3147 = vld [vmem:[#allocation2 + $0x298] sm:$0xff]
        %v3148 = vld [vmem:[#allocation2 + $0x2a0] sm:$0xff]
        %v3149 = vld [vmem:[#allocation2 + $0x2a8] sm:$0xff]
        %v3150 = vld [vmem:[#allocation2 + $0x2b0] sm:$0xff]
        %v3151 = vld [vmem:[#allocation2 + $0x2b8] sm:$0xff]
        %v3152 = vld [vmem:[#allocation2 + $0x2c0] sm:$0xff]
        %v3153 = vld [vmem:[#allocation2 + $0x2c8] sm:$0xff]
        %v3154 = vld [vmem:[#allocation2 + $0x2d0] sm:$0xff]
        %v3155 = vld [vmem:[#allocation2 + $0x2d8] sm:$0xff]
        %v3156 = vld [vmem:[#allocation2 + $0x2e0] sm:$0xff]
        %v3157 = vld [vmem:[#allocation2 + $0x2e8] sm:$0xff]
        %v3158 = vld [vmem:[#allocation2 + $0x2f0] sm:$0xff]
        %v3159 = vld [vmem:[#allocation2 + $0x2f8] sm:$0xff]
        %v3160 = vld [vmem:[#allocation2 + $0x300] sm:$0xff]
        %v3161 = vld [vmem:[#allocation2 + $0x308] sm:$0xff]
        %v3162 = vld [vmem:[#allocation2 + $0x310] sm:$0xff]
        %v3163 = vld [vmem:[#allocation2 + $0x318] sm:$0xff]
        %v3164 = vld [vmem:[#allocation2 + $0x320] sm:$0xff]
        %v3165 = vld [vmem:[#allocation2 + $0x328] sm:$0xff]
        %v3166 = vld [vmem:[#allocation2 + $0x330] sm:$0xff]
        %v3167 = vld [vmem:[#allocation2 + $0x338] sm:$0xff]
        %v3168 = vld [vmem:[#allocation2 + $0x340] sm:$0xff]
        %v3169 = vld [vmem:[#allocation2 + $0x348] sm:$0xff]
        %v3170 = vld [vmem:[#allocation2 + $0x350] sm:$0xff]
        %v3171 = vld [vmem:[#allocation2 + $0x358] sm:$0xff]
        %v3172 = vld [vmem:[#allocation2 + $0x360] sm:$0xff]
        %v3173 = vld [vmem:[#allocation2 + $0x368] sm:$0xff]
        %v3174 = vld [vmem:[#allocation2 + $0x370] sm:$0xff]
        %v3175 = vld [vmem:[#allocation2 + $0x378] sm:$0xff]
        %v3176 = vld [vmem:[#allocation2 + $0x380] sm:$0xff]
        %v3177 = vld [vmem:[#allocation2 + $0x388] sm:$0xff]
        %v3178 = vld [vmem:[#allocation2 + $0x390] sm:$0xff]
        %v3179 = vld [vmem:[#allocation2 + $0x398] sm:$0xff]
        %v3180 = vld [vmem:[#allocation2 + $0x3a0] sm:$0xff]
        %v3181 = vld [vmem:[#allocation2 + $0x3a8] sm:$0xff]
        %v3182 = vld [vmem:[#allocation2 + $0x3b0] sm:$0xff]
        %v3183 = vld [vmem:[#allocation2 + $0x3b8] sm:$0xff]
        %v3184 = vld [vmem:[#allocation2 + $0x3c0] sm:$0xff]
        %v3185 = vld [vmem:[#allocation2 + $0x3c8] sm:$0xff]
        %v3186 = vld [vmem:[#allocation2 + $0x3d0] sm:$0xff]
        %v3187 = vld [vmem:[#allocation2 + $0x3d8] sm:$0xff]
        %v3188 = vld [vmem:[#allocation2 + $0x3e0] sm:$0xff]
        %v3189 = vld [vmem:[#allocation2 + $0x3e8] sm:$0xff]
        %v3190 = vld [vmem:[#allocation2 + $0x3f0] sm:$0xff]
        %v3191 = vld [vmem:[#allocation2 + $0x3f8] sm:$0xff]
        %v3192 = vld [vmem:[#allocation2 + $0x400] sm:$0xff]
        %v3193 = vld [vmem:[#allocation2 + $0x408] sm:$0xff]
        %v3194 = vld [vmem:[#allocation2 + $0x410] sm:$0xff]
        %v3195 = vld [vmem:[#allocation2 + $0x418] sm:$0xff]
        %v3196 = vld [vmem:[#allocation2 + $0x420] sm:$0xff]
        %v3197 = vld [vmem:[#allocation2 + $0x428] sm:$0xff]
        %v3198 = vld [vmem:[#allocation2 + $0x430] sm:$0xff]
        %v3199 = vld [vmem:[#allocation2 + $0x438] sm:$0xff]
        %v3200 = vld [vmem:[#allocation2 + $0x440] sm:$0xff]
        %v3201 = vld [vmem:[#allocation2 + $0x448] sm:$0xff]
        %v3202 = vld [vmem:[#allocation2 + $0x450] sm:$0xff]
        %v3203 = vld [vmem:[#allocation2 + $0x458] sm:$0xff]
        %v3204 = vld [vmem:[#allocation2 + $0x460] sm:$0xff]
        %v3205 = vld [vmem:[#allocation2 + $0x468] sm:$0xff]
        %v3206 = vld [vmem:[#allocation2 + $0x470] sm:$0xff]
        %v3207 = vld [vmem:[#allocation2 + $0x478] sm:$0xff]
        %v3208 = vld [vmem:[#allocation2 + $0x480] sm:$0xff]
        %v3209 = vld [vmem:[#allocation2 + $0x488] sm:$0xff]
        %v3210 = vld [vmem:[#allocation2 + $0x490] sm:$0xff]
        %v3211 = vld [vmem:[#allocation2 + $0x498] sm:$0xff]
        %v3212 = vld [vmem:[#allocation2 + $0x4a0] sm:$0xff]
        %v3213 = vld [vmem:[#allocation2 + $0x4a8] sm:$0xff]
        %v3214 = vld [vmem:[#allocation2 + $0x4b0] sm:$0xff]
        %v3215 = vld [vmem:[#allocation2 + $0x4b8] sm:$0xff]
        %v3216 = vld [vmem:[#allocation2 + $0x4c0] sm:$0xff]
        %v3217 = vld [vmem:[#allocation2 + $0x4c8] sm:$0xff]
        %v3218 = vld [vmem:[#allocation2 + $0x4d0] sm:$0xff]
        %v3219 = vld [vmem:[#allocation2 + $0x4d8] sm:$0xff]
        %v3220 = vld [vmem:[#allocation2 + $0x4e0] sm:$0xff]
        %v3221 = vld [vmem:[#allocation2 + $0x4e8] sm:$0xff]
        %v3222 = vld [vmem:[#allocation2 + $0x4f0] sm:$0xff]
        %v3223 = vld [vmem:[#allocation2 + $0x4f8] sm:$0xff]
        %3224 = vmatprep.subr.bf16.mxu0 %v3065
        %3225 = vmatpush1.bf16.msra.mxu0 %v3064
        %3226 = vmatprep.subr.bf16.mxu0 %v3069
        %3227 = vmatpush1.bf16.msra.mxu0 %v3068
        %3228 = vmatprep.subr.bf16.mxu0 %v3073
        %3229 = vmatpush1.bf16.msra.mxu0 %v3072
        %3230 = vmatprep.subr.bf16.mxu0 %v3077
        %3231 = vmatpush1.bf16.msra.mxu0 %v3076
        %3232 = vmatprep.subr.bf16.mxu0 %v3081
        %3233 = vmatpush1.bf16.msra.mxu0 %v3080
        %3234 = vmatprep.subr.bf16.mxu0 %v3085
        %3235 = vmatpush1.bf16.msra.mxu0 %v3084
        %3236 = vmatprep.subr.bf16.mxu0 %v3089
        %3237 = vmatpush1.bf16.msra.mxu0 %v3088
        %3238 = vmatprep.subr.bf16.mxu0 %v3093
        %3239 = vmatpush1.bf16.msra.mxu0 %v3092
        %3240 = vmatprep.subr.bf16.mxu0 %v3097
        %3241 = vmatpush1.bf16.msra.mxu0 %v3096
        %3242 = vmatprep.subr.bf16.mxu0 %v3101
        %3243 = vmatpush1.bf16.msra.mxu0 %v3100
        %3244 = vmatprep.subr.bf16.mxu0 %v3105
        %3245 = vmatpush1.bf16.msra.mxu0 %v3104
        %3246 = vmatprep.subr.bf16.mxu0 %v3109
        %3247 = vmatpush1.bf16.msra.mxu0 %v3108
        %3248 = vmatprep.subr.bf16.mxu0 %v3113
        %3249 = vmatpush1.bf16.msra.mxu0 %v3112
        %3250 = vmatprep.subr.bf16.mxu0 %v3117
        %3251 = vmatpush1.bf16.msra.mxu0 %v3116
        %3252 = vmatprep.subr.bf16.mxu0 %v3121
        %3253 = vmatpush1.bf16.msra.mxu0 %v3120
        %3254 = vmatprep.subr.bf16.mxu0 %v3125
        %3255 = vmatpush1.bf16.msra.mxu0 %v3124
        %3256 = vmatprep.mubr.bf16.mxu0 %v3053
        %3257 = vmatmul.mubr.bf16.gmra.mrb[0].mxu0 %v3052
        %v3258 = vpop.f32.mrb[0].mxu0
        %v3259 = vadd.f32 0.0, %v3258
        %v3260 = vpop.f32.mrb[0].mxu0
        %v3261 = vadd.f32 0.0, %v3260
        %v3262 = vpop.f32.mrb[0].mxu0
        %v3263 = vpop.f32.mrb[0].mxu0
        %3264 = vdwg.mxu0
        %3265 = vmatprep.subr.bf16.mxu0 %v3129
        %3266 = vmatpush1.bf16.msra.mxu0 %v3128
        %3267 = vmatprep.subr.bf16.mxu0 %v3133
        %3268 = vmatpush1.bf16.msra.mxu0 %v3132
        %3269 = vmatprep.subr.bf16.mxu0 %v3137
        %3270 = vmatpush1.bf16.msra.mxu0 %v3136
        %3271 = vmatprep.subr.bf16.mxu0 %v3141
        %3272 = vmatpush1.bf16.msra.mxu0 %v3140
        %3273 = vmatprep.subr.bf16.mxu0 %v3145
        %3274 = vmatpush1.bf16.msra.mxu0 %v3144
        %3275 = vmatprep.subr.bf16.mxu0 %v3149
        %3276 = vmatpush1.bf16.msra.mxu0 %v3148
        %3277 = vmatprep.subr.bf16.mxu0 %v3153
        %3278 = vmatpush1.bf16.msra.mxu0 %v3152
        %3279 = vmatprep.subr.bf16.mxu0 %v3157
        %3280 = vmatpush1.bf16.msra.mxu0 %v3156
        %3281 = vmatprep.subr.bf16.mxu0 %v3161
        %3282 = vmatpush1.bf16.msra.mxu0 %v3160
        %3283 = vmatprep.subr.bf16.mxu0 %v3165
        %3284 = vmatpush1.bf16.msra.mxu0 %v3164
        %3285 = vmatprep.subr.bf16.mxu0 %v3169
        %3286 = vmatpush1.bf16.msra.mxu0 %v3168
        %3287 = vmatprep.subr.bf16.mxu0 %v3173
        %3288 = vmatpush1.bf16.msra.mxu0 %v3172
        %3289 = vmatprep.subr.bf16.mxu0 %v3177
        %3290 = vmatpush1.bf16.msra.mxu0 %v3176
        %3291 = vmatprep.subr.bf16.mxu0 %v3181
        %3292 = vmatpush1.bf16.msra.mxu0 %v3180
        %3293 = vmatprep.subr.bf16.mxu0 %v3185
        %3294 = vmatpush1.bf16.msra.mxu0 %v3184
        %3295 = vmatprep.subr.bf16.mxu0 %v3189
        %3296 = vmatpush1.bf16.msra.mxu0 %v3188
        %3297 = vmatprep.mubr.bf16.mxu0 %v3055
        %3298 = vmatmul.mubr.bf16.gmra.mrb[0].mxu0 %v3054
        %v3299 = vpop.f32.mrb[0].mxu0
        %v3300 = vadd.f32 %v3259, %v3299
        %v3301 = vpop.f32.mrb[0].mxu0
        %v3302 = vadd.f32 %v3261, %v3301
        %v3303 = vpop.f32.mrb[0].mxu0
        %v3304 = vpop.f32.mrb[0].mxu0
        %3305 = vdwg.mxu0
        %3306 = vmatprep.subr.bf16.mxu0 %v3193
        %3307 = vmatpush1.bf16.msra.mxu0 %v3192
        %3308 = vmatprep.subr.bf16.mxu0 %v3197
        %3309 = vmatpush1.bf16.msra.mxu0 %v3196
        %3310 = vmatprep.subr.bf16.mxu0 %v3201
        %3311 = vmatpush1.bf16.msra.mxu0 %v3200
        %3312 = vmatprep.subr.bf16.mxu0 %v3205
        %3313 = vmatpush1.bf16.msra.mxu0 %v3204
        %3314 = vmatprep.subr.bf16.mxu0 %v3209
        %3315 = vmatpush1.bf16.msra.mxu0 %v3208
        %3316 = vmatprep.subr.bf16.mxu0 %v3213
        %3317 = vmatpush1.bf16.msra.mxu0 %v3212
        %3318 = vmatprep.subr.bf16.mxu0 %v3217
        %3319 = vmatpush1.bf16.msra.mxu0 %v3216
        %3320 = vmatprep.subr.bf16.mxu0 %v3221
        %3321 = vmatpush1.bf16.msra.mxu0 %v3220
        %3322 = vmatprep.subr.bf16.mxu0 0
        %3323 = vmatpush1.bf16.msra.mxu0 0
        %3324 = vmatprep.subr.bf16.mxu0 0
        %3325 = vmatpush1.bf16.msra.mxu0 0
        %3326 = vmatprep.subr.bf16.mxu0 0
        %3327 = vmatpush1.bf16.msra.mxu0 0
        %3328 = vmatprep.subr.bf16.mxu0 0
        %3329 = vmatpush1.bf16.msra.mxu0 0
        %3330 = vmatprep.subr.bf16.mxu0 0
        %3331 = vmatpush1.bf16.msra.mxu0 0
        %3332 = vmatprep.subr.bf16.mxu0 0
        %3333 = vmatpush1.bf16.msra.mxu0 0
        %3334 = vmatprep.subr.bf16.mxu0 0
        %3335 = vmatpush1.bf16.msra.mxu0 0
        %3336 = vmatprep.subr.bf16.mxu0 0
        %3337 = vmatpush1.bf16.msra.mxu0 0
        %3338 = vmatprep.mubr.bf16.mxu0 0
        %3339 = vmatmul.mubr.bf16.gmra.mrb[0].mxu0 %v3056
        %v3340 = vpop.f32.mrb[0].mxu0
        %v3341 = vadd.f32 %v3300, %v3340
        %v3342 = vpop.f32.mrb[0].mxu0
        %v3343 = vadd.f32 %v3302, %v3342
        %v3344 = vpop.f32.mrb[0].mxu0
        %v3345 = vpop.f32.mrb[0].mxu0
        %3346 = vdwg.mxu0
        %3347 = vmatprep.subr.bf16.mxu0 %v3067
        %3348 = vmatpush1.bf16.msra.mxu0 %v3066
        %3349 = vmatprep.subr.bf16.mxu0 %v3071
        %3350 = vmatpush1.bf16.msra.mxu0 %v3070
        %3351 = vmatprep.subr.bf16.mxu0 %v3075
        %3352 = vmatpush1.bf16.msra.mxu0 %v3074
        %3353 = vmatprep.subr.bf16.mxu0 %v3079
        %3354 = vmatpush1.bf16.msra.mxu0 %v3078
        %3355 = vmatprep.subr.bf16.mxu0 %v3083
        %3356 = vmatpush1.bf16.msra.mxu0 %v3082
        %3357 = vmatprep.subr.bf16.mxu0 %v3087
        %3358 = vmatpush1.bf16.msra.mxu0 %v3086
        %3359 = vmatprep.subr.bf16.mxu0 %v3091
        %3360 = vmatpush1.bf16.msra.mxu0 %v3090
        %3361 = vmatprep.subr.bf16.mxu0 %v3095
        %3362 = vmatpush1.bf16.msra.mxu0 %v3094
        %3363 = vmatprep.subr.bf16.mxu0 %v3099
        %3364 = vmatpush1.bf16.msra.mxu0 %v3098
        %3365 = vmatprep.subr.bf16.mxu0 %v3103
        %3366 = vmatpush1.bf16.msra.mxu0 %v3102
        %3367 = vmatprep.subr.bf16.mxu0 %v3107
        %3368 = vmatpush1.bf16.msra.mxu0 %v3106
        %3369 = vmatprep.subr.bf16.mxu0 %v3111
        %3370 = vmatpush1.bf16.msra.mxu0 %v3110
        %3371 = vmatprep.subr.bf16.mxu0 %v3115
        %3372 = vmatpush1.bf16.msra.mxu0 %v3114
        %3373 = vmatprep.subr.bf16.mxu0 %v3119
        %3374 = vmatpush1.bf16.msra.mxu0 %v3118
        %3375 = vmatprep.subr.bf16.mxu0 %v3123
        %3376 = vmatpush1.bf16.msra.mxu0 %v3122
        %3377 = vmatprep.subr.bf16.mxu0 %v3127
        %3378 = vmatpush1.bf16.msra.mxu0 %v3126
        %3379 = vmatprep.mubr.bf16.mxu0 %v3053
        %3380 = vmatmul.mubr.bf16.gmra.mrb[0].mxu0 %v3052
        %v3381 = vpop.f32.mrb[0].mxu0
        %v3382 = vadd.f32 0.0, %v3381
        %v3383 = vpop.f32.mrb[0].mxu0
        %v3384 = vadd.f32 0.0, %v3383
        %v3385 = vpop.f32.mrb[0].mxu0
        %v3386 = vpop.f32.mrb[0].mxu0
        %3387 = vdwg.mxu0
        %3388 = vmatprep.subr.bf16.mxu0 %v3131
        %3389 = vmatpush1.bf16.msra.mxu0 %v3130
        %3390 = vmatprep.subr.bf16.mxu0 %v3135
        %3391 = vmatpush1.bf16.msra.mxu0 %v3134
        %3392 = vmatprep.subr.bf16.mxu0 %v3139
        %3393 = vmatpush1.bf16.msra.mxu0 %v3138
        %3394 = vmatprep.subr.bf16.mxu0 %v3143
        %3395 = vmatpush1.bf16.msra.mxu0 %v3142
        %3396 = vmatprep.subr.bf16.mxu0 %v3147
        %3397 = vmatpush1.bf16.msra.mxu0 %v3146
        %3398 = vmatprep.subr.bf16.mxu0 %v3151
        %3399 = vmatpush1.bf16.msra.mxu0 %v3150
        %3400 = vmatprep.subr.bf16.mxu0 %v3155
        %3401 = vmatpush1.bf16.msra.mxu0 %v3154
        %3402 = vmatprep.subr.bf16.mxu0 %v3159
        %3403 = vmatpush1.bf16.msra.mxu0 %v3158
        %3404 = vmatprep.subr.bf16.mxu0 %v3163
        %3405 = vmatpush1.bf16.msra.mxu0 %v3162
        %3406 = vmatprep.subr.bf16.mxu0 %v3167
        %3407 = vmatpush1.bf16.msra.mxu0 %v3166
        %3408 = vmatprep.subr.bf16.mxu0 %v3171
        %3409 = vmatpush1.bf16.msra.mxu0 %v3170
        %3410 = vmatprep.subr.bf16.mxu0 %v3175
        %3411 = vmatpush1.bf16.msra.mxu0 %v3174
        %3412 = vmatprep.subr.bf16.mxu0 %v3179
        %3413 = vmatpush1.bf16.msra.mxu0 %v3178
        %3414 = vmatprep.subr.bf16.mxu0 %v3183
        %3415 = vmatpush1.bf16.msra.mxu0 %v3182
        %3416 = vmatprep.subr.bf16.mxu0 %v3187
        %3417 = vmatpush1.bf16.msra.mxu0 %v3186
        %3418 = vmatprep.subr.bf16.mxu0 %v3191
        %3419 = vmatpush1.bf16.msra.mxu0 %v3190
        %3420 = vmatprep.mubr.bf16.mxu0 %v3055
        %3421 = vmatmul.mubr.bf16.gmra.mrb[0].mxu0 %v3054
        %v3422 = vpop.f32.mrb[0].mxu0
        %v3423 = vadd.f32 %v3382, %v3422
        %v3424 = vpop.f32.mrb[0].mxu0
        %v3425 = vadd.f32 %v3384, %v3424
        %v3426 = vpop.f32.mrb[0].mxu0
        %v3427 = vpop.f32.mrb[0].mxu0
        %3428 = vdwg.mxu0
        %3429 = vmatprep.subr.bf16.mxu0 %v3195
        %3430 = vmatpush1.bf16.msra.mxu0 %v3194
        %3431 = vmatprep.subr.bf16.mxu0 %v3199
        %3432 = vmatpush1.bf16.msra.mxu0 %v3198
        %3433 = vmatprep.subr.bf16.mxu0 %v3203
        %3434 = vmatpush1.bf16.msra.mxu0 %v3202
        %3435 = vmatprep.subr.bf16.mxu0 %v3207
        %3436 = vmatpush1.bf16.msra.mxu0 %v3206
        %3437 = vmatprep.subr.bf16.mxu0 %v3211
        %3438 = vmatpush1.bf16.msra.mxu0 %v3210
        %3439 = vmatprep.subr.bf16.mxu0 %v3215
        %3440 = vmatpush1.bf16.msra.mxu0 %v3214
        %3441 = vmatprep.subr.bf16.mxu0 %v3219
        %3442 = vmatpush1.bf16.msra.mxu0 %v3218
        %3443 = vmatprep.subr.bf16.mxu0 %v3223
        %3444 = vmatpush1.bf16.msra.mxu0 %v3222
        %3445 = vmatprep.subr.bf16.mxu0 0
        %3446 = vmatpush1.bf16.msra.mxu0 0
        %3447 = vmatprep.subr.bf16.mxu0 0
        %3448 = vmatpush1.bf16.msra.mxu0 0
        %3449 = vmatprep.subr.bf16.mxu0 0
        %3450 = vmatpush1.bf16.msra.mxu0 0
        %3451 = vmatprep.subr.bf16.mxu0 0
        %3452 = vmatpush1.bf16.msra.mxu0 0
        %3453 = vmatprep.subr.bf16.mxu0 0
        %3454 = vmatpush1.bf16.msra.mxu0 0
        %3455 = vmatprep.subr.bf16.mxu0 0
        %3456 = vmatpush1.bf16.msra.mxu0 0
        %3457 = vmatprep.subr.bf16.mxu0 0
        %3458 = vmatpush1.bf16.msra.mxu0 0
        %3459 = vmatprep.subr.bf16.mxu0 0
        %3460 = vmatpush1.bf16.msra.mxu0 0
        %3461 = vmatprep.mubr.bf16.mxu0 0
        %3462 = vmatmul.mubr.bf16.gmra.mrb[0].mxu0 %v3056
        %v3463 = vpop.f32.mrb[0].mxu0
        %v3464 = vadd.f32 %v3423, %v3463
        %v3465 = vpop.f32.mrb[0].mxu0
        %v3466 = vadd.f32 %v3425, %v3465
        %v3467 = vpop.f32.mrb[0].mxu0
        %v3468 = vpop.f32.mrb[0].mxu0
        %3469 = vdwg.mxu0
        %v3470 = vrot.slane %v3341, 4
        %v3471 = vadd.f32 %v3341, %v3470
        %v3472 = vrot.slane %v3471, 2
        %v3473 = vadd.f32 %v3471, %v3472
        %v3474 = vrot.slane %v3473, 1
        %v3475 = vadd.f32 %v3473, %v3474
        %v3476 = vrot.slane %v3343, 4
        %v3477 = vadd.f32 %v3343, %v3476
        %v3478 = vrot.slane %v3477, 2
        %v3479 = vadd.f32 %v3477, %v3478
        %v3480 = vrot.slane %v3479, 1
        %v3481 = vadd.f32 %v3479, %v3480
        %v3482 = vrot.slane %v3464, 4
        %v3483 = vadd.f32 %v3464, %v3482
        %v3484 = vrot.slane %v3483, 2
        %v3485 = vadd.f32 %v3483, %v3484
        %v3486 = vrot.slane %v3485, 1
        %v3487 = vadd.f32 %v3485, %v3486
        %v3488 = vrot.slane %v3466, 4
        %v3489 = vadd.f32 %v3466, %v3488
        %v3490 = vrot.slane %v3489, 2
        %v3491 = vadd.f32 %v3489, %v3490
        %v3492 = vrot.slane %v3491, 1
        %v3493 = vadd.f32 %v3491, %v3492
        %v3494 = vmul.f32 %v3475, %v2810
        %v3495 = vmul.f32 %v3481, %v2810
        %v3496 = vmul.f32 %v3487, %v2810
        %v3497 = vmul.f32 %v3493, %v2810
        %v3498 = vsub.f32 %v3341, %v3494
        %v3499 = vsub.f32 %v3343, %v3495
        %v3500 = vsub.f32 %v3464, %v3496
        %v3501 = vsub.f32 %v3466, %v3497
        %v3502 = vmul.f32 %v3498, %v3498
        %v3503 = vmul.f32 %v3499, %v3499
        %v3504 = vmul.f32 %v3500, %v3500
        %v3505 = vmul.f32 %v3501, %v3501
        %v3506 = vrot.slane %v3502, 4
        %v3507 = vadd.f32 %v3502, %v3506
        %v3508 = vrot.slane %v3507, 2
        %v3509 = vadd.f32 %v3507, %v3508
        %v3510 = vrot.slane %v3509, 1
        %v3511 = vadd.f32 %v3509, %v3510
        %v3512 = vrot.slane %v3503, 4
        %v3513 = vadd.f32 %v3503, %v3512
        %v3514 = vrot.slane %v3513, 2
        %v3515 = vadd.f32 %v3513, %v3514
        %v3516 = vrot.slane %v3515, 1
        %v3517 = vadd.f32 %v3515, %v3516
        %v3518 = vrot.slane %v3504, 4
        %v3519 = vadd.f32 %v3504, %v3518
        %v3520 = vrot.slane %v3519, 2
        %v3521 = vadd.f32 %v3519, %v3520
        %v3522 = vrot.slane %v3521, 1
        %v3523 = vadd.f32 %v3521, %v3522
        %v3524 = vrot.slane %v3505, 4
        %v3525 = vadd.f32 %v3505, %v3524
        %v3526 = vrot.slane %v3525, 2
        %v3527 = vadd.f32 %v3525, %v3526
        %v3528 = vrot.slane %v3527, 1
        %v3529 = vadd.f32 %v3527, %v3528
        %v3530 = vmul.f32 %v3511, %v2810
        %v3531 = vmul.f32 %v3517, %v2810
        %v3532 = vmul.f32 %v3523, %v2810
        %v3533 = vmul.f32 %v3529, %v2810
        %s3534 = scalar_lea.vmem [#allocation10], 2
        %v3535 = vld [vmem:[%s3534] ss:$8 sm:$0xf]
        %s3536 = scalar_lea.vmem [#allocation10], 3
        %v3537 = vld [vmem:[%s3536] ss:$8 sm:$0xf]
        %v3538 = vadd.f32 %v3530, 1e-05
        %v3539 = vadd.f32 %v3531, 1e-05
        %v3540 = vadd.f32 %v3532, 1e-05
        %v3541 = vadd.f32 %v3533, 1e-05
        %v3542 = vrsqrt.pop %v3538
        %v3543 = vrsqrt.pop %v3539
        %v3544 = vrsqrt.pop %v3540
        %v3545 = vrsqrt.pop %v3541
        %v3550 = vcombine.low %v3542, %v3543
        %v3551 = vcombine.low %v3544, %v3545
        %v3553 = vunpack.c.l.s4 1966171168
        %v3554 = vunpack.c.0.s8 %v3553
        %v3555 = vlaneseq
        %v3556 = vshrl.u32 %v3555, 7
        %v3557 = vsub.s32 %v3554, %v3556
        %v3558 = vrot.slane %v3550, %v3557
        %v3560 = vunpack.c.l.s4 1966171168
        %v3561 = vunpack.c.0.s8 %v3560
        %v3562 = vlaneseq
        %v3563 = vshrl.u32 %v3562, 7
        %v3564 = vsub.s32 %v3561, %v3563
        %v3565 = vrot.slane %v3551, %v3564
        %v3566 = vcombine.low %v3558, %v3565
        %v3568 = vunpack.c.l.s4 1966171168
        %v3569 = vunpack.c.0.s8 %v3568
        %v3570 = vlaneseq
        %v3571 = vshrl.u32 %v3570, 7
        %v3572 = vsub.s32 %v3569, %v3571
        %v3573 = vrot.slane %v3566, %v3572
        %v3575 = vmul.f32 %v3535, %v3573
        %v3577 = vlaneseq
        %v3578 = vshrl.u32 %v3577, 7
        %v3579 = vsub.s32 0, %v3578
        %v3580 = vrot.slane %v3575, %v3579
        %v3581 = vlaneseq
        %v3582 = vshrl.u32 %v3581, 7
        %v3583 = vsub.s32 1, %v3582
        %v3584 = vrot.slane %v3575, %v3583
        %v3585 = vlaneseq
        %v3586 = vshrl.u32 %v3585, 7
        %v3587 = vsub.s32 2, %v3586
        %v3588 = vrot.slane %v3575, %v3587
        %v3589 = vlaneseq
        %v3590 = vshrl.u32 %v3589, 7
        %v3591 = vsub.s32 3, %v3590
        %v3592 = vrot.slane %v3575, %v3591
        %v3597 = vmul.f32 %v3494, %v3580
        %v3598 = vmul.f32 %v3495, %v3584
        %v3599 = vmul.f32 %v3496, %v3588
        %v3600 = vmul.f32 %v3497, %v3592
        %v3605 = vcombine.low %v3597, %v3598
        %v3606 = vcombine.low %v3599, %v3600
        %v3608 = vunpack.c.l.s4 1966171168
        %v3609 = vunpack.c.0.s8 %v3608
        %v3610 = vlaneseq
        %v3611 = vshrl.u32 %v3610, 7
        %v3612 = vsub.s32 %v3609, %v3611
        %v3613 = vrot.slane %v3605, %v3612
        %v3615 = vunpack.c.l.s4 1966171168
        %v3616 = vunpack.c.0.s8 %v3615
        %v3617 = vlaneseq
        %v3618 = vshrl.u32 %v3617, 7
        %v3619 = vsub.s32 %v3616, %v3618
        %v3620 = vrot.slane %v3606, %v3619
        %v3621 = vcombine.low %v3613, %v3620
        %v3623 = vunpack.c.l.s4 1966171168
        %v3624 = vunpack.c.0.s8 %v3623
        %v3625 = vlaneseq
        %v3626 = vshrl.u32 %v3625, 7
        %v3627 = vsub.s32 %v3624, %v3626
        %v3628 = vrot.slane %v3621, %v3627
        %v3630 = vsub.f32 %v3537, %v3628
        %v3631 = vmul.f32 %v3341, %v3580
        %v3632 = vmul.f32 %v3343, %v3584
        %v3633 = vmul.f32 %v3464, %v3588
        %v3634 = vmul.f32 %v3466, %v3592
        %v3636 = vlaneseq
        %v3637 = vshrl.u32 %v3636, 7
        %v3638 = vsub.s32 0, %v3637
        %v3639 = vrot.slane %v3630, %v3638
        %v3640 = vlaneseq
        %v3641 = vshrl.u32 %v3640, 7
        %v3642 = vsub.s32 1, %v3641
        %v3643 = vrot.slane %v3630, %v3642
        %v3644 = vlaneseq
        %v3645 = vshrl.u32 %v3644, 7
        %v3646 = vsub.s32 2, %v3645
        %v3647 = vrot.slane %v3630, %v3646
        %v3648 = vlaneseq
        %v3649 = vshrl.u32 %v3648, 7
        %v3650 = vsub.s32 3, %v3649
        %v3651 = vrot.slane %v3630, %v3650
        %v3656 = vadd.f32 %v3631, %v3639
        %v3657 = vadd.f32 %v3632, %v3643
        %v3658 = vadd.f32 %v3633, %v3647
        %v3659 = vadd.f32 %v3634, %v3651
        %vm3660 = vcmp.ge.f32.partialorder %v3656, 0.0
        %vm3661 = vcmp.ge.f32.partialorder %v3657, 0.0
        %vm3662 = vcmp.ge.f32.partialorder %v3658, 0.0
        %vm3663 = vcmp.ge.f32.partialorder %v3659, 0.0
        %v3664 = vmul.f32 %v3656, 0.01
        %v3665 = vmul.f32 %v3657, 0.01
        %v3666 = vmul.f32 %v3658, 0.01
        %v3667 = vmul.f32 %v3659, 0.01
        %v3668 = vsel %vm3660, %v3656, %v3664
        %v3669 = vsel %vm3661, %v3657, %v3665
        %v3670 = vsel %vm3662, %v3658, %v3666
        %v3671 = vsel %vm3663, %v3659, %v3667
        %v3672 = vpack.c.bf16 %v3668, %v3668
        %v3673 = vpack.c.bf16 %v3669, %v3669
        %v3674 = vpack.c.bf16 %v3670, %v3670
        %v3675 = vpack.c.bf16 %v3671, %v3671
        // Predicated region
        $region53: #{autoencoder_forward_stacked.1} parent=31 // pred_check
          %p3676 = pneg %p245
        $region54: #{autoencoder_forward_stacked.1} parent=31 // pred_check_branch
          %3678 = sbr.rel (%p3676) target = $region56
        $region55: #{autoencoder_forward_stacked.1} parent=31 // pred_region
          %s3679 = scalar_lea.sflag [#allocation9], 1
          %s3680 = smul.u32 4, 64
          %s3681 = smul.u32 %s3680, 2
          %s3682 = sshll.u32 %s3681, 4
          %3683 = dma.done %s3679, %s3682
        $region56: #{autoencoder_forward_stacked.1} parent=31 // pred_fallthru
          _
        %v3684 = vld [vmem:[#allocation3] sm:$0xff]
        %v3685 = vld [vmem:[#allocation3 + $0x8] sm:$0xff]
        %v3686 = vld [vmem:[#allocation3 + $0x10] sm:$0xff]
        %v3687 = vld [vmem:[#allocation3 + $0x18] sm:$0xff]
        %v3688 = vld [vmem:[#allocation3 + $0x20] sm:$0xff]
        %v3689 = vld [vmem:[#allocation3 + $0x28] sm:$0xff]
        %v3690 = vld [vmem:[#allocation3 + $0x30] sm:$0xff]
        %v3691 = vld [vmem:[#allocation3 + $0x38] sm:$0xff]
        %v3692 = vld [vmem:[#allocation3 + $0x40] sm:$0xff]
        %v3693 = vld [vmem:[#allocation3 + $0x48] sm:$0xff]
        %v3694 = vld [vmem:[#allocation3 + $0x50] sm:$0xff]
        %v3695 = vld [vmem:[#allocation3 + $0x58] sm:$0xff]
        %v3696 = vld [vmem:[#allocation3 + $0x60] sm:$0xff]
        %v3697 = vld [vmem:[#allocation3 + $0x68] sm:$0xff]
        %v3698 = vld [vmem:[#allocation3 + $0x70] sm:$0xff]
        %v3699 = vld [vmem:[#allocation3 + $0x78] sm:$0xff]
        %v3700 = vld [vmem:[#allocation3 + $0x80] sm:$0xff]
        %v3701 = vld [vmem:[#allocation3 + $0x88] sm:$0xff]
        %v3702 = vld [vmem:[#allocation3 + $0x90] sm:$0xff]
        %v3703 = vld [vmem:[#allocation3 + $0x98] sm:$0xff]
        %v3704 = vld [vmem:[#allocation3 + $0xa0] sm:$0xff]
        %v3705 = vld [vmem:[#allocation3 + $0xa8] sm:$0xff]
        %v3706 = vld [vmem:[#allocation3 + $0xb0] sm:$0xff]
        %v3707 = vld [vmem:[#allocation3 + $0xb8] sm:$0xff]
        %v3708 = vld [vmem:[#allocation3 + $0xc0] sm:$0xff]
        %v3709 = vld [vmem:[#allocation3 + $0xc8] sm:$0xff]
        %v3710 = vld [vmem:[#allocation3 + $0xd0] sm:$0xff]
        %v3711 = vld [vmem:[#allocation3 + $0xd8] sm:$0xff]
        %v3712 = vld [vmem:[#allocation3 + $0xe0] sm:$0xff]
        %v3713 = vld [vmem:[#allocation3 + $0xe8] sm:$0xff]
        %v3714 = vld [vmem:[#allocation3 + $0xf0] sm:$0xff]
        %v3715 = vld [vmem:[#allocation3 + $0xf8] sm:$0xff]
        %v3716 = vld [vmem:[#allocation3 + $0x100] sm:$0xff]
        %v3717 = vld [vmem:[#allocation3 + $0x108] sm:$0xff]
        %v3718 = vld [vmem:[#allocation3 + $0x110] sm:$0xff]
        %v3719 = vld [vmem:[#allocation3 + $0x118] sm:$0xff]
        %v3720 = vld [vmem:[#allocation3 + $0x120] sm:$0xff]
        %v3721 = vld [vmem:[#allocation3 + $0x128] sm:$0xff]
        %v3722 = vld [vmem:[#allocation3 + $0x130] sm:$0xff]
        %v3723 = vld [vmem:[#allocation3 + $0x138] sm:$0xff]
        %v3724 = vld [vmem:[#allocation3 + $0x140] sm:$0xff]
        %v3725 = vld [vmem:[#allocation3 + $0x148] sm:$0xff]
        %v3726 = vld [vmem:[#allocation3 + $0x150] sm:$0xff]
        %v3727 = vld [vmem:[#allocation3 + $0x158] sm:$0xff]
        %v3728 = vld [vmem:[#allocation3 + $0x160] sm:$0xff]
        %v3729 = vld [vmem:[#allocation3 + $0x168] sm:$0xff]
        %v3730 = vld [vmem:[#allocation3 + $0x170] sm:$0xff]
        %v3731 = vld [vmem:[#allocation3 + $0x178] sm:$0xff]
        %v3732 = vld [vmem:[#allocation3 + $0x180] sm:$0xff]
        %v3733 = vld [vmem:[#allocation3 + $0x188] sm:$0xff]
        %v3734 = vld [vmem:[#allocation3 + $0x190] sm:$0xff]
        %v3735 = vld [vmem:[#allocation3 + $0x198] sm:$0xff]
        %v3736 = vld [vmem:[#allocation3 + $0x1a0] sm:$0xff]
        %v3737 = vld [vmem:[#allocation3 + $0x1a8] sm:$0xff]
        %v3738 = vld [vmem:[#allocation3 + $0x1b0] sm:$0xff]
        %v3739 = vld [vmem:[#allocation3 + $0x1b8] sm:$0xff]
        %v3740 = vld [vmem:[#allocation3 + $0x1c0] sm:$0xff]
        %v3741 = vld [vmem:[#allocation3 + $0x1c8] sm:$0xff]
        %v3742 = vld [vmem:[#allocation3 + $0x1d0] sm:$0xff]
        %v3743 = vld [vmem:[#allocation3 + $0x1d8] sm:$0xff]
        %v3744 = vld [vmem:[#allocation3 + $0x1e0] sm:$0xff]
        %v3745 = vld [vmem:[#allocation3 + $0x1e8] sm:$0xff]
        %v3746 = vld [vmem:[#allocation3 + $0x1f0] sm:$0xff]
        %v3747 = vld [vmem:[#allocation3 + $0x1f8] sm:$0xff]
        %3748 = vmatprep.subr.bf16.mxu0 %v3685
        %3749 = vmatpush1.bf16.msra.mxu0 %v3684
        %3750 = vmatprep.subr.bf16.mxu0 %v3687
        %3751 = vmatpush1.bf16.msra.mxu0 %v3686
        %3752 = vmatprep.subr.bf16.mxu0 %v3689
        %3753 = vmatpush1.bf16.msra.mxu0 %v3688
        %3754 = vmatprep.subr.bf16.mxu0 %v3691
        %3755 = vmatpush1.bf16.msra.mxu0 %v3690
        %3756 = vmatprep.subr.bf16.mxu0 %v3693
        %3757 = vmatpush1.bf16.msra.mxu0 %v3692
        %3758 = vmatprep.subr.bf16.mxu0 %v3695
        %3759 = vmatpush1.bf16.msra.mxu0 %v3694
        %3760 = vmatprep.subr.bf16.mxu0 %v3697
        %3761 = vmatpush1.bf16.msra.mxu0 %v3696
        %3762 = vmatprep.subr.bf16.mxu0 %v3699
        %3763 = vmatpush1.bf16.msra.mxu0 %v3698
        %3764 = vmatprep.subr.bf16.mxu0 %v3701
        %3765 = vmatpush1.bf16.msra.mxu0 %v3700
        %3766 = vmatprep.subr.bf16.mxu0 %v3703
        %3767 = vmatpush1.bf16.msra.mxu0 %v3702
        %3768 = vmatprep.subr.bf16.mxu0 %v3705
        %3769 = vmatpush1.bf16.msra.mxu0 %v3704
        %3770 = vmatprep.subr.bf16.mxu0 %v3707
        %3771 = vmatpush1.bf16.msra.mxu0 %v3706
        %3772 = vmatprep.subr.bf16.mxu0 %v3709
        %3773 = vmatpush1.bf16.msra.mxu0 %v3708
        %3774 = vmatprep.subr.bf16.mxu0 %v3711
        %3775 = vmatpush1.bf16.msra.mxu0 %v3710
        %3776 = vmatprep.subr.bf16.mxu0 %v3713
        %3777 = vmatpush1.bf16.msra.mxu0 %v3712
        %3778 = vmatprep.subr.bf16.mxu0 %v3715
        %3779 = vmatpush1.bf16.msra.mxu0 %v3714
        %3780 = vmatprep.mubr.bf16.mxu0 %v3673
        %3781 = vmatmul.mubr.bf16.gmra.mrb[0].mxu0 %v3672
        %v3782 = vpop.f32.mrb[0].mxu0
        %v3783 = vadd.f32 0.0, %v3782
        %v3784 = vpop.f32.mrb[0].mxu0
        %v3785 = vadd.f32 0.0, %v3784
        %v3786 = vpop.f32.mrb[0].mxu0
        %v3787 = vpop.f32.mrb[0].mxu0
        %3788 = vdwg.mxu0
        %3789 = vmatprep.subr.bf16.mxu0 %v3717
        %3790 = vmatpush1.bf16.msra.mxu0 %v3716
        %3791 = vmatprep.subr.bf16.mxu0 %v3719
        %3792 = vmatpush1.bf16.msra.mxu0 %v3718
        %3793 = vmatprep.subr.bf16.mxu0 %v3721
        %3794 = vmatpush1.bf16.msra.mxu0 %v3720
        %3795 = vmatprep.subr.bf16.mxu0 %v3723
        %3796 = vmatpush1.bf16.msra.mxu0 %v3722
        %3797 = vmatprep.subr.bf16.mxu0 %v3725
        %3798 = vmatpush1.bf16.msra.mxu0 %v3724
        %3799 = vmatprep.subr.bf16.mxu0 %v3727
        %3800 = vmatpush1.bf16.msra.mxu0 %v3726
        %3801 = vmatprep.subr.bf16.mxu0 %v3729
        %3802 = vmatpush1.bf16.msra.mxu0 %v3728
        %3803 = vmatprep.subr.bf16.mxu0 %v3731
        %3804 = vmatpush1.bf16.msra.mxu0 %v3730
        %3805 = vmatprep.subr.bf16.mxu0 %v3733
        %3806 = vmatpush1.bf16.msra.mxu0 %v3732
        %3807 = vmatprep.subr.bf16.mxu0 %v3735
        %3808 = vmatpush1.bf16.msra.mxu0 %v3734
        %3809 = vmatprep.subr.bf16.mxu0 %v3737
        %3810 = vmatpush1.bf16.msra.mxu0 %v3736
        %3811 = vmatprep.subr.bf16.mxu0 %v3739
        %3812 = vmatpush1.bf16.msra.mxu0 %v3738
        %3813 = vmatprep.subr.bf16.mxu0 %v3741
        %3814 = vmatpush1.bf16.msra.mxu0 %v3740
        %3815 = vmatprep.subr.bf16.mxu0 %v3743
        %3816 = vmatpush1.bf16.msra.mxu0 %v3742
        %3817 = vmatprep.subr.bf16.mxu0 %v3745
        %3818 = vmatpush1.bf16.msra.mxu0 %v3744
        %3819 = vmatprep.subr.bf16.mxu0 %v3747
        %3820 = vmatpush1.bf16.msra.mxu0 %v3746
        %3821 = vmatprep.mubr.bf16.mxu0 %v3675
        %3822 = vmatmul.mubr.bf16.gmra.mrb[0].mxu0 %v3674
        %v3823 = vpop.f32.mrb[0].mxu0
        %v3824 = vadd.f32 %v3783, %v3823
        %v3825 = vpop.f32.mrb[0].mxu0
        %v3826 = vadd.f32 %v3785, %v3825
        %v3827 = vpop.f32.mrb[0].mxu0
        %v3828 = vpop.f32.mrb[0].mxu0
        %3829 = vdwg.mxu0
        %v3830 = vrot.slane %v3824, 4
        %v3831 = vadd.f32 %v3824, %v3830
        %v3832 = vrot.slane %v3831, 2
        %v3833 = vadd.f32 %v3831, %v3832
        %v3834 = vrot.slane %v3833, 1
        %v3835 = vadd.f32 %v3833, %v3834
        %v3836 = vrot.slane %v3826, 4
        %v3837 = vadd.f32 %v3826, %v3836
        %v3838 = vrot.slane %v3837, 2
        %v3839 = vadd.f32 %v3837, %v3838
        %v3840 = vrot.slane %v3839, 1
        %v3841 = vadd.f32 %v3839, %v3840
        %v3842 = vmul.f32 %v3835, %v2810
        %v3843 = vmul.f32 %v3841, %v2810
        %v3844 = vsub.f32 %v3824, %v3842
        %v3845 = vsub.f32 %v3826, %v3843
        %v3846 = vmul.f32 %v3844, %v3844
        %v3847 = vmul.f32 %v3845, %v3845
        %v3848 = vrot.slane %v3846, 4
        %v3849 = vadd.f32 %v3846, %v3848
        %v3850 = vrot.slane %v3849, 2
        %v3851 = vadd.f32 %v3849, %v3850
        %v3852 = vrot.slane %v3851, 1
        %v3853 = vadd.f32 %v3851, %v3852
        %v3854 = vrot.slane %v3847, 4
        %v3855 = vadd.f32 %v3847, %v3854
        %v3856 = vrot.slane %v3855, 2
        %v3857 = vadd.f32 %v3855, %v3856
        %v3858 = vrot.slane %v3857, 1
        %v3859 = vadd.f32 %v3857, %v3858
        %v3860 = vmul.f32 %v3853, %v2810
        %v3861 = vmul.f32 %v3859, %v2810
        %s3862 = scalar_lea.vmem [#allocation10], 4
        %v3863 = vld [vmem:[%s3862] ss:$8 sm:$0x3]
        %s3864 = scalar_lea.vmem [#allocation10], 5
        %v3865 = vld [vmem:[%s3864] ss:$8 sm:$0x3]
        %v3866 = vadd.f32 %v3860, 1e-05
        %v3867 = vadd.f32 %v3861, 1e-05
        %v3868 = vrsqrt.pop %v3866
        %v3869 = vrsqrt.pop %v3867
        %v3872 = vcombine.low %v3868, %v3869
        %v3874 = vunpack.c.l.s4 1966171168
        %v3875 = vunpack.c.0.s8 %v3874
        %v3876 = vlaneseq
        %v3877 = vshrl.u32 %v3876, 7
        %v3878 = vsub.s32 %v3875, %v3877
        %v3879 = vrot.slane %v3872, %v3878
        %v3881 = vunpack.c.l.s4 1966171168
        %v3882 = vunpack.c.0.s8 %v3881
        %v3883 = vlaneseq
        %v3884 = vshrl.u32 %v3883, 7
        %v3885 = vsub.s32 %v3882, %v3884
        %v3886 = vrot.slane %v3879, %v3885
        %v3888 = vmul.f32 %v3863, %v3886
        %v3890 = vlaneseq
        %v3891 = vshrl.u32 %v3890, 7
        %v3892 = vsub.s32 0, %v3891
        %v3893 = vrot.slane %v3888, %v3892
        %v3894 = vlaneseq
        %v3895 = vshrl.u32 %v3894, 7
        %v3896 = vsub.s32 1, %v3895
        %v3897 = vrot.slane %v3888, %v3896
        %v3900 = vmul.f32 %v3842, %v3893
        %v3901 = vmul.f32 %v3843, %v3897
        %v3904 = vcombine.low %v3900, %v3901
        %v3906 = vunpack.c.l.s4 1966171168
        %v3907 = vunpack.c.0.s8 %v3906
        %v3908 = vlaneseq
        %v3909 = vshrl.u32 %v3908, 7
        %v3910 = vsub.s32 %v3907, %v3909
        %v3911 = vrot.slane %v3904, %v3910
        %v3913 = vunpack.c.l.s4 1966171168
        %v3914 = vunpack.c.0.s8 %v3913
        %v3915 = vlaneseq
        %v3916 = vshrl.u32 %v3915, 7
        %v3917 = vsub.s32 %v3914, %v3916
        %v3918 = vrot.slane %v3911, %v3917
        %v3920 = vsub.f32 %v3865, %v3918
        %v3921 = vmul.f32 %v3824, %v3893
        %v3922 = vmul.f32 %v3826, %v3897
        %v3924 = vlaneseq
        %v3925 = vshrl.u32 %v3924, 7
        %v3926 = vsub.s32 0, %v3925
        %v3927 = vrot.slane %v3920, %v3926
        %v3928 = vlaneseq
        %v3929 = vshrl.u32 %v3928, 7
        %v3930 = vsub.s32 1, %v3929
        %v3931 = vrot.slane %v3920, %v3930
        %v3934 = vadd.f32 %v3921, %v3927
        %v3935 = vadd.f32 %v3922, %v3931
        %vm3936 = vcmp.ge.f32.partialorder %v3934, 0.0
        %vm3937 = vcmp.ge.f32.partialorder %v3935, 0.0
        %v3938 = vmul.f32 %v3934, 0.01
        %v3939 = vmul.f32 %v3935, 0.01
        %v3940 = vsel %vm3936, %v3934, %v3938
        %v3941 = vsel %vm3937, %v3935, %v3939
        %v3942 = vpack.c.bf16 %v3940, %v3940
        %v3943 = vpack.c.bf16 %v3941, %v3941
        // Predicated region
        $region57: #{autoencoder_forward_stacked.1} parent=31 // pred_check
          %p3944 = pneg %p245
        $region58: #{autoencoder_forward_stacked.1} parent=31 // pred_check_branch
          %3946 = sbr.rel (%p3944) target = $region60
        $region59: #{autoencoder_forward_stacked.1} parent=31 // pred_region
          %s3947 = scalar_lea.sflag [#allocation9], 2
          %s3948 = smul.u32 4, 32
          %s3949 = smul.u32 %s3948, 1
          %s3950 = sshll.u32 %s3949, 4
          %3951 = dma.done %s3947, %s3950
        $region60: #{autoencoder_forward_stacked.1} parent=31 // pred_fallthru
          _
        %v3952 = vld [vmem:[#allocation4] sm:$0xff]
        %v3953 = vld [vmem:[#allocation4 + $0x8] sm:$0xff]
        %v3954 = vld [vmem:[#allocation4 + $0x10] sm:$0xff]
        %v3955 = vld [vmem:[#allocation4 + $0x18] sm:$0xff]
        %v3956 = vld [vmem:[#allocation4 + $0x20] sm:$0xff]
        %v3957 = vld [vmem:[#allocation4 + $0x28] sm:$0xff]
        %v3958 = vld [vmem:[#allocation4 + $0x30] sm:$0xff]
        %v3959 = vld [vmem:[#allocation4 + $0x38] sm:$0xff]
        %v3960 = vld [vmem:[#allocation4 + $0x40] sm:$0xff]
        %v3961 = vld [vmem:[#allocation4 + $0x48] sm:$0xff]
        %v3962 = vld [vmem:[#allocation4 + $0x50] sm:$0xff]
        %v3963 = vld [vmem:[#allocation4 + $0x58] sm:$0xff]
        %v3964 = vld [vmem:[#allocation4 + $0x60] sm:$0xff]
        %v3965 = vld [vmem:[#allocation4 + $0x68] sm:$0xff]
        %v3966 = vld [vmem:[#allocation4 + $0x70] sm:$0xff]
        %v3967 = vld [vmem:[#allocation4 + $0x78] sm:$0xff]
        %3968 = vmatprep.subr.bf16.mxu0 0
        %3969 = vmatpush1.bf16.msra.mxu0 %v3952
        %3970 = vmatprep.subr.bf16.mxu0 0
        %3971 = vmatpush1.bf16.msra.mxu0 %v3953
        %3972 = vmatprep.subr.bf16.mxu0 0
        %3973 = vmatpush1.bf16.msra.mxu0 %v3954
        %3974 = vmatprep.subr.bf16.mxu0 0
        %3975 = vmatpush1.bf16.msra.mxu0 %v3955
        %3976 = vmatprep.subr.bf16.mxu0 0
        %3977 = vmatpush1.bf16.msra.mxu0 %v3956
        %3978 = vmatprep.subr.bf16.mxu0 0
        %3979 = vmatpush1.bf16.msra.mxu0 %v3957
        %3980 = vmatprep.subr.bf16.mxu0 0
        %3981 = vmatpush1.bf16.msra.mxu0 %v3958
        %3982 = vmatprep.subr.bf16.mxu0 0
        %3983 = vmatpush1.bf16.msra.mxu0 %v3959
        %3984 = vmatprep.subr.bf16.mxu0 0
        %3985 = vmatpush1.bf16.msra.mxu0 %v3960
        %3986 = vmatprep.subr.bf16.mxu0 0
        %3987 = vmatpush1.bf16.msra.mxu0 %v3961
        %3988 = vmatprep.subr.bf16.mxu0 0
        %3989 = vmatpush1.bf16.msra.mxu0 %v3962
        %3990 = vmatprep.subr.bf16.mxu0 0
        %3991 = vmatpush1.bf16.msra.mxu0 %v3963
        %3992 = vmatprep.subr.bf16.mxu0 0
        %3993 = vmatpush1.bf16.msra.mxu0 %v3964
        %3994 = vmatprep.subr.bf16.mxu0 0
        %3995 = vmatpush1.bf16.msra.mxu0 %v3965
        %3996 = vmatprep.subr.bf16.mxu0 0
        %3997 = vmatpush1.bf16.msra.mxu0 %v3966
        %3998 = vmatprep.subr.bf16.mxu0 0
        %3999 = vmatpush1.bf16.msra.mxu0 %v3967
        %4000 = vmatprep.mubr.bf16.mxu0 %v3943
        %4001 = vmatmul.mubr.bf16.gmra.mrb[0].mxu0 %v3942
        %v4002 = vpop.f32.mrb[0].mxu0
        %v4003 = vadd.f32 0.0, %v4002
        %v4004 = vpop.f32.mrb[0].mxu0
        %v4005 = vpop.f32.mrb[0].mxu0
        %v4006 = vpop.f32.mrb[0].mxu0
        %4007 = vdwg.mxu0
        %v4008 = vrot.slane %v4003, 4
        %v4009 = vadd.f32 %v4003, %v4008
        %v4010 = vrot.slane %v4009, 2
        %v4011 = vadd.f32 %v4009, %v4010
        %v4012 = vrot.slane %v4011, 1
        %v4013 = vadd.f32 %v4011, %v4012
        %v4014 = vmul.f32 %v4013, %v2810
        %v4015 = vsub.f32 %v4003, %v4014
        %v4016 = vmul.f32 %v4015, %v4015
        %v4017 = vrot.slane %v4016, 4
        %v4018 = vadd.f32 %v4016, %v4017
        %v4019 = vrot.slane %v4018, 2
        %v4020 = vadd.f32 %v4018, %v4019
        %v4021 = vrot.slane %v4020, 1
        %v4022 = vadd.f32 %v4020, %v4021
        %v4023 = vmul.f32 %v4022, %v2810
        %v4024 = vld [vmem:[#allocation10 + $0x6] ss:$0 sm:$0xff]
        %v4025 = vld [vmem:[#allocation10 + $0x7] ss:$0 sm:$0xff]
        %v4026 = vadd.f32 %v4023, 1e-05
        %v4027 = vrsqrt.pop %v4026
        %v4028 = vmul.f32 %v4024, %v4027
        %v4029 = vmul.f32 %v4014, %v4028
        %v4030 = vsub.f32 %v4025, %v4029
        %v4031 = vmul.f32 %v4003, %v4028
        %v4032 = vadd.f32 %v4031, %v4030
        %vm4033 = vcmp.ge.f32.partialorder %v4032, 0.0
        %v4034 = vmul.f32 %v4032, 0.01
        %v4035 = vsel %vm4033, %v4032, %v4034
        %v4036 = vpack.c.bf16 %v4035, %v4035
        // Predicated region
        $region61: #{autoencoder_forward_stacked.1} parent=31 // pred_check
          %p4037 = pneg %p245
        $region62: #{autoencoder_forward_stacked.1} parent=31 // pred_check_branch
          %4039 = sbr.rel (%p4037) target = $region64
        $region63: #{autoencoder_forward_stacked.1} parent=31 // pred_region
          %s4040 = scalar_lea.sflag [#allocation9], 3
          %s4041 = smul.u32 4, 16
          %s4042 = smul.u32 %s4041, 2
          %s4043 = sshll.u32 %s4042, 4
          %4044 = dma.done %s4040, %s4043
        $region64: #{autoencoder_forward_stacked.1} parent=31 // pred_fallthru
          _
        %v4045 = vld [vmem:[#allocation5] sm:$0xff]
        %v4046 = vld [vmem:[#allocation5 + $0x8] sm:$0xff]
        %v4047 = vld [vmem:[#allocation5 + $0x10] sm:$0xff]
        %v4048 = vld [vmem:[#allocation5 + $0x18] sm:$0xff]
        %v4049 = vld [vmem:[#allocation5 + $0x20] sm:$0xff]
        %v4050 = vld [vmem:[#allocation5 + $0x28] sm:$0xff]
        %v4051 = vld [vmem:[#allocation5 + $0x30] sm:$0xff]
        %v4052 = vld [vmem:[#allocation5 + $0x38] sm:$0xff]
        %v4053 = vld [vmem:[#allocation5 + $0x40] sm:$0xff]
        %v4054 = vld [vmem:[#allocation5 + $0x48] sm:$0xff]
        %v4055 = vld [vmem:[#allocation5 + $0x50] sm:$0xff]
        %v4056 = vld [vmem:[#allocation5 + $0x58] sm:$0xff]
        %v4057 = vld [vmem:[#allocation5 + $0x60] sm:$0xff]
        %v4058 = vld [vmem:[#allocation5 + $0x68] sm:$0xff]
        %v4059 = vld [vmem:[#allocation5 + $0x70] sm:$0xff]
        %v4060 = vld [vmem:[#allocation5 + $0x78] sm:$0xff]
        %4061 = vmatprep.subr.bf16.mxu0 %v4046
        %4062 = vmatpush1.bf16.msra.mxu0 %v4045
        %4063 = vmatprep.subr.bf16.mxu0 %v4048
        %4064 = vmatpush1.bf16.msra.mxu0 %v4047
        %4065 = vmatprep.subr.bf16.mxu0 %v4050
        %4066 = vmatpush1.bf16.msra.mxu0 %v4049
        %4067 = vmatprep.subr.bf16.mxu0 %v4052
        %4068 = vmatpush1.bf16.msra.mxu0 %v4051
        %4069 = vmatprep.subr.bf16.mxu0 %v4054
        %4070 = vmatpush1.bf16.msra.mxu0 %v4053
        %4071 = vmatprep.subr.bf16.mxu0 %v4056
        %4072 = vmatpush1.bf16.msra.mxu0 %v4055
        %4073 = vmatprep.subr.bf16.mxu0 %v4058
        %4074 = vmatpush1.bf16.msra.mxu0 %v4057
        %4075 = vmatprep.subr.bf16.mxu0 %v4060
        %4076 = vmatpush1.bf16.msra.mxu0 %v4059
        %4077 = vmatprep.subr.bf16.mxu0 0
        %4078 = vmatpush1.bf16.msra.mxu0 0
        %4079 = vmatprep.subr.bf16.mxu0 0
        %4080 = vmatpush1.bf16.msra.mxu0 0
        %4081 = vmatprep.subr.bf16.mxu0 0
        %4082 = vmatpush1.bf16.msra.mxu0 0
        %4083 = vmatprep.subr.bf16.mxu0 0
        %4084 = vmatpush1.bf16.msra.mxu0 0
        %4085 = vmatprep.subr.bf16.mxu0 0
        %4086 = vmatpush1.bf16.msra.mxu0 0
        %4087 = vmatprep.subr.bf16.mxu0 0
        %4088 = vmatpush1.bf16.msra.mxu0 0
        %4089 = vmatprep.subr.bf16.mxu0 0
        %4090 = vmatpush1.bf16.msra.mxu0 0
        %4091 = vmatprep.subr.bf16.mxu0 0
        %4092 = vmatpush1.bf16.msra.mxu0 0
        %4093 = vmatprep.mubr.bf16.mxu0 0
        %4094 = vmatmul.mubr.bf16.gmra.mrb[0].mxu0 %v4036
        %v4095 = vpop.f32.mrb[0].mxu0
        %v4096 = vadd.f32 0.0, %v4095
        %v4097 = vpop.f32.mrb[0].mxu0
        %v4098 = vadd.f32 0.0, %v4097
        %v4099 = vpop.f32.mrb[0].mxu0
        %v4100 = vpop.f32.mrb[0].mxu0
        %4101 = vdwg.mxu0
        %v4102 = vrot.slane %v4096, 4
        %v4103 = vadd.f32 %v4096, %v4102
        %v4104 = vrot.slane %v4103, 2
        %v4105 = vadd.f32 %v4103, %v4104
        %v4106 = vrot.slane %v4105, 1
        %v4107 = vadd.f32 %v4105, %v4106
        %v4108 = vrot.slane %v4098, 4
        %v4109 = vadd.f32 %v4098, %v4108
        %v4110 = vrot.slane %v4109, 2
        %v4111 = vadd.f32 %v4109, %v4110
        %v4112 = vrot.slane %v4111, 1
        %v4113 = vadd.f32 %v4111, %v4112
        %v4114 = vmul.f32 %v4107, %v2810
        %v4115 = vmul.f32 %v4113, %v2810
        %v4116 = vsub.f32 %v4096, %v4114
        %v4117 = vsub.f32 %v4098, %v4115
        %v4118 = vmul.f32 %v4116, %v4116
        %v4119 = vmul.f32 %v4117, %v4117
        %v4120 = vrot.slane %v4118, 4
        %v4121 = vadd.f32 %v4118, %v4120
        %v4122 = vrot.slane %v4121, 2
        %v4123 = vadd.f32 %v4121, %v4122
        %v4124 = vrot.slane %v4123, 1
        %v4125 = vadd.f32 %v4123, %v4124
        %v4126 = vrot.slane %v4119, 4
        %v4127 = vadd.f32 %v4119, %v4126
        %v4128 = vrot.slane %v4127, 2
        %v4129 = vadd.f32 %v4127, %v4128
        %v4130 = vrot.slane %v4129, 1
        %v4131 = vadd.f32 %v4129, %v4130
        %v4132 = vmul.f32 %v4125, %v2810
        %v4133 = vmul.f32 %v4131, %v2810
        %s4134 = scalar_lea.vmem [#allocation10], 56
        %v4135 = vld [vmem:[%s4134] ss:$8 sm:$0x3]
        %s4136 = scalar_lea.vmem [#allocation10], 57
        %v4137 = vld [vmem:[%s4136] ss:$8 sm:$0x3]
        %v4138 = vadd.f32 %v4132, 1e-05
        %v4139 = vadd.f32 %v4133, 1e-05
        %v4140 = vrsqrt.pop %v4138
        %v4141 = vrsqrt.pop %v4139
        %v4144 = vcombine.low %v4140, %v4141
        %v4146 = vunpack.c.l.s4 1966171168
        %v4147 = vunpack.c.0.s8 %v4146
        %v4148 = vlaneseq
        %v4149 = vshrl.u32 %v4148, 7
        %v4150 = vsub.s32 %v4147, %v4149
        %v4151 = vrot.slane %v4144, %v4150
        %v4153 = vunpack.c.l.s4 1966171168
        %v4154 = vunpack.c.0.s8 %v4153
        %v4155 = vlaneseq
        %v4156 = vshrl.u32 %v4155, 7
        %v4157 = vsub.s32 %v4154, %v4156
        %v4158 = vrot.slane %v4151, %v4157
        %v4160 = vmul.f32 %v4135, %v4158
        %v4162 = vlaneseq
        %v4163 = vshrl.u32 %v4162, 7
        %v4164 = vsub.s32 0, %v4163
        %v4165 = vrot.slane %v4160, %v4164
        %v4166 = vlaneseq
        %v4167 = vshrl.u32 %v4166, 7
        %v4168 = vsub.s32 1, %v4167
        %v4169 = vrot.slane %v4160, %v4168
        %v4172 = vmul.f32 %v4114, %v4165
        %v4173 = vmul.f32 %v4115, %v4169
        %v4176 = vcombine.low %v4172, %v4173
        %v4178 = vunpack.c.l.s4 1966171168
        %v4179 = vunpack.c.0.s8 %v4178
        %v4180 = vlaneseq
        %v4181 = vshrl.u32 %v4180, 7
        %v4182 = vsub.s32 %v4179, %v4181
        %v4183 = vrot.slane %v4176, %v4182
        %v4185 = vunpack.c.l.s4 1966171168
        %v4186 = vunpack.c.0.s8 %v4185
        %v4187 = vlaneseq
        %v4188 = vshrl.u32 %v4187, 7
        %v4189 = vsub.s32 %v4186, %v4188
        %v4190 = vrot.slane %v4183, %v4189
        %v4192 = vsub.f32 %v4137, %v4190
        %v4193 = vmul.f32 %v4096, %v4165
        %v4194 = vmul.f32 %v4098, %v4169
        %v4196 = vlaneseq
        %v4197 = vshrl.u32 %v4196, 7
        %v4198 = vsub.s32 0, %v4197
        %v4199 = vrot.slane %v4192, %v4198
        %v4200 = vlaneseq
        %v4201 = vshrl.u32 %v4200, 7
        %v4202 = vsub.s32 1, %v4201
        %v4203 = vrot.slane %v4192, %v4202
        %v4206 = vadd.f32 %v4193, %v4199
        %v4207 = vadd.f32 %v4194, %v4203
        %vm4208 = vcmp.ge.f32.partialorder %v4206, 0.0
        %vm4209 = vcmp.ge.f32.partialorder %v4207, 0.0
        %v4210 = vmul.f32 %v4206, 0.01
        %v4211 = vmul.f32 %v4207, 0.01
        %v4212 = vsel %vm4208, %v4206, %v4210
        %v4213 = vsel %vm4209, %v4207, %v4211
        %v4214 = vpack.c.bf16 %v4212, %v4212
        %v4215 = vpack.c.bf16 %v4213, %v4213
        // Predicated region
        $region65: #{autoencoder_forward_stacked.1} parent=31 // pred_check
          %p4216 = pneg %p245
        $region66: #{autoencoder_forward_stacked.1} parent=31 // pred_check_branch
          %4218 = sbr.rel (%p4216) target = $region68
        $region67: #{autoencoder_forward_stacked.1} parent=31 // pred_region
          %s4219 = scalar_lea.sflag [#allocation9], 4
          %s4220 = smul.u32 4, 32
          %s4221 = smul.u32 %s4220, 4
          %s4222 = sshll.u32 %s4221, 4
          %4223 = dma.done %s4219, %s4222
        $region68: #{autoencoder_forward_stacked.1} parent=31 // pred_fallthru
          _
        %v4224 = vld [vmem:[#allocation6] sm:$0xff]
        %v4225 = vld [vmem:[#allocation6 + $0x8] sm:$0xff]
        %v4226 = vld [vmem:[#allocation6 + $0x10] sm:$0xff]
        %v4227 = vld [vmem:[#allocation6 + $0x18] sm:$0xff]
        %v4228 = vld [vmem:[#allocation6 + $0x20] sm:$0xff]
        %v4229 = vld [vmem:[#allocation6 + $0x28] sm:$0xff]
        %v4230 = vld [vmem:[#allocation6 + $0x30] sm:$0xff]
        %v4231 = vld [vmem:[#allocation6 + $0x38] sm:$0xff]
        %v4232 = vld [vmem:[#allocation6 + $0x40] sm:$0xff]
        %v4233 = vld [vmem:[#allocation6 + $0x48] sm:$0xff]
        %v4234 = vld [vmem:[#allocation6 + $0x50] sm:$0xff]
        %v4235 = vld [vmem:[#allocation6 + $0x58] sm:$0xff]
        %v4236 = vld [vmem:[#allocation6 + $0x60] sm:$0xff]
        %v4237 = vld [vmem:[#allocation6 + $0x68] sm:$0xff]
        %v4238 = vld [vmem:[#allocation6 + $0x70] sm:$0xff]
        %v4239 = vld [vmem:[#allocation6 + $0x78] sm:$0xff]
        %v4240 = vld [vmem:[#allocation6 + $0x80] sm:$0xff]
        %v4241 = vld [vmem:[#allocation6 + $0x88] sm:$0xff]
        %v4242 = vld [vmem:[#allocation6 + $0x90] sm:$0xff]
        %v4243 = vld [vmem:[#allocation6 + $0x98] sm:$0xff]
        %v4244 = vld [vmem:[#allocation6 + $0xa0] sm:$0xff]
        %v4245 = vld [vmem:[#allocation6 + $0xa8] sm:$0xff]
        %v4246 = vld [vmem:[#allocation6 + $0xb0] sm:$0xff]
        %v4247 = vld [vmem:[#allocation6 + $0xb8] sm:$0xff]
        %v4248 = vld [vmem:[#allocation6 + $0xc0] sm:$0xff]
        %v4249 = vld [vmem:[#allocation6 + $0xc8] sm:$0xff]
        %v4250 = vld [vmem:[#allocation6 + $0xd0] sm:$0xff]
        %v4251 = vld [vmem:[#allocation6 + $0xd8] sm:$0xff]
        %v4252 = vld [vmem:[#allocation6 + $0xe0] sm:$0xff]
        %v4253 = vld [vmem:[#allocation6 + $0xe8] sm:$0xff]
        %v4254 = vld [vmem:[#allocation6 + $0xf0] sm:$0xff]
        %v4255 = vld [vmem:[#allocation6 + $0xf8] sm:$0xff]
        %v4256 = vld [vmem:[#allocation6 + $0x100] sm:$0xff]
        %v4257 = vld [vmem:[#allocation6 + $0x108] sm:$0xff]
        %v4258 = vld [vmem:[#allocation6 + $0x110] sm:$0xff]
        %v4259 = vld [vmem:[#allocation6 + $0x118] sm:$0xff]
        %v4260 = vld [vmem:[#allocation6 + $0x120] sm:$0xff]
        %v4261 = vld [vmem:[#allocation6 + $0x128] sm:$0xff]
        %v4262 = vld [vmem:[#allocation6 + $0x130] sm:$0xff]
        %v4263 = vld [vmem:[#allocation6 + $0x138] sm:$0xff]
        %v4264 = vld [vmem:[#allocation6 + $0x140] sm:$0xff]
        %v4265 = vld [vmem:[#allocation6 + $0x148] sm:$0xff]
        %v4266 = vld [vmem:[#allocation6 + $0x150] sm:$0xff]
        %v4267 = vld [vmem:[#allocation6 + $0x158] sm:$0xff]
        %v4268 = vld [vmem:[#allocation6 + $0x160] sm:$0xff]
        %v4269 = vld [vmem:[#allocation6 + $0x168] sm:$0xff]
        %v4270 = vld [vmem:[#allocation6 + $0x170] sm:$0xff]
        %v4271 = vld [vmem:[#allocation6 + $0x178] sm:$0xff]
        %v4272 = vld [vmem:[#allocation6 + $0x180] sm:$0xff]
        %v4273 = vld [vmem:[#allocation6 + $0x188] sm:$0xff]
        %v4274 = vld [vmem:[#allocation6 + $0x190] sm:$0xff]
        %v4275 = vld [vmem:[#allocation6 + $0x198] sm:$0xff]
        %v4276 = vld [vmem:[#allocation6 + $0x1a0] sm:$0xff]
        %v4277 = vld [vmem:[#allocation6 + $0x1a8] sm:$0xff]
        %v4278 = vld [vmem:[#allocation6 + $0x1b0] sm:$0xff]
        %v4279 = vld [vmem:[#allocation6 + $0x1b8] sm:$0xff]
        %v4280 = vld [vmem:[#allocation6 + $0x1c0] sm:$0xff]
        %v4281 = vld [vmem:[#allocation6 + $0x1c8] sm:$0xff]
        %v4282 = vld [vmem:[#allocation6 + $0x1d0] sm:$0xff]
        %v4283 = vld [vmem:[#allocation6 + $0x1d8] sm:$0xff]
        %v4284 = vld [vmem:[#allocation6 + $0x1e0] sm:$0xff]
        %v4285 = vld [vmem:[#allocation6 + $0x1e8] sm:$0xff]
        %v4286 = vld [vmem:[#allocation6 + $0x1f0] sm:$0xff]
        %v4287 = vld [vmem:[#allocation6 + $0x1f8] sm:$0xff]
        %4288 = vmatprep.subr.bf16.mxu0 %v4225
        %4289 = vmatpush1.bf16.msra.mxu0 %v4224
        %4290 = vmatprep.subr.bf16.mxu0 %v4229
        %4291 = vmatpush1.bf16.msra.mxu0 %v4228
        %4292 = vmatprep.subr.bf16.mxu0 %v4233
        %4293 = vmatpush1.bf16.msra.mxu0 %v4232
        %4294 = vmatprep.subr.bf16.mxu0 %v4237
        %4295 = vmatpush1.bf16.msra.mxu0 %v4236
        %4296 = vmatprep.subr.bf16.mxu0 %v4241
        %4297 = vmatpush1.bf16.msra.mxu0 %v4240
        %4298 = vmatprep.subr.bf16.mxu0 %v4245
        %4299 = vmatpush1.bf16.msra.mxu0 %v4244
        %4300 = vmatprep.subr.bf16.mxu0 %v4249
        %4301 = vmatpush1.bf16.msra.mxu0 %v4248
        %4302 = vmatprep.subr.bf16.mxu0 %v4253
        %4303 = vmatpush1.bf16.msra.mxu0 %v4252
        %4304 = vmatprep.subr.bf16.mxu0 %v4257
        %4305 = vmatpush1.bf16.msra.mxu0 %v4256
        %4306 = vmatprep.subr.bf16.mxu0 %v4261
        %4307 = vmatpush1.bf16.msra.mxu0 %v4260
        %4308 = vmatprep.subr.bf16.mxu0 %v4265
        %4309 = vmatpush1.bf16.msra.mxu0 %v4264
        %4310 = vmatprep.subr.bf16.mxu0 %v4269
        %4311 = vmatpush1.bf16.msra.mxu0 %v4268
        %4312 = vmatprep.subr.bf16.mxu0 %v4273
        %4313 = vmatpush1.bf16.msra.mxu0 %v4272
        %4314 = vmatprep.subr.bf16.mxu0 %v4277
        %4315 = vmatpush1.bf16.msra.mxu0 %v4276
        %4316 = vmatprep.subr.bf16.mxu0 %v4281
        %4317 = vmatpush1.bf16.msra.mxu0 %v4280
        %4318 = vmatprep.subr.bf16.mxu0 %v4285
        %4319 = vmatpush1.bf16.msra.mxu0 %v4284
        %4320 = vmatprep.mubr.bf16.mxu0 %v4215
        %4321 = vmatmul.mubr.bf16.gmra.mrb[0].mxu0 %v4214
        %v4322 = vpop.f32.mrb[0].mxu0
        %v4323 = vadd.f32 0.0, %v4322
        %v4324 = vpop.f32.mrb[0].mxu0
        %v4325 = vadd.f32 0.0, %v4324
        %v4326 = vpop.f32.mrb[0].mxu0
        %v4327 = vpop.f32.mrb[0].mxu0
        %4328 = vdwg.mxu0
        %4329 = vmatprep.subr.bf16.mxu0 %v4227
        %4330 = vmatpush1.bf16.msra.mxu0 %v4226
        %4331 = vmatprep.subr.bf16.mxu0 %v4231
        %4332 = vmatpush1.bf16.msra.mxu0 %v4230
        %4333 = vmatprep.subr.bf16.mxu0 %v4235
        %4334 = vmatpush1.bf16.msra.mxu0 %v4234
        %4335 = vmatprep.subr.bf16.mxu0 %v4239
        %4336 = vmatpush1.bf16.msra.mxu0 %v4238
        %4337 = vmatprep.subr.bf16.mxu0 %v4243
        %4338 = vmatpush1.bf16.msra.mxu0 %v4242
        %4339 = vmatprep.subr.bf16.mxu0 %v4247
        %4340 = vmatpush1.bf16.msra.mxu0 %v4246
        %4341 = vmatprep.subr.bf16.mxu0 %v4251
        %4342 = vmatpush1.bf16.msra.mxu0 %v4250
        %4343 = vmatprep.subr.bf16.mxu0 %v4255
        %4344 = vmatpush1.bf16.msra.mxu0 %v4254
        %4345 = vmatprep.subr.bf16.mxu0 %v4259
        %4346 = vmatpush1.bf16.msra.mxu0 %v4258
        %4347 = vmatprep.subr.bf16.mxu0 %v4263
        %4348 = vmatpush1.bf16.msra.mxu0 %v4262
        %4349 = vmatprep.subr.bf16.mxu0 %v4267
        %4350 = vmatpush1.bf16.msra.mxu0 %v4266
        %4351 = vmatprep.subr.bf16.mxu0 %v4271
        %4352 = vmatpush1.bf16.msra.mxu0 %v4270
        %4353 = vmatprep.subr.bf16.mxu0 %v4275
        %4354 = vmatpush1.bf16.msra.mxu0 %v4274
        %4355 = vmatprep.subr.bf16.mxu0 %v4279
        %4356 = vmatpush1.bf16.msra.mxu0 %v4278
        %4357 = vmatprep.subr.bf16.mxu0 %v4283
        %4358 = vmatpush1.bf16.msra.mxu0 %v4282
        %4359 = vmatprep.subr.bf16.mxu0 %v4287
        %4360 = vmatpush1.bf16.msra.mxu0 %v4286
        %4361 = vmatprep.mubr.bf16.mxu0 %v4215
        %4362 = vmatmul.mubr.bf16.gmra.mrb[0].mxu0 %v4214
        %v4363 = vpop.f32.mrb[0].mxu0
        %v4364 = vadd.f32 0.0, %v4363
        %v4365 = vpop.f32.mrb[0].mxu0
        %v4366 = vadd.f32 0.0, %v4365
        %v4367 = vpop.f32.mrb[0].mxu0
        %v4368 = vpop.f32.mrb[0].mxu0
        %4369 = vdwg.mxu0
        %v4370 = vrot.slane %v4323, 4
        %v4371 = vadd.f32 %v4323, %v4370
        %v4372 = vrot.slane %v4371, 2
        %v4373 = vadd.f32 %v4371, %v4372
        %v4374 = vrot.slane %v4373, 1
        %v4375 = vadd.f32 %v4373, %v4374
        %v4376 = vrot.slane %v4325, 4
        %v4377 = vadd.f32 %v4325, %v4376
        %v4378 = vrot.slane %v4377, 2
        %v4379 = vadd.f32 %v4377, %v4378
        %v4380 = vrot.slane %v4379, 1
        %v4381 = vadd.f32 %v4379, %v4380
        %v4382 = vrot.slane %v4364, 4
        %v4383 = vadd.f32 %v4364, %v4382
        %v4384 = vrot.slane %v4383, 2
        %v4385 = vadd.f32 %v4383, %v4384
        %v4386 = vrot.slane %v4385, 1
        %v4387 = vadd.f32 %v4385, %v4386
        %v4388 = vrot.slane %v4366, 4
        %v4389 = vadd.f32 %v4366, %v4388
        %v4390 = vrot.slane %v4389, 2
        %v4391 = vadd.f32 %v4389, %v4390
        %v4392 = vrot.slane %v4391, 1
        %v4393 = vadd.f32 %v4391, %v4392
        %v4394 = vmul.f32 %v4375, %v2810
        %v4395 = vmul.f32 %v4381, %v2810
        %v4396 = vmul.f32 %v4387, %v2810
        %v4397 = vmul.f32 %v4393, %v2810
        %v4398 = vsub.f32 %v4323, %v4394
        %v4399 = vsub.f32 %v4325, %v4395
        %v4400 = vsub.f32 %v4364, %v4396
        %v4401 = vsub.f32 %v4366, %v4397
        %v4402 = vmul.f32 %v4398, %v4398
        %v4403 = vmul.f32 %v4399, %v4399
        %v4404 = vmul.f32 %v4400, %v4400
        %v4405 = vmul.f32 %v4401, %v4401
        %v4406 = vrot.slane %v4402, 4
        %v4407 = vadd.f32 %v4402, %v4406
        %v4408 = vrot.slane %v4407, 2
        %v4409 = vadd.f32 %v4407, %v4408
        %v4410 = vrot.slane %v4409, 1
        %v4411 = vadd.f32 %v4409, %v4410
        %v4412 = vrot.slane %v4403, 4
        %v4413 = vadd.f32 %v4403, %v4412
        %v4414 = vrot.slane %v4413, 2
        %v4415 = vadd.f32 %v4413, %v4414
        %v4416 = vrot.slane %v4415, 1
        %v4417 = vadd.f32 %v4415, %v4416
        %v4418 = vrot.slane %v4404, 4
        %v4419 = vadd.f32 %v4404, %v4418
        %v4420 = vrot.slane %v4419, 2
        %v4421 = vadd.f32 %v4419, %v4420
        %v4422 = vrot.slane %v4421, 1
        %v4423 = vadd.f32 %v4421, %v4422
        %v4424 = vrot.slane %v4405, 4
        %v4425 = vadd.f32 %v4405, %v4424
        %v4426 = vrot.slane %v4425, 2
        %v4427 = vadd.f32 %v4425, %v4426
        %v4428 = vrot.slane %v4427, 1
        %v4429 = vadd.f32 %v4427, %v4428
        %v4430 = vmul.f32 %v4411, %v2810
        %v4431 = vmul.f32 %v4417, %v2810
        %v4432 = vmul.f32 %v4423, %v2810
        %v4433 = vmul.f32 %v4429, %v2810
        %s4434 = scalar_lea.vmem [#allocation10], 58
        %v4435 = vld [vmem:[%s4434] ss:$8 sm:$0xf]
        %s4436 = scalar_lea.vmem [#allocation10], 59
        %v4437 = vld [vmem:[%s4436] ss:$8 sm:$0xf]
        %v4438 = vadd.f32 %v4430, 1e-05
        %v4439 = vadd.f32 %v4431, 1e-05
        %v4440 = vadd.f32 %v4432, 1e-05
        %v4441 = vadd.f32 %v4433, 1e-05
        %v4442 = vrsqrt.pop %v4438
        %v4443 = vrsqrt.pop %v4439
        %v4444 = vrsqrt.pop %v4440
        %v4445 = vrsqrt.pop %v4441
        %v4450 = vcombine.low %v4442, %v4443
        %v4451 = vcombine.low %v4444, %v4445
        %v4453 = vunpack.c.l.s4 1966171168
        %v4454 = vunpack.c.0.s8 %v4453
        %v4455 = vlaneseq
        %v4456 = vshrl.u32 %v4455, 7
        %v4457 = vsub.s32 %v4454, %v4456
        %v4458 = vrot.slane %v4450, %v4457
        %v4460 = vunpack.c.l.s4 1966171168
        %v4461 = vunpack.c.0.s8 %v4460
        %v4462 = vlaneseq
        %v4463 = vshrl.u32 %v4462, 7
        %v4464 = vsub.s32 %v4461, %v4463
        %v4465 = vrot.slane %v4451, %v4464
        %v4466 = vcombine.low %v4458, %v4465
        %v4468 = vunpack.c.l.s4 1966171168
        %v4469 = vunpack.c.0.s8 %v4468
        %v4470 = vlaneseq
        %v4471 = vshrl.u32 %v4470, 7
        %v4472 = vsub.s32 %v4469, %v4471
        %v4473 = vrot.slane %v4466, %v4472
        %v4475 = vmul.f32 %v4435, %v4473
        %v4477 = vlaneseq
        %v4478 = vshrl.u32 %v4477, 7
        %v4479 = vsub.s32 0, %v4478
        %v4480 = vrot.slane %v4475, %v4479
        %v4481 = vlaneseq
        %v4482 = vshrl.u32 %v4481, 7
        %v4483 = vsub.s32 1, %v4482
        %v4484 = vrot.slane %v4475, %v4483
        %v4485 = vlaneseq
        %v4486 = vshrl.u32 %v4485, 7
        %v4487 = vsub.s32 2, %v4486
        %v4488 = vrot.slane %v4475, %v4487
        %v4489 = vlaneseq
        %v4490 = vshrl.u32 %v4489, 7
        %v4491 = vsub.s32 3, %v4490
        %v4492 = vrot.slane %v4475, %v4491
        %v4497 = vmul.f32 %v4394, %v4480
        %v4498 = vmul.f32 %v4395, %v4484
        %v4499 = vmul.f32 %v4396, %v4488
        %v4500 = vmul.f32 %v4397, %v4492
        %v4505 = vcombine.low %v4497, %v4498
        %v4506 = vcombine.low %v4499, %v4500
        %v4508 = vunpack.c.l.s4 1966171168
        %v4509 = vunpack.c.0.s8 %v4508
        %v4510 = vlaneseq
        %v4511 = vshrl.u32 %v4510, 7
        %v4512 = vsub.s32 %v4509, %v4511
        %v4513 = vrot.slane %v4505, %v4512
        %v4515 = vunpack.c.l.s4 1966171168
        %v4516 = vunpack.c.0.s8 %v4515
        %v4517 = vlaneseq
        %v4518 = vshrl.u32 %v4517, 7
        %v4519 = vsub.s32 %v4516, %v4518
        %v4520 = vrot.slane %v4506, %v4519
        %v4521 = vcombine.low %v4513, %v4520
        %v4523 = vunpack.c.l.s4 1966171168
        %v4524 = vunpack.c.0.s8 %v4523
        %v4525 = vlaneseq
        %v4526 = vshrl.u32 %v4525, 7
        %v4527 = vsub.s32 %v4524, %v4526
        %v4528 = vrot.slane %v4521, %v4527
        %v4530 = vsub.f32 %v4437, %v4528
        %v4531 = vmul.f32 %v4323, %v4480
        %v4532 = vmul.f32 %v4325, %v4484
        %v4533 = vmul.f32 %v4364, %v4488
        %v4534 = vmul.f32 %v4366, %v4492
        %v4536 = vlaneseq
        %v4537 = vshrl.u32 %v4536, 7
        %v4538 = vsub.s32 0, %v4537
        %v4539 = vrot.slane %v4530, %v4538
        %v4540 = vlaneseq
        %v4541 = vshrl.u32 %v4540, 7
        %v4542 = vsub.s32 1, %v4541
        %v4543 = vrot.slane %v4530, %v4542
        %v4544 = vlaneseq
        %v4545 = vshrl.u32 %v4544, 7
        %v4546 = vsub.s32 2, %v4545
        %v4547 = vrot.slane %v4530, %v4546
        %v4548 = vlaneseq
        %v4549 = vshrl.u32 %v4548, 7
        %v4550 = vsub.s32 3, %v4549
        %v4551 = vrot.slane %v4530, %v4550
        %v4556 = vadd.f32 %v4531, %v4539
        %v4557 = vadd.f32 %v4532, %v4543
        %v4558 = vadd.f32 %v4533, %v4547
        %v4559 = vadd.f32 %v4534, %v4551
        %vm4560 = vcmp.ge.f32.partialorder %v4556, 0.0
        %vm4561 = vcmp.ge.f32.partialorder %v4557, 0.0
        %vm4562 = vcmp.ge.f32.partialorder %v4558, 0.0
        %vm4563 = vcmp.ge.f32.partialorder %v4559, 0.0
        %v4564 = vmul.f32 %v4556, 0.01
        %v4565 = vmul.f32 %v4557, 0.01
        %v4566 = vmul.f32 %v4558, 0.01
        %v4567 = vmul.f32 %v4559, 0.01
        %v4568 = vsel %vm4560, %v4556, %v4564
        %v4569 = vsel %vm4561, %v4557, %v4565
        %v4570 = vsel %vm4562, %v4558, %v4566
        %v4571 = vsel %vm4563, %v4559, %v4567
        %v4572 = vpack.c.bf16 %v4568, %v4568
        %v4573 = vpack.c.bf16 %v4569, %v4569
        %v4574 = vpack.c.bf16 %v4570, %v4570
        %v4575 = vpack.c.bf16 %v4571, %v4571
        // Predicated region
        $region69: #{autoencoder_forward_stacked.1} parent=31 // pred_check
          %p4576 = pneg %p245
        $region70: #{autoencoder_forward_stacked.1} parent=31 // pred_check_branch
          %4578 = sbr.rel (%p4576) target = $region72
        $region71: #{autoencoder_forward_stacked.1} parent=31 // pred_region
          %s4579 = scalar_lea.sflag [#allocation9], 5
          %s4580 = smul.u32 4, 64
          %s4581 = smul.u32 %s4580, 5
          %s4582 = sshll.u32 %s4581, 4
          %4583 = dma.done %s4579, %s4582
        $region72: #{autoencoder_forward_stacked.1} parent=31 // pred_fallthru
          _
        %v4584 = vld [vmem:[#allocation7] sm:$0xff]
        %v4585 = vld [vmem:[#allocation7 + $0x8] sm:$0xff]
        %v4586 = vld [vmem:[#allocation7 + $0x10] sm:$0xff]
        %v4587 = vld [vmem:[#allocation7 + $0x18] sm:$0xff]
        %v4588 = vld [vmem:[#allocation7 + $0x20] sm:$0xff]
        %v4589 = vld [vmem:[#allocation7 + $0x28] sm:$0xff]
        %v4590 = vld [vmem:[#allocation7 + $0x30] sm:$0xff]
        %v4591 = vld [vmem:[#allocation7 + $0x38] sm:$0xff]
        %v4592 = vld [vmem:[#allocation7 + $0x40] sm:$0xff]
        %v4593 = vld [vmem:[#allocation7 + $0x48] sm:$0xff]
        %v4594 = vld [vmem:[#allocation7 + $0x50] sm:$0xff]
        %v4595 = vld [vmem:[#allocation7 + $0x58] sm:$0xff]
        %v4596 = vld [vmem:[#allocation7 + $0x60] sm:$0xff]
        %v4597 = vld [vmem:[#allocation7 + $0x68] sm:$0xff]
        %v4598 = vld [vmem:[#allocation7 + $0x70] sm:$0xff]
        %v4599 = vld [vmem:[#allocation7 + $0x78] sm:$0xff]
        %v4600 = vld [vmem:[#allocation7 + $0x80] sm:$0xff]
        %v4601 = vld [vmem:[#allocation7 + $0x88] sm:$0xff]
        %v4602 = vld [vmem:[#allocation7 + $0x90] sm:$0xff]
        %v4603 = vld [vmem:[#allocation7 + $0x98] sm:$0xff]
        %v4604 = vld [vmem:[#allocation7 + $0xa0] sm:$0xff]
        %v4605 = vld [vmem:[#allocation7 + $0xa8] sm:$0xff]
        %v4606 = vld [vmem:[#allocation7 + $0xb0] sm:$0xff]
        %v4607 = vld [vmem:[#allocation7 + $0xb8] sm:$0xff]
        %v4608 = vld [vmem:[#allocation7 + $0xc0] sm:$0xff]
        %v4609 = vld [vmem:[#allocation7 + $0xc8] sm:$0xff]
        %v4610 = vld [vmem:[#allocation7 + $0xd0] sm:$0xff]
        %v4611 = vld [vmem:[#allocation7 + $0xd8] sm:$0xff]
        %v4612 = vld [vmem:[#allocation7 + $0xe0] sm:$0xff]
        %v4613 = vld [vmem:[#allocation7 + $0xe8] sm:$0xff]
        %v4614 = vld [vmem:[#allocation7 + $0xf0] sm:$0xff]
        %v4615 = vld [vmem:[#allocation7 + $0xf8] sm:$0xff]
        %v4616 = vld [vmem:[#allocation7 + $0x100] sm:$0xff]
        %v4617 = vld [vmem:[#allocation7 + $0x108] sm:$0xff]
        %v4618 = vld [vmem:[#allocation7 + $0x110] sm:$0xff]
        %v4619 = vld [vmem:[#allocation7 + $0x118] sm:$0xff]
        %v4620 = vld [vmem:[#allocation7 + $0x120] sm:$0xff]
        %v4621 = vld [vmem:[#allocation7 + $0x128] sm:$0xff]
        %v4622 = vld [vmem:[#allocation7 + $0x130] sm:$0xff]
        %v4623 = vld [vmem:[#allocation7 + $0x138] sm:$0xff]
        %v4624 = vld [vmem:[#allocation7 + $0x140] sm:$0xff]
        %v4625 = vld [vmem:[#allocation7 + $0x148] sm:$0xff]
        %v4626 = vld [vmem:[#allocation7 + $0x150] sm:$0xff]
        %v4627 = vld [vmem:[#allocation7 + $0x158] sm:$0xff]
        %v4628 = vld [vmem:[#allocation7 + $0x160] sm:$0xff]
        %v4629 = vld [vmem:[#allocation7 + $0x168] sm:$0xff]
        %v4630 = vld [vmem:[#allocation7 + $0x170] sm:$0xff]
        %v4631 = vld [vmem:[#allocation7 + $0x178] sm:$0xff]
        %v4632 = vld [vmem:[#allocation7 + $0x180] sm:$0xff]
        %v4633 = vld [vmem:[#allocation7 + $0x188] sm:$0xff]
        %v4634 = vld [vmem:[#allocation7 + $0x190] sm:$0xff]
        %v4635 = vld [vmem:[#allocation7 + $0x198] sm:$0xff]
        %v4636 = vld [vmem:[#allocation7 + $0x1a0] sm:$0xff]
        %v4637 = vld [vmem:[#allocation7 + $0x1a8] sm:$0xff]
        %v4638 = vld [vmem:[#allocation7 + $0x1b0] sm:$0xff]
        %v4639 = vld [vmem:[#allocation7 + $0x1b8] sm:$0xff]
        %v4640 = vld [vmem:[#allocation7 + $0x1c0] sm:$0xff]
        %v4641 = vld [vmem:[#allocation7 + $0x1c8] sm:$0xff]
        %v4642 = vld [vmem:[#allocation7 + $0x1d0] sm:$0xff]
        %v4643 = vld [vmem:[#allocation7 + $0x1d8] sm:$0xff]
        %v4644 = vld [vmem:[#allocation7 + $0x1e0] sm:$0xff]
        %v4645 = vld [vmem:[#allocation7 + $0x1e8] sm:$0xff]
        %v4646 = vld [vmem:[#allocation7 + $0x1f0] sm:$0xff]
        %v4647 = vld [vmem:[#allocation7 + $0x1f8] sm:$0xff]
        %v4648 = vld [vmem:[#allocation7 + $0x200] sm:$0xff]
        %v4649 = vld [vmem:[#allocation7 + $0x208] sm:$0xff]
        %v4650 = vld [vmem:[#allocation7 + $0x210] sm:$0xff]
        %v4651 = vld [vmem:[#allocation7 + $0x218] sm:$0xff]
        %v4652 = vld [vmem:[#allocation7 + $0x220] sm:$0xff]
        %v4653 = vld [vmem:[#allocation7 + $0x228] sm:$0xff]
        %v4654 = vld [vmem:[#allocation7 + $0x230] sm:$0xff]
        %v4655 = vld [vmem:[#allocation7 + $0x238] sm:$0xff]
        %v4656 = vld [vmem:[#allocation7 + $0x240] sm:$0xff]
        %v4657 = vld [vmem:[#allocation7 + $0x248] sm:$0xff]
        %v4658 = vld [vmem:[#allocation7 + $0x250] sm:$0xff]
        %v4659 = vld [vmem:[#allocation7 + $0x258] sm:$0xff]
        %v4660 = vld [vmem:[#allocation7 + $0x260] sm:$0xff]
        %v4661 = vld [vmem:[#allocation7 + $0x268] sm:$0xff]
        %v4662 = vld [vmem:[#allocation7 + $0x270] sm:$0xff]
        %v4663 = vld [vmem:[#allocation7 + $0x278] sm:$0xff]
        %v4664 = vld [vmem:[#allocation7 + $0x280] sm:$0xff]
        %v4665 = vld [vmem:[#allocation7 + $0x288] sm:$0xff]
        %v4666 = vld [vmem:[#allocation7 + $0x290] sm:$0xff]
        %v4667 = vld [vmem:[#allocation7 + $0x298] sm:$0xff]
        %v4668 = vld [vmem:[#allocation7 + $0x2a0] sm:$0xff]
        %v4669 = vld [vmem:[#allocation7 + $0x2a8] sm:$0xff]
        %v4670 = vld [vmem:[#allocation7 + $0x2b0] sm:$0xff]
        %v4671 = vld [vmem:[#allocation7 + $0x2b8] sm:$0xff]
        %v4672 = vld [vmem:[#allocation7 + $0x2c0] sm:$0xff]
        %v4673 = vld [vmem:[#allocation7 + $0x2c8] sm:$0xff]
        %v4674 = vld [vmem:[#allocation7 + $0x2d0] sm:$0xff]
        %v4675 = vld [vmem:[#allocation7 + $0x2d8] sm:$0xff]
        %v4676 = vld [vmem:[#allocation7 + $0x2e0] sm:$0xff]
        %v4677 = vld [vmem:[#allocation7 + $0x2e8] sm:$0xff]
        %v4678 = vld [vmem:[#allocation7 + $0x2f0] sm:$0xff]
        %v4679 = vld [vmem:[#allocation7 + $0x2f8] sm:$0xff]
        %v4680 = vld [vmem:[#allocation7 + $0x300] sm:$0xff]
        %v4681 = vld [vmem:[#allocation7 + $0x308] sm:$0xff]
        %v4682 = vld [vmem:[#allocation7 + $0x310] sm:$0xff]
        %v4683 = vld [vmem:[#allocation7 + $0x318] sm:$0xff]
        %v4684 = vld [vmem:[#allocation7 + $0x320] sm:$0xff]
        %v4685 = vld [vmem:[#allocation7 + $0x328] sm:$0xff]
        %v4686 = vld [vmem:[#allocation7 + $0x330] sm:$0xff]
        %v4687 = vld [vmem:[#allocation7 + $0x338] sm:$0xff]
        %v4688 = vld [vmem:[#allocation7 + $0x340] sm:$0xff]
        %v4689 = vld [vmem:[#allocation7 + $0x348] sm:$0xff]
        %v4690 = vld [vmem:[#allocation7 + $0x350] sm:$0xff]
        %v4691 = vld [vmem:[#allocation7 + $0x358] sm:$0xff]
        %v4692 = vld [vmem:[#allocation7 + $0x360] sm:$0xff]
        %v4693 = vld [vmem:[#allocation7 + $0x368] sm:$0xff]
        %v4694 = vld [vmem:[#allocation7 + $0x370] sm:$0xff]
        %v4695 = vld [vmem:[#allocation7 + $0x378] sm:$0xff]
        %v4696 = vld [vmem:[#allocation7 + $0x380] sm:$0xff]
        %v4697 = vld [vmem:[#allocation7 + $0x388] sm:$0xff]
        %v4698 = vld [vmem:[#allocation7 + $0x390] sm:$0xff]
        %v4699 = vld [vmem:[#allocation7 + $0x398] sm:$0xff]
        %v4700 = vld [vmem:[#allocation7 + $0x3a0] sm:$0xff]
        %v4701 = vld [vmem:[#allocation7 + $0x3a8] sm:$0xff]
        %v4702 = vld [vmem:[#allocation7 + $0x3b0] sm:$0xff]
        %v4703 = vld [vmem:[#allocation7 + $0x3b8] sm:$0xff]
        %v4704 = vld [vmem:[#allocation7 + $0x3c0] sm:$0xff]
        %v4705 = vld [vmem:[#allocation7 + $0x3c8] sm:$0xff]
        %v4706 = vld [vmem:[#allocation7 + $0x3d0] sm:$0xff]
        %v4707 = vld [vmem:[#allocation7 + $0x3d8] sm:$0xff]
        %v4708 = vld [vmem:[#allocation7 + $0x3e0] sm:$0xff]
        %v4709 = vld [vmem:[#allocation7 + $0x3e8] sm:$0xff]
        %v4710 = vld [vmem:[#allocation7 + $0x3f0] sm:$0xff]
        %v4711 = vld [vmem:[#allocation7 + $0x3f8] sm:$0xff]
        %v4712 = vld [vmem:[#allocation7 + $0x400] sm:$0xff]
        %v4713 = vld [vmem:[#allocation7 + $0x408] sm:$0xff]
        %v4714 = vld [vmem:[#allocation7 + $0x410] sm:$0xff]
        %v4715 = vld [vmem:[#allocation7 + $0x418] sm:$0xff]
        %v4716 = vld [vmem:[#allocation7 + $0x420] sm:$0xff]
        %v4717 = vld [vmem:[#allocation7 + $0x428] sm:$0xff]
        %v4718 = vld [vmem:[#allocation7 + $0x430] sm:$0xff]
        %v4719 = vld [vmem:[#allocation7 + $0x438] sm:$0xff]
        %v4720 = vld [vmem:[#allocation7 + $0x440] sm:$0xff]
        %v4721 = vld [vmem:[#allocation7 + $0x448] sm:$0xff]
        %v4722 = vld [vmem:[#allocation7 + $0x450] sm:$0xff]
        %v4723 = vld [vmem:[#allocation7 + $0x458] sm:$0xff]
        %v4724 = vld [vmem:[#allocation7 + $0x460] sm:$0xff]
        %v4725 = vld [vmem:[#allocation7 + $0x468] sm:$0xff]
        %v4726 = vld [vmem:[#allocation7 + $0x470] sm:$0xff]
        %v4727 = vld [vmem:[#allocation7 + $0x478] sm:$0xff]
        %v4728 = vld [vmem:[#allocation7 + $0x480] sm:$0xff]
        %v4729 = vld [vmem:[#allocation7 + $0x488] sm:$0xff]
        %v4730 = vld [vmem:[#allocation7 + $0x490] sm:$0xff]
        %v4731 = vld [vmem:[#allocation7 + $0x498] sm:$0xff]
        %v4732 = vld [vmem:[#allocation7 + $0x4a0] sm:$0xff]
        %v4733 = vld [vmem:[#allocation7 + $0x4a8] sm:$0xff]
        %v4734 = vld [vmem:[#allocation7 + $0x4b0] sm:$0xff]
        %v4735 = vld [vmem:[#allocation7 + $0x4b8] sm:$0xff]
        %v4736 = vld [vmem:[#allocation7 + $0x4c0] sm:$0xff]
        %v4737 = vld [vmem:[#allocation7 + $0x4c8] sm:$0xff]
        %v4738 = vld [vmem:[#allocation7 + $0x4d0] sm:$0xff]
        %v4739 = vld [vmem:[#allocation7 + $0x4d8] sm:$0xff]
        %v4740 = vld [vmem:[#allocation7 + $0x4e0] sm:$0xff]
        %v4741 = vld [vmem:[#allocation7 + $0x4e8] sm:$0xff]
        %v4742 = vld [vmem:[#allocation7 + $0x4f0] sm:$0xff]
        %v4743 = vld [vmem:[#allocation7 + $0x4f8] sm:$0xff]
        %4744 = vmatprep.subr.bf16.mxu0 %v4585
        %4745 = vmatpush1.bf16.msra.mxu0 %v4584
        %4746 = vmatprep.subr.bf16.mxu0 %v4590
        %4747 = vmatpush1.bf16.msra.mxu0 %v4589
        %4748 = vmatprep.subr.bf16.mxu0 %v4595
        %4749 = vmatpush1.bf16.msra.mxu0 %v4594
        %4750 = vmatprep.subr.bf16.mxu0 %v4600
        %4751 = vmatpush1.bf16.msra.mxu0 %v4599
        %4752 = vmatprep.subr.bf16.mxu0 %v4605
        %4753 = vmatpush1.bf16.msra.mxu0 %v4604
        %4754 = vmatprep.subr.bf16.mxu0 %v4610
        %4755 = vmatpush1.bf16.msra.mxu0 %v4609
        %4756 = vmatprep.subr.bf16.mxu0 %v4615
        %4757 = vmatpush1.bf16.msra.mxu0 %v4614
        %4758 = vmatprep.subr.bf16.mxu0 %v4620
        %4759 = vmatpush1.bf16.msra.mxu0 %v4619
        %4760 = vmatprep.subr.bf16.mxu0 %v4625
        %4761 = vmatpush1.bf16.msra.mxu0 %v4624
        %4762 = vmatprep.subr.bf16.mxu0 %v4630
        %4763 = vmatpush1.bf16.msra.mxu0 %v4629
        %4764 = vmatprep.subr.bf16.mxu0 %v4635
        %4765 = vmatpush1.bf16.msra.mxu0 %v4634
        %4766 = vmatprep.subr.bf16.mxu0 %v4640
        %4767 = vmatpush1.bf16.msra.mxu0 %v4639
        %4768 = vmatprep.subr.bf16.mxu0 %v4645
        %4769 = vmatpush1.bf16.msra.mxu0 %v4644
        %4770 = vmatprep.subr.bf16.mxu0 %v4650
        %4771 = vmatpush1.bf16.msra.mxu0 %v4649
        %4772 = vmatprep.subr.bf16.mxu0 %v4655
        %4773 = vmatpush1.bf16.msra.mxu0 %v4654
        %4774 = vmatprep.subr.bf16.mxu0 %v4660
        %4775 = vmatpush1.bf16.msra.mxu0 %v4659
        %4776 = vmatprep.mubr.bf16.mxu0 %v4573
        %4777 = vmatmul.mubr.bf16.gmra.mrb[0].mxu0 %v4572
        %v4778 = vpop.f32.mrb[0].mxu0
        %v4779 = vadd.f32 0.0, %v4778
        %v4780 = vpop.f32.mrb[0].mxu0
        %v4781 = vadd.f32 0.0, %v4780
        %v4782 = vpop.f32.mrb[0].mxu0
        %v4783 = vpop.f32.mrb[0].mxu0
        %4784 = vdwg.mxu0
        %4785 = vmatprep.subr.bf16.mxu0 %v4665
        %4786 = vmatpush1.bf16.msra.mxu0 %v4664
        %4787 = vmatprep.subr.bf16.mxu0 %v4670
        %4788 = vmatpush1.bf16.msra.mxu0 %v4669
        %4789 = vmatprep.subr.bf16.mxu0 %v4675
        %4790 = vmatpush1.bf16.msra.mxu0 %v4674
        %4791 = vmatprep.subr.bf16.mxu0 %v4680
        %4792 = vmatpush1.bf16.msra.mxu0 %v4679
        %4793 = vmatprep.subr.bf16.mxu0 %v4685
        %4794 = vmatpush1.bf16.msra.mxu0 %v4684
        %4795 = vmatprep.subr.bf16.mxu0 %v4690
        %4796 = vmatpush1.bf16.msra.mxu0 %v4689
        %4797 = vmatprep.subr.bf16.mxu0 %v4695
        %4798 = vmatpush1.bf16.msra.mxu0 %v4694
        %4799 = vmatprep.subr.bf16.mxu0 %v4700
        %4800 = vmatpush1.bf16.msra.mxu0 %v4699
        %4801 = vmatprep.subr.bf16.mxu0 %v4705
        %4802 = vmatpush1.bf16.msra.mxu0 %v4704
        %4803 = vmatprep.subr.bf16.mxu0 %v4710
        %4804 = vmatpush1.bf16.msra.mxu0 %v4709
        %4805 = vmatprep.subr.bf16.mxu0 %v4715
        %4806 = vmatpush1.bf16.msra.mxu0 %v4714
        %4807 = vmatprep.subr.bf16.mxu0 %v4720
        %4808 = vmatpush1.bf16.msra.mxu0 %v4719
        %4809 = vmatprep.subr.bf16.mxu0 %v4725
        %4810 = vmatpush1.bf16.msra.mxu0 %v4724
        %4811 = vmatprep.subr.bf16.mxu0 %v4730
        %4812 = vmatpush1.bf16.msra.mxu0 %v4729
        %4813 = vmatprep.subr.bf16.mxu0 %v4735
        %4814 = vmatpush1.bf16.msra.mxu0 %v4734
        %4815 = vmatprep.subr.bf16.mxu0 %v4740
        %4816 = vmatpush1.bf16.msra.mxu0 %v4739
        %4817 = vmatprep.mubr.bf16.mxu0 %v4575
        %4818 = vmatmul.mubr.bf16.gmra.mrb[0].mxu0 %v4574
        %v4819 = vpop.f32.mrb[0].mxu0
        %v4820 = vadd.f32 %v4779, %v4819
        %v4821 = vpop.f32.mrb[0].mxu0
        %v4822 = vadd.f32 %v4781, %v4821
        %v4823 = vpop.f32.mrb[0].mxu0
        %v4824 = vpop.f32.mrb[0].mxu0
        %4825 = vdwg.mxu0
        %4826 = vmatprep.subr.bf16.mxu0 %v4587
        %4827 = vmatpush1.bf16.msra.mxu0 %v4586
        %4828 = vmatprep.subr.bf16.mxu0 %v4592
        %4829 = vmatpush1.bf16.msra.mxu0 %v4591
        %4830 = vmatprep.subr.bf16.mxu0 %v4597
        %4831 = vmatpush1.bf16.msra.mxu0 %v4596
        %4832 = vmatprep.subr.bf16.mxu0 %v4602
        %4833 = vmatpush1.bf16.msra.mxu0 %v4601
        %4834 = vmatprep.subr.bf16.mxu0 %v4607
        %4835 = vmatpush1.bf16.msra.mxu0 %v4606
        %4836 = vmatprep.subr.bf16.mxu0 %v4612
        %4837 = vmatpush1.bf16.msra.mxu0 %v4611
        %4838 = vmatprep.subr.bf16.mxu0 %v4617
        %4839 = vmatpush1.bf16.msra.mxu0 %v4616
        %4840 = vmatprep.subr.bf16.mxu0 %v4622
        %4841 = vmatpush1.bf16.msra.mxu0 %v4621
        %4842 = vmatprep.subr.bf16.mxu0 %v4627
        %4843 = vmatpush1.bf16.msra.mxu0 %v4626
        %4844 = vmatprep.subr.bf16.mxu0 %v4632
        %4845 = vmatpush1.bf16.msra.mxu0 %v4631
        %4846 = vmatprep.subr.bf16.mxu0 %v4637
        %4847 = vmatpush1.bf16.msra.mxu0 %v4636
        %4848 = vmatprep.subr.bf16.mxu0 %v4642
        %4849 = vmatpush1.bf16.msra.mxu0 %v4641
        %4850 = vmatprep.subr.bf16.mxu0 %v4647
        %4851 = vmatpush1.bf16.msra.mxu0 %v4646
        %4852 = vmatprep.subr.bf16.mxu0 %v4652
        %4853 = vmatpush1.bf16.msra.mxu0 %v4651
        %4854 = vmatprep.subr.bf16.mxu0 %v4657
        %4855 = vmatpush1.bf16.msra.mxu0 %v4656
        %4856 = vmatprep.subr.bf16.mxu0 %v4662
        %4857 = vmatpush1.bf16.msra.mxu0 %v4661
        %4858 = vmatprep.mubr.bf16.mxu0 %v4573
        %4859 = vmatmul.mubr.bf16.gmra.mrb[0].mxu0 %v4572
        %v4860 = vpop.f32.mrb[0].mxu0
        %v4861 = vadd.f32 0.0, %v4860
        %v4862 = vpop.f32.mrb[0].mxu0
        %v4863 = vadd.f32 0.0, %v4862
        %v4864 = vpop.f32.mrb[0].mxu0
        %v4865 = vpop.f32.mrb[0].mxu0
        %4866 = vdwg.mxu0
        %4867 = vmatprep.subr.bf16.mxu0 %v4667
        %4868 = vmatpush1.bf16.msra.mxu0 %v4666
        %4869 = vmatprep.subr.bf16.mxu0 %v4672
        %4870 = vmatpush1.bf16.msra.mxu0 %v4671
        %4871 = vmatprep.subr.bf16.mxu0 %v4677
        %4872 = vmatpush1.bf16.msra.mxu0 %v4676
        %4873 = vmatprep.subr.bf16.mxu0 %v4682
        %4874 = vmatpush1.bf16.msra.mxu0 %v4681
        %4875 = vmatprep.subr.bf16.mxu0 %v4687
        %4876 = vmatpush1.bf16.msra.mxu0 %v4686
        %4877 = vmatprep.subr.bf16.mxu0 %v4692
        %4878 = vmatpush1.bf16.msra.mxu0 %v4691
        %4879 = vmatprep.subr.bf16.mxu0 %v4697
        %4880 = vmatpush1.bf16.msra.mxu0 %v4696
        %4881 = vmatprep.subr.bf16.mxu0 %v4702
        %4882 = vmatpush1.bf16.msra.mxu0 %v4701
        %4883 = vmatprep.subr.bf16.mxu0 %v4707
        %4884 = vmatpush1.bf16.msra.mxu0 %v4706
        %4885 = vmatprep.subr.bf16.mxu0 %v4712
        %4886 = vmatpush1.bf16.msra.mxu0 %v4711
        %4887 = vmatprep.subr.bf16.mxu0 %v4717
        %4888 = vmatpush1.bf16.msra.mxu0 %v4716
        %4889 = vmatprep.subr.bf16.mxu0 %v4722
        %4890 = vmatpush1.bf16.msra.mxu0 %v4721
        %4891 = vmatprep.subr.bf16.mxu0 %v4727
        %4892 = vmatpush1.bf16.msra.mxu0 %v4726
        %4893 = vmatprep.subr.bf16.mxu0 %v4732
        %4894 = vmatpush1.bf16.msra.mxu0 %v4731
        %4895 = vmatprep.subr.bf16.mxu0 %v4737
        %4896 = vmatpush1.bf16.msra.mxu0 %v4736
        %4897 = vmatprep.subr.bf16.mxu0 %v4742
        %4898 = vmatpush1.bf16.msra.mxu0 %v4741
        %4899 = vmatprep.mubr.bf16.mxu0 %v4575
        %4900 = vmatmul.mubr.bf16.gmra.mrb[0].mxu0 %v4574
        %v4901 = vpop.f32.mrb[0].mxu0
        %v4902 = vadd.f32 %v4861, %v4901
        %v4903 = vpop.f32.mrb[0].mxu0
        %v4904 = vadd.f32 %v4863, %v4903
        %v4905 = vpop.f32.mrb[0].mxu0
        %v4906 = vpop.f32.mrb[0].mxu0
        %4907 = vdwg.mxu0
        %4908 = vmatprep.subr.bf16.mxu0 0
        %4909 = vmatpush1.bf16.msra.mxu0 %v4588
        %4910 = vmatprep.subr.bf16.mxu0 0
        %4911 = vmatpush1.bf16.msra.mxu0 %v4593
        %4912 = vmatprep.subr.bf16.mxu0 0
        %4913 = vmatpush1.bf16.msra.mxu0 %v4598
        %4914 = vmatprep.subr.bf16.mxu0 0
        %4915 = vmatpush1.bf16.msra.mxu0 %v4603
        %4916 = vmatprep.subr.bf16.mxu0 0
        %4917 = vmatpush1.bf16.msra.mxu0 %v4608
        %4918 = vmatprep.subr.bf16.mxu0 0
        %4919 = vmatpush1.bf16.msra.mxu0 %v4613
        %4920 = vmatprep.subr.bf16.mxu0 0
        %4921 = vmatpush1.bf16.msra.mxu0 %v4618
        %4922 = vmatprep.subr.bf16.mxu0 0
        %4923 = vmatpush1.bf16.msra.mxu0 %v4623
        %4924 = vmatprep.subr.bf16.mxu0 0
        %4925 = vmatpush1.bf16.msra.mxu0 %v4628
        %4926 = vmatprep.subr.bf16.mxu0 0
        %4927 = vmatpush1.bf16.msra.mxu0 %v4633
        %4928 = vmatprep.subr.bf16.mxu0 0
        %4929 = vmatpush1.bf16.msra.mxu0 %v4638
        %4930 = vmatprep.subr.bf16.mxu0 0
        %4931 = vmatpush1.bf16.msra.mxu0 %v4643
        %4932 = vmatprep.subr.bf16.mxu0 0
        %4933 = vmatpush1.bf16.msra.mxu0 %v4648
        %4934 = vmatprep.subr.bf16.mxu0 0
        %4935 = vmatpush1.bf16.msra.mxu0 %v4653
        %4936 = vmatprep.subr.bf16.mxu0 0
        %4937 = vmatpush1.bf16.msra.mxu0 %v4658
        %4938 = vmatprep.subr.bf16.mxu0 0
        %4939 = vmatpush1.bf16.msra.mxu0 %v4663
        %4940 = vmatprep.mubr.bf16.mxu0 %v4573
        %4941 = vmatmul.mubr.bf16.gmra.mrb[0].mxu0 %v4572
        %v4942 = vpop.f32.mrb[0].mxu0
        %v4943 = vadd.f32 0.0, %v4942
        %v4944 = vpop.f32.mrb[0].mxu0
        %v4945 = vpop.f32.mrb[0].mxu0
        %v4946 = vpop.f32.mrb[0].mxu0
        %4947 = vdwg.mxu0
        %4948 = vmatprep.subr.bf16.mxu0 0
        %4949 = vmatpush1.bf16.msra.mxu0 %v4668
        %4950 = vmatprep.subr.bf16.mxu0 0
        %4951 = vmatpush1.bf16.msra.mxu0 %v4673
        %4952 = vmatprep.subr.bf16.mxu0 0
        %4953 = vmatpush1.bf16.msra.mxu0 %v4678
        %4954 = vmatprep.subr.bf16.mxu0 0
        %4955 = vmatpush1.bf16.msra.mxu0 %v4683
        %4956 = vmatprep.subr.bf16.mxu0 0
        %4957 = vmatpush1.bf16.msra.mxu0 %v4688
        %4958 = vmatprep.subr.bf16.mxu0 0
        %4959 = vmatpush1.bf16.msra.mxu0 %v4693
        %4960 = vmatprep.subr.bf16.mxu0 0
        %4961 = vmatpush1.bf16.msra.mxu0 %v4698
        %4962 = vmatprep.subr.bf16.mxu0 0
        %4963 = vmatpush1.bf16.msra.mxu0 %v4703
        %4964 = vmatprep.subr.bf16.mxu0 0
        %4965 = vmatpush1.bf16.msra.mxu0 %v4708
        %4966 = vmatprep.subr.bf16.mxu0 0
        %4967 = vmatpush1.bf16.msra.mxu0 %v4713
        %4968 = vmatprep.subr.bf16.mxu0 0
        %4969 = vmatpush1.bf16.msra.mxu0 %v4718
        %4970 = vmatprep.subr.bf16.mxu0 0
        %4971 = vmatpush1.bf16.msra.mxu0 %v4723
        %4972 = vmatprep.subr.bf16.mxu0 0
        %4973 = vmatpush1.bf16.msra.mxu0 %v4728
        %4974 = vmatprep.subr.bf16.mxu0 0
        %4975 = vmatpush1.bf16.msra.mxu0 %v4733
        %4976 = vmatprep.subr.bf16.mxu0 0
        %4977 = vmatpush1.bf16.msra.mxu0 %v4738
        %4978 = vmatprep.subr.bf16.mxu0 0
        %4979 = vmatpush1.bf16.msra.mxu0 %v4743
        %4980 = vmatprep.mubr.bf16.mxu0 %v4575
        %4981 = vmatmul.mubr.bf16.gmra.mrb[0].mxu0 %v4574
        %v4982 = vpop.f32.mrb[0].mxu0
        %v4983 = vadd.f32 %v4943, %v4982
        %v4984 = vpop.f32.mrb[0].mxu0
        %v4985 = vpop.f32.mrb[0].mxu0
        %v4986 = vpop.f32.mrb[0].mxu0
        %4987 = vdwg.mxu0
        %v4988 = vrot.slane %v4820, 4
        %v4989 = vadd.f32 %v4820, %v4988
        %v4990 = vrot.slane %v4989, 2
        %v4991 = vadd.f32 %v4989, %v4990
        %v4992 = vrot.slane %v4991, 1
        %v4993 = vadd.f32 %v4991, %v4992
        %v4994 = vrot.slane %v4822, 4
        %v4995 = vadd.f32 %v4822, %v4994
        %v4996 = vrot.slane %v4995, 2
        %v4997 = vadd.f32 %v4995, %v4996
        %v4998 = vrot.slane %v4997, 1
        %v4999 = vadd.f32 %v4997, %v4998
        %v5000 = vrot.slane %v4902, 4
        %v5001 = vadd.f32 %v4902, %v5000
        %v5002 = vrot.slane %v5001, 2
        %v5003 = vadd.f32 %v5001, %v5002
        %v5004 = vrot.slane %v5003, 1
        %v5005 = vadd.f32 %v5003, %v5004
        %v5006 = vrot.slane %v4904, 4
        %v5007 = vadd.f32 %v4904, %v5006
        %v5008 = vrot.slane %v5007, 2
        %v5009 = vadd.f32 %v5007, %v5008
        %v5010 = vrot.slane %v5009, 1
        %v5011 = vadd.f32 %v5009, %v5010
        %v5012 = vrot.slane %v4983, 4
        %v5013 = vadd.f32 %v4983, %v5012
        %v5014 = vrot.slane %v5013, 2
        %v5015 = vadd.f32 %v5013, %v5014
        %v5016 = vrot.slane %v5015, 1
        %v5017 = vadd.f32 %v5015, %v5016
        %v5018 = vmul.f32 %v4993, %v2810
        %v5019 = vmul.f32 %v4999, %v2810
        %v5020 = vmul.f32 %v5005, %v2810
        %v5021 = vmul.f32 %v5011, %v2810
        %v5022 = vmul.f32 %v5017, %v2810
        %v5023 = vsub.f32 %v4820, %v5018
        %v5024 = vsub.f32 %v4822, %v5019
        %v5025 = vsub.f32 %v4902, %v5020
        %v5026 = vsub.f32 %v4904, %v5021
        %v5027 = vsub.f32 %v4983, %v5022
        %v5028 = vmul.f32 %v5023, %v5023
        %v5029 = vmul.f32 %v5024, %v5024
        %v5030 = vmul.f32 %v5025, %v5025
        %v5031 = vmul.f32 %v5026, %v5026
        %v5032 = vmul.f32 %v5027, %v5027
        %v5033 = vrot.slane %v5028, 4
        %v5034 = vadd.f32 %v5028, %v5033
        %v5035 = vrot.slane %v5034, 2
        %v5036 = vadd.f32 %v5034, %v5035
        %v5037 = vrot.slane %v5036, 1
        %v5038 = vadd.f32 %v5036, %v5037
        %v5039 = vrot.slane %v5029, 4
        %v5040 = vadd.f32 %v5029, %v5039
        %v5041 = vrot.slane %v5040, 2
        %v5042 = vadd.f32 %v5040, %v5041
        %v5043 = vrot.slane %v5042, 1
        %v5044 = vadd.f32 %v5042, %v5043
        %v5045 = vrot.slane %v5030, 4
        %v5046 = vadd.f32 %v5030, %v5045
        %v5047 = vrot.slane %v5046, 2
        %v5048 = vadd.f32 %v5046, %v5047
        %v5049 = vrot.slane %v5048, 1
        %v5050 = vadd.f32 %v5048, %v5049
        %v5051 = vrot.slane %v5031, 4
        %v5052 = vadd.f32 %v5031, %v5051
        %v5053 = vrot.slane %v5052, 2
        %v5054 = vadd.f32 %v5052, %v5053
        %v5055 = vrot.slane %v5054, 1
        %v5056 = vadd.f32 %v5054, %v5055
        %v5057 = vrot.slane %v5032, 4
        %v5058 = vadd.f32 %v5032, %v5057
        %v5059 = vrot.slane %v5058, 2
        %v5060 = vadd.f32 %v5058, %v5059
        %v5061 = vrot.slane %v5060, 1
        %v5062 = vadd.f32 %v5060, %v5061
        %v5063 = vmul.f32 %v5038, %v2810
        %v5064 = vmul.f32 %v5044, %v2810
        %v5065 = vmul.f32 %v5050, %v2810
        %v5066 = vmul.f32 %v5056, %v2810
        %v5067 = vmul.f32 %v5062, %v2810
        %s5068 = scalar_lea.vmem [#allocation10], 60
        %v5069 = vld [vmem:[%s5068] ss:$8 sm:$0xf]
        %v5070 = vld [vmem:[%s5068] ss:$8 sm:$0x10]
        %v5071 = vor.u32 %v5069, %v5070
        %s5072 = scalar_lea.vmem [#allocation10], 61
        %v5073 = vld [vmem:[%s5072] ss:$8 sm:$0xf]
        %v5074 = vld [vmem:[%s5072] ss:$8 sm:$0x10]
        %v5075 = vor.u32 %v5073, %v5074
        %v5076 = vadd.f32 %v5063, 1e-05
        %v5077 = vadd.f32 %v5064, 1e-05
        %v5078 = vadd.f32 %v5065, 1e-05
        %v5079 = vadd.f32 %v5066, 1e-05
        %v5080 = vadd.f32 %v5067, 1e-05
        %v5081 = vrsqrt.pop %v5076
        %v5082 = vrsqrt.pop %v5077
        %v5083 = vrsqrt.pop %v5078
        %v5084 = vrsqrt.pop %v5079
        %v5085 = vrsqrt.pop %v5080
        %v5091 = vcombine.low %v5081, %v5082
        %v5092 = vcombine.low %v5083, %v5084
        %v5094 = vunpack.c.l.s4 1966171168
        %v5095 = vunpack.c.0.s8 %v5094
        %v5096 = vlaneseq
        %v5097 = vshrl.u32 %v5096, 7
        %v5098 = vsub.s32 %v5095, %v5097
        %v5099 = vrot.slane %v5091, %v5098
        %v5101 = vunpack.c.l.s4 1966171168
        %v5102 = vunpack.c.0.s8 %v5101
        %v5103 = vlaneseq
        %v5104 = vshrl.u32 %v5103, 7
        %v5105 = vsub.s32 %v5102, %v5104
        %v5106 = vrot.slane %v5092, %v5105
        %v5108 = vunpack.c.l.s4 1966171168
        %v5109 = vunpack.c.0.s8 %v5108
        %v5110 = vlaneseq
        %v5111 = vshrl.u32 %v5110, 7
        %v5112 = vsub.s32 %v5109, %v5111
        %v5113 = vrot.slane %v5085, %v5112
        %v5114 = vcombine.low %v5099, %v5106
        %v5116 = vunpack.c.l.s4 1966171168
        %v5117 = vunpack.c.0.s8 %v5116
        %v5118 = vlaneseq
        %v5119 = vshrl.u32 %v5118, 7
        %v5120 = vsub.s32 %v5117, %v5119
        %v5121 = vrot.slane %v5114, %v5120
        %v5123 = vunpack.c.l.s4 1966171168
        %v5124 = vunpack.c.0.s8 %v5123
        %v5125 = vlaneseq
        %v5126 = vshrl.u32 %v5125, 7
        %v5127 = vsub.s32 %v5124, %v5126
        %v5128 = vrot.slane %v5113, %v5127
        %v5129 = vcombine.low %v5121, %v5128
        %v5131 = vmul.f32 %v5071, %v5129
        %v5133 = vlaneseq
        %v5134 = vshrl.u32 %v5133, 7
        %v5135 = vsub.s32 0, %v5134
        %v5136 = vrot.slane %v5131, %v5135
        %v5137 = vlaneseq
        %v5138 = vshrl.u32 %v5137, 7
        %v5139 = vsub.s32 1, %v5138
        %v5140 = vrot.slane %v5131, %v5139
        %v5141 = vlaneseq
        %v5142 = vshrl.u32 %v5141, 7
        %v5143 = vsub.s32 2, %v5142
        %v5144 = vrot.slane %v5131, %v5143
        %v5145 = vlaneseq
        %v5146 = vshrl.u32 %v5145, 7
        %v5147 = vsub.s32 3, %v5146
        %v5148 = vrot.slane %v5131, %v5147
        %v5149 = vlaneseq
        %v5150 = vshrl.u32 %v5149, 7
        %v5151 = vsub.s32 4, %v5150
        %v5152 = vrot.slane %v5131, %v5151
        %v5158 = vmul.f32 %v5018, %v5136
        %v5159 = vmul.f32 %v5019, %v5140
        %v5160 = vmul.f32 %v5020, %v5144
        %v5161 = vmul.f32 %v5021, %v5148
        %v5162 = vmul.f32 %v5022, %v5152
        %v5168 = vcombine.low %v5158, %v5159
        %v5169 = vcombine.low %v5160, %v5161
        %v5171 = vunpack.c.l.s4 1966171168
        %v5172 = vunpack.c.0.s8 %v5171
        %v5173 = vlaneseq
        %v5174 = vshrl.u32 %v5173, 7
        %v5175 = vsub.s32 %v5172, %v5174
        %v5176 = vrot.slane %v5168, %v5175
        %v5178 = vunpack.c.l.s4 1966171168
        %v5179 = vunpack.c.0.s8 %v5178
        %v5180 = vlaneseq
        %v5181 = vshrl.u32 %v5180, 7
        %v5182 = vsub.s32 %v5179, %v5181
        %v5183 = vrot.slane %v5169, %v5182
        %v5185 = vunpack.c.l.s4 1966171168
        %v5186 = vunpack.c.0.s8 %v5185
        %v5187 = vlaneseq
        %v5188 = vshrl.u32 %v5187, 7
        %v5189 = vsub.s32 %v5186, %v5188
        %v5190 = vrot.slane %v5162, %v5189
        %v5191 = vcombine.low %v5176, %v5183
        %v5193 = vunpack.c.l.s4 1966171168
        %v5194 = vunpack.c.0.s8 %v5193
        %v5195 = vlaneseq
        %v5196 = vshrl.u32 %v5195, 7
        %v5197 = vsub.s32 %v5194, %v5196
        %v5198 = vrot.slane %v5191, %v5197
        %v5200 = vunpack.c.l.s4 1966171168
        %v5201 = vunpack.c.0.s8 %v5200
        %v5202 = vlaneseq
        %v5203 = vshrl.u32 %v5202, 7
        %v5204 = vsub.s32 %v5201, %v5203
        %v5205 = vrot.slane %v5190, %v5204
        %v5206 = vcombine.low %v5198, %v5205
        %v5208 = vsub.f32 %v5075, %v5206
        %v5209 = vmul.f32 %v4820, %v5136
        %v5210 = vmul.f32 %v4822, %v5140
        %v5211 = vmul.f32 %v4902, %v5144
        %v5212 = vmul.f32 %v4904, %v5148
        %v5213 = vmul.f32 %v4983, %v5152
        %v5215 = vlaneseq
        %v5216 = vshrl.u32 %v5215, 7
        %v5217 = vsub.s32 0, %v5216
        %v5218 = vrot.slane %v5208, %v5217
        %v5219 = vlaneseq
        %v5220 = vshrl.u32 %v5219, 7
        %v5221 = vsub.s32 1, %v5220
        %v5222 = vrot.slane %v5208, %v5221
        %v5223 = vlaneseq
        %v5224 = vshrl.u32 %v5223, 7
        %v5225 = vsub.s32 2, %v5224
        %v5226 = vrot.slane %v5208, %v5225
        %v5227 = vlaneseq
        %v5228 = vshrl.u32 %v5227, 7
        %v5229 = vsub.s32 3, %v5228
        %v5230 = vrot.slane %v5208, %v5229
        %v5231 = vlaneseq
        %v5232 = vshrl.u32 %v5231, 7
        %v5233 = vsub.s32 4, %v5232
        %v5234 = vrot.slane %v5208, %v5233
        %v5240 = vadd.f32 %v5209, %v5218
        %v5241 = vadd.f32 %v5210, %v5222
        %v5242 = vadd.f32 %v5211, %v5226
        %v5243 = vadd.f32 %v5212, %v5230
        %v5244 = vadd.f32 %v5213, %v5234
        %vm5245 = vcmp.ge.f32.partialorder %v5240, 0.0
        %vm5246 = vcmp.ge.f32.partialorder %v5241, 0.0
        %vm5247 = vcmp.ge.f32.partialorder %v5242, 0.0
        %vm5248 = vcmp.ge.f32.partialorder %v5243, 0.0
        %vm5249 = vcmp.ge.f32.partialorder %v5244, 0.0
        %v5250 = vmul.f32 %v5240, 0.01
        %v5251 = vmul.f32 %v5241, 0.01
        %v5252 = vmul.f32 %v5242, 0.01
        %v5253 = vmul.f32 %v5243, 0.01
        %v5254 = vmul.f32 %v5244, 0.01
        %v5255 = vsel %vm5245, %v5240, %v5250
        %v5256 = vsel %vm5246, %v5241, %v5251
        %v5257 = vsel %vm5247, %v5242, %v5252
        %v5258 = vsel %vm5248, %v5243, %v5253
        %v5259 = vsel %vm5249, %v5244, %v5254
        %v5260 = vpack.c.bf16 %v5255, %v5255
        %v5261 = vpack.c.bf16 %v5256, %v5256
        %v5262 = vpack.c.bf16 %v5257, %v5257
        %v5263 = vpack.c.bf16 %v5258, %v5258
        %v5264 = vpack.c.bf16 %v5259, %v5259
        // Predicated region
        $region73: #{autoencoder_forward_stacked.1} parent=31 // pred_check
          %p5265 = pneg %p245
        $region74: #{autoencoder_forward_stacked.1} parent=31 // pred_check_branch
          %5267 = sbr.rel (%p5265) target = $region76
        $region75: #{autoencoder_forward_stacked.1} parent=31 // pred_region
          %s5268 = scalar_lea.sflag [#allocation9], 6
          %s5269 = smul.u32 4, 80
          %s5270 = smul.u32 %s5269, 7
          %s5271 = sshll.u32 %s5270, 4
          %5272 = dma.done %s5268, %s5271
        $region76: #{autoencoder_forward_stacked.1} parent=31 // pred_fallthru
          _
        %v5273 = vld [vmem:[#allocation8] sm:$0xff]
        %v5274 = vld [vmem:[#allocation8 + $0x8] sm:$0xff]
        %v5275 = vld [vmem:[#allocation8 + $0x10] sm:$0xff]
        %v5276 = vld [vmem:[#allocation8 + $0x18] sm:$0xff]
        %v5277 = vld [vmem:[#allocation8 + $0x20] sm:$0xff]
        %v5278 = vld [vmem:[#allocation8 + $0x28] sm:$0xff]
        %v5279 = vld [vmem:[#allocation8 + $0x30] sm:$0xff]
        %v5280 = vld [vmem:[#allocation8 + $0x38] sm:$0xff]
        %v5281 = vld [vmem:[#allocation8 + $0x40] sm:$0xff]
        %v5282 = vld [vmem:[#allocation8 + $0x48] sm:$0xff]
        %v5283 = vld [vmem:[#allocation8 + $0x50] sm:$0xff]
        %v5284 = vld [vmem:[#allocation8 + $0x58] sm:$0xff]
        %v5285 = vld [vmem:[#allocation8 + $0x60] sm:$0xff]
        %v5286 = vld [vmem:[#allocation8 + $0x68] sm:$0xff]
        %v5287 = vld [vmem:[#allocation8 + $0x70] sm:$0xff]
        %v5288 = vld [vmem:[#allocation8 + $0x78] sm:$0xff]
        %v5289 = vld [vmem:[#allocation8 + $0x80] sm:$0xff]
        %v5290 = vld [vmem:[#allocation8 + $0x88] sm:$0xff]
        %v5291 = vld [vmem:[#allocation8 + $0x90] sm:$0xff]
        %v5292 = vld [vmem:[#allocation8 + $0x98] sm:$0xff]
        %v5293 = vld [vmem:[#allocation8 + $0xa0] sm:$0xff]
        %v5294 = vld [vmem:[#allocation8 + $0xa8] sm:$0xff]
        %v5295 = vld [vmem:[#allocation8 + $0xb0] sm:$0xff]
        %v5296 = vld [vmem:[#allocation8 + $0xb8] sm:$0xff]
        %v5297 = vld [vmem:[#allocation8 + $0xc0] sm:$0xff]
        %v5298 = vld [vmem:[#allocation8 + $0xc8] sm:$0xff]
        %v5299 = vld [vmem:[#allocation8 + $0xd0] sm:$0xff]
        %v5300 = vld [vmem:[#allocation8 + $0xd8] sm:$0xff]
        %v5301 = vld [vmem:[#allocation8 + $0xe0] sm:$0xff]
        %v5302 = vld [vmem:[#allocation8 + $0xe8] sm:$0xff]
        %v5303 = vld [vmem:[#allocation8 + $0xf0] sm:$0xff]
        %v5304 = vld [vmem:[#allocation8 + $0xf8] sm:$0xff]
        %v5305 = vld [vmem:[#allocation8 + $0x100] sm:$0xff]
        %v5306 = vld [vmem:[#allocation8 + $0x108] sm:$0xff]
        %v5307 = vld [vmem:[#allocation8 + $0x110] sm:$0xff]
        %v5308 = vld [vmem:[#allocation8 + $0x118] sm:$0xff]
        %v5309 = vld [vmem:[#allocation8 + $0x120] sm:$0xff]
        %v5310 = vld [vmem:[#allocation8 + $0x128] sm:$0xff]
        %v5311 = vld [vmem:[#allocation8 + $0x130] sm:$0xff]
        %v5312 = vld [vmem:[#allocation8 + $0x138] sm:$0xff]
        %v5313 = vld [vmem:[#allocation8 + $0x140] sm:$0xff]
        %v5314 = vld [vmem:[#allocation8 + $0x148] sm:$0xff]
        %v5315 = vld [vmem:[#allocation8 + $0x150] sm:$0xff]
        %v5316 = vld [vmem:[#allocation8 + $0x158] sm:$0xff]
        %v5317 = vld [vmem:[#allocation8 + $0x160] sm:$0xff]
        %v5318 = vld [vmem:[#allocation8 + $0x168] sm:$0xff]
        %v5319 = vld [vmem:[#allocation8 + $0x170] sm:$0xff]
        %v5320 = vld [vmem:[#allocation8 + $0x178] sm:$0xff]
        %v5321 = vld [vmem:[#allocation8 + $0x180] sm:$0xff]
        %v5322 = vld [vmem:[#allocation8 + $0x188] sm:$0xff]
        %v5323 = vld [vmem:[#allocation8 + $0x190] sm:$0xff]
        %v5324 = vld [vmem:[#allocation8 + $0x198] sm:$0xff]
        %v5325 = vld [vmem:[#allocation8 + $0x1a0] sm:$0xff]
        %v5326 = vld [vmem:[#allocation8 + $0x1a8] sm:$0xff]
        %v5327 = vld [vmem:[#allocation8 + $0x1b0] sm:$0xff]
        %v5328 = vld [vmem:[#allocation8 + $0x1b8] sm:$0xff]
        %v5329 = vld [vmem:[#allocation8 + $0x1c0] sm:$0xff]
        %v5330 = vld [vmem:[#allocation8 + $0x1c8] sm:$0xff]
        %v5331 = vld [vmem:[#allocation8 + $0x1d0] sm:$0xff]
        %v5332 = vld [vmem:[#allocation8 + $0x1d8] sm:$0xff]
        %v5333 = vld [vmem:[#allocation8 + $0x1e0] sm:$0xff]
        %v5334 = vld [vmem:[#allocation8 + $0x1e8] sm:$0xff]
        %v5335 = vld [vmem:[#allocation8 + $0x1f0] sm:$0xff]
        %v5336 = vld [vmem:[#allocation8 + $0x1f8] sm:$0xff]
        %v5337 = vld [vmem:[#allocation8 + $0x200] sm:$0xff]
        %v5338 = vld [vmem:[#allocation8 + $0x208] sm:$0xff]
        %v5339 = vld [vmem:[#allocation8 + $0x210] sm:$0xff]
        %v5340 = vld [vmem:[#allocation8 + $0x218] sm:$0xff]
        %v5341 = vld [vmem:[#allocation8 + $0x220] sm:$0xff]
        %v5342 = vld [vmem:[#allocation8 + $0x228] sm:$0xff]
        %v5343 = vld [vmem:[#allocation8 + $0x230] sm:$0xff]
        %v5344 = vld [vmem:[#allocation8 + $0x238] sm:$0xff]
        %v5345 = vld [vmem:[#allocation8 + $0x240] sm:$0xff]
        %v5346 = vld [vmem:[#allocation8 + $0x248] sm:$0xff]
        %v5347 = vld [vmem:[#allocation8 + $0x250] sm:$0xff]
        %v5348 = vld [vmem:[#allocation8 + $0x258] sm:$0xff]
        %v5349 = vld [vmem:[#allocation8 + $0x260] sm:$0xff]
        %v5350 = vld [vmem:[#allocation8 + $0x268] sm:$0xff]
        %v5351 = vld [vmem:[#allocation8 + $0x270] sm:$0xff]
        %v5352 = vld [vmem:[#allocation8 + $0x278] sm:$0xff]
        %v5353 = vld [vmem:[#allocation8 + $0x280] sm:$0xff]
        %v5354 = vld [vmem:[#allocation8 + $0x288] sm:$0xff]
        %v5355 = vld [vmem:[#allocation8 + $0x290] sm:$0xff]
        %v5356 = vld [vmem:[#allocation8 + $0x298] sm:$0xff]
        %v5357 = vld [vmem:[#allocation8 + $0x2a0] sm:$0xff]
        %v5358 = vld [vmem:[#allocation8 + $0x2a8] sm:$0xff]
        %v5359 = vld [vmem:[#allocation8 + $0x2b0] sm:$0xff]
        %v5360 = vld [vmem:[#allocation8 + $0x2b8] sm:$0xff]
        %v5361 = vld [vmem:[#allocation8 + $0x2c0] sm:$0xff]
        %v5362 = vld [vmem:[#allocation8 + $0x2c8] sm:$0xff]
        %v5363 = vld [vmem:[#allocation8 + $0x2d0] sm:$0xff]
        %v5364 = vld [vmem:[#allocation8 + $0x2d8] sm:$0xff]
        %v5365 = vld [vmem:[#allocation8 + $0x2e0] sm:$0xff]
        %v5366 = vld [vmem:[#allocation8 + $0x2e8] sm:$0xff]
        %v5367 = vld [vmem:[#allocation8 + $0x2f0] sm:$0xff]
        %v5368 = vld [vmem:[#allocation8 + $0x2f8] sm:$0xff]
        %v5369 = vld [vmem:[#allocation8 + $0x300] sm:$0xff]
        %v5370 = vld [vmem:[#allocation8 + $0x308] sm:$0xff]
        %v5371 = vld [vmem:[#allocation8 + $0x310] sm:$0xff]
        %v5372 = vld [vmem:[#allocation8 + $0x318] sm:$0xff]
        %v5373 = vld [vmem:[#allocation8 + $0x320] sm:$0xff]
        %v5374 = vld [vmem:[#allocation8 + $0x328] sm:$0xff]
        %v5375 = vld [vmem:[#allocation8 + $0x330] sm:$0xff]
        %v5376 = vld [vmem:[#allocation8 + $0x338] sm:$0xff]
        %v5377 = vld [vmem:[#allocation8 + $0x340] sm:$0xff]
        %v5378 = vld [vmem:[#allocation8 + $0x348] sm:$0xff]
        %v5379 = vld [vmem:[#allocation8 + $0x350] sm:$0xff]
        %v5380 = vld [vmem:[#allocation8 + $0x358] sm:$0xff]
        %v5381 = vld [vmem:[#allocation8 + $0x360] sm:$0xff]
        %v5382 = vld [vmem:[#allocation8 + $0x368] sm:$0xff]
        %v5383 = vld [vmem:[#allocation8 + $0x370] sm:$0xff]
        %v5384 = vld [vmem:[#allocation8 + $0x378] sm:$0xff]
        %v5385 = vld [vmem:[#allocation8 + $0x380] sm:$0xff]
        %v5386 = vld [vmem:[#allocation8 + $0x388] sm:$0xff]
        %v5387 = vld [vmem:[#allocation8 + $0x390] sm:$0xff]
        %v5388 = vld [vmem:[#allocation8 + $0x398] sm:$0xff]
        %v5389 = vld [vmem:[#allocation8 + $0x3a0] sm:$0xff]
        %v5390 = vld [vmem:[#allocation8 + $0x3a8] sm:$0xff]
        %v5391 = vld [vmem:[#allocation8 + $0x3b0] sm:$0xff]
        %v5392 = vld [vmem:[#allocation8 + $0x3b8] sm:$0xff]
        %v5393 = vld [vmem:[#allocation8 + $0x3c0] sm:$0xff]
        %v5394 = vld [vmem:[#allocation8 + $0x3c8] sm:$0xff]
        %v5395 = vld [vmem:[#allocation8 + $0x3d0] sm:$0xff]
        %v5396 = vld [vmem:[#allocation8 + $0x3d8] sm:$0xff]
        %v5397 = vld [vmem:[#allocation8 + $0x3e0] sm:$0xff]
        %v5398 = vld [vmem:[#allocation8 + $0x3e8] sm:$0xff]
        %v5399 = vld [vmem:[#allocation8 + $0x3f0] sm:$0xff]
        %v5400 = vld [vmem:[#allocation8 + $0x3f8] sm:$0xff]
        %v5401 = vld [vmem:[#allocation8 + $0x400] sm:$0xff]
        %v5402 = vld [vmem:[#allocation8 + $0x408] sm:$0xff]
        %v5403 = vld [vmem:[#allocation8 + $0x410] sm:$0xff]
        %v5404 = vld [vmem:[#allocation8 + $0x418] sm:$0xff]
        %v5405 = vld [vmem:[#allocation8 + $0x420] sm:$0xff]
        %v5406 = vld [vmem:[#allocation8 + $0x428] sm:$0xff]
        %v5407 = vld [vmem:[#allocation8 + $0x430] sm:$0xff]
        %v5408 = vld [vmem:[#allocation8 + $0x438] sm:$0xff]
        %v5409 = vld [vmem:[#allocation8 + $0x440] sm:$0xff]
        %v5410 = vld [vmem:[#allocation8 + $0x448] sm:$0xff]
        %v5411 = vld [vmem:[#allocation8 + $0x450] sm:$0xff]
        %v5412 = vld [vmem:[#allocation8 + $0x458] sm:$0xff]
        %v5413 = vld [vmem:[#allocation8 + $0x460] sm:$0xff]
        %v5414 = vld [vmem:[#allocation8 + $0x468] sm:$0xff]
        %v5415 = vld [vmem:[#allocation8 + $0x470] sm:$0xff]
        %v5416 = vld [vmem:[#allocation8 + $0x478] sm:$0xff]
        %v5417 = vld [vmem:[#allocation8 + $0x480] sm:$0xff]
        %v5418 = vld [vmem:[#allocation8 + $0x488] sm:$0xff]
        %v5419 = vld [vmem:[#allocation8 + $0x490] sm:$0xff]
        %v5420 = vld [vmem:[#allocation8 + $0x498] sm:$0xff]
        %v5421 = vld [vmem:[#allocation8 + $0x4a0] sm:$0xff]
        %v5422 = vld [vmem:[#allocation8 + $0x4a8] sm:$0xff]
        %v5423 = vld [vmem:[#allocation8 + $0x4b0] sm:$0xff]
        %v5424 = vld [vmem:[#allocation8 + $0x4b8] sm:$0xff]
        %v5425 = vld [vmem:[#allocation8 + $0x4c0] sm:$0xff]
        %v5426 = vld [vmem:[#allocation8 + $0x4c8] sm:$0xff]
        %v5427 = vld [vmem:[#allocation8 + $0x4d0] sm:$0xff]
        %v5428 = vld [vmem:[#allocation8 + $0x4d8] sm:$0xff]
        %v5429 = vld [vmem:[#allocation8 + $0x4e0] sm:$0xff]
        %v5430 = vld [vmem:[#allocation8 + $0x4e8] sm:$0xff]
        %v5431 = vld [vmem:[#allocation8 + $0x4f0] sm:$0xff]
        %v5432 = vld [vmem:[#allocation8 + $0x4f8] sm:$0xff]
        %v5433 = vld [vmem:[#allocation8 + $0x500] sm:$0xff]
        %v5434 = vld [vmem:[#allocation8 + $0x508] sm:$0xff]
        %v5435 = vld [vmem:[#allocation8 + $0x510] sm:$0xff]
        %v5436 = vld [vmem:[#allocation8 + $0x518] sm:$0xff]
        %v5437 = vld [vmem:[#allocation8 + $0x520] sm:$0xff]
        %v5438 = vld [vmem:[#allocation8 + $0x528] sm:$0xff]
        %v5439 = vld [vmem:[#allocation8 + $0x530] sm:$0xff]
        %v5440 = vld [vmem:[#allocation8 + $0x538] sm:$0xff]
        %v5441 = vld [vmem:[#allocation8 + $0x540] sm:$0xff]
        %v5442 = vld [vmem:[#allocation8 + $0x548] sm:$0xff]
        %v5443 = vld [vmem:[#allocation8 + $0x550] sm:$0xff]
        %v5444 = vld [vmem:[#allocation8 + $0x558] sm:$0xff]
        %v5445 = vld [vmem:[#allocation8 + $0x560] sm:$0xff]
        %v5446 = vld [vmem:[#allocation8 + $0x568] sm:$0xff]
        %v5447 = vld [vmem:[#allocation8 + $0x570] sm:$0xff]
        %v5448 = vld [vmem:[#allocation8 + $0x578] sm:$0xff]
        %v5449 = vld [vmem:[#allocation8 + $0x580] sm:$0xff]
        %v5450 = vld [vmem:[#allocation8 + $0x588] sm:$0xff]
        %v5451 = vld [vmem:[#allocation8 + $0x590] sm:$0xff]
        %v5452 = vld [vmem:[#allocation8 + $0x598] sm:$0xff]
        %v5453 = vld [vmem:[#allocation8 + $0x5a0] sm:$0xff]
        %v5454 = vld [vmem:[#allocation8 + $0x5a8] sm:$0xff]
        %v5455 = vld [vmem:[#allocation8 + $0x5b0] sm:$0xff]
        %v5456 = vld [vmem:[#allocation8 + $0x5b8] sm:$0xff]
        %v5457 = vld [vmem:[#allocation8 + $0x5c0] sm:$0xff]
        %v5458 = vld [vmem:[#allocation8 + $0x5c8] sm:$0xff]
        %v5459 = vld [vmem:[#allocation8 + $0x5d0] sm:$0xff]
        %v5460 = vld [vmem:[#allocation8 + $0x5d8] sm:$0xff]
        %v5461 = vld [vmem:[#allocation8 + $0x5e0] sm:$0xff]
        %v5462 = vld [vmem:[#allocation8 + $0x5e8] sm:$0xff]
        %v5463 = vld [vmem:[#allocation8 + $0x5f0] sm:$0xff]
        %v5464 = vld [vmem:[#allocation8 + $0x5f8] sm:$0xff]
        %v5465 = vld [vmem:[#allocation8 + $0x600] sm:$0xff]
        %v5466 = vld [vmem:[#allocation8 + $0x608] sm:$0xff]
        %v5467 = vld [vmem:[#allocation8 + $0x610] sm:$0xff]
        %v5468 = vld [vmem:[#allocation8 + $0x618] sm:$0xff]
        %v5469 = vld [vmem:[#allocation8 + $0x620] sm:$0xff]
        %v5470 = vld [vmem:[#allocation8 + $0x628] sm:$0xff]
        %v5471 = vld [vmem:[#allocation8 + $0x630] sm:$0xff]
        %v5472 = vld [vmem:[#allocation8 + $0x638] sm:$0xff]
        %v5473 = vld [vmem:[#allocation8 + $0x640] sm:$0xff]
        %v5474 = vld [vmem:[#allocation8 + $0x648] sm:$0xff]
        %v5475 = vld [vmem:[#allocation8 + $0x650] sm:$0xff]
        %v5476 = vld [vmem:[#allocation8 + $0x658] sm:$0xff]
        %v5477 = vld [vmem:[#allocation8 + $0x660] sm:$0xff]
        %v5478 = vld [vmem:[#allocation8 + $0x668] sm:$0xff]
        %v5479 = vld [vmem:[#allocation8 + $0x670] sm:$0xff]
        %v5480 = vld [vmem:[#allocation8 + $0x678] sm:$0xff]
        %v5481 = vld [vmem:[#allocation8 + $0x680] sm:$0xff]
        %v5482 = vld [vmem:[#allocation8 + $0x688] sm:$0xff]
        %v5483 = vld [vmem:[#allocation8 + $0x690] sm:$0xff]
        %v5484 = vld [vmem:[#allocation8 + $0x698] sm:$0xff]
        %v5485 = vld [vmem:[#allocation8 + $0x6a0] sm:$0xff]
        %v5486 = vld [vmem:[#allocation8 + $0x6a8] sm:$0xff]
        %v5487 = vld [vmem:[#allocation8 + $0x6b0] sm:$0xff]
        %v5488 = vld [vmem:[#allocation8 + $0x6b8] sm:$0xff]
        %v5489 = vld [vmem:[#allocation8 + $0x6c0] sm:$0xff]
        %v5490 = vld [vmem:[#allocation8 + $0x6c8] sm:$0xff]
        %v5491 = vld [vmem:[#allocation8 + $0x6d0] sm:$0xff]
        %v5492 = vld [vmem:[#allocation8 + $0x6d8] sm:$0xff]
        %v5493 = vld [vmem:[#allocation8 + $0x6e0] sm:$0xff]
        %v5494 = vld [vmem:[#allocation8 + $0x6e8] sm:$0xff]
        %v5495 = vld [vmem:[#allocation8 + $0x6f0] sm:$0xff]
        %v5496 = vld [vmem:[#allocation8 + $0x6f8] sm:$0xff]
        %v5497 = vld [vmem:[#allocation8 + $0x700] sm:$0xff]
        %v5498 = vld [vmem:[#allocation8 + $0x708] sm:$0xff]
        %v5499 = vld [vmem:[#allocation8 + $0x710] sm:$0xff]
        %v5500 = vld [vmem:[#allocation8 + $0x718] sm:$0xff]
        %v5501 = vld [vmem:[#allocation8 + $0x720] sm:$0xff]
        %v5502 = vld [vmem:[#allocation8 + $0x728] sm:$0xff]
        %v5503 = vld [vmem:[#allocation8 + $0x730] sm:$0xff]
        %v5504 = vld [vmem:[#allocation8 + $0x738] sm:$0xff]
        %v5505 = vld [vmem:[#allocation8 + $0x740] sm:$0xff]
        %v5506 = vld [vmem:[#allocation8 + $0x748] sm:$0xff]
        %v5507 = vld [vmem:[#allocation8 + $0x750] sm:$0xff]
        %v5508 = vld [vmem:[#allocation8 + $0x758] sm:$0xff]
        %v5509 = vld [vmem:[#allocation8 + $0x760] sm:$0xff]
        %v5510 = vld [vmem:[#allocation8 + $0x768] sm:$0xff]
        %v5511 = vld [vmem:[#allocation8 + $0x770] sm:$0xff]
        %v5512 = vld [vmem:[#allocation8 + $0x778] sm:$0xff]
        %v5513 = vld [vmem:[#allocation8 + $0x780] sm:$0xff]
        %v5514 = vld [vmem:[#allocation8 + $0x788] sm:$0xff]
        %v5515 = vld [vmem:[#allocation8 + $0x790] sm:$0xff]
        %v5516 = vld [vmem:[#allocation8 + $0x798] sm:$0xff]
        %v5517 = vld [vmem:[#allocation8 + $0x7a0] sm:$0xff]
        %v5518 = vld [vmem:[#allocation8 + $0x7a8] sm:$0xff]
        %v5519 = vld [vmem:[#allocation8 + $0x7b0] sm:$0xff]
        %v5520 = vld [vmem:[#allocation8 + $0x7b8] sm:$0xff]
        %v5521 = vld [vmem:[#allocation8 + $0x7c0] sm:$0xff]
        %v5522 = vld [vmem:[#allocation8 + $0x7c8] sm:$0xff]
        %v5523 = vld [vmem:[#allocation8 + $0x7d0] sm:$0xff]
        %v5524 = vld [vmem:[#allocation8 + $0x7d8] sm:$0xff]
        %v5525 = vld [vmem:[#allocation8 + $0x7e0] sm:$0xff]
        %v5526 = vld [vmem:[#allocation8 + $0x7e8] sm:$0xff]
        %v5527 = vld [vmem:[#allocation8 + $0x7f0] sm:$0xff]
        %v5528 = vld [vmem:[#allocation8 + $0x7f8] sm:$0xff]
        %v5529 = vld [vmem:[#allocation8 + $0x800] sm:$0xff]
        %v5530 = vld [vmem:[#allocation8 + $0x808] sm:$0xff]
        %v5531 = vld [vmem:[#allocation8 + $0x810] sm:$0xff]
        %v5532 = vld [vmem:[#allocation8 + $0x818] sm:$0xff]
        %v5533 = vld [vmem:[#allocation8 + $0x820] sm:$0xff]
        %v5534 = vld [vmem:[#allocation8 + $0x828] sm:$0xff]
        %v5535 = vld [vmem:[#allocation8 + $0x830] sm:$0xff]
        %v5536 = vld [vmem:[#allocation8 + $0x838] sm:$0xff]
        %v5537 = vld [vmem:[#allocation8 + $0x840] sm:$0xff]
        %v5538 = vld [vmem:[#allocation8 + $0x848] sm:$0xff]
        %v5539 = vld [vmem:[#allocation8 + $0x850] sm:$0xff]
        %v5540 = vld [vmem:[#allocation8 + $0x858] sm:$0xff]
        %v5541 = vld [vmem:[#allocation8 + $0x860] sm:$0xff]
        %v5542 = vld [vmem:[#allocation8 + $0x868] sm:$0xff]
        %v5543 = vld [vmem:[#allocation8 + $0x870] sm:$0xff]
        %v5544 = vld [vmem:[#allocation8 + $0x878] sm:$0xff]
        %v5545 = vld [vmem:[#allocation8 + $0x880] sm:$0xff]
        %v5546 = vld [vmem:[#allocation8 + $0x888] sm:$0xff]
        %v5547 = vld [vmem:[#allocation8 + $0x890] sm:$0xff]
        %v5548 = vld [vmem:[#allocation8 + $0x898] sm:$0xff]
        %v5549 = vld [vmem:[#allocation8 + $0x8a0] sm:$0xff]
        %v5550 = vld [vmem:[#allocation8 + $0x8a8] sm:$0xff]
        %v5551 = vld [vmem:[#allocation8 + $0x8b0] sm:$0xff]
        %v5552 = vld [vmem:[#allocation8 + $0x8b8] sm:$0xff]
        %5553 = vmatprep.subr.bf16.mxu0 %v5274
        %5554 = vmatpush1.bf16.msra.mxu0 %v5273
        %5555 = vmatprep.subr.bf16.mxu0 %v5281
        %5556 = vmatpush1.bf16.msra.mxu0 %v5280
        %5557 = vmatprep.subr.bf16.mxu0 %v5288
        %5558 = vmatpush1.bf16.msra.mxu0 %v5287
        %5559 = vmatprep.subr.bf16.mxu0 %v5295
        %5560 = vmatpush1.bf16.msra.mxu0 %v5294
        %5561 = vmatprep.subr.bf16.mxu0 %v5302
        %5562 = vmatpush1.bf16.msra.mxu0 %v5301
        %5563 = vmatprep.subr.bf16.mxu0 %v5309
        %5564 = vmatpush1.bf16.msra.mxu0 %v5308
        %5565 = vmatprep.subr.bf16.mxu0 %v5316
        %5566 = vmatpush1.bf16.msra.mxu0 %v5315
        %5567 = vmatprep.subr.bf16.mxu0 %v5323
        %5568 = vmatpush1.bf16.msra.mxu0 %v5322
        %5569 = vmatprep.subr.bf16.mxu0 %v5330
        %5570 = vmatpush1.bf16.msra.mxu0 %v5329
        %5571 = vmatprep.subr.bf16.mxu0 %v5337
        %5572 = vmatpush1.bf16.msra.mxu0 %v5336
        %5573 = vmatprep.subr.bf16.mxu0 %v5344
        %5574 = vmatpush1.bf16.msra.mxu0 %v5343
        %5575 = vmatprep.subr.bf16.mxu0 %v5351
        %5576 = vmatpush1.bf16.msra.mxu0 %v5350
        %5577 = vmatprep.subr.bf16.mxu0 %v5358
        %5578 = vmatpush1.bf16.msra.mxu0 %v5357
        %5579 = vmatprep.subr.bf16.mxu0 %v5365
        %5580 = vmatpush1.bf16.msra.mxu0 %v5364
        %5581 = vmatprep.subr.bf16.mxu0 %v5372
        %5582 = vmatpush1.bf16.msra.mxu0 %v5371
        %5583 = vmatprep.subr.bf16.mxu0 %v5379
        %5584 = vmatpush1.bf16.msra.mxu0 %v5378
        %5585 = vmatprep.mubr.bf16.mxu0 %v5261
        %5586 = vmatmul.mubr.bf16.gmra.mrb[0].mxu0 %v5260
        %v5587 = vpop.f32.mrb[0].mxu0
        %v5588 = vadd.f32 0.0, %v5587
        %v5589 = vpop.f32.mrb[0].mxu0
        %v5590 = vadd.f32 0.0, %v5589
        %v5591 = vpop.f32.mrb[0].mxu0
        %v5592 = vpop.f32.mrb[0].mxu0
        %5593 = vdwg.mxu0
        %5594 = vmatprep.subr.bf16.mxu0 %v5386
        %5595 = vmatpush1.bf16.msra.mxu0 %v5385
        %5596 = vmatprep.subr.bf16.mxu0 %v5393
        %5597 = vmatpush1.bf16.msra.mxu0 %v5392
        %5598 = vmatprep.subr.bf16.mxu0 %v5400
        %5599 = vmatpush1.bf16.msra.mxu0 %v5399
        %5600 = vmatprep.subr.bf16.mxu0 %v5407
        %5601 = vmatpush1.bf16.msra.mxu0 %v5406
        %5602 = vmatprep.subr.bf16.mxu0 %v5414
        %5603 = vmatpush1.bf16.msra.mxu0 %v5413
        %5604 = vmatprep.subr.bf16.mxu0 %v5421
        %5605 = vmatpush1.bf16.msra.mxu0 %v5420
        %5606 = vmatprep.subr.bf16.mxu0 %v5428
        %5607 = vmatpush1.bf16.msra.mxu0 %v5427
        %5608 = vmatprep.subr.bf16.mxu0 %v5435
        %5609 = vmatpush1.bf16.msra.mxu0 %v5434
        %5610 = vmatprep.subr.bf16.mxu0 %v5442
        %5611 = vmatpush1.bf16.msra.mxu0 %v5441
        %5612 = vmatprep.subr.bf16.mxu0 %v5449
        %5613 = vmatpush1.bf16.msra.mxu0 %v5448
        %5614 = vmatprep.subr.bf16.mxu0 %v5456
        %5615 = vmatpush1.bf16.msra.mxu0 %v5455
        %5616 = vmatprep.subr.bf16.mxu0 %v5463
        %5617 = vmatpush1.bf16.msra.mxu0 %v5462
        %5618 = vmatprep.subr.bf16.mxu0 %v5470
        %5619 = vmatpush1.bf16.msra.mxu0 %v5469
        %5620 = vmatprep.subr.bf16.mxu0 %v5477
        %5621 = vmatpush1.bf16.msra.mxu0 %v5476
        %5622 = vmatprep.subr.bf16.mxu0 %v5484
        %5623 = vmatpush1.bf16.msra.mxu0 %v5483
        %5624 = vmatprep.subr.bf16.mxu0 %v5491
        %5625 = vmatpush1.bf16.msra.mxu0 %v5490
        %5626 = vmatprep.mubr.bf16.mxu0 %v5263
        %5627 = vmatmul.mubr.bf16.gmra.mrb[0].mxu0 %v5262
        %v5628 = vpop.f32.mrb[0].mxu0
        %v5629 = vadd.f32 %v5588, %v5628
        %v5630 = vpop.f32.mrb[0].mxu0
        %v5631 = vadd.f32 %v5590, %v5630
        %v5632 = vpop.f32.mrb[0].mxu0
        %v5633 = vpop.f32.mrb[0].mxu0
        %5634 = vdwg.mxu0
        %5635 = vmatprep.subr.bf16.mxu0 %v5498
        %5636 = vmatpush1.bf16.msra.mxu0 %v5497
        %5637 = vmatprep.subr.bf16.mxu0 %v5505
        %5638 = vmatpush1.bf16.msra.mxu0 %v5504
        %5639 = vmatprep.subr.bf16.mxu0 %v5512
        %5640 = vmatpush1.bf16.msra.mxu0 %v5511
        %5641 = vmatprep.subr.bf16.mxu0 %v5519
        %5642 = vmatpush1.bf16.msra.mxu0 %v5518
        %5643 = vmatprep.subr.bf16.mxu0 %v5526
        %5644 = vmatpush1.bf16.msra.mxu0 %v5525
        %5645 = vmatprep.subr.bf16.mxu0 %v5533
        %5646 = vmatpush1.bf16.msra.mxu0 %v5532
        %5647 = vmatprep.subr.bf16.mxu0 %v5540
        %5648 = vmatpush1.bf16.msra.mxu0 %v5539
        %5649 = vmatprep.subr.bf16.mxu0 %v5547
        %5650 = vmatpush1.bf16.msra.mxu0 %v5546
        %5651 = vmatprep.subr.bf16.mxu0 0
        %5652 = vmatpush1.bf16.msra.mxu0 0
        %5653 = vmatprep.subr.bf16.mxu0 0
        %5654 = vmatpush1.bf16.msra.mxu0 0
        %5655 = vmatprep.subr.bf16.mxu0 0
        %5656 = vmatpush1.bf16.msra.mxu0 0
        %5657 = vmatprep.subr.bf16.mxu0 0
        %5658 = vmatpush1.bf16.msra.mxu0 0
        %5659 = vmatprep.subr.bf16.mxu0 0
        %5660 = vmatpush1.bf16.msra.mxu0 0
        %5661 = vmatprep.subr.bf16.mxu0 0
        %5662 = vmatpush1.bf16.msra.mxu0 0
        %5663 = vmatprep.subr.bf16.mxu0 0
        %5664 = vmatpush1.bf16.msra.mxu0 0
        %5665 = vmatprep.subr.bf16.mxu0 0
        %5666 = vmatpush1.bf16.msra.mxu0 0
        %5667 = vmatprep.mubr.bf16.mxu0 0
        %5668 = vmatmul.mubr.bf16.gmra.mrb[0].mxu0 %v5264
        %v5669 = vpop.f32.mrb[0].mxu0
        %v5670 = vadd.f32 %v5629, %v5669
        %v5671 = vpop.f32.mrb[0].mxu0
        %v5672 = vadd.f32 %v5631, %v5671
        %v5673 = vpop.f32.mrb[0].mxu0
        %v5674 = vpop.f32.mrb[0].mxu0
        %5675 = vdwg.mxu0
        %5676 = vmatprep.subr.bf16.mxu0 %v5276
        %5677 = vmatpush1.bf16.msra.mxu0 %v5275
        %5678 = vmatprep.subr.bf16.mxu0 %v5283
        %5679 = vmatpush1.bf16.msra.mxu0 %v5282
        %5680 = vmatprep.subr.bf16.mxu0 %v5290
        %5681 = vmatpush1.bf16.msra.mxu0 %v5289
        %5682 = vmatprep.subr.bf16.mxu0 %v5297
        %5683 = vmatpush1.bf16.msra.mxu0 %v5296
        %5684 = vmatprep.subr.bf16.mxu0 %v5304
        %5685 = vmatpush1.bf16.msra.mxu0 %v5303
        %5686 = vmatprep.subr.bf16.mxu0 %v5311
        %5687 = vmatpush1.bf16.msra.mxu0 %v5310
        %5688 = vmatprep.subr.bf16.mxu0 %v5318
        %5689 = vmatpush1.bf16.msra.mxu0 %v5317
        %5690 = vmatprep.subr.bf16.mxu0 %v5325
        %5691 = vmatpush1.bf16.msra.mxu0 %v5324
        %5692 = vmatprep.subr.bf16.mxu0 %v5332
        %5693 = vmatpush1.bf16.msra.mxu0 %v5331
        %5694 = vmatprep.subr.bf16.mxu0 %v5339
        %5695 = vmatpush1.bf16.msra.mxu0 %v5338
        %5696 = vmatprep.subr.bf16.mxu0 %v5346
        %5697 = vmatpush1.bf16.msra.mxu0 %v5345
        %5698 = vmatprep.subr.bf16.mxu0 %v5353
        %5699 = vmatpush1.bf16.msra.mxu0 %v5352
        %5700 = vmatprep.subr.bf16.mxu0 %v5360
        %5701 = vmatpush1.bf16.msra.mxu0 %v5359
        %5702 = vmatprep.subr.bf16.mxu0 %v5367
        %5703 = vmatpush1.bf16.msra.mxu0 %v5366
        %5704 = vmatprep.subr.bf16.mxu0 %v5374
        %5705 = vmatpush1.bf16.msra.mxu0 %v5373
        %5706 = vmatprep.subr.bf16.mxu0 %v5381
        %5707 = vmatpush1.bf16.msra.mxu0 %v5380
        %5708 = vmatprep.mubr.bf16.mxu0 %v5261
        %5709 = vmatmul.mubr.bf16.gmra.mrb[0].mxu0 %v5260
        %v5710 = vpop.f32.mrb[0].mxu0
        %v5711 = vadd.f32 0.0, %v5710
        %v5712 = vpop.f32.mrb[0].mxu0
        %v5713 = vadd.f32 0.0, %v5712
        %v5714 = vpop.f32.mrb[0].mxu0
        %v5715 = vpop.f32.mrb[0].mxu0
        %5716 = vdwg.mxu0
        %5717 = vmatprep.subr.bf16.mxu0 %v5388
        %5718 = vmatpush1.bf16.msra.mxu0 %v5387
        %5719 = vmatprep.subr.bf16.mxu0 %v5395
        %5720 = vmatpush1.bf16.msra.mxu0 %v5394
        %5721 = vmatprep.subr.bf16.mxu0 %v5402
        %5722 = vmatpush1.bf16.msra.mxu0 %v5401
        %5723 = vmatprep.subr.bf16.mxu0 %v5409
        %5724 = vmatpush1.bf16.msra.mxu0 %v5408
        %5725 = vmatprep.subr.bf16.mxu0 %v5416
        %5726 = vmatpush1.bf16.msra.mxu0 %v5415
        %5727 = vmatprep.subr.bf16.mxu0 %v5423
        %5728 = vmatpush1.bf16.msra.mxu0 %v5422
        %5729 = vmatprep.subr.bf16.mxu0 %v5430
        %5730 = vmatpush1.bf16.msra.mxu0 %v5429
        %5731 = vmatprep.subr.bf16.mxu0 %v5437
        %5732 = vmatpush1.bf16.msra.mxu0 %v5436
        %5733 = vmatprep.subr.bf16.mxu0 %v5444
        %5734 = vmatpush1.bf16.msra.mxu0 %v5443
        %5735 = vmatprep.subr.bf16.mxu0 %v5451
        %5736 = vmatpush1.bf16.msra.mxu0 %v5450
        %5737 = vmatprep.subr.bf16.mxu0 %v5458
        %5738 = vmatpush1.bf16.msra.mxu0 %v5457
        %5739 = vmatprep.subr.bf16.mxu0 %v5465
        %5740 = vmatpush1.bf16.msra.mxu0 %v5464
        %5741 = vmatprep.subr.bf16.mxu0 %v5472
        %5742 = vmatpush1.bf16.msra.mxu0 %v5471
        %5743 = vmatprep.subr.bf16.mxu0 %v5479
        %5744 = vmatpush1.bf16.msra.mxu0 %v5478
        %5745 = vmatprep.subr.bf16.mxu0 %v5486
        %5746 = vmatpush1.bf16.msra.mxu0 %v5485
        %5747 = vmatprep.subr.bf16.mxu0 %v5493
        %5748 = vmatpush1.bf16.msra.mxu0 %v5492
        %5749 = vmatprep.mubr.bf16.mxu0 %v5263
        %5750 = vmatmul.mubr.bf16.gmra.mrb[0].mxu0 %v5262
        %v5751 = vpop.f32.mrb[0].mxu0
        %v5752 = vadd.f32 %v5711, %v5751
        %v5753 = vpop.f32.mrb[0].mxu0
        %v5754 = vadd.f32 %v5713, %v5753
        %v5755 = vpop.f32.mrb[0].mxu0
        %v5756 = vpop.f32.mrb[0].mxu0
        %5757 = vdwg.mxu0
        %5758 = vmatprep.subr.bf16.mxu0 %v5500
        %5759 = vmatpush1.bf16.msra.mxu0 %v5499
        %5760 = vmatprep.subr.bf16.mxu0 %v5507
        %5761 = vmatpush1.bf16.msra.mxu0 %v5506
        %5762 = vmatprep.subr.bf16.mxu0 %v5514
        %5763 = vmatpush1.bf16.msra.mxu0 %v5513
        %5764 = vmatprep.subr.bf16.mxu0 %v5521
        %5765 = vmatpush1.bf16.msra.mxu0 %v5520
        %5766 = vmatprep.subr.bf16.mxu0 %v5528
        %5767 = vmatpush1.bf16.msra.mxu0 %v5527
        %5768 = vmatprep.subr.bf16.mxu0 %v5535
        %5769 = vmatpush1.bf16.msra.mxu0 %v5534
        %5770 = vmatprep.subr.bf16.mxu0 %v5542
        %5771 = vmatpush1.bf16.msra.mxu0 %v5541
        %5772 = vmatprep.subr.bf16.mxu0 %v5549
        %5773 = vmatpush1.bf16.msra.mxu0 %v5548
        %5774 = vmatprep.subr.bf16.mxu0 0
        %5775 = vmatpush1.bf16.msra.mxu0 0
        %5776 = vmatprep.subr.bf16.mxu0 0
        %5777 = vmatpush1.bf16.msra.mxu0 0
        %5778 = vmatprep.subr.bf16.mxu0 0
        %5779 = vmatpush1.bf16.msra.mxu0 0
        %5780 = vmatprep.subr.bf16.mxu0 0
        %5781 = vmatpush1.bf16.msra.mxu0 0
        %5782 = vmatprep.subr.bf16.mxu0 0
        %5783 = vmatpush1.bf16.msra.mxu0 0
        %5784 = vmatprep.subr.bf16.mxu0 0
        %5785 = vmatpush1.bf16.msra.mxu0 0
        %5786 = vmatprep.subr.bf16.mxu0 0
        %5787 = vmatpush1.bf16.msra.mxu0 0
        %5788 = vmatprep.subr.bf16.mxu0 0
        %5789 = vmatpush1.bf16.msra.mxu0 0
        %5790 = vmatprep.mubr.bf16.mxu0 0
        %5791 = vmatmul.mubr.bf16.gmra.mrb[0].mxu0 %v5264
        %v5792 = vpop.f32.mrb[0].mxu0
        %v5793 = vadd.f32 %v5752, %v5792
        %v5794 = vpop.f32.mrb[0].mxu0
        %v5795 = vadd.f32 %v5754, %v5794
        %v5796 = vpop.f32.mrb[0].mxu0
        %v5797 = vpop.f32.mrb[0].mxu0
        %5798 = vdwg.mxu0
        %5799 = vmatprep.subr.bf16.mxu0 %v5278
        %5800 = vmatpush1.bf16.msra.mxu0 %v5277
        %5801 = vmatprep.subr.bf16.mxu0 %v5285
        %5802 = vmatpush1.bf16.msra.mxu0 %v5284
        %5803 = vmatprep.subr.bf16.mxu0 %v5292
        %5804 = vmatpush1.bf16.msra.mxu0 %v5291
        %5805 = vmatprep.subr.bf16.mxu0 %v5299
        %5806 = vmatpush1.bf16.msra.mxu0 %v5298
        %5807 = vmatprep.subr.bf16.mxu0 %v5306
        %5808 = vmatpush1.bf16.msra.mxu0 %v5305
        %5809 = vmatprep.subr.bf16.mxu0 %v5313
        %5810 = vmatpush1.bf16.msra.mxu0 %v5312
        %5811 = vmatprep.subr.bf16.mxu0 %v5320
        %5812 = vmatpush1.bf16.msra.mxu0 %v5319
        %5813 = vmatprep.subr.bf16.mxu0 %v5327
        %5814 = vmatpush1.bf16.msra.mxu0 %v5326
        %5815 = vmatprep.subr.bf16.mxu0 %v5334
        %5816 = vmatpush1.bf16.msra.mxu0 %v5333
        %5817 = vmatprep.subr.bf16.mxu0 %v5341
        %5818 = vmatpush1.bf16.msra.mxu0 %v5340
        %5819 = vmatprep.subr.bf16.mxu0 %v5348
        %5820 = vmatpush1.bf16.msra.mxu0 %v5347
        %5821 = vmatprep.subr.bf16.mxu0 %v5355
        %5822 = vmatpush1.bf16.msra.mxu0 %v5354
        %5823 = vmatprep.subr.bf16.mxu0 %v5362
        %5824 = vmatpush1.bf16.msra.mxu0 %v5361
        %5825 = vmatprep.subr.bf16.mxu0 %v5369
        %5826 = vmatpush1.bf16.msra.mxu0 %v5368
        %5827 = vmatprep.subr.bf16.mxu0 %v5376
        %5828 = vmatpush1.bf16.msra.mxu0 %v5375
        %5829 = vmatprep.subr.bf16.mxu0 %v5383
        %5830 = vmatpush1.bf16.msra.mxu0 %v5382
        %5831 = vmatprep.mubr.bf16.mxu0 %v5261
        %5832 = vmatmul.mubr.bf16.gmra.mrb[0].mxu0 %v5260
        %v5833 = vpop.f32.mrb[0].mxu0
        %v5834 = vadd.f32 0.0, %v5833
        %v5835 = vpop.f32.mrb[0].mxu0
        %v5836 = vadd.f32 0.0, %v5835
        %v5837 = vpop.f32.mrb[0].mxu0
        %v5838 = vpop.f32.mrb[0].mxu0
        %5839 = vdwg.mxu0
        %5840 = vmatprep.subr.bf16.mxu0 %v5390
        %5841 = vmatpush1.bf16.msra.mxu0 %v5389
        %5842 = vmatprep.subr.bf16.mxu0 %v5397
        %5843 = vmatpush1.bf16.msra.mxu0 %v5396
        %5844 = vmatprep.subr.bf16.mxu0 %v5404
        %5845 = vmatpush1.bf16.msra.mxu0 %v5403
        %5846 = vmatprep.subr.bf16.mxu0 %v5411
        %5847 = vmatpush1.bf16.msra.mxu0 %v5410
        %5848 = vmatprep.subr.bf16.mxu0 %v5418
        %5849 = vmatpush1.bf16.msra.mxu0 %v5417
        %5850 = vmatprep.subr.bf16.mxu0 %v5425
        %5851 = vmatpush1.bf16.msra.mxu0 %v5424
        %5852 = vmatprep.subr.bf16.mxu0 %v5432
        %5853 = vmatpush1.bf16.msra.mxu0 %v5431
        %5854 = vmatprep.subr.bf16.mxu0 %v5439
        %5855 = vmatpush1.bf16.msra.mxu0 %v5438
        %5856 = vmatprep.subr.bf16.mxu0 %v5446
        %5857 = vmatpush1.bf16.msra.mxu0 %v5445
        %5858 = vmatprep.subr.bf16.mxu0 %v5453
        %5859 = vmatpush1.bf16.msra.mxu0 %v5452
        %5860 = vmatprep.subr.bf16.mxu0 %v5460
        %5861 = vmatpush1.bf16.msra.mxu0 %v5459
        %5862 = vmatprep.subr.bf16.mxu0 %v5467
        %5863 = vmatpush1.bf16.msra.mxu0 %v5466
        %5864 = vmatprep.subr.bf16.mxu0 %v5474
        %5865 = vmatpush1.bf16.msra.mxu0 %v5473
        %5866 = vmatprep.subr.bf16.mxu0 %v5481
        %5867 = vmatpush1.bf16.msra.mxu0 %v5480
        %5868 = vmatprep.subr.bf16.mxu0 %v5488
        %5869 = vmatpush1.bf16.msra.mxu0 %v5487
        %5870 = vmatprep.subr.bf16.mxu0 %v5495
        %5871 = vmatpush1.bf16.msra.mxu0 %v5494
        %5872 = vmatprep.mubr.bf16.mxu0 %v5263
        %5873 = vmatmul.mubr.bf16.gmra.mrb[0].mxu0 %v5262
        %v5874 = vpop.f32.mrb[0].mxu0
        %v5875 = vadd.f32 %v5834, %v5874
        %v5876 = vpop.f32.mrb[0].mxu0
        %v5877 = vadd.f32 %v5836, %v5876
        %v5878 = vpop.f32.mrb[0].mxu0
        %v5879 = vpop.f32.mrb[0].mxu0
        %5880 = vdwg.mxu0
        %5881 = vmatprep.subr.bf16.mxu0 %v5502
        %5882 = vmatpush1.bf16.msra.mxu0 %v5501
        %5883 = vmatprep.subr.bf16.mxu0 %v5509
        %5884 = vmatpush1.bf16.msra.mxu0 %v5508
        %5885 = vmatprep.subr.bf16.mxu0 %v5516
        %5886 = vmatpush1.bf16.msra.mxu0 %v5515
        %5887 = vmatprep.subr.bf16.mxu0 %v5523
        %5888 = vmatpush1.bf16.msra.mxu0 %v5522
        %5889 = vmatprep.subr.bf16.mxu0 %v5530
        %5890 = vmatpush1.bf16.msra.mxu0 %v5529
        %5891 = vmatprep.subr.bf16.mxu0 %v5537
        %5892 = vmatpush1.bf16.msra.mxu0 %v5536
        %5893 = vmatprep.subr.bf16.mxu0 %v5544
        %5894 = vmatpush1.bf16.msra.mxu0 %v5543
        %5895 = vmatprep.subr.bf16.mxu0 %v5551
        %5896 = vmatpush1.bf16.msra.mxu0 %v5550
        %5897 = vmatprep.subr.bf16.mxu0 0
        %5898 = vmatpush1.bf16.msra.mxu0 0
        %5899 = vmatprep.subr.bf16.mxu0 0
        %5900 = vmatpush1.bf16.msra.mxu0 0
        %5901 = vmatprep.subr.bf16.mxu0 0
        %5902 = vmatpush1.bf16.msra.mxu0 0
        %5903 = vmatprep.subr.bf16.mxu0 0
        %5904 = vmatpush1.bf16.msra.mxu0 0
        %5905 = vmatprep.subr.bf16.mxu0 0
        %5906 = vmatpush1.bf16.msra.mxu0 0
        %5907 = vmatprep.subr.bf16.mxu0 0
        %5908 = vmatpush1.bf16.msra.mxu0 0
        %5909 = vmatprep.subr.bf16.mxu0 0
        %5910 = vmatpush1.bf16.msra.mxu0 0
        %5911 = vmatprep.subr.bf16.mxu0 0
        %5912 = vmatpush1.bf16.msra.mxu0 0
        %5913 = vmatprep.mubr.bf16.mxu0 0
        %5914 = vmatmul.mubr.bf16.gmra.mrb[0].mxu0 %v5264
        %v5915 = vpop.f32.mrb[0].mxu0
        %v5916 = vadd.f32 %v5875, %v5915
        %v5917 = vpop.f32.mrb[0].mxu0
        %v5918 = vadd.f32 %v5877, %v5917
        %v5919 = vpop.f32.mrb[0].mxu0
        %v5920 = vpop.f32.mrb[0].mxu0
        %5921 = vdwg.mxu0
        %5922 = vmatprep.subr.bf16.mxu0 0
        %5923 = vmatpush1.bf16.msra.mxu0 %v5279
        %5924 = vmatprep.subr.bf16.mxu0 0
        %5925 = vmatpush1.bf16.msra.mxu0 %v5286
        %5926 = vmatprep.subr.bf16.mxu0 0
        %5927 = vmatpush1.bf16.msra.mxu0 %v5293
        %5928 = vmatprep.subr.bf16.mxu0 0
        %5929 = vmatpush1.bf16.msra.mxu0 %v5300
        %5930 = vmatprep.subr.bf16.mxu0 0
        %5931 = vmatpush1.bf16.msra.mxu0 %v5307
        %5932 = vmatprep.subr.bf16.mxu0 0
        %5933 = vmatpush1.bf16.msra.mxu0 %v5314
        %5934 = vmatprep.subr.bf16.mxu0 0
        %5935 = vmatpush1.bf16.msra.mxu0 %v5321
        %5936 = vmatprep.subr.bf16.mxu0 0
        %5937 = vmatpush1.bf16.msra.mxu0 %v5328
        %5938 = vmatprep.subr.bf16.mxu0 0
        %5939 = vmatpush1.bf16.msra.mxu0 %v5335
        %5940 = vmatprep.subr.bf16.mxu0 0
        %5941 = vmatpush1.bf16.msra.mxu0 %v5342
        %5942 = vmatprep.subr.bf16.mxu0 0
        %5943 = vmatpush1.bf16.msra.mxu0 %v5349
        %5944 = vmatprep.subr.bf16.mxu0 0
        %5945 = vmatpush1.bf16.msra.mxu0 %v5356
        %5946 = vmatprep.subr.bf16.mxu0 0
        %5947 = vmatpush1.bf16.msra.mxu0 %v5363
        %5948 = vmatprep.subr.bf16.mxu0 0
        %5949 = vmatpush1.bf16.msra.mxu0 %v5370
        %5950 = vmatprep.subr.bf16.mxu0 0
        %5951 = vmatpush1.bf16.msra.mxu0 %v5377
        %5952 = vmatprep.subr.bf16.mxu0 0
        %5953 = vmatpush1.bf16.msra.mxu0 %v5384
        %5954 = vmatprep.mubr.bf16.mxu0 %v5261
        %5955 = vmatmul.mubr.bf16.gmra.mrb[0].mxu0 %v5260
        %v5956 = vpop.f32.mrb[0].mxu0
        %v5957 = vadd.f32 0.0, %v5956
        %v5958 = vpop.f32.mrb[0].mxu0
        %v5959 = vpop.f32.mrb[0].mxu0
        %v5960 = vpop.f32.mrb[0].mxu0
        %5961 = vdwg.mxu0
        %5962 = vmatprep.subr.bf16.mxu0 0
        %5963 = vmatpush1.bf16.msra.mxu0 %v5391
        %5964 = vmatprep.subr.bf16.mxu0 0
        %5965 = vmatpush1.bf16.msra.mxu0 %v5398
        %5966 = vmatprep.subr.bf16.mxu0 0
        %5967 = vmatpush1.bf16.msra.mxu0 %v5405
        %5968 = vmatprep.subr.bf16.mxu0 0
        %5969 = vmatpush1.bf16.msra.mxu0 %v5412
        %5970 = vmatprep.subr.bf16.mxu0 0
        %5971 = vmatpush1.bf16.msra.mxu0 %v5419
        %5972 = vmatprep.subr.bf16.mxu0 0
        %5973 = vmatpush1.bf16.msra.mxu0 %v5426
        %5974 = vmatprep.subr.bf16.mxu0 0
        %5975 = vmatpush1.bf16.msra.mxu0 %v5433
        %5976 = vmatprep.subr.bf16.mxu0 0
        %5977 = vmatpush1.bf16.msra.mxu0 %v5440
        %5978 = vmatprep.subr.bf16.mxu0 0
        %5979 = vmatpush1.bf16.msra.mxu0 %v5447
        %5980 = vmatprep.subr.bf16.mxu0 0
        %5981 = vmatpush1.bf16.msra.mxu0 %v5454
        %5982 = vmatprep.subr.bf16.mxu0 0
        %5983 = vmatpush1.bf16.msra.mxu0 %v5461
        %5984 = vmatprep.subr.bf16.mxu0 0
        %5985 = vmatpush1.bf16.msra.mxu0 %v5468
        %5986 = vmatprep.subr.bf16.mxu0 0
        %5987 = vmatpush1.bf16.msra.mxu0 %v5475
        %5988 = vmatprep.subr.bf16.mxu0 0
        %5989 = vmatpush1.bf16.msra.mxu0 %v5482
        %5990 = vmatprep.subr.bf16.mxu0 0
        %5991 = vmatpush1.bf16.msra.mxu0 %v5489
        %5992 = vmatprep.subr.bf16.mxu0 0
        %5993 = vmatpush1.bf16.msra.mxu0 %v5496
        %5994 = vmatprep.mubr.bf16.mxu0 %v5263
        %5995 = vmatmul.mubr.bf16.gmra.mrb[0].mxu0 %v5262
        %v5996 = vpop.f32.mrb[0].mxu0
        %v5997 = vadd.f32 %v5957, %v5996
        %v5998 = vpop.f32.mrb[0].mxu0
        %v5999 = vpop.f32.mrb[0].mxu0
        %v6000 = vpop.f32.mrb[0].mxu0
        %6001 = vdwg.mxu0
        %6002 = vmatprep.subr.bf16.mxu0 0
        %6003 = vmatpush1.bf16.msra.mxu0 %v5503
        %6004 = vmatprep.subr.bf16.mxu0 0
        %6005 = vmatpush1.bf16.msra.mxu0 %v5510
        %6006 = vmatprep.subr.bf16.mxu0 0
        %6007 = vmatpush1.bf16.msra.mxu0 %v5517
        %6008 = vmatprep.subr.bf16.mxu0 0
        %6009 = vmatpush1.bf16.msra.mxu0 %v5524
        %6010 = vmatprep.subr.bf16.mxu0 0
        %6011 = vmatpush1.bf16.msra.mxu0 %v5531
        %6012 = vmatprep.subr.bf16.mxu0 0
        %6013 = vmatpush1.bf16.msra.mxu0 %v5538
        %6014 = vmatprep.subr.bf16.mxu0 0
        %6015 = vmatpush1.bf16.msra.mxu0 %v5545
        %6016 = vmatprep.subr.bf16.mxu0 0
        %6017 = vmatpush1.bf16.msra.mxu0 %v5552
        %6018 = vmatprep.subr.bf16.mxu0 0
        %6019 = vmatpush1.bf16.msra.mxu0 0
        %6020 = vmatprep.subr.bf16.mxu0 0
        %6021 = vmatpush1.bf16.msra.mxu0 0
        %6022 = vmatprep.subr.bf16.mxu0 0
        %6023 = vmatpush1.bf16.msra.mxu0 0
        %6024 = vmatprep.subr.bf16.mxu0 0
        %6025 = vmatpush1.bf16.msra.mxu0 0
        %6026 = vmatprep.subr.bf16.mxu0 0
        %6027 = vmatpush1.bf16.msra.mxu0 0
        %6028 = vmatprep.subr.bf16.mxu0 0
        %6029 = vmatpush1.bf16.msra.mxu0 0
        %6030 = vmatprep.subr.bf16.mxu0 0
        %6031 = vmatpush1.bf16.msra.mxu0 0
        %6032 = vmatprep.subr.bf16.mxu0 0
        %6033 = vmatpush1.bf16.msra.mxu0 0
        %6034 = vmatprep.mubr.bf16.mxu0 0
        %6035 = vmatmul.mubr.bf16.gmra.mrb[0].mxu0 %v5264
        %v6036 = vpop.f32.mrb[0].mxu0
        %v6037 = vadd.f32 %v5997, %v6036
        %v6038 = vpop.f32.mrb[0].mxu0
        %v6039 = vpop.f32.mrb[0].mxu0
        %v6040 = vpop.f32.mrb[0].mxu0
        %6041 = vdwg.mxu0
        %v6042 = vrot.slane %v5670, 4
        %v6043 = vadd.f32 %v5670, %v6042
        %v6044 = vrot.slane %v6043, 2
        %v6045 = vadd.f32 %v6043, %v6044
        %v6046 = vrot.slane %v6045, 1
        %v6047 = vadd.f32 %v6045, %v6046
        %v6048 = vrot.slane %v5672, 4
        %v6049 = vadd.f32 %v5672, %v6048
        %v6050 = vrot.slane %v6049, 2
        %v6051 = vadd.f32 %v6049, %v6050
        %v6052 = vrot.slane %v6051, 1
        %v6053 = vadd.f32 %v6051, %v6052
        %v6054 = vrot.slane %v5793, 4
        %v6055 = vadd.f32 %v5793, %v6054
        %v6056 = vrot.slane %v6055, 2
        %v6057 = vadd.f32 %v6055, %v6056
        %v6058 = vrot.slane %v6057, 1
        %v6059 = vadd.f32 %v6057, %v6058
        %v6060 = vrot.slane %v5795, 4
        %v6061 = vadd.f32 %v5795, %v6060
        %v6062 = vrot.slane %v6061, 2
        %v6063 = vadd.f32 %v6061, %v6062
        %v6064 = vrot.slane %v6063, 1
        %v6065 = vadd.f32 %v6063, %v6064
        %v6066 = vrot.slane %v5916, 4
        %v6067 = vadd.f32 %v5916, %v6066
        %v6068 = vrot.slane %v6067, 2
        %v6069 = vadd.f32 %v6067, %v6068
        %v6070 = vrot.slane %v6069, 1
        %v6071 = vadd.f32 %v6069, %v6070
        %v6072 = vrot.slane %v5918, 4
        %v6073 = vadd.f32 %v5918, %v6072
        %v6074 = vrot.slane %v6073, 2
        %v6075 = vadd.f32 %v6073, %v6074
        %v6076 = vrot.slane %v6075, 1
        %v6077 = vadd.f32 %v6075, %v6076
        %v6078 = vrot.slane %v6037, 4
        %v6079 = vadd.f32 %v6037, %v6078
        %v6080 = vrot.slane %v6079, 2
        %v6081 = vadd.f32 %v6079, %v6080
        %v6082 = vrot.slane %v6081, 1
        %v6083 = vadd.f32 %v6081, %v6082
        %v6084 = vmul.f32 %v6047, %v2810
        %v6085 = vmul.f32 %v6053, %v2810
        %v6086 = vmul.f32 %v6059, %v2810
        %v6087 = vmul.f32 %v6065, %v2810
        %v6088 = vmul.f32 %v6071, %v2810
        %v6089 = vmul.f32 %v6077, %v2810
        %v6090 = vmul.f32 %v6083, %v2810
        %v6091 = vsub.f32 %v5670, %v6084
        %v6092 = vsub.f32 %v5672, %v6085
        %v6093 = vsub.f32 %v5793, %v6086
        %v6094 = vsub.f32 %v5795, %v6087
        %v6095 = vsub.f32 %v5916, %v6088
        %v6096 = vsub.f32 %v5918, %v6089
        %v6097 = vsub.f32 %v6037, %v6090
        %v6098 = vmul.f32 %v6091, %v6091
        %v6099 = vmul.f32 %v6092, %v6092
        %v6100 = vmul.f32 %v6093, %v6093
        %v6101 = vmul.f32 %v6094, %v6094
        %v6102 = vmul.f32 %v6095, %v6095
        %v6103 = vmul.f32 %v6096, %v6096
        %v6104 = vmul.f32 %v6097, %v6097
        %v6105 = vrot.slane %v6098, 4
        %v6106 = vadd.f32 %v6098, %v6105
        %v6107 = vrot.slane %v6106, 2
        %v6108 = vadd.f32 %v6106, %v6107
        %v6109 = vrot.slane %v6108, 1
        %v6110 = vadd.f32 %v6108, %v6109
        %v6111 = vrot.slane %v6099, 4
        %v6112 = vadd.f32 %v6099, %v6111
        %v6113 = vrot.slane %v6112, 2
        %v6114 = vadd.f32 %v6112, %v6113
        %v6115 = vrot.slane %v6114, 1
        %v6116 = vadd.f32 %v6114, %v6115
        %v6117 = vrot.slane %v6100, 4
        %v6118 = vadd.f32 %v6100, %v6117
        %v6119 = vrot.slane %v6118, 2
        %v6120 = vadd.f32 %v6118, %v6119
        %v6121 = vrot.slane %v6120, 1
        %v6122 = vadd.f32 %v6120, %v6121
        %v6123 = vrot.slane %v6101, 4
        %v6124 = vadd.f32 %v6101, %v6123
        %v6125 = vrot.slane %v6124, 2
        %v6126 = vadd.f32 %v6124, %v6125
        %v6127 = vrot.slane %v6126, 1
        %v6128 = vadd.f32 %v6126, %v6127
        %v6129 = vrot.slane %v6102, 4
        %v6130 = vadd.f32 %v6102, %v6129
        %v6131 = vrot.slane %v6130, 2
        %v6132 = vadd.f32 %v6130, %v6131
        %v6133 = vrot.slane %v6132, 1
        %v6134 = vadd.f32 %v6132, %v6133
        %v6135 = vrot.slane %v6103, 4
        %v6136 = vadd.f32 %v6103, %v6135
        %v6137 = vrot.slane %v6136, 2
        %v6138 = vadd.f32 %v6136, %v6137
        %v6139 = vrot.slane %v6138, 1
        %v6140 = vadd.f32 %v6138, %v6139
        %v6141 = vrot.slane %v6104, 4
        %v6142 = vadd.f32 %v6104, %v6141
        %v6143 = vrot.slane %v6142, 2
        %v6144 = vadd.f32 %v6142, %v6143
        %v6145 = vrot.slane %v6144, 1
        %v6146 = vadd.f32 %v6144, %v6145
        %v6147 = vmul.f32 %v6110, %v2810
        %v6148 = vmul.f32 %v6116, %v2810
        %v6149 = vmul.f32 %v6122, %v2810
        %v6150 = vmul.f32 %v6128, %v2810
        %v6151 = vmul.f32 %v6134, %v2810
        %v6152 = vmul.f32 %v6140, %v2810
        %v6153 = vmul.f32 %v6146, %v2810
        %s6154 = scalar_lea.vmem [#allocation10], 62
        %v6155 = vld [vmem:[%s6154] ss:$8 sm:$0xf]
        %v6156 = vld [vmem:[%s6154] ss:$8 sm:$0xf0]
        %v6157 = vor.u32 %v6155, %v6156
        %s6158 = scalar_lea.vmem [#allocation10], 63
        %v6159 = vld [vmem:[%s6158] ss:$8 sm:$0xf]
        %v6160 = vld [vmem:[%s6158] ss:$8 sm:$0xf0]
        %v6161 = vor.u32 %v6159, %v6160
        %v6162 = vadd.f32 %v6147, 1e-05
        %v6163 = vadd.f32 %v6148, 1e-05
        %v6164 = vadd.f32 %v6149, 1e-05
        %v6165 = vadd.f32 %v6150, 1e-05
        %v6166 = vadd.f32 %v6151, 1e-05
        %v6167 = vadd.f32 %v6152, 1e-05
        %v6168 = vadd.f32 %v6153, 1e-05
        %v6169 = vrsqrt.pop %v6162
        %v6170 = vrsqrt.pop %v6163
        %v6171 = vrsqrt.pop %v6164
        %v6172 = vrsqrt.pop %v6165
        %v6173 = vrsqrt.pop %v6166
        %v6174 = vrsqrt.pop %v6167
        %v6175 = vrsqrt.pop %v6168
        %v6183 = vcombine.low %v6169, %v6170
        %v6184 = vcombine.low %v6171, %v6172
        %v6185 = vcombine.low %v6173, %v6174
        %v6187 = vunpack.c.l.s4 1966171168
        %v6188 = vunpack.c.0.s8 %v6187
        %v6189 = vlaneseq
        %v6190 = vshrl.u32 %v6189, 7
        %v6191 = vsub.s32 %v6188, %v6190
        %v6192 = vrot.slane %v6183, %v6191
        %v6194 = vunpack.c.l.s4 1966171168
        %v6195 = vunpack.c.0.s8 %v6194
        %v6196 = vlaneseq
        %v6197 = vshrl.u32 %v6196, 7
        %v6198 = vsub.s32 %v6195, %v6197
        %v6199 = vrot.slane %v6184, %v6198
        %v6201 = vunpack.c.l.s4 1966171168
        %v6202 = vunpack.c.0.s8 %v6201
        %v6203 = vlaneseq
        %v6204 = vshrl.u32 %v6203, 7
        %v6205 = vsub.s32 %v6202, %v6204
        %v6206 = vrot.slane %v6185, %v6205
        %v6208 = vunpack.c.l.s4 1966171168
        %v6209 = vunpack.c.0.s8 %v6208
        %v6210 = vlaneseq
        %v6211 = vshrl.u32 %v6210, 7
        %v6212 = vsub.s32 %v6209, %v6211
        %v6213 = vrot.slane %v6175, %v6212
        %v6214 = vcombine.low %v6192, %v6199
        %v6215 = vcombine.low %v6206, %v6213
        %v6217 = vunpack.c.l.s4 1966171168
        %v6218 = vunpack.c.0.s8 %v6217
        %v6219 = vlaneseq
        %v6220 = vshrl.u32 %v6219, 7
        %v6221 = vsub.s32 %v6218, %v6220
        %v6222 = vrot.slane %v6214, %v6221
        %v6224 = vunpack.c.l.s4 1966171168
        %v6225 = vunpack.c.0.s8 %v6224
        %v6226 = vlaneseq
        %v6227 = vshrl.u32 %v6226, 7
        %v6228 = vsub.s32 %v6225, %v6227
        %v6229 = vrot.slane %v6215, %v6228
        %v6230 = vcombine.low %v6222, %v6229
        %v6232 = vmul.f32 %v6157, %v6230
        %v6234 = vlaneseq
        %v6235 = vshrl.u32 %v6234, 7
        %v6236 = vsub.s32 0, %v6235
        %v6237 = vrot.slane %v6232, %v6236
        %v6238 = vlaneseq
        %v6239 = vshrl.u32 %v6238, 7
        %v6240 = vsub.s32 1, %v6239
        %v6241 = vrot.slane %v6232, %v6240
        %v6242 = vlaneseq
        %v6243 = vshrl.u32 %v6242, 7
        %v6244 = vsub.s32 2, %v6243
        %v6245 = vrot.slane %v6232, %v6244
        %v6246 = vlaneseq
        %v6247 = vshrl.u32 %v6246, 7
        %v6248 = vsub.s32 3, %v6247
        %v6249 = vrot.slane %v6232, %v6248
        %v6250 = vlaneseq
        %v6251 = vshrl.u32 %v6250, 7
        %v6252 = vsub.s32 4, %v6251
        %v6253 = vrot.slane %v6232, %v6252
        %v6254 = vlaneseq
        %v6255 = vshrl.u32 %v6254, 7
        %v6256 = vsub.s32 5, %v6255
        %v6257 = vrot.slane %v6232, %v6256
        %v6258 = vlaneseq
        %v6259 = vshrl.u32 %v6258, 7
        %v6260 = vsub.s32 6, %v6259
        %v6261 = vrot.slane %v6232, %v6260
        %v6269 = vmul.f32 %v6084, %v6237
        %v6270 = vmul.f32 %v6085, %v6241
        %v6271 = vmul.f32 %v6086, %v6245
        %v6272 = vmul.f32 %v6087, %v6249
        %v6273 = vmul.f32 %v6088, %v6253
        %v6274 = vmul.f32 %v6089, %v6257
        %v6275 = vmul.f32 %v6090, %v6261
        %v6283 = vcombine.low %v6269, %v6270
        %v6284 = vcombine.low %v6271, %v6272
        %v6285 = vcombine.low %v6273, %v6274
        %v6287 = vunpack.c.l.s4 1966171168
        %v6288 = vunpack.c.0.s8 %v6287
        %v6289 = vlaneseq
        %v6290 = vshrl.u32 %v6289, 7
        %v6291 = vsub.s32 %v6288, %v6290
        %v6292 = vrot.slane %v6283, %v6291
        %v6294 = vunpack.c.l.s4 1966171168
        %v6295 = vunpack.c.0.s8 %v6294
        %v6296 = vlaneseq
        %v6297 = vshrl.u32 %v6296, 7
        %v6298 = vsub.s32 %v6295, %v6297
        %v6299 = vrot.slane %v6284, %v6298
        %v6301 = vunpack.c.l.s4 1966171168
        %v6302 = vunpack.c.0.s8 %v6301
        %v6303 = vlaneseq
        %v6304 = vshrl.u32 %v6303, 7
        %v6305 = vsub.s32 %v6302, %v6304
        %v6306 = vrot.slane %v6285, %v6305
        %v6308 = vunpack.c.l.s4 1966171168
        %v6309 = vunpack.c.0.s8 %v6308
        %v6310 = vlaneseq
        %v6311 = vshrl.u32 %v6310, 7
        %v6312 = vsub.s32 %v6309, %v6311
        %v6313 = vrot.slane %v6275, %v6312
        %v6314 = vcombine.low %v6292, %v6299
        %v6315 = vcombine.low %v6306, %v6313
        %v6317 = vunpack.c.l.s4 1966171168
        %v6318 = vunpack.c.0.s8 %v6317
        %v6319 = vlaneseq
        %v6320 = vshrl.u32 %v6319, 7
        %v6321 = vsub.s32 %v6318, %v6320
        %v6322 = vrot.slane %v6314, %v6321
        %v6324 = vunpack.c.l.s4 1966171168
        %v6325 = vunpack.c.0.s8 %v6324
        %v6326 = vlaneseq
        %v6327 = vshrl.u32 %v6326, 7
        %v6328 = vsub.s32 %v6325, %v6327
        %v6329 = vrot.slane %v6315, %v6328
        %v6330 = vcombine.low %v6322, %v6329
        %v6332 = vsub.f32 %v6161, %v6330
        %v6333 = vmul.f32 %v5670, %v6237
        %v6334 = vmul.f32 %v5672, %v6241
        %v6335 = vmul.f32 %v5793, %v6245
        %v6336 = vmul.f32 %v5795, %v6249
        %v6337 = vmul.f32 %v5916, %v6253
        %v6338 = vmul.f32 %v5918, %v6257
        %v6339 = vmul.f32 %v6037, %v6261
        %v6341 = vlaneseq
        %v6342 = vshrl.u32 %v6341, 7
        %v6343 = vsub.s32 0, %v6342
        %v6344 = vrot.slane %v6332, %v6343
        %v6345 = vlaneseq
        %v6346 = vshrl.u32 %v6345, 7
        %v6347 = vsub.s32 1, %v6346
        %v6348 = vrot.slane %v6332, %v6347
        %v6349 = vlaneseq
        %v6350 = vshrl.u32 %v6349, 7
        %v6351 = vsub.s32 2, %v6350
        %v6352 = vrot.slane %v6332, %v6351
        %v6353 = vlaneseq
        %v6354 = vshrl.u32 %v6353, 7
        %v6355 = vsub.s32 3, %v6354
        %v6356 = vrot.slane %v6332, %v6355
        %v6357 = vlaneseq
        %v6358 = vshrl.u32 %v6357, 7
        %v6359 = vsub.s32 4, %v6358
        %v6360 = vrot.slane %v6332, %v6359
        %v6361 = vlaneseq
        %v6362 = vshrl.u32 %v6361, 7
        %v6363 = vsub.s32 5, %v6362
        %v6364 = vrot.slane %v6332, %v6363
        %v6365 = vlaneseq
        %v6366 = vshrl.u32 %v6365, 7
        %v6367 = vsub.s32 6, %v6366
        %v6368 = vrot.slane %v6332, %v6367
        %v6376 = vadd.f32 %v6333, %v6344
        %v6377 = vadd.f32 %v6334, %v6348
        %v6378 = vadd.f32 %v6335, %v6352
        %v6379 = vadd.f32 %v6336, %v6356
        %v6380 = vadd.f32 %v6337, %v6360
        %v6381 = vadd.f32 %v6338, %v6364
        %v6382 = vadd.f32 %v6339, %v6368
        %v6383 = vmul.f32 %v6376, 0.5
        %v6384 = vmul.f32 %v6377, 0.5
        %v6385 = vmul.f32 %v6378, 0.5
        %v6386 = vmul.f32 %v6379, 0.5
        %v6387 = vmul.f32 %v6380, 0.5
        %v6388 = vmul.f32 %v6381, 0.5
        %v6389 = vmul.f32 %v6382, 0.5
        %v6390 = vtanh.pop %v6383
        %v6391 = vtanh.pop %v6384
        %v6392 = vtanh.pop %v6385
        %v6393 = vtanh.pop %v6386
        %v6394 = vtanh.pop %v6387
        %v6395 = vtanh.pop %v6388
        %v6396 = vtanh.pop %v6389
        %v6397 = vadd.f32 %v6390, 1.0
        %v6398 = vadd.f32 %v6391, 1.0
        %v6399 = vadd.f32 %v6392, 1.0
        %v6400 = vadd.f32 %v6393, 1.0
        %v6401 = vadd.f32 %v6394, 1.0
        %v6402 = vadd.f32 %v6395, 1.0
        %v6403 = vadd.f32 %v6396, 1.0
        %v6404 = vmul.f32 %v6397, 0.5
        %v6405 = vmul.f32 %v6398, 0.5
        %v6406 = vmul.f32 %v6399, 0.5
        %v6407 = vmul.f32 %v6400, 0.5
        %v6408 = vmul.f32 %v6401, 0.5
        %v6409 = vmul.f32 %v6402, 0.5
        %v6410 = vmul.f32 %v6403, 0.5
        %6411 = vst [vmem:[%s238] sm:$0xff] %v4035
        %6412 = vst [vmem:[%s231] sm:$0xff] %v6404
        %6413 = vst [vmem:[%s231 + $0x8] sm:$0xff] %v6405
        %6414 = vst [vmem:[%s231 + $0x10] sm:$0xff] %v6406
        %6415 = vst [vmem:[%s231 + $0x18] sm:$0xff] %v6407
        %6416 = vst [vmem:[%s231 + $0x20] sm:$0xff] %v6408
        %6417 = vst [vmem:[%s231 + $0x28] sm:$0xff] %v6409
        %6418 = vst [vmem:[%s231 + $0x30] sm:$0xff] %v6410
        %s6419 = sand.u32 %s107, 1
        %s6420 = scalar_lea.sflag [#allocation12], %s6419
        %s6421 = sand.u32 %s107, 1
        %s6422 = smul.addr %s6421, 56
        %s6423 = scalar_lea.vmem [#allocation15], %s6422
        %s6424 = sand.u32 %s133, 1
        %s6425 = scalar_lea.sflag [#allocation17], %s6424
        %s6426 = sand.u32 %s133, 1
        %s6427 = smul.addr %s6426, 8
        %s6428 = scalar_lea.vmem [#allocation16], %s6427
        // Predicated region
        $region77: #{autoencoder_forward_stacked.1} parent=31 // pred_check
          %p6429 = pneg %p117
        $region78: #{autoencoder_forward_stacked.1} parent=31 // pred_check_branch
          %6431 = sbr.rel (%p6429) target = $region80
        $region79: #{autoencoder_forward_stacked.1} parent=31 // pred_region
          %s6433 = ssub.s32 896, 896
          %6434 = vsyncadd %s6420, %s6433
          %s6435 = smul.addr %s31, 7
          %s6436 = smul.addr %s6435, 128
          %s6437 = scalar_lea.hbm %s10, %s6436
          %s6439 = sshll.u32 %s6423, 4
          %s6440 = int_to_ptr.vmem [resolvable:$true] %s6439
          %6442 = dma.vmem_to_hbm [thread:$0]  %s6440, 896, %s6437, %s6420
        $region80: #{autoencoder_forward_stacked.1} parent=31 // pred_fallthru
          _
        // Predicated region
        $region81: #{autoencoder_forward_stacked.1} parent=31 // pred_check
          %p6443 = pneg %p143
        $region82: #{autoencoder_forward_stacked.1} parent=31 // pred_check_branch
          %6445 = sbr.rel (%p6443) target = $region84
        $region83: #{autoencoder_forward_stacked.1} parent=31 // pred_region
          %s6447 = ssub.s32 128, 128
          %6448 = vsyncadd %s6425, %s6447
          %s6449 = smul.addr %s31, 128
          %s6450 = scalar_lea.hbm %s11, %s6449
          %s6452 = sshll.u32 %s6428, 4
          %s6453 = int_to_ptr.vmem [resolvable:$true] %s6452
          %6455 = dma.vmem_to_hbm [thread:$0]  %s6453, 128, %s6450, %s6425
        $region84: #{autoencoder_forward_stacked.1} parent=31 // pred_fallthru
          _
      $region32: #{autoencoder_forward_stacked.1} parent=5 // pred_fallthru
        _
      %p6456 = scmp.le.s32.totalorder 2, %s26
      // Predicated region
      $region85: #{autoencoder_forward_stacked.1} parent=5 // pred_check
        %p6457 = pneg %p6456
      $region86: #{autoencoder_forward_stacked.1} parent=5 // pred_check_branch
        %6459 = sbr.rel (%p6457) target = $region88
      $region87: #{autoencoder_forward_stacked.1} parent=5 // pred_region
        %s6460 = ssub.s32 %s26, 2
        // Predicated region
        $region89: #{autoencoder_forward_stacked.1} parent=87 // pred_check
          %p6461 = pneg %p123
        $region90: #{autoencoder_forward_stacked.1} parent=87 // pred_check_branch
          %6463 = sbr.rel (%p6461) target = $region92
        $region91: #{autoencoder_forward_stacked.1} parent=87 // pred_region
          %s6464 = sand.u32 %s108, 1
          %s6465 = scalar_lea.sflag [#allocation12], %s6464
          %s6466 = sand.u32 %s108, 1
          %s6467 = smul.addr %s6466, 56
          %s6468 = scalar_lea.vmem [#allocation15], %s6467
          %6469 = dma.done %s6465, 896
        $region92: #{autoencoder_forward_stacked.1} parent=87 // pred_fallthru
          _
        // Predicated region
        $region93: #{autoencoder_forward_stacked.1} parent=87 // pred_check
          %p6470 = pneg %p149
        $region94: #{autoencoder_forward_stacked.1} parent=87 // pred_check_branch
          %6472 = sbr.rel (%p6470) target = $region96
        $region95: #{autoencoder_forward_stacked.1} parent=87 // pred_region
          %s6473 = sand.u32 %s134, 1
          %s6474 = scalar_lea.sflag [#allocation17], %s6473
          %s6475 = sand.u32 %s134, 1
          %s6476 = smul.addr %s6475, 8
          %s6477 = scalar_lea.vmem [#allocation16], %s6476
          %6478 = dma.done %s6474, 128
        $region96: #{autoencoder_forward_stacked.1} parent=87 // pred_fallthru
          _
      $region88: #{autoencoder_forward_stacked.1} parent=5 // pred_fallthru
        _
    $region6: #{autoencoder_forward_stacked.1} parent=1 // loop_footer
      %s30 = sadd.s32 1, %s26
    $region7: #{autoencoder_forward_stacked.1} parent=1 // loop_footer_branch
      %25 = sbr.rel target = $region3
    $region8: #{autoencoder_forward_stacked.1} parent=1 // loop_exit
      _
    %6479 = vsyncpa [#allocation11], 1
    %s6480 = scalar_lea.sflag [#allocation11], 1
    %6481 = vsyncpa %s6480, 1
    %6482 = vsyncpa [#allocation14], 1
    %6483 = vsyncpa [#allocation12], 1
    %s6484 = scalar_lea.sflag [#allocation12], 1
    %6485 = vsyncpa %s6484, 1
    %6486 = vsyncpa [#allocation17], 1
    %s6487 = scalar_lea.sflag [#allocation17], 1
    %6488 = vsyncpa %s6487, 1
  %6489 = vsyncmov [#allocation9]
  %s6490 = vpop.sfrf %6489
  %p6491 = scmp.eq.s32.totalorder %s6490, 0
  %p6492 = pneg %p6491
  %6494 = shalt.err (%p6492)
  %s6495 = scalar_lea.sflag [#allocation9], 1
  %6496 = vsyncmov %s6495
  %s6497 = vpop.sfrf %6496
  %p6498 = scmp.eq.s32.totalorder %s6497, 0
  %p6499 = pneg %p6498
  %6501 = shalt.err (%p6499)
  %s6502 = scalar_lea.sflag [#allocation9], 2
  %6503 = vsyncmov %s6502
  %s6504 = vpop.sfrf %6503
  %p6505 = scmp.eq.s32.totalorder %s6504, 0
  %p6506 = pneg %p6505
  %6508 = shalt.err (%p6506)
  %s6509 = scalar_lea.sflag [#allocation9], 3
  %6510 = vsyncmov %s6509
  %s6511 = vpop.sfrf %6510
  %p6512 = scmp.eq.s32.totalorder %s6511, 0
  %p6513 = pneg %p6512
  %6515 = shalt.err (%p6513)
  %s6516 = scalar_lea.sflag [#allocation9], 4
  %6517 = vsyncmov %s6516
  %s6518 = vpop.sfrf %6517
  %p6519 = scmp.eq.s32.totalorder %s6518, 0
  %p6520 = pneg %p6519
  %6522 = shalt.err (%p6520)
  %s6523 = scalar_lea.sflag [#allocation9], 5
  %6524 = vsyncmov %s6523
  %s6525 = vpop.sfrf %6524
  %p6526 = scmp.eq.s32.totalorder %s6525, 0
  %p6527 = pneg %p6526
  %6529 = shalt.err (%p6527)
  %s6530 = scalar_lea.sflag [#allocation9], 6
  %6531 = vsyncmov %s6530
  %s6532 = vpop.sfrf %6531
  %p6533 = scmp.eq.s32.totalorder %s6532, 0
  %p6534 = pneg %p6533
  %6536 = shalt.err (%p6534)

</llo_original>
